<compile_context>
chip_gen: v6e
topology: v6e:2x2x1
jax: 0.10.0
libtpu: 0.0.40
codegen_flags: <defaults>
</compile_context>

<pallas_src>
import jax
import jax.numpy as jnp
from jax.experimental import pallas as pl
from jax.experimental.pallas import tpu as pltpu

EPS = 1e-5

K_IN = 28 * 28      # 784
HID = 800
OUT = 10

K_PAD = 896         # 7 * 128
H_PAD = 896         # 7 * 128
O_PAD = 128         # 1 * 128


def _bn_relu_bf16(h, gamma, beta):
    """Training-mode BatchNorm1d + ReLU as a per-feature scale/shift, f32 math.

    h: (B, F) f32 matmul accumulator.  Returns bf16, ready for the next MXU
    pass.  Per-element cost is one mul + one add + one max.
    Padded lanes (gamma = beta = 0, h = 0) stay exactly 0.
    """
    mean = jnp.mean(h, axis=0, keepdims=True)
    mean_sq = jnp.mean(h * h, axis=0, keepdims=True)
    var = jnp.maximum(mean_sq - mean * mean, 0.0)
    s = gamma * jax.lax.rsqrt(var + EPS)          # (1, F) f32
    t = beta - mean * s                           # (1, F) f32
    return jnp.maximum(h * s + t, 0.0).astype(jnp.bfloat16)


def student_kernel(x_ref,
                   w1_ref, g1_ref, be1_ref,
                   w2_hbm, g2_ref, be2_ref,
                   w3_hbm, b3_ref,
                   o_ref,
                   w2_vmem, w3_vmem, sem):
    # Kick off w2/w3 HBM->VMEM DMAs immediately; they overlap fc1 + bn1.
    cp_w2 = pltpu.make_async_copy(w2_hbm, w2_vmem, sem.at[0])
    cp_w3 = pltpu.make_async_copy(w3_hbm, w3_vmem, sem.at[1])
    cp_w2.start()
    cp_w3.start()

    x = x_ref[...]                                              # (B, 896) bf16

    # fc1 (no bias: pre-BN bias is an exact no-op) -> bn1 -> relu
    h1 = jnp.dot(x, w1_ref[...], preferred_element_type=jnp.float32)
    h1 = _bn_relu_bf16(h1, g1_ref[...], be1_ref[...])           # (B, 896) bf16

    # fc2 -> bn2 -> relu
    cp_w2.wait()
    h2 = jnp.dot(h1, w2_vmem[...], preferred_element_type=jnp.float32)
    h2 = _bn_relu_bf16(h2, g2_ref[...], be2_ref[...])           # (B, 896) bf16

    # fc3 -> lane-dense padded output (B, 128); cols 10..127 are exactly 0.
    cp_w3.wait()
    o_ref[...] = jnp.dot(h2, w3_vmem[...],
                         preferred_element_type=jnp.float32) + b3_ref[...]


def _pad_to(a, shape):
    pads = [(0, t - s) for s, t in zip(a.shape, shape)]
    return jnp.pad(a, pads)


def init_params(key):
    """Deterministic init matching nn.Linear / nn.BatchNorm1d shapes.

    Linear weights stored as (in, out) = W^T of PyTorch's (out, in).
    Biases / BN params are (1, F).  All values f32 (PyTorch-equivalent);
    pack_params pads/casts (and drops the BN-cancelled fc1/fc2 biases).
    """
    k = jax.random.split(key, 6)

    def linear(kw, kb, fan_in, fan_out):
        bound = 1.0 / jnp.sqrt(fan_in)
        w = jax.random.uniform(kw, (fan_in, fan_out), jnp.float32, -bound, bound)
        b = jax.random.uniform(kb, (1, fan_out), jnp.float32, -bound, bound)
        return w, b

    w1, b1 = linear(k[0], k[1], K_IN, HID)
    w2, b2 = linear(k[2], k[3], HID, HID)
    w3, b3 = linear(k[4], k[5], HID, OUT)

    g1 = jnp.ones((1, HID), jnp.float32)
    be1 = jnp.zeros((1, HID), jnp.float32)
    g2 = jnp.ones((1, HID), jnp.float32)
    be2 = jnp.zeros((1, HID), jnp.float32)

    return (w1, b1, g1, be1, w2, b2, g2, be2, w3, b3)


def pack_params(params):
    """Zero-pad to lane multiples; weights bf16, small params f32.

    b1/b2 are intentionally NOT packed: a bias before training-mode BN is a
    mathematical no-op (mean subtraction cancels it).
    """
    (w1, _b1, g1, be1, w2, _b2, g2, be2, w3, b3) = params
    w1p = _pad_to(w1, (K_PAD, H_PAD)).astype(jnp.bfloat16)
    w2p = _pad_to(w2, (H_PAD, H_PAD)).astype(jnp.bfloat16)
    w3p = _pad_to(w3, (H_PAD, O_PAD)).astype(jnp.bfloat16)
    b3p = _pad_to(b3, (1, O_PAD))          # padded lanes = 0
    g1p = _pad_to(g1, (1, H_PAD))          # padded gamma lanes = 0
    g2p = _pad_to(g2, (1, H_PAD))
    be1p = _pad_to(be1, (1, H_PAD))        # padded beta lanes = 0
    be2p = _pad_to(be2, (1, H_PAD))
    return (w1p, g1p, be1p, w2p, g2p, be2p, w3p, b3p)


def student_forward(x, packed_params):
    """x: (B, 1, 28, 28) or (B, 784) float32.  Returns (B, 10) float32."""
    B = x.shape[0]
    x2d = x.reshape(B, K_IN).astype(jnp.float32)
    x2d = jnp.pad(x2d, ((0, 0), (0, K_PAD - K_IN))).astype(jnp.bfloat16)

    (w1, g1, be1, w2, g2, be2, w3, b3) = packed_params

    flops = 2 * B * (K_PAD * H_PAD + H_PAD * H_PAD + H_PAD * O_PAD)
    bytes_accessed = (
        (K_PAD * H_PAD + H_PAD * H_PAD + H_PAD * O_PAD) * 2      # bf16 weights
        + (4 * H_PAD + O_PAD) * 4                                # bn params / b3
        + B * K_PAD * 2                                          # x (bf16)
        + B * O_PAD * 4                                          # out (f32)
    )
    cost = pl.CostEstimate(flops=flops,
                           transcendentals=2 * H_PAD,            # rsqrt per BN lane
                           bytes_accessed=bytes_accessed)

    vmem = pl.BlockSpec(memory_space=pltpu.MemorySpace.VMEM)
    anyspace = pl.BlockSpec(memory_space=pl.ANY)

    out_pad = pl.pallas_call(
        student_kernel,
        out_shape=jax.ShapeDtypeStruct((B, O_PAD), jnp.float32),
        in_specs=[vmem,                       # x
                  vmem, vmem, vmem,           # w1, g1, be1
                  anyspace, vmem, vmem,       # w2 (HBM), g2, be2
                  anyspace, vmem],            # w3 (HBM), b3
        out_specs=vmem,
        scratch_shapes=[
            pltpu.VMEM((H_PAD, H_PAD), jnp.bfloat16),   # w2 landing buffer
            pltpu.VMEM((H_PAD, O_PAD), jnp.bfloat16),   # w3 landing buffer
            pltpu.SemaphoreType.DMA((2,)),
        ],
        compiler_params=pltpu.CompilerParams(vmem_limit_bytes=32 << 20),
        cost_estimate=cost,
    )(x2d, w1, g1, be1, w2, g2, be2, w3, b3)

    return out_pad[:, :OUT]


def student_reference(x, params):
    """Pure-JAX f32 reference matching the PyTorch module (training-mode BN)."""
    (w1, b1, g1, be1, w2, b2, g2, be2, w3, b3) = params
    h = x.reshape(x.shape[0], K_IN).astype(jnp.float32)

    def bn_relu(h, gamma, beta):
        mean = jnp.mean(h, axis=0, keepdims=True)
        var = jnp.mean((h - mean) ** 2, axis=0, keepdims=True)
        return jnp.maximum((h - mean) / jnp.sqrt(var + EPS) * gamma + beta, 0.0)

    h = bn_relu(h @ w1 + b1, g1, be1)
    h = bn_relu(h @ w2 + b2, g2, be2)
    return h @ w3 + b3


if __name__ == "__main__":
    key = jax.random.PRNGKey(0)
    kx, kp = jax.random.split(key)

    B = 8
    x = jax.random.normal(kx, (B, 1, 28, 28), jnp.float32)
    params = init_params(kp)
    packed = pack_params(params)

    out = student_forward(x, packed)
    jax.block_until_ready(out)

    assert out.shape == (B, OUT) and out.dtype == jnp.float32
    assert bool(jnp.all(jnp.isfinite(out)))

    # Loose bf16-vs-f32 sanity bound against the full f32 reference
    # (which still includes the fc1/fc2 biases, verifying they cancel).
    ref = student_reference(x, params)
    max_diff = float(jnp.max(jnp.abs(out - ref)))
    assert max_diff < 0.3, f"max |kernel - ref| = {max_diff}"

    print("KERNEL_OK")
</pallas_src>

<mosaic_0001>
module attributes {stable_mosaic.version = 11 : i64} {
  func.func @student_kernel(%arg0: memref<8x896xbf16, #tpu.memory_space<vmem>>, %arg1: memref<896x896xbf16, #tpu.memory_space<vmem>>, %arg2: memref<1x896xf32, #tpu.memory_space<vmem>>, %arg3: memref<1x896xf32, #tpu.memory_space<vmem>>, %arg4: memref<896x896xbf16, #tpu.memory_space<any>>, %arg5: memref<1x896xf32, #tpu.memory_space<vmem>>, %arg6: memref<1x896xf32, #tpu.memory_space<vmem>>, %arg7: memref<896x128xbf16, #tpu.memory_space<any>>, %arg8: memref<1x128xf32, #tpu.memory_space<vmem>>, %arg9: memref<8x128xf32, #tpu.memory_space<vmem>>, %arg10: memref<896x896xbf16, #tpu.memory_space<vmem>>, %arg11: memref<896x128xbf16, #tpu.memory_space<vmem>>, %arg12: memref<2x!tpu.dma_semaphore, #tpu.memory_space<semaphore_mem>>) attributes {dimension_semantics = [], scalar_prefetch = 0 : i64, scratch_operands = 3 : i64, tpu.core_type = #tpu.core_type<tc>} {
    %c0_i32 = arith.constant 0 : i32
    %0 = tpu.memref_slice %arg12[%c0_i32] : memref<2x!tpu.dma_semaphore, #tpu.memory_space<semaphore_mem>> -> memref<1x!tpu.dma_semaphore, #tpu.memory_space<semaphore_mem>>
    %1 = tpu.memref_squeeze %0 : memref<1x!tpu.dma_semaphore, #tpu.memory_space<semaphore_mem>> -> memref<!tpu.dma_semaphore, #tpu.memory_space<semaphore_mem>>
    tpu.enqueue_dma source(%arg4 : memref<896x896xbf16, #tpu.memory_space<any>>) target(%arg10 : memref<896x896xbf16, #tpu.memory_space<vmem>>) target_semaphore(%1 : memref<!tpu.dma_semaphore, #tpu.memory_space<semaphore_mem>>)
    %c1_i32 = arith.constant 1 : i32
    %2 = tpu.memref_slice %arg12[%c1_i32] : memref<2x!tpu.dma_semaphore, #tpu.memory_space<semaphore_mem>> -> memref<1x!tpu.dma_semaphore, #tpu.memory_space<semaphore_mem>>
    %3 = tpu.memref_squeeze %2 : memref<1x!tpu.dma_semaphore, #tpu.memory_space<semaphore_mem>> -> memref<!tpu.dma_semaphore, #tpu.memory_space<semaphore_mem>>
    tpu.enqueue_dma source(%arg7 : memref<896x128xbf16, #tpu.memory_space<any>>) target(%arg11 : memref<896x128xbf16, #tpu.memory_space<vmem>>) target_semaphore(%3 : memref<!tpu.dma_semaphore, #tpu.memory_space<semaphore_mem>>)
    %c0 = arith.constant 0 : index
    %c0_0 = arith.constant 0 : index
    %4 = vector.load %arg0[%c0, %c0_0] : memref<8x896xbf16, #tpu.memory_space<vmem>>, vector<8x896xbf16>
    %c0_1 = arith.constant 0 : index
    %c0_2 = arith.constant 0 : index
    %5 = vector.load %arg1[%c0_1, %c0_2] : memref<896x896xbf16, #tpu.memory_space<vmem>>, vector<896x896xbf16>
    %cst = arith.constant dense<0.000000e+00> : vector<8x896xf32>
    %6 = tpu.matmul %4, %5, %cst {dimension_numbers = #tpu.dot_dimension_numbers<[1], [0], [0], [1], [0, 0, 1, 1], [], []>} : vector<8x896xbf16>, vector<896x896xbf16>, vector<8x896xf32> -> vector<8x896xf32>
    %c0_3 = arith.constant 0 : index
    %c0_4 = arith.constant 0 : index
    %7 = vector.load %arg2[%c0_3, %c0_4] : memref<1x896xf32, #tpu.memory_space<vmem>>, vector<1x896xf32>
    %c0_5 = arith.constant 0 : index
    %c0_6 = arith.constant 0 : index
    %8 = vector.load %arg3[%c0_5, %c0_6] : memref<1x896xf32, #tpu.memory_space<vmem>>, vector<1x896xf32>
    %cst_7 = arith.constant dense<0.000000e+00> : vector<896xf32>
    %9 = vector.multi_reduction <add>, %6, %cst_7 [0] : vector<8x896xf32> to vector<896xf32>
    %10 = vector.shape_cast %9 : vector<896xf32> to vector<1x896xf32>
    %cst_8 = arith.constant 8.000000e+00 : f32
    %11 = vector.broadcast %cst_8 : f32 to vector<1x896xf32>
    %12 = arith.divf %10, %11 : vector<1x896xf32>
    %13 = arith.mulf %6, %6 : vector<8x896xf32>
    %cst_9 = arith.constant dense<0.000000e+00> : vector<896xf32>
    %14 = vector.multi_reduction <add>, %13, %cst_9 [0] : vector<8x896xf32> to vector<896xf32>
    %15 = vector.shape_cast %14 : vector<896xf32> to vector<1x896xf32>
    %cst_10 = arith.constant 8.000000e+00 : f32
    %16 = vector.broadcast %cst_10 : f32 to vector<1x896xf32>
    %17 = arith.divf %15, %16 : vector<1x896xf32>
    %18 = arith.mulf %12, %12 : vector<1x896xf32>
    %19 = arith.subf %17, %18 : vector<1x896xf32>
    %cst_11 = arith.constant 0.000000e+00 : f32
    %20 = vector.broadcast %cst_11 : f32 to vector<1x896xf32>
    %21 = arith.maximumf %19, %20 : vector<1x896xf32>
    %cst_12 = arith.constant 9.99999974E-6 : f32
    %22 = vector.broadcast %cst_12 : f32 to vector<1x896xf32>
    %23 = arith.addf %21, %22 : vector<1x896xf32>
    %24 = math.rsqrt %23 : vector<1x896xf32>
    %25 = arith.mulf %7, %24 : vector<1x896xf32>
    %26 = arith.mulf %12, %25 : vector<1x896xf32>
    %27 = arith.subf %8, %26 : vector<1x896xf32>
    %28 = vector.broadcast %25 : vector<1x896xf32> to vector<8x896xf32>
    %29 = arith.mulf %6, %28 : vector<8x896xf32>
    %30 = vector.broadcast %27 : vector<1x896xf32> to vector<8x896xf32>
    %31 = arith.addf %29, %30 : vector<8x896xf32>
    %cst_13 = arith.constant 0.000000e+00 : f32
    %32 = vector.broadcast %cst_13 : f32 to vector<8x896xf32>
    %33 = arith.maximumf %31, %32 : vector<8x896xf32>
    %34 = arith.truncf %33 : vector<8x896xf32> to vector<8x896xbf16>
    %c0_i32_14 = arith.constant 0 : i32
    %35 = tpu.memref_slice %arg12[%c0_i32_14] : memref<2x!tpu.dma_semaphore, #tpu.memory_space<semaphore_mem>> -> memref<1x!tpu.dma_semaphore, #tpu.memory_space<semaphore_mem>>
    %36 = tpu.memref_squeeze %35 : memref<1x!tpu.dma_semaphore, #tpu.memory_space<semaphore_mem>> -> memref<!tpu.dma_semaphore, #tpu.memory_space<semaphore_mem>>
    tpu.wait_dma2 semaphore(%36 : memref<!tpu.dma_semaphore, #tpu.memory_space<semaphore_mem>>) src(%arg4 : memref<896x896xbf16, #tpu.memory_space<any>>) dst(%arg10 : memref<896x896xbf16, #tpu.memory_space<vmem>>)
    %c0_15 = arith.constant 0 : index
    %c0_16 = arith.constant 0 : index
    %37 = vector.load %arg10[%c0_15, %c0_16] : memref<896x896xbf16, #tpu.memory_space<vmem>>, vector<896x896xbf16>
    %cst_17 = arith.constant dense<0.000000e+00> : vector<8x896xf32>
    %38 = tpu.matmul %34, %37, %cst_17 {dimension_numbers = #tpu.dot_dimension_numbers<[1], [0], [0], [1], [0, 0, 1, 1], [], []>} : vector<8x896xbf16>, vector<896x896xbf16>, vector<8x896xf32> -> vector<8x896xf32>
    %c0_18 = arith.constant 0 : index
    %c0_19 = arith.constant 0 : index
    %39 = vector.load %arg5[%c0_18, %c0_19] : memref<1x896xf32, #tpu.memory_space<vmem>>, vector<1x896xf32>
    %c0_20 = arith.constant 0 : index
    %c0_21 = arith.constant 0 : index
    %40 = vector.load %arg6[%c0_20, %c0_21] : memref<1x896xf32, #tpu.memory_space<vmem>>, vector<1x896xf32>
    %cst_22 = arith.constant dense<0.000000e+00> : vector<896xf32>
    %41 = vector.multi_reduction <add>, %38, %cst_22 [0] : vector<8x896xf32> to vector<896xf32>
    %42 = vector.shape_cast %41 : vector<896xf32> to vector<1x896xf32>
    %cst_23 = arith.constant 8.000000e+00 : f32
    %43 = vector.broadcast %cst_23 : f32 to vector<1x896xf32>
    %44 = arith.divf %42, %43 : vector<1x896xf32>
    %45 = arith.mulf %38, %38 : vector<8x896xf32>
    %cst_24 = arith.constant dense<0.000000e+00> : vector<896xf32>
    %46 = vector.multi_reduction <add>, %45, %cst_24 [0] : vector<8x896xf32> to vector<896xf32>
    %47 = vector.shape_cast %46 : vector<896xf32> to vector<1x896xf32>
    %cst_25 = arith.constant 8.000000e+00 : f32
    %48 = vector.broadcast %cst_25 : f32 to vector<1x896xf32>
    %49 = arith.divf %47, %48 : vector<1x896xf32>
    %50 = arith.mulf %44, %44 : vector<1x896xf32>
    %51 = arith.subf %49, %50 : vector<1x896xf32>
    %cst_26 = arith.constant 0.000000e+00 : f32
    %52 = vector.broadcast %cst_26 : f32 to vector<1x896xf32>
    %53 = arith.maximumf %51, %52 : vector<1x896xf32>
    %cst_27 = arith.constant 9.99999974E-6 : f32
    %54 = vector.broadcast %cst_27 : f32 to vector<1x896xf32>
    %55 = arith.addf %53, %54 : vector<1x896xf32>
    %56 = math.rsqrt %55 : vector<1x896xf32>
    %57 = arith.mulf %39, %56 : vector<1x896xf32>
    %58 = arith.mulf %44, %57 : vector<1x896xf32>
    %59 = arith.subf %40, %58 : vector<1x896xf32>
    %60 = vector.broadcast %57 : vector<1x896xf32> to vector<8x896xf32>
    %61 = arith.mulf %38, %60 : vector<8x896xf32>
    %62 = vector.broadcast %59 : vector<1x896xf32> to vector<8x896xf32>
    %63 = arith.addf %61, %62 : vector<8x896xf32>
    %cst_28 = arith.constant 0.000000e+00 : f32
    %64 = vector.broadcast %cst_28 : f32 to vector<8x896xf32>
    %65 = arith.maximumf %63, %64 : vector<8x896xf32>
    %66 = arith.truncf %65 : vector<8x896xf32> to vector<8x896xbf16>
    %c1_i32_29 = arith.constant 1 : i32
    %67 = tpu.memref_slice %arg12[%c1_i32_29] : memref<2x!tpu.dma_semaphore, #tpu.memory_space<semaphore_mem>> -> memref<1x!tpu.dma_semaphore, #tpu.memory_space<semaphore_mem>>
    %68 = tpu.memref_squeeze %67 : memref<1x!tpu.dma_semaphore, #tpu.memory_space<semaphore_mem>> -> memref<!tpu.dma_semaphore, #tpu.memory_space<semaphore_mem>>
    tpu.wait_dma2 semaphore(%68 : memref<!tpu.dma_semaphore, #tpu.memory_space<semaphore_mem>>) src(%arg7 : memref<896x128xbf16, #tpu.memory_space<any>>) dst(%arg11 : memref<896x128xbf16, #tpu.memory_space<vmem>>)
    %c0_30 = arith.constant 0 : index
    %c0_31 = arith.constant 0 : index
    %69 = vector.load %arg11[%c0_30, %c0_31] : memref<896x128xbf16, #tpu.memory_space<vmem>>, vector<896x128xbf16>
    %cst_32 = arith.constant dense<0.000000e+00> : vector<8x128xf32>
    %70 = tpu.matmul %66, %69, %cst_32 {dimension_numbers = #tpu.dot_dimension_numbers<[1], [0], [0], [1], [0, 0, 1, 1], [], []>} : vector<8x896xbf16>, vector<896x128xbf16>, vector<8x128xf32> -> vector<8x128xf32>
    %c0_33 = arith.constant 0 : index
    %c0_34 = arith.constant 0 : index
    %71 = vector.load %arg8[%c0_33, %c0_34] : memref<1x128xf32, #tpu.memory_space<vmem>>, vector<1x128xf32>
    %72 = vector.broadcast %71 : vector<1x128xf32> to vector<8x128xf32>
    %73 = arith.addf %70, %72 : vector<8x128xf32>
    %c0_35 = arith.constant 0 : index
    %c0_36 = arith.constant 0 : index
    %74 = vector.load %arg9[%c0_35, %c0_36] : memref<8x128xf32, #tpu.memory_space<vmem>>, vector<8x128xf32>
    tpu.vector_store %arg9[%c0_35, %c0_36], %73 {strides = array<i32>} : memref<8x128xf32, #tpu.memory_space<vmem>>, vector<8x128xf32>,
    return
  }
}

</mosaic_0001>

<llo_original>
// kernel: tpu_custom_call.1
$region0: #{tpu_custom_call.1}
  #allocation0 [shape = 'u32[]', space=smem, size = 0x4, offset = 0x4, fixed_abs, tag = 'smem constant byte address 0x4 - core index']
  #allocation1 [shape = 'u32[144,128]{1,0:T(1,128)}', space=vmem, size = 0x12000, scoped, tag = 'internal scratch']
  #allocation2 [shape = 'bf16[896,896]{1,0:T(8,128)(2,1)}', space=vmem, size = 0x188000, scoped, tag = 'scratch operand']
  #allocation3 [shape = 'bf16[896,128]{1,0:T(8,128)(2,1)}', space=vmem, size = 0x38000, scoped, tag = 'scratch operand']
  #allocation4 [shape = 's32[2]{0}', space=sflag, size = 0x8, scoped, tag = 'scratch operand']
  #allocation18 [shape = 's32[]', space=sflag, size = 0x4, offset = 0, fixed_abs, tag = 'sflag constant byte address 0x0 - dummy sync flag']
  #allocation19 [shape = 's32[]', space=sflag, size = 0x4, offset = 0, fixed_abs, tag = 'sflag constant byte address 0x0 - dummy sync flag']
  #allocation20 [shape = 'u32[]', space=smem, size = 0x4, offset = 0x44, fixed_abs, tag = 'smem constant byte address 0x44 - assertion arg 0']
  #allocation21 [shape = 'u32[]', space=smem, size = 0x4, offset = 0x48, fixed_abs, tag = 'smem constant byte address 0x48 - assertion arg 1']
  #allocation22 [shape = 's32[]', space=sflag, size = 0x4, offset = 0, fixed_abs, tag = 'sflag constant byte address 0x0 - dummy sync flag']
  #allocation23 [shape = 's32[]', space=sflag, size = 0x4, offset = 0, fixed_abs, tag = 'sflag constant byte address 0x0 - dummy sync flag']
  %s0 = inlined_call_operand.hbm [shape: bf16[8,896], index: 0, kind: input, shape index: {}]
  %s1 = inlined_call_operand.hbm [shape: bf16[896,896], index: 1, kind: input, shape index: {}]
  %s2 = inlined_call_operand.hbm [shape: f32[1,896], index: 2, kind: input, shape index: {}]
  %s3 = inlined_call_operand.hbm [shape: f32[1,896], index: 3, kind: input, shape index: {}]
  %s4 = inlined_call_operand.hbm [shape: bf16[896,896], index: 4, kind: input, shape index: {}]
  %s5 = inlined_call_operand.hbm [shape: f32[1,896], index: 5, kind: input, shape index: {}]
  %s6 = inlined_call_operand.hbm [shape: f32[1,896], index: 6, kind: input, shape index: {}]
  %s7 = inlined_call_operand.hbm [shape: bf16[896,128], index: 7, kind: input, shape index: {}]
  %s8 = inlined_call_operand.hbm [shape: f32[1,128], index: 8, kind: input, shape index: {}]
  %s9 = inlined_call_operand.hbm [shape: f32[8,128], index: 9, kind: output, shape index: {}]
  %s10 = sld [smem:[#allocation0]]
  $region74: #{tpu_custom_call.1} parent=0
    _
  %s12 = ssub.s32 1, %s10
  %s13 = scalar_select 0, %s12, %s10
  $region1: #{tpu_custom_call.1} parent=0
    #allocation5 [shape = 'u8[14336]{0}', space=vmem, size = 0x3800, scoped, tag = 'input window, operand 0, single buffered']
    #allocation6 [shape = 's32[1]{0}', space=sflag, size = 0x4, scoped, tag = 'scoped memory for tpu_custom_call.1']
    #allocation7 [shape = 's32[1]{0}', space=sflag, size = 0x4, scoped, tag = 'scoped memory for tpu_custom_call.1']
    #allocation8 [shape = 'u8[1605632]{0}', space=vmem, size = 0x188000, scoped, tag = 'input window, operand 1, single buffered']
    #allocation9 [shape = 's32[1]{0}', space=sflag, size = 0x4, scoped, tag = 'scoped memory for tpu_custom_call.1']
    #allocation10 [shape = 'u8[3584]{0}', space=vmem, size = 0x1000, scoped, tag = 'input window, operand 2, single buffered']
    #allocation11 [shape = 'u8[3584]{0}', space=vmem, size = 0x1000, scoped, tag = 'input window, operand 3, single buffered']
    #allocation12 [shape = 's32[1]{0}', space=sflag, size = 0x4, scoped, tag = 'scoped memory for tpu_custom_call.1']
    #allocation13 [shape = 'u8[3584]{0}', space=vmem, size = 0x1000, scoped, tag = 'input window, operand 5, single buffered']
    #allocation14 [shape = 'u8[3584]{0}', space=vmem, size = 0x1000, scoped, tag = 'input window, operand 6, single buffered']
    #allocation15 [shape = 's32[1]{0}', space=sflag, size = 0x4, scoped, tag = 'scoped memory for tpu_custom_call.1']
    #allocation16 [shape = 'u8[512]{0}', space=vmem, size = 0x400, scoped, tag = 'input window, operand 8, single buffered']
    #allocation17 [shape = 'u8[4096]{0}', space=vmem, size = 0x1000, scoped, tag = 'output window, operand 0, single buffered']
    %14 = vsyncpa [#allocation6], 0
    %15 = vsyncpa [#allocation9], 0
    %16 = vsyncpa [#allocation12], 0
    %17 = vsyncpa [#allocation15], 0
    %18 = vsyncpa [#allocation7], 0
    // Predicated region
    $region2: #{tpu_custom_call.1} parent=1 // pred_check
      _
    $region3: #{tpu_custom_call.1} parent=1 // pred_check_branch
      %20 = sbr.rel (0) target = $region5
    $region4: #{tpu_custom_call.1} parent=1 // pred_region
      %s22 = ssub.s32 448, 448
      %23 = vsyncadd [#allocation6], %s22
      %s25 = sshll.u32 [#allocation5], 4
      %s26 = int_to_ptr.vmem [resolvable:$true] %s25
      %28 = dma.hbm_to_vmem [thread:$0]  %s0, 448, %s26, [#allocation6]
    $region5: #{tpu_custom_call.1} parent=1 // pred_fallthru
      _
    // Predicated region
    $region6: #{tpu_custom_call.1} parent=1 // pred_check
      _
    $region7: #{tpu_custom_call.1} parent=1 // pred_check_branch
      %30 = sbr.rel (0) target = $region9
    $region8: #{tpu_custom_call.1} parent=1 // pred_region
      %s32 = ssub.s32 50176, 50176
      %33 = vsyncadd [#allocation9], %s32
      %s34 = sshll.u32 [#allocation8], 4
      %s35 = int_to_ptr.vmem [resolvable:$true] %s34
      %40 = dma.hbm_to_vmem [thread:$0]  %s1, 50176, %s35, [#allocation9], 448, 448, 28
    $region9: #{tpu_custom_call.1} parent=1 // pred_fallthru
      _
    // Predicated region
    $region10: #{tpu_custom_call.1} parent=1 // pred_check
      _
    $region11: #{tpu_custom_call.1} parent=1 // pred_check_branch
      %42 = sbr.rel (0) target = $region13
    $region12: #{tpu_custom_call.1} parent=1 // pred_region
      %s44 = ssub.s32 112, 112
      %45 = vsyncadd [#allocation9], %s44
      %s47 = sshll.u32 [#allocation10], 4
      %s48 = int_to_ptr.vmem [resolvable:$true] %s47
      %50 = dma.hbm_to_vmem [thread:$0]  %s2, 112, %s48, [#allocation9]
    $region13: #{tpu_custom_call.1} parent=1 // pred_fallthru
      _
    // Predicated region
    $region14: #{tpu_custom_call.1} parent=1 // pred_check
      _
    $region15: #{tpu_custom_call.1} parent=1 // pred_check_branch
      %52 = sbr.rel (0) target = $region17
    $region16: #{tpu_custom_call.1} parent=1 // pred_region
      %s54 = ssub.s32 112, 112
      %55 = vsyncadd [#allocation12], %s54
      %s57 = sshll.u32 [#allocation11], 4
      %s58 = int_to_ptr.vmem [resolvable:$true] %s57
      %60 = dma.hbm_to_vmem [thread:$0]  %s3, 112, %s58, [#allocation12]
    $region17: #{tpu_custom_call.1} parent=1 // pred_fallthru
      _
    // Predicated region
    $region18: #{tpu_custom_call.1} parent=1 // pred_check
      _
    $region19: #{tpu_custom_call.1} parent=1 // pred_check_branch
      %62 = sbr.rel (0) target = $region21
    $region20: #{tpu_custom_call.1} parent=1 // pred_region
      %s64 = ssub.s32 112, 112
      %65 = vsyncadd [#allocation12], %s64
      %s67 = sshll.u32 [#allocation13], 4
      %s68 = int_to_ptr.vmem [resolvable:$true] %s67
      %70 = dma.hbm_to_vmem [thread:$0]  %s5, 112, %s68, [#allocation12]
    $region21: #{tpu_custom_call.1} parent=1 // pred_fallthru
      _
    // Predicated region
    $region22: #{tpu_custom_call.1} parent=1 // pred_check
      _
    $region23: #{tpu_custom_call.1} parent=1 // pred_check_branch
      %72 = sbr.rel (0) target = $region25
    $region24: #{tpu_custom_call.1} parent=1 // pred_region
      %s74 = ssub.s32 112, 112
      %75 = vsyncadd [#allocation15], %s74
      %s77 = sshll.u32 [#allocation14], 4
      %s78 = int_to_ptr.vmem [resolvable:$true] %s77
      %80 = dma.hbm_to_vmem [thread:$0]  %s6, 112, %s78, [#allocation15]
    $region25: #{tpu_custom_call.1} parent=1 // pred_fallthru
      _
    // Predicated region
    $region26: #{tpu_custom_call.1} parent=1 // pred_check
      _
    $region27: #{tpu_custom_call.1} parent=1 // pred_check_branch
      %82 = sbr.rel (0) target = $region29
    $region28: #{tpu_custom_call.1} parent=1 // pred_region
      %s84 = ssub.s32 16, 16
      %85 = vsyncadd [#allocation15], %s84
      %s87 = sshll.u32 [#allocation16], 4
      %s88 = int_to_ptr.vmem [resolvable:$true] %s87
      %90 = dma.hbm_to_vmem [thread:$0]  %s8, 16, %s88, [#allocation15]
    $region29: #{tpu_custom_call.1} parent=1 // pred_fallthru
      _
    // Predicated region
    $region30: #{tpu_custom_call.1} parent=1 // pred_check
      _
    $region31: #{tpu_custom_call.1} parent=1 // pred_check_branch
      %92 = sbr.rel (0) target = $region33
    $region32: #{tpu_custom_call.1} parent=1 // pred_region
      %93 = dma.done [#allocation6], 448
    $region33: #{tpu_custom_call.1} parent=1 // pred_fallthru
      _
    // Predicated region
    $region34: #{tpu_custom_call.1} parent=1 // pred_check
      _
    $region35: #{tpu_custom_call.1} parent=1 // pred_check_branch
      %95 = sbr.rel (0) target = $region37
    $region36: #{tpu_custom_call.1} parent=1 // pred_region
      %96 = dma.done [#allocation9], 50176
    $region37: #{tpu_custom_call.1} parent=1 // pred_fallthru
      _
    // Predicated region
    $region38: #{tpu_custom_call.1} parent=1 // pred_check
      _
    $region39: #{tpu_custom_call.1} parent=1 // pred_check_branch
      %98 = sbr.rel (0) target = $region41
    $region40: #{tpu_custom_call.1} parent=1 // pred_region
      %99 = dma.done [#allocation9], 112
    $region41: #{tpu_custom_call.1} parent=1 // pred_fallthru
      _
    // Predicated region
    $region42: #{tpu_custom_call.1} parent=1 // pred_check
      _
    $region43: #{tpu_custom_call.1} parent=1 // pred_check_branch
      %101 = sbr.rel (0) target = $region45
    $region44: #{tpu_custom_call.1} parent=1 // pred_region
      %102 = dma.done [#allocation12], 112
    $region45: #{tpu_custom_call.1} parent=1 // pred_fallthru
      _
    // Predicated region
    $region46: #{tpu_custom_call.1} parent=1 // pred_check
      _
    $region47: #{tpu_custom_call.1} parent=1 // pred_check_branch
      %104 = sbr.rel (0) target = $region49
    $region48: #{tpu_custom_call.1} parent=1 // pred_region
      %105 = dma.done [#allocation12], 112
    $region49: #{tpu_custom_call.1} parent=1 // pred_fallthru
      _
    // Predicated region
    $region50: #{tpu_custom_call.1} parent=1 // pred_check
      _
    $region51: #{tpu_custom_call.1} parent=1 // pred_check_branch
      %107 = sbr.rel (0) target = $region53
    $region52: #{tpu_custom_call.1} parent=1 // pred_region
      %108 = dma.done [#allocation15], 112
    $region53: #{tpu_custom_call.1} parent=1 // pred_fallthru
      _
    // Predicated region
    $region54: #{tpu_custom_call.1} parent=1 // pred_check
      _
    $region55: #{tpu_custom_call.1} parent=1 // pred_check_branch
      %110 = sbr.rel (0) target = $region57
    $region56: #{tpu_custom_call.1} parent=1 // pred_region
      %111 = dma.done [#allocation15], 16
    $region57: #{tpu_custom_call.1} parent=1 // pred_fallthru
      _
    // Predicated region
    $region58: #{tpu_custom_call.1} parent=1 // pred_check
      _
    $region59: #{tpu_custom_call.1} parent=1 // pred_check_branch
      %114 = sbr.rel target = $region61
    $region60: #{tpu_custom_call.1} parent=1 // pred_region
      %115 = sst [smem:[#allocation20]] [#allocation19]
      %116 = sst [smem:[#allocation21]] [#allocation18]
    $region61: #{tpu_custom_call.1} parent=1 // pred_fallthru
      _
    %118 = shalt.err (0)
    %s120 = sshll.u32 [#allocation2], 4
    %s121 = int_to_ptr.vmem [resolvable:$true] %s120
    %123 = dma.hbm_to_vmem [thread:$0]  %s4, 50176, %s121, [#allocation4]
    %s124 = scalar_lea.sflag [#allocation4], 1
    // Predicated region
    $region62: #{tpu_custom_call.1} parent=1 // pred_check
      _
    $region63: #{tpu_custom_call.1} parent=1 // pred_check_branch
      %126 = sbr.rel target = $region65
    $region64: #{tpu_custom_call.1} parent=1 // pred_region
      %127 = sst [smem:[#allocation20]] [#allocation23]
      %128 = sst [smem:[#allocation21]] [#allocation22]
    $region65: #{tpu_custom_call.1} parent=1 // pred_fallthru
      _
    %130 = shalt.err (0)
    %s132 = sshll.u32 [#allocation3], 4
    %s133 = int_to_ptr.vmem [resolvable:$true] %s132
    %135 = dma.hbm_to_vmem [thread:$0]  %s7, 7168, %s133, %s124
    %v136 = vld [vmem:[#allocation5] sm:$0xff]
    %v137 = vld [vmem:[#allocation5 + $0x8] sm:$0xff]
    %v138 = vld [vmem:[#allocation5 + $0x10] sm:$0xff]
    %v139 = vld [vmem:[#allocation5 + $0x18] sm:$0xf]
    %v140 = vld [vmem:[#allocation8] sm:$0xff]
    %v141 = vld [vmem:[#allocation8 + $0x8] sm:$0xff]
    %v142 = vld [vmem:[#allocation8 + $0x10] sm:$0xff]
    %v143 = vld [vmem:[#allocation8 + $0x18] sm:$0xf]
    %v144 = vld [vmem:[#allocation8 + $0x1c] sm:$0xff]
    %v145 = vld [vmem:[#allocation8 + $0x24] sm:$0xff]
    %v146 = vld [vmem:[#allocation8 + $0x2c] sm:$0xff]
    %v147 = vld [vmem:[#allocation8 + $0x34] sm:$0xf]
    %v148 = vld [vmem:[#allocation8 + $0x38] sm:$0xff]
    %v149 = vld [vmem:[#allocation8 + $0x40] sm:$0xff]
    %v150 = vld [vmem:[#allocation8 + $0x48] sm:$0xff]
    %v151 = vld [vmem:[#allocation8 + $0x50] sm:$0xf]
    %v152 = vld [vmem:[#allocation8 + $0x54] sm:$0xff]
    %v153 = vld [vmem:[#allocation8 + $0x5c] sm:$0xff]
    %v154 = vld [vmem:[#allocation8 + $0x64] sm:$0xff]
    %v155 = vld [vmem:[#allocation8 + $0x6c] sm:$0xf]
    %v156 = vld [vmem:[#allocation8 + $0x70] sm:$0xff]
    %v157 = vld [vmem:[#allocation8 + $0x78] sm:$0xff]
    %v158 = vld [vmem:[#allocation8 + $0x80] sm:$0xff]
    %v159 = vld [vmem:[#allocation8 + $0x88] sm:$0xf]
    %v160 = vld [vmem:[#allocation8 + $0x8c] sm:$0xff]
    %v161 = vld [vmem:[#allocation8 + $0x94] sm:$0xff]
    %v162 = vld [vmem:[#allocation8 + $0x9c] sm:$0xff]
    %v163 = vld [vmem:[#allocation8 + $0xa4] sm:$0xf]
    %v164 = vld [vmem:[#allocation8 + $0xa8] sm:$0xff]
    %v165 = vld [vmem:[#allocation8 + $0xb0] sm:$0xff]
    %v166 = vld [vmem:[#allocation8 + $0xb8] sm:$0xff]
    %v167 = vld [vmem:[#allocation8 + $0xc0] sm:$0xf]
    %v168 = vld [vmem:[#allocation8 + $0xc4] sm:$0xff]
    %v169 = vld [vmem:[#allocation8 + $0xcc] sm:$0xff]
    %v170 = vld [vmem:[#allocation8 + $0xd4] sm:$0xff]
    %v171 = vld [vmem:[#allocation8 + $0xdc] sm:$0xf]
    %v172 = vld [vmem:[#allocation8 + $0xe0] sm:$0xff]
    %v173 = vld [vmem:[#allocation8 + $0xe8] sm:$0xff]
    %v174 = vld [vmem:[#allocation8 + $0xf0] sm:$0xff]
    %v175 = vld [vmem:[#allocation8 + $0xf8] sm:$0xf]
    %v176 = vld [vmem:[#allocation8 + $0xfc] sm:$0xff]
    %v177 = vld [vmem:[#allocation8 + $0x104] sm:$0xff]
    %v178 = vld [vmem:[#allocation8 + $0x10c] sm:$0xff]
    %v179 = vld [vmem:[#allocation8 + $0x114] sm:$0xf]
    %v180 = vld [vmem:[#allocation8 + $0x118] sm:$0xff]
    %v181 = vld [vmem:[#allocation8 + $0x120] sm:$0xff]
    %v182 = vld [vmem:[#allocation8 + $0x128] sm:$0xff]
    %v183 = vld [vmem:[#allocation8 + $0x130] sm:$0xf]
    %v184 = vld [vmem:[#allocation8 + $0x134] sm:$0xff]
    %v185 = vld [vmem:[#allocation8 + $0x13c] sm:$0xff]
    %v186 = vld [vmem:[#allocation8 + $0x144] sm:$0xff]
    %v187 = vld [vmem:[#allocation8 + $0x14c] sm:$0xf]
    %v188 = vld [vmem:[#allocation8 + $0x150] sm:$0xff]
    %v189 = vld [vmem:[#allocation8 + $0x158] sm:$0xff]
    %v190 = vld [vmem:[#allocation8 + $0x160] sm:$0xff]
    %v191 = vld [vmem:[#allocation8 + $0x168] sm:$0xf]
    %v192 = vld [vmem:[#allocation8 + $0x16c] sm:$0xff]
    %v193 = vld [vmem:[#allocation8 + $0x174] sm:$0xff]
    %v194 = vld [vmem:[#allocation8 + $0x17c] sm:$0xff]
    %v195 = vld [vmem:[#allocation8 + $0x184] sm:$0xf]
    %v196 = vld [vmem:[#allocation8 + $0x188] sm:$0xff]
    %v197 = vld [vmem:[#allocation8 + $0x190] sm:$0xff]
    %v198 = vld [vmem:[#allocation8 + $0x198] sm:$0xff]
    %v199 = vld [vmem:[#allocation8 + $0x1a0] sm:$0xf]
    %v200 = vld [vmem:[#allocation8 + $0x1a4] sm:$0xff]
    %v201 = vld [vmem:[#allocation8 + $0x1ac] sm:$0xff]
    %v202 = vld [vmem:[#allocation8 + $0x1b4] sm:$0xff]
    %v203 = vld [vmem:[#allocation8 + $0x1bc] sm:$0xf]
    %v204 = vld [vmem:[#allocation8 + $0x1c0] sm:$0xff]
    %v205 = vld [vmem:[#allocation8 + $0x1c8] sm:$0xff]
    %v206 = vld [vmem:[#allocation8 + $0x1d0] sm:$0xff]
    %v207 = vld [vmem:[#allocation8 + $0x1d8] sm:$0xf]
    %v208 = vld [vmem:[#allocation8 + $0x1dc] sm:$0xff]
    %v209 = vld [vmem:[#allocation8 + $0x1e4] sm:$0xff]
    %v210 = vld [vmem:[#allocation8 + $0x1ec] sm:$0xff]
    %v211 = vld [vmem:[#allocation8 + $0x1f4] sm:$0xf]
    %v212 = vld [vmem:[#allocation8 + $0x1f8] sm:$0xff]
    %v213 = vld [vmem:[#allocation8 + $0x200] sm:$0xff]
    %v214 = vld [vmem:[#allocation8 + $0x208] sm:$0xff]
    %v215 = vld [vmem:[#allocation8 + $0x210] sm:$0xf]
    %v216 = vld [vmem:[#allocation8 + $0x214] sm:$0xff]
    %v217 = vld [vmem:[#allocation8 + $0x21c] sm:$0xff]
    %v218 = vld [vmem:[#allocation8 + $0x224] sm:$0xff]
    %v219 = vld [vmem:[#allocation8 + $0x22c] sm:$0xf]
    %v220 = vld [vmem:[#allocation8 + $0x230] sm:$0xff]
    %v221 = vld [vmem:[#allocation8 + $0x238] sm:$0xff]
    %v222 = vld [vmem:[#allocation8 + $0x240] sm:$0xff]
    %v223 = vld [vmem:[#allocation8 + $0x248] sm:$0xf]
    %v224 = vld [vmem:[#allocation8 + $0x24c] sm:$0xff]
    %v225 = vld [vmem:[#allocation8 + $0x254] sm:$0xff]
    %v226 = vld [vmem:[#allocation8 + $0x25c] sm:$0xff]
    %v227 = vld [vmem:[#allocation8 + $0x264] sm:$0xf]
    %v228 = vld [vmem:[#allocation8 + $0x268] sm:$0xff]
    %v229 = vld [vmem:[#allocation8 + $0x270] sm:$0xff]
    %v230 = vld [vmem:[#allocation8 + $0x278] sm:$0xff]
    %v231 = vld [vmem:[#allocation8 + $0x280] sm:$0xf]
    %v232 = vld [vmem:[#allocation8 + $0x284] sm:$0xff]
    %v233 = vld [vmem:[#allocation8 + $0x28c] sm:$0xff]
    %v234 = vld [vmem:[#allocation8 + $0x294] sm:$0xff]
    %v235 = vld [vmem:[#allocation8 + $0x29c] sm:$0xf]
    %v236 = vld [vmem:[#allocation8 + $0x2a0] sm:$0xff]
    %v237 = vld [vmem:[#allocation8 + $0x2a8] sm:$0xff]
    %v238 = vld [vmem:[#allocation8 + $0x2b0] sm:$0xff]
    %v239 = vld [vmem:[#allocation8 + $0x2b8] sm:$0xf]
    %v240 = vld [vmem:[#allocation8 + $0x2bc] sm:$0xff]
    %v241 = vld [vmem:[#allocation8 + $0x2c4] sm:$0xff]
    %v242 = vld [vmem:[#allocation8 + $0x2cc] sm:$0xff]
    %v243 = vld [vmem:[#allocation8 + $0x2d4] sm:$0xf]
    %v244 = vld [vmem:[#allocation8 + $0x2d8] sm:$0xff]
    %v245 = vld [vmem:[#allocation8 + $0x2e0] sm:$0xff]
    %v246 = vld [vmem:[#allocation8 + $0x2e8] sm:$0xff]
    %v247 = vld [vmem:[#allocation8 + $0x2f0] sm:$0xf]
    %v248 = vld [vmem:[#allocation8 + $0x2f4] sm:$0xff]
    %v249 = vld [vmem:[#allocation8 + $0x2fc] sm:$0xff]
    %v250 = vld [vmem:[#allocation8 + $0x304] sm:$0xff]
    %v251 = vld [vmem:[#allocation8 + $0x30c] sm:$0xf]
    %v252 = vld [vmem:[#allocation8 + $0x310] sm:$0xff]
    %v253 = vld [vmem:[#allocation8 + $0x318] sm:$0xff]
    %v254 = vld [vmem:[#allocation8 + $0x320] sm:$0xff]
    %v255 = vld [vmem:[#allocation8 + $0x328] sm:$0xf]
    %v256 = vld [vmem:[#allocation8 + $0x32c] sm:$0xff]
    %v257 = vld [vmem:[#allocation8 + $0x334] sm:$0xff]
    %v258 = vld [vmem:[#allocation8 + $0x33c] sm:$0xff]
    %v259 = vld [vmem:[#allocation8 + $0x344] sm:$0xf]
    %v260 = vld [vmem:[#allocation8 + $0x348] sm:$0xff]
    %v261 = vld [vmem:[#allocation8 + $0x350] sm:$0xff]
    %v262 = vld [vmem:[#allocation8 + $0x358] sm:$0xff]
    %v263 = vld [vmem:[#allocation8 + $0x360] sm:$0xf]
    %v264 = vld [vmem:[#allocation8 + $0x364] sm:$0xff]
    %v265 = vld [vmem:[#allocation8 + $0x36c] sm:$0xff]
    %v266 = vld [vmem:[#allocation8 + $0x374] sm:$0xff]
    %v267 = vld [vmem:[#allocation8 + $0x37c] sm:$0xf]
    %v268 = vld [vmem:[#allocation8 + $0x380] sm:$0xff]
    %v269 = vld [vmem:[#allocation8 + $0x388] sm:$0xff]
    %v270 = vld [vmem:[#allocation8 + $0x390] sm:$0xff]
    %v271 = vld [vmem:[#allocation8 + $0x398] sm:$0xf]
    %v272 = vld [vmem:[#allocation8 + $0x39c] sm:$0xff]
    %v273 = vld [vmem:[#allocation8 + $0x3a4] sm:$0xff]
    %v274 = vld [vmem:[#allocation8 + $0x3ac] sm:$0xff]
    %v275 = vld [vmem:[#allocation8 + $0x3b4] sm:$0xf]
    %v276 = vld [vmem:[#allocation8 + $0x3b8] sm:$0xff]
    %v277 = vld [vmem:[#allocation8 + $0x3c0] sm:$0xff]
    %v278 = vld [vmem:[#allocation8 + $0x3c8] sm:$0xff]
    %v279 = vld [vmem:[#allocation8 + $0x3d0] sm:$0xf]
    %v280 = vld [vmem:[#allocation8 + $0x3d4] sm:$0xff]
    %v281 = vld [vmem:[#allocation8 + $0x3dc] sm:$0xff]
    %v282 = vld [vmem:[#allocation8 + $0x3e4] sm:$0xff]
    %v283 = vld [vmem:[#allocation8 + $0x3ec] sm:$0xf]
    %v284 = vld [vmem:[#allocation8 + $0x3f0] sm:$0xff]
    %v285 = vld [vmem:[#allocation8 + $0x3f8] sm:$0xff]
    %v286 = vld [vmem:[#allocation8 + $0x400] sm:$0xff]
    %v287 = vld [vmem:[#allocation8 + $0x408] sm:$0xf]
    %v288 = vld [vmem:[#allocation8 + $0x40c] sm:$0xff]
    %v289 = vld [vmem:[#allocation8 + $0x414] sm:$0xff]
    %v290 = vld [vmem:[#allocation8 + $0x41c] sm:$0xff]
    %v291 = vld [vmem:[#allocation8 + $0x424] sm:$0xf]
    %v292 = vld [vmem:[#allocation8 + $0x428] sm:$0xff]
    %v293 = vld [vmem:[#allocation8 + $0x430] sm:$0xff]
    %v294 = vld [vmem:[#allocation8 + $0x438] sm:$0xff]
    %v295 = vld [vmem:[#allocation8 + $0x440] sm:$0xf]
    %v296 = vld [vmem:[#allocation8 + $0x444] sm:$0xff]
    %v297 = vld [vmem:[#allocation8 + $0x44c] sm:$0xff]
    %v298 = vld [vmem:[#allocation8 + $0x454] sm:$0xff]
    %v299 = vld [vmem:[#allocation8 + $0x45c] sm:$0xf]
    %v300 = vld [vmem:[#allocation8 + $0x460] sm:$0xff]
    %v301 = vld [vmem:[#allocation8 + $0x468] sm:$0xff]
    %v302 = vld [vmem:[#allocation8 + $0x470] sm:$0xff]
    %v303 = vld [vmem:[#allocation8 + $0x478] sm:$0xf]
    %v304 = vld [vmem:[#allocation8 + $0x47c] sm:$0xff]
    %v305 = vld [vmem:[#allocation8 + $0x484] sm:$0xff]
    %v306 = vld [vmem:[#allocation8 + $0x48c] sm:$0xff]
    %v307 = vld [vmem:[#allocation8 + $0x494] sm:$0xf]
    %v308 = vld [vmem:[#allocation8 + $0x498] sm:$0xff]
    %v309 = vld [vmem:[#allocation8 + $0x4a0] sm:$0xff]
    %v310 = vld [vmem:[#allocation8 + $0x4a8] sm:$0xff]
    %v311 = vld [vmem:[#allocation8 + $0x4b0] sm:$0xf]
    %v312 = vld [vmem:[#allocation8 + $0x4b4] sm:$0xff]
    %v313 = vld [vmem:[#allocation8 + $0x4bc] sm:$0xff]
    %v314 = vld [vmem:[#allocation8 + $0x4c4] sm:$0xff]
    %v315 = vld [vmem:[#allocation8 + $0x4cc] sm:$0xf]
    %v316 = vld [vmem:[#allocation8 + $0x4d0] sm:$0xff]
    %v317 = vld [vmem:[#allocation8 + $0x4d8] sm:$0xff]
    %v318 = vld [vmem:[#allocation8 + $0x4e0] sm:$0xff]
    %v319 = vld [vmem:[#allocation8 + $0x4e8] sm:$0xf]
    %v320 = vld [vmem:[#allocation8 + $0x4ec] sm:$0xff]
    %v321 = vld [vmem:[#allocation8 + $0x4f4] sm:$0xff]
    %v322 = vld [vmem:[#allocation8 + $0x4fc] sm:$0xff]
    %v323 = vld [vmem:[#allocation8 + $0x504] sm:$0xf]
    %v324 = vld [vmem:[#allocation8 + $0x508] sm:$0xff]
    %v325 = vld [vmem:[#allocation8 + $0x510] sm:$0xff]
    %v326 = vld [vmem:[#allocation8 + $0x518] sm:$0xff]
    %v327 = vld [vmem:[#allocation8 + $0x520] sm:$0xf]
    %v328 = vld [vmem:[#allocation8 + $0x524] sm:$0xff]
    %v329 = vld [vmem:[#allocation8 + $0x52c] sm:$0xff]
    %v330 = vld [vmem:[#allocation8 + $0x534] sm:$0xff]
    %v331 = vld [vmem:[#allocation8 + $0x53c] sm:$0xf]
    %v332 = vld [vmem:[#allocation8 + $0x540] sm:$0xff]
    %v333 = vld [vmem:[#allocation8 + $0x548] sm:$0xff]
    %v334 = vld [vmem:[#allocation8 + $0x550] sm:$0xff]
    %v335 = vld [vmem:[#allocation8 + $0x558] sm:$0xf]
    %v336 = vld [vmem:[#allocation8 + $0x55c] sm:$0xff]
    %v337 = vld [vmem:[#allocation8 + $0x564] sm:$0xff]
    %v338 = vld [vmem:[#allocation8 + $0x56c] sm:$0xff]
    %v339 = vld [vmem:[#allocation8 + $0x574] sm:$0xf]
    %v340 = vld [vmem:[#allocation8 + $0x578] sm:$0xff]
    %v341 = vld [vmem:[#allocation8 + $0x580] sm:$0xff]
    %v342 = vld [vmem:[#allocation8 + $0x588] sm:$0xff]
    %v343 = vld [vmem:[#allocation8 + $0x590] sm:$0xf]
    %v344 = vld [vmem:[#allocation8 + $0x594] sm:$0xff]
    %v345 = vld [vmem:[#allocation8 + $0x59c] sm:$0xff]
    %v346 = vld [vmem:[#allocation8 + $0x5a4] sm:$0xff]
    %v347 = vld [vmem:[#allocation8 + $0x5ac] sm:$0xf]
    %v348 = vld [vmem:[#allocation8 + $0x5b0] sm:$0xff]
    %v349 = vld [vmem:[#allocation8 + $0x5b8] sm:$0xff]
    %v350 = vld [vmem:[#allocation8 + $0x5c0] sm:$0xff]
    %v351 = vld [vmem:[#allocation8 + $0x5c8] sm:$0xf]
    %v352 = vld [vmem:[#allocation8 + $0x5cc] sm:$0xff]
    %v353 = vld [vmem:[#allocation8 + $0x5d4] sm:$0xff]
    %v354 = vld [vmem:[#allocation8 + $0x5dc] sm:$0xff]
    %v355 = vld [vmem:[#allocation8 + $0x5e4] sm:$0xf]
    %v356 = vld [vmem:[#allocation8 + $0x5e8] sm:$0xff]
    %v357 = vld [vmem:[#allocation8 + $0x5f0] sm:$0xff]
    %v358 = vld [vmem:[#allocation8 + $0x5f8] sm:$0xff]
    %v359 = vld [vmem:[#allocation8 + $0x600] sm:$0xf]
    %v360 = vld [vmem:[#allocation8 + $0x604] sm:$0xff]
    %v361 = vld [vmem:[#allocation8 + $0x60c] sm:$0xff]
    %v362 = vld [vmem:[#allocation8 + $0x614] sm:$0xff]
    %v363 = vld [vmem:[#allocation8 + $0x61c] sm:$0xf]
    %v364 = vld [vmem:[#allocation8 + $0x620] sm:$0xff]
    %v365 = vld [vmem:[#allocation8 + $0x628] sm:$0xff]
    %v366 = vld [vmem:[#allocation8 + $0x630] sm:$0xff]
    %v367 = vld [vmem:[#allocation8 + $0x638] sm:$0xf]
    %v368 = vld [vmem:[#allocation8 + $0x63c] sm:$0xff]
    %v369 = vld [vmem:[#allocation8 + $0x644] sm:$0xff]
    %v370 = vld [vmem:[#allocation8 + $0x64c] sm:$0xff]
    %v371 = vld [vmem:[#allocation8 + $0x654] sm:$0xf]
    %v372 = vld [vmem:[#allocation8 + $0x658] sm:$0xff]
    %v373 = vld [vmem:[#allocation8 + $0x660] sm:$0xff]
    %v374 = vld [vmem:[#allocation8 + $0x668] sm:$0xff]
    %v375 = vld [vmem:[#allocation8 + $0x670] sm:$0xf]
    %v376 = vld [vmem:[#allocation8 + $0x674] sm:$0xff]
    %v377 = vld [vmem:[#allocation8 + $0x67c] sm:$0xff]
    %v378 = vld [vmem:[#allocation8 + $0x684] sm:$0xff]
    %v379 = vld [vmem:[#allocation8 + $0x68c] sm:$0xf]
    %v380 = vld [vmem:[#allocation8 + $0x690] sm:$0xff]
    %v381 = vld [vmem:[#allocation8 + $0x698] sm:$0xff]
    %v382 = vld [vmem:[#allocation8 + $0x6a0] sm:$0xff]
    %v383 = vld [vmem:[#allocation8 + $0x6a8] sm:$0xf]
    %v384 = vld [vmem:[#allocation8 + $0x6ac] sm:$0xff]
    %v385 = vld [vmem:[#allocation8 + $0x6b4] sm:$0xff]
    %v386 = vld [vmem:[#allocation8 + $0x6bc] sm:$0xff]
    %v387 = vld [vmem:[#allocation8 + $0x6c4] sm:$0xf]
    %v388 = vld [vmem:[#allocation8 + $0x6c8] sm:$0xff]
    %v389 = vld [vmem:[#allocation8 + $0x6d0] sm:$0xff]
    %v390 = vld [vmem:[#allocation8 + $0x6d8] sm:$0xff]
    %v391 = vld [vmem:[#allocation8 + $0x6e0] sm:$0xf]
    %v392 = vld [vmem:[#allocation8 + $0x6e4] sm:$0xff]
    %v393 = vld [vmem:[#allocation8 + $0x6ec] sm:$0xff]
    %v394 = vld [vmem:[#allocation8 + $0x6f4] sm:$0xff]
    %v395 = vld [vmem:[#allocation8 + $0x6fc] sm:$0xf]
    %v396 = vld [vmem:[#allocation8 + $0x700] sm:$0xff]
    %v397 = vld [vmem:[#allocation8 + $0x708] sm:$0xff]
    %v398 = vld [vmem:[#allocation8 + $0x710] sm:$0xff]
    %v399 = vld [vmem:[#allocation8 + $0x718] sm:$0xf]
    %v400 = vld [vmem:[#allocation8 + $0x71c] sm:$0xff]
    %v401 = vld [vmem:[#allocation8 + $0x724] sm:$0xff]
    %v402 = vld [vmem:[#allocation8 + $0x72c] sm:$0xff]
    %v403 = vld [vmem:[#allocation8 + $0x734] sm:$0xf]
    %v404 = vld [vmem:[#allocation8 + $0x738] sm:$0xff]
    %v405 = vld [vmem:[#allocation8 + $0x740] sm:$0xff]
    %v406 = vld [vmem:[#allocation8 + $0x748] sm:$0xff]
    %v407 = vld [vmem:[#allocation8 + $0x750] sm:$0xf]
    %v408 = vld [vmem:[#allocation8 + $0x754] sm:$0xff]
    %v409 = vld [vmem:[#allocation8 + $0x75c] sm:$0xff]
    %v410 = vld [vmem:[#allocation8 + $0x764] sm:$0xff]
    %v411 = vld [vmem:[#allocation8 + $0x76c] sm:$0xf]
    %v412 = vld [vmem:[#allocation8 + $0x770] sm:$0xff]
    %v413 = vld [vmem:[#allocation8 + $0x778] sm:$0xff]
    %v414 = vld [vmem:[#allocation8 + $0x780] sm:$0xff]
    %v415 = vld [vmem:[#allocation8 + $0x788] sm:$0xf]
    %v416 = vld [vmem:[#allocation8 + $0x78c] sm:$0xff]
    %v417 = vld [vmem:[#allocation8 + $0x794] sm:$0xff]
    %v418 = vld [vmem:[#allocation8 + $0x79c] sm:$0xff]
    %v419 = vld [vmem:[#allocation8 + $0x7a4] sm:$0xf]
    %v420 = vld [vmem:[#allocation8 + $0x7a8] sm:$0xff]
    %v421 = vld [vmem:[#allocation8 + $0x7b0] sm:$0xff]
    %v422 = vld [vmem:[#allocation8 + $0x7b8] sm:$0xff]
    %v423 = vld [vmem:[#allocation8 + $0x7c0] sm:$0xf]
    %v424 = vld [vmem:[#allocation8 + $0x7c4] sm:$0xff]
    %v425 = vld [vmem:[#allocation8 + $0x7cc] sm:$0xff]
    %v426 = vld [vmem:[#allocation8 + $0x7d4] sm:$0xff]
    %v427 = vld [vmem:[#allocation8 + $0x7dc] sm:$0xf]
    %v428 = vld [vmem:[#allocation8 + $0x7e0] sm:$0xff]
    %v429 = vld [vmem:[#allocation8 + $0x7e8] sm:$0xff]
    %v430 = vld [vmem:[#allocation8 + $0x7f0] sm:$0xff]
    %v431 = vld [vmem:[#allocation8 + $0x7f8] sm:$0xf]
    %v432 = vld [vmem:[#allocation8 + $0x7fc] sm:$0xff]
    %v433 = vld [vmem:[#allocation8 + $0x804] sm:$0xff]
    %v434 = vld [vmem:[#allocation8 + $0x80c] sm:$0xff]
    %v435 = vld [vmem:[#allocation8 + $0x814] sm:$0xf]
    %v436 = vld [vmem:[#allocation8 + $0x818] sm:$0xff]
    %v437 = vld [vmem:[#allocation8 + $0x820] sm:$0xff]
    %v438 = vld [vmem:[#allocation8 + $0x828] sm:$0xff]
    %v439 = vld [vmem:[#allocation8 + $0x830] sm:$0xf]
    %v440 = vld [vmem:[#allocation8 + $0x834] sm:$0xff]
    %v441 = vld [vmem:[#allocation8 + $0x83c] sm:$0xff]
    %v442 = vld [vmem:[#allocation8 + $0x844] sm:$0xff]
    %v443 = vld [vmem:[#allocation8 + $0x84c] sm:$0xf]
    %v444 = vld [vmem:[#allocation8 + $0x850] sm:$0xff]
    %v445 = vld [vmem:[#allocation8 + $0x858] sm:$0xff]
    %v446 = vld [vmem:[#allocation8 + $0x860] sm:$0xff]
    %v447 = vld [vmem:[#allocation8 + $0x868] sm:$0xf]
    %v448 = vld [vmem:[#allocation8 + $0x86c] sm:$0xff]
    %v449 = vld [vmem:[#allocation8 + $0x874] sm:$0xff]
    %v450 = vld [vmem:[#allocation8 + $0x87c] sm:$0xff]
    %v451 = vld [vmem:[#allocation8 + $0x884] sm:$0xf]
    %v452 = vld [vmem:[#allocation8 + $0x888] sm:$0xff]
    %v453 = vld [vmem:[#allocation8 + $0x890] sm:$0xff]
    %v454 = vld [vmem:[#allocation8 + $0x898] sm:$0xff]
    %v455 = vld [vmem:[#allocation8 + $0x8a0] sm:$0xf]
    %v456 = vld [vmem:[#allocation8 + $0x8a4] sm:$0xff]
    %v457 = vld [vmem:[#allocation8 + $0x8ac] sm:$0xff]
    %v458 = vld [vmem:[#allocation8 + $0x8b4] sm:$0xff]
    %v459 = vld [vmem:[#allocation8 + $0x8bc] sm:$0xf]
    %v460 = vld [vmem:[#allocation8 + $0x8c0] sm:$0xff]
    %v461 = vld [vmem:[#allocation8 + $0x8c8] sm:$0xff]
    %v462 = vld [vmem:[#allocation8 + $0x8d0] sm:$0xff]
    %v463 = vld [vmem:[#allocation8 + $0x8d8] sm:$0xf]
    %v464 = vld [vmem:[#allocation8 + $0x8dc] sm:$0xff]
    %v465 = vld [vmem:[#allocation8 + $0x8e4] sm:$0xff]
    %v466 = vld [vmem:[#allocation8 + $0x8ec] sm:$0xff]
    %v467 = vld [vmem:[#allocation8 + $0x8f4] sm:$0xf]
    %v468 = vld [vmem:[#allocation8 + $0x8f8] sm:$0xff]
    %v469 = vld [vmem:[#allocation8 + $0x900] sm:$0xff]
    %v470 = vld [vmem:[#allocation8 + $0x908] sm:$0xff]
    %v471 = vld [vmem:[#allocation8 + $0x910] sm:$0xf]
    %v472 = vld [vmem:[#allocation8 + $0x914] sm:$0xff]
    %v473 = vld [vmem:[#allocation8 + $0x91c] sm:$0xff]
    %v474 = vld [vmem:[#allocation8 + $0x924] sm:$0xff]
    %v475 = vld [vmem:[#allocation8 + $0x92c] sm:$0xf]
    %v476 = vld [vmem:[#allocation8 + $0x930] sm:$0xff]
    %v477 = vld [vmem:[#allocation8 + $0x938] sm:$0xff]
    %v478 = vld [vmem:[#allocation8 + $0x940] sm:$0xff]
    %v479 = vld [vmem:[#allocation8 + $0x948] sm:$0xf]
    %v480 = vld [vmem:[#allocation8 + $0x94c] sm:$0xff]
    %v481 = vld [vmem:[#allocation8 + $0x954] sm:$0xff]
    %v482 = vld [vmem:[#allocation8 + $0x95c] sm:$0xff]
    %v483 = vld [vmem:[#allocation8 + $0x964] sm:$0xf]
    %v484 = vld [vmem:[#allocation8 + $0x968] sm:$0xff]
    %v485 = vld [vmem:[#allocation8 + $0x970] sm:$0xff]
    %v486 = vld [vmem:[#allocation8 + $0x978] sm:$0xff]
    %v487 = vld [vmem:[#allocation8 + $0x980] sm:$0xf]
    %v488 = vld [vmem:[#allocation8 + $0x984] sm:$0xff]
    %v489 = vld [vmem:[#allocation8 + $0x98c] sm:$0xff]
    %v490 = vld [vmem:[#allocation8 + $0x994] sm:$0xff]
    %v491 = vld [vmem:[#allocation8 + $0x99c] sm:$0xf]
    %v492 = vld [vmem:[#allocation8 + $0x9a0] sm:$0xff]
    %v493 = vld [vmem:[#allocation8 + $0x9a8] sm:$0xff]
    %v494 = vld [vmem:[#allocation8 + $0x9b0] sm:$0xff]
    %v495 = vld [vmem:[#allocation8 + $0x9b8] sm:$0xf]
    %v496 = vld [vmem:[#allocation8 + $0x9bc] sm:$0xff]
    %v497 = vld [vmem:[#allocation8 + $0x9c4] sm:$0xff]
    %v498 = vld [vmem:[#allocation8 + $0x9cc] sm:$0xff]
    %v499 = vld [vmem:[#allocation8 + $0x9d4] sm:$0xf]
    %v500 = vld [vmem:[#allocation8 + $0x9d8] sm:$0xff]
    %v501 = vld [vmem:[#allocation8 + $0x9e0] sm:$0xff]
    %v502 = vld [vmem:[#allocation8 + $0x9e8] sm:$0xff]
    %v503 = vld [vmem:[#allocation8 + $0x9f0] sm:$0xf]
    %v504 = vld [vmem:[#allocation8 + $0x9f4] sm:$0xff]
    %v505 = vld [vmem:[#allocation8 + $0x9fc] sm:$0xff]
    %v506 = vld [vmem:[#allocation8 + $0xa04] sm:$0xff]
    %v507 = vld [vmem:[#allocation8 + $0xa0c] sm:$0xf]
    %v508 = vld [vmem:[#allocation8 + $0xa10] sm:$0xff]
    %v509 = vld [vmem:[#allocation8 + $0xa18] sm:$0xff]
    %v510 = vld [vmem:[#allocation8 + $0xa20] sm:$0xff]
    %v511 = vld [vmem:[#allocation8 + $0xa28] sm:$0xf]
    %v512 = vld [vmem:[#allocation8 + $0xa2c] sm:$0xff]
    %v513 = vld [vmem:[#allocation8 + $0xa34] sm:$0xff]
    %v514 = vld [vmem:[#allocation8 + $0xa3c] sm:$0xff]
    %v515 = vld [vmem:[#allocation8 + $0xa44] sm:$0xf]
    %v516 = vld [vmem:[#allocation8 + $0xa48] sm:$0xff]
    %v517 = vld [vmem:[#allocation8 + $0xa50] sm:$0xff]
    %v518 = vld [vmem:[#allocation8 + $0xa58] sm:$0xff]
    %v519 = vld [vmem:[#allocation8 + $0xa60] sm:$0xf]
    %v520 = vld [vmem:[#allocation8 + $0xa64] sm:$0xff]
    %v521 = vld [vmem:[#allocation8 + $0xa6c] sm:$0xff]
    %v522 = vld [vmem:[#allocation8 + $0xa74] sm:$0xff]
    %v523 = vld [vmem:[#allocation8 + $0xa7c] sm:$0xf]
    %v524 = vld [vmem:[#allocation8 + $0xa80] sm:$0xff]
    %v525 = vld [vmem:[#allocation8 + $0xa88] sm:$0xff]
    %v526 = vld [vmem:[#allocation8 + $0xa90] sm:$0xff]
    %v527 = vld [vmem:[#allocation8 + $0xa98] sm:$0xf]
    %v528 = vld [vmem:[#allocation8 + $0xa9c] sm:$0xff]
    %v529 = vld [vmem:[#allocation8 + $0xaa4] sm:$0xff]
    %v530 = vld [vmem:[#allocation8 + $0xaac] sm:$0xff]
    %v531 = vld [vmem:[#allocation8 + $0xab4] sm:$0xf]
    %v532 = vld [vmem:[#allocation8 + $0xab8] sm:$0xff]
    %v533 = vld [vmem:[#allocation8 + $0xac0] sm:$0xff]
    %v534 = vld [vmem:[#allocation8 + $0xac8] sm:$0xff]
    %v535 = vld [vmem:[#allocation8 + $0xad0] sm:$0xf]
    %v536 = vld [vmem:[#allocation8 + $0xad4] sm:$0xff]
    %v537 = vld [vmem:[#allocation8 + $0xadc] sm:$0xff]
    %v538 = vld [vmem:[#allocation8 + $0xae4] sm:$0xff]
    %v539 = vld [vmem:[#allocation8 + $0xaec] sm:$0xf]
    %v540 = vld [vmem:[#allocation8 + $0xaf0] sm:$0xff]
    %v541 = vld [vmem:[#allocation8 + $0xaf8] sm:$0xff]
    %v542 = vld [vmem:[#allocation8 + $0xb00] sm:$0xff]
    %v543 = vld [vmem:[#allocation8 + $0xb08] sm:$0xf]
    %v544 = vld [vmem:[#allocation8 + $0xb0c] sm:$0xff]
    %v545 = vld [vmem:[#allocation8 + $0xb14] sm:$0xff]
    %v546 = vld [vmem:[#allocation8 + $0xb1c] sm:$0xff]
    %v547 = vld [vmem:[#allocation8 + $0xb24] sm:$0xf]
    %v548 = vld [vmem:[#allocation8 + $0xb28] sm:$0xff]
    %v549 = vld [vmem:[#allocation8 + $0xb30] sm:$0xff]
    %v550 = vld [vmem:[#allocation8 + $0xb38] sm:$0xff]
    %v551 = vld [vmem:[#allocation8 + $0xb40] sm:$0xf]
    %v552 = vld [vmem:[#allocation8 + $0xb44] sm:$0xff]
    %v553 = vld [vmem:[#allocation8 + $0xb4c] sm:$0xff]
    %v554 = vld [vmem:[#allocation8 + $0xb54] sm:$0xff]
    %v555 = vld [vmem:[#allocation8 + $0xb5c] sm:$0xf]
    %v556 = vld [vmem:[#allocation8 + $0xb60] sm:$0xff]
    %v557 = vld [vmem:[#allocation8 + $0xb68] sm:$0xff]
    %v558 = vld [vmem:[#allocation8 + $0xb70] sm:$0xff]
    %v559 = vld [vmem:[#allocation8 + $0xb78] sm:$0xf]
    %v560 = vld [vmem:[#allocation8 + $0xb7c] sm:$0xff]
    %v561 = vld [vmem:[#allocation8 + $0xb84] sm:$0xff]
    %v562 = vld [vmem:[#allocation8 + $0xb8c] sm:$0xff]
    %v563 = vld [vmem:[#allocation8 + $0xb94] sm:$0xf]
    %v564 = vld [vmem:[#allocation8 + $0xb98] sm:$0xff]
    %v565 = vld [vmem:[#allocation8 + $0xba0] sm:$0xff]
    %v566 = vld [vmem:[#allocation8 + $0xba8] sm:$0xff]
    %v567 = vld [vmem:[#allocation8 + $0xbb0] sm:$0xf]
    %v568 = vld [vmem:[#allocation8 + $0xbb4] sm:$0xff]
    %v569 = vld [vmem:[#allocation8 + $0xbbc] sm:$0xff]
    %v570 = vld [vmem:[#allocation8 + $0xbc4] sm:$0xff]
    %v571 = vld [vmem:[#allocation8 + $0xbcc] sm:$0xf]
    %v572 = vld [vmem:[#allocation8 + $0xbd0] sm:$0xff]
    %v573 = vld [vmem:[#allocation8 + $0xbd8] sm:$0xff]
    %v574 = vld [vmem:[#allocation8 + $0xbe0] sm:$0xff]
    %v575 = vld [vmem:[#allocation8 + $0xbe8] sm:$0xf]
    %v576 = vld [vmem:[#allocation8 + $0xbec] sm:$0xff]
    %v577 = vld [vmem:[#allocation8 + $0xbf4] sm:$0xff]
    %v578 = vld [vmem:[#allocation8 + $0xbfc] sm:$0xff]
    %v579 = vld [vmem:[#allocation8 + $0xc04] sm:$0xf]
    %v580 = vld [vmem:[#allocation8 + $0xc08] sm:$0xff]
    %v581 = vld [vmem:[#allocation8 + $0xc10] sm:$0xff]
    %v582 = vld [vmem:[#allocation8 + $0xc18] sm:$0xff]
    %v583 = vld [vmem:[#allocation8 + $0xc20] sm:$0xf]
    %v584 = vld [vmem:[#allocation8 + $0xc24] sm:$0xff]
    %v585 = vld [vmem:[#allocation8 + $0xc2c] sm:$0xff]
    %v586 = vld [vmem:[#allocation8 + $0xc34] sm:$0xff]
    %v587 = vld [vmem:[#allocation8 + $0xc3c] sm:$0xf]
    %v592 = vunpack.c.l.b16 %v136
    %v593 = vunpack.c.h.b16 %v136
    %v594 = vunpack.c.l.b16 %v137
    %v595 = vunpack.c.h.b16 %v137
    %v596 = vunpack.c.l.b16 %v138
    %v597 = vunpack.c.h.b16 %v138
    %v598 = vunpack.c.l.b16 %v139
    %v599 = vpack.c.b16 %v592, %v592
    %v600 = vpack.c.b16 %v593, %v593
    %v601 = vpack.c.b16 %v594, %v594
    %v602 = vpack.c.b16 %v595, %v595
    %v603 = vpack.c.b16 %v596, %v596
    %v604 = vpack.c.b16 %v597, %v597
    %v605 = vpack.c.b16 %v598, %v598
    %v1061 = vunpack.c.l.b16 %v140
    %v1062 = vunpack.c.h.b16 %v140
    %v1063 = vunpack.c.l.b16 %v141
    %v1064 = vunpack.c.h.b16 %v141
    %v1065 = vunpack.c.l.b16 %v142
    %v1066 = vunpack.c.h.b16 %v142
    %v1067 = vunpack.c.l.b16 %v143
    %v1068 = vunpack.c.l.b16 %v144
    %v1069 = vunpack.c.h.b16 %v144
    %v1070 = vunpack.c.l.b16 %v145
    %v1071 = vunpack.c.h.b16 %v145
    %v1072 = vunpack.c.l.b16 %v146
    %v1073 = vunpack.c.h.b16 %v146
    %v1074 = vunpack.c.l.b16 %v147
    %v1075 = vunpack.c.l.b16 %v148
    %v1076 = vunpack.c.h.b16 %v148
    %v1077 = vunpack.c.l.b16 %v149
    %v1078 = vunpack.c.h.b16 %v149
    %v1079 = vunpack.c.l.b16 %v150
    %v1080 = vunpack.c.h.b16 %v150
    %v1081 = vunpack.c.l.b16 %v151
    %v1082 = vunpack.c.l.b16 %v152
    %v1083 = vunpack.c.h.b16 %v152
    %v1084 = vunpack.c.l.b16 %v153
    %v1085 = vunpack.c.h.b16 %v153
    %v1086 = vunpack.c.l.b16 %v154
    %v1087 = vunpack.c.h.b16 %v154
    %v1088 = vunpack.c.l.b16 %v155
    %v1089 = vunpack.c.l.b16 %v156
    %v1090 = vunpack.c.h.b16 %v156
    %v1091 = vunpack.c.l.b16 %v157
    %v1092 = vunpack.c.h.b16 %v157
    %v1093 = vunpack.c.l.b16 %v158
    %v1094 = vunpack.c.h.b16 %v158
    %v1095 = vunpack.c.l.b16 %v159
    %v1096 = vunpack.c.l.b16 %v160
    %v1097 = vunpack.c.h.b16 %v160
    %v1098 = vunpack.c.l.b16 %v161
    %v1099 = vunpack.c.h.b16 %v161
    %v1100 = vunpack.c.l.b16 %v162
    %v1101 = vunpack.c.h.b16 %v162
    %v1102 = vunpack.c.l.b16 %v163
    %v1103 = vunpack.c.l.b16 %v164
    %v1104 = vunpack.c.h.b16 %v164
    %v1105 = vunpack.c.l.b16 %v165
    %v1106 = vunpack.c.h.b16 %v165
    %v1107 = vunpack.c.l.b16 %v166
    %v1108 = vunpack.c.h.b16 %v166
    %v1109 = vunpack.c.l.b16 %v167
    %v1110 = vunpack.c.l.b16 %v168
    %v1111 = vunpack.c.h.b16 %v168
    %v1112 = vunpack.c.l.b16 %v169
    %v1113 = vunpack.c.h.b16 %v169
    %v1114 = vunpack.c.l.b16 %v170
    %v1115 = vunpack.c.h.b16 %v170
    %v1116 = vunpack.c.l.b16 %v171
    %v1117 = vunpack.c.l.b16 %v172
    %v1118 = vunpack.c.h.b16 %v172
    %v1119 = vunpack.c.l.b16 %v173
    %v1120 = vunpack.c.h.b16 %v173
    %v1121 = vunpack.c.l.b16 %v174
    %v1122 = vunpack.c.h.b16 %v174
    %v1123 = vunpack.c.l.b16 %v175
    %v1124 = vunpack.c.l.b16 %v176
    %v1125 = vunpack.c.h.b16 %v176
    %v1126 = vunpack.c.l.b16 %v177
    %v1127 = vunpack.c.h.b16 %v177
    %v1128 = vunpack.c.l.b16 %v178
    %v1129 = vunpack.c.h.b16 %v178
    %v1130 = vunpack.c.l.b16 %v179
    %v1131 = vunpack.c.l.b16 %v180
    %v1132 = vunpack.c.h.b16 %v180
    %v1133 = vunpack.c.l.b16 %v181
    %v1134 = vunpack.c.h.b16 %v181
    %v1135 = vunpack.c.l.b16 %v182
    %v1136 = vunpack.c.h.b16 %v182
    %v1137 = vunpack.c.l.b16 %v183
    %v1138 = vunpack.c.l.b16 %v184
    %v1139 = vunpack.c.h.b16 %v184
    %v1140 = vunpack.c.l.b16 %v185
    %v1141 = vunpack.c.h.b16 %v185
    %v1142 = vunpack.c.l.b16 %v186
    %v1143 = vunpack.c.h.b16 %v186
    %v1144 = vunpack.c.l.b16 %v187
    %v1145 = vunpack.c.l.b16 %v188
    %v1146 = vunpack.c.h.b16 %v188
    %v1147 = vunpack.c.l.b16 %v189
    %v1148 = vunpack.c.h.b16 %v189
    %v1149 = vunpack.c.l.b16 %v190
    %v1150 = vunpack.c.h.b16 %v190
    %v1151 = vunpack.c.l.b16 %v191
    %v1152 = vunpack.c.l.b16 %v192
    %v1153 = vunpack.c.h.b16 %v192
    %v1154 = vunpack.c.l.b16 %v193
    %v1155 = vunpack.c.h.b16 %v193
    %v1156 = vunpack.c.l.b16 %v194
    %v1157 = vunpack.c.h.b16 %v194
    %v1158 = vunpack.c.l.b16 %v195
    %v1159 = vunpack.c.l.b16 %v196
    %v1160 = vunpack.c.h.b16 %v196
    %v1161 = vunpack.c.l.b16 %v197
    %v1162 = vunpack.c.h.b16 %v197
    %v1163 = vunpack.c.l.b16 %v198
    %v1164 = vunpack.c.h.b16 %v198
    %v1165 = vunpack.c.l.b16 %v199
    %v1166 = vunpack.c.l.b16 %v200
    %v1167 = vunpack.c.h.b16 %v200
    %v1168 = vunpack.c.l.b16 %v201
    %v1169 = vunpack.c.h.b16 %v201
    %v1170 = vunpack.c.l.b16 %v202
    %v1171 = vunpack.c.h.b16 %v202
    %v1172 = vunpack.c.l.b16 %v203
    %v1173 = vunpack.c.l.b16 %v204
    %v1174 = vunpack.c.h.b16 %v204
    %v1175 = vunpack.c.l.b16 %v205
    %v1176 = vunpack.c.h.b16 %v205
    %v1177 = vunpack.c.l.b16 %v206
    %v1178 = vunpack.c.h.b16 %v206
    %v1179 = vunpack.c.l.b16 %v207
    %v1180 = vunpack.c.l.b16 %v208
    %v1181 = vunpack.c.h.b16 %v208
    %v1182 = vunpack.c.l.b16 %v209
    %v1183 = vunpack.c.h.b16 %v209
    %v1184 = vunpack.c.l.b16 %v210
    %v1185 = vunpack.c.h.b16 %v210
    %v1186 = vunpack.c.l.b16 %v211
    %v1187 = vunpack.c.l.b16 %v212
    %v1188 = vunpack.c.h.b16 %v212
    %v1189 = vunpack.c.l.b16 %v213
    %v1190 = vunpack.c.h.b16 %v213
    %v1191 = vunpack.c.l.b16 %v214
    %v1192 = vunpack.c.h.b16 %v214
    %v1193 = vunpack.c.l.b16 %v215
    %v1194 = vunpack.c.l.b16 %v216
    %v1195 = vunpack.c.h.b16 %v216
    %v1196 = vunpack.c.l.b16 %v217
    %v1197 = vunpack.c.h.b16 %v217
    %v1198 = vunpack.c.l.b16 %v218
    %v1199 = vunpack.c.h.b16 %v218
    %v1200 = vunpack.c.l.b16 %v219
    %v1201 = vunpack.c.l.b16 %v220
    %v1202 = vunpack.c.h.b16 %v220
    %v1203 = vunpack.c.l.b16 %v221
    %v1204 = vunpack.c.h.b16 %v221
    %v1205 = vunpack.c.l.b16 %v222
    %v1206 = vunpack.c.h.b16 %v222
    %v1207 = vunpack.c.l.b16 %v223
    %v1208 = vunpack.c.l.b16 %v224
    %v1209 = vunpack.c.h.b16 %v224
    %v1210 = vunpack.c.l.b16 %v225
    %v1211 = vunpack.c.h.b16 %v225
    %v1212 = vunpack.c.l.b16 %v226
    %v1213 = vunpack.c.h.b16 %v226
    %v1214 = vunpack.c.l.b16 %v227
    %v1215 = vunpack.c.l.b16 %v228
    %v1216 = vunpack.c.h.b16 %v228
    %v1217 = vunpack.c.l.b16 %v229
    %v1218 = vunpack.c.h.b16 %v229
    %v1219 = vunpack.c.l.b16 %v230
    %v1220 = vunpack.c.h.b16 %v230
    %v1221 = vunpack.c.l.b16 %v231
    %v1222 = vunpack.c.l.b16 %v232
    %v1223 = vunpack.c.h.b16 %v232
    %v1224 = vunpack.c.l.b16 %v233
    %v1225 = vunpack.c.h.b16 %v233
    %v1226 = vunpack.c.l.b16 %v234
    %v1227 = vunpack.c.h.b16 %v234
    %v1228 = vunpack.c.l.b16 %v235
    %v1229 = vunpack.c.l.b16 %v236
    %v1230 = vunpack.c.h.b16 %v236
    %v1231 = vunpack.c.l.b16 %v237
    %v1232 = vunpack.c.h.b16 %v237
    %v1233 = vunpack.c.l.b16 %v238
    %v1234 = vunpack.c.h.b16 %v238
    %v1235 = vunpack.c.l.b16 %v239
    %v1236 = vunpack.c.l.b16 %v240
    %v1237 = vunpack.c.h.b16 %v240
    %v1238 = vunpack.c.l.b16 %v241
    %v1239 = vunpack.c.h.b16 %v241
    %v1240 = vunpack.c.l.b16 %v242
    %v1241 = vunpack.c.h.b16 %v242
    %v1242 = vunpack.c.l.b16 %v243
    %v1243 = vunpack.c.l.b16 %v244
    %v1244 = vunpack.c.h.b16 %v244
    %v1245 = vunpack.c.l.b16 %v245
    %v1246 = vunpack.c.h.b16 %v245
    %v1247 = vunpack.c.l.b16 %v246
    %v1248 = vunpack.c.h.b16 %v246
    %v1249 = vunpack.c.l.b16 %v247
    %v1250 = vunpack.c.l.b16 %v248
    %v1251 = vunpack.c.h.b16 %v248
    %v1252 = vunpack.c.l.b16 %v249
    %v1253 = vunpack.c.h.b16 %v249
    %v1254 = vunpack.c.l.b16 %v250
    %v1255 = vunpack.c.h.b16 %v250
    %v1256 = vunpack.c.l.b16 %v251
    %v1257 = vunpack.c.l.b16 %v252
    %v1258 = vunpack.c.h.b16 %v252
    %v1259 = vunpack.c.l.b16 %v253
    %v1260 = vunpack.c.h.b16 %v253
    %v1261 = vunpack.c.l.b16 %v254
    %v1262 = vunpack.c.h.b16 %v254
    %v1263 = vunpack.c.l.b16 %v255
    %v1264 = vunpack.c.l.b16 %v256
    %v1265 = vunpack.c.h.b16 %v256
    %v1266 = vunpack.c.l.b16 %v257
    %v1267 = vunpack.c.h.b16 %v257
    %v1268 = vunpack.c.l.b16 %v258
    %v1269 = vunpack.c.h.b16 %v258
    %v1270 = vunpack.c.l.b16 %v259
    %v1271 = vunpack.c.l.b16 %v260
    %v1272 = vunpack.c.h.b16 %v260
    %v1273 = vunpack.c.l.b16 %v261
    %v1274 = vunpack.c.h.b16 %v261
    %v1275 = vunpack.c.l.b16 %v262
    %v1276 = vunpack.c.h.b16 %v262
    %v1277 = vunpack.c.l.b16 %v263
    %v1278 = vunpack.c.l.b16 %v264
    %v1279 = vunpack.c.h.b16 %v264
    %v1280 = vunpack.c.l.b16 %v265
    %v1281 = vunpack.c.h.b16 %v265
    %v1282 = vunpack.c.l.b16 %v266
    %v1283 = vunpack.c.h.b16 %v266
    %v1284 = vunpack.c.l.b16 %v267
    %v1285 = vunpack.c.l.b16 %v268
    %v1286 = vunpack.c.h.b16 %v268
    %v1287 = vunpack.c.l.b16 %v269
    %v1288 = vunpack.c.h.b16 %v269
    %v1289 = vunpack.c.l.b16 %v270
    %v1290 = vunpack.c.h.b16 %v270
    %v1291 = vunpack.c.l.b16 %v271
    %v1292 = vunpack.c.l.b16 %v272
    %v1293 = vunpack.c.h.b16 %v272
    %v1294 = vunpack.c.l.b16 %v273
    %v1295 = vunpack.c.h.b16 %v273
    %v1296 = vunpack.c.l.b16 %v274
    %v1297 = vunpack.c.h.b16 %v274
    %v1298 = vunpack.c.l.b16 %v275
    %v1299 = vunpack.c.l.b16 %v276
    %v1300 = vunpack.c.h.b16 %v276
    %v1301 = vunpack.c.l.b16 %v277
    %v1302 = vunpack.c.h.b16 %v277
    %v1303 = vunpack.c.l.b16 %v278
    %v1304 = vunpack.c.h.b16 %v278
    %v1305 = vunpack.c.l.b16 %v279
    %v1306 = vunpack.c.l.b16 %v280
    %v1307 = vunpack.c.h.b16 %v280
    %v1308 = vunpack.c.l.b16 %v281
    %v1309 = vunpack.c.h.b16 %v281
    %v1310 = vunpack.c.l.b16 %v282
    %v1311 = vunpack.c.h.b16 %v282
    %v1312 = vunpack.c.l.b16 %v283
    %v1313 = vunpack.c.l.b16 %v284
    %v1314 = vunpack.c.h.b16 %v284
    %v1315 = vunpack.c.l.b16 %v285
    %v1316 = vunpack.c.h.b16 %v285
    %v1317 = vunpack.c.l.b16 %v286
    %v1318 = vunpack.c.h.b16 %v286
    %v1319 = vunpack.c.l.b16 %v287
    %v1320 = vunpack.c.l.b16 %v288
    %v1321 = vunpack.c.h.b16 %v288
    %v1322 = vunpack.c.l.b16 %v289
    %v1323 = vunpack.c.h.b16 %v289
    %v1324 = vunpack.c.l.b16 %v290
    %v1325 = vunpack.c.h.b16 %v290
    %v1326 = vunpack.c.l.b16 %v291
    %v1327 = vunpack.c.l.b16 %v292
    %v1328 = vunpack.c.h.b16 %v292
    %v1329 = vunpack.c.l.b16 %v293
    %v1330 = vunpack.c.h.b16 %v293
    %v1331 = vunpack.c.l.b16 %v294
    %v1332 = vunpack.c.h.b16 %v294
    %v1333 = vunpack.c.l.b16 %v295
    %v1334 = vunpack.c.l.b16 %v296
    %v1335 = vunpack.c.h.b16 %v296
    %v1336 = vunpack.c.l.b16 %v297
    %v1337 = vunpack.c.h.b16 %v297
    %v1338 = vunpack.c.l.b16 %v298
    %v1339 = vunpack.c.h.b16 %v298
    %v1340 = vunpack.c.l.b16 %v299
    %v1341 = vunpack.c.l.b16 %v300
    %v1342 = vunpack.c.h.b16 %v300
    %v1343 = vunpack.c.l.b16 %v301
    %v1344 = vunpack.c.h.b16 %v301
    %v1345 = vunpack.c.l.b16 %v302
    %v1346 = vunpack.c.h.b16 %v302
    %v1347 = vunpack.c.l.b16 %v303
    %v1348 = vunpack.c.l.b16 %v304
    %v1349 = vunpack.c.h.b16 %v304
    %v1350 = vunpack.c.l.b16 %v305
    %v1351 = vunpack.c.h.b16 %v305
    %v1352 = vunpack.c.l.b16 %v306
    %v1353 = vunpack.c.h.b16 %v306
    %v1354 = vunpack.c.l.b16 %v307
    %v1355 = vunpack.c.l.b16 %v308
    %v1356 = vunpack.c.h.b16 %v308
    %v1357 = vunpack.c.l.b16 %v309
    %v1358 = vunpack.c.h.b16 %v309
    %v1359 = vunpack.c.l.b16 %v310
    %v1360 = vunpack.c.h.b16 %v310
    %v1361 = vunpack.c.l.b16 %v311
    %v1362 = vunpack.c.l.b16 %v312
    %v1363 = vunpack.c.h.b16 %v312
    %v1364 = vunpack.c.l.b16 %v313
    %v1365 = vunpack.c.h.b16 %v313
    %v1366 = vunpack.c.l.b16 %v314
    %v1367 = vunpack.c.h.b16 %v314
    %v1368 = vunpack.c.l.b16 %v315
    %v1369 = vunpack.c.l.b16 %v316
    %v1370 = vunpack.c.h.b16 %v316
    %v1371 = vunpack.c.l.b16 %v317
    %v1372 = vunpack.c.h.b16 %v317
    %v1373 = vunpack.c.l.b16 %v318
    %v1374 = vunpack.c.h.b16 %v318
    %v1375 = vunpack.c.l.b16 %v319
    %v1376 = vunpack.c.l.b16 %v320
    %v1377 = vunpack.c.h.b16 %v320
    %v1378 = vunpack.c.l.b16 %v321
    %v1379 = vunpack.c.h.b16 %v321
    %v1380 = vunpack.c.l.b16 %v322
    %v1381 = vunpack.c.h.b16 %v322
    %v1382 = vunpack.c.l.b16 %v323
    %v1383 = vunpack.c.l.b16 %v324
    %v1384 = vunpack.c.h.b16 %v324
    %v1385 = vunpack.c.l.b16 %v325
    %v1386 = vunpack.c.h.b16 %v325
    %v1387 = vunpack.c.l.b16 %v326
    %v1388 = vunpack.c.h.b16 %v326
    %v1389 = vunpack.c.l.b16 %v327
    %v1390 = vunpack.c.l.b16 %v328
    %v1391 = vunpack.c.h.b16 %v328
    %v1392 = vunpack.c.l.b16 %v329
    %v1393 = vunpack.c.h.b16 %v329
    %v1394 = vunpack.c.l.b16 %v330
    %v1395 = vunpack.c.h.b16 %v330
    %v1396 = vunpack.c.l.b16 %v331
    %v1397 = vunpack.c.l.b16 %v332
    %v1398 = vunpack.c.h.b16 %v332
    %v1399 = vunpack.c.l.b16 %v333
    %v1400 = vunpack.c.h.b16 %v333
    %v1401 = vunpack.c.l.b16 %v334
    %v1402 = vunpack.c.h.b16 %v334
    %v1403 = vunpack.c.l.b16 %v335
    %v1404 = vunpack.c.l.b16 %v336
    %v1405 = vunpack.c.h.b16 %v336
    %v1406 = vunpack.c.l.b16 %v337
    %v1407 = vunpack.c.h.b16 %v337
    %v1408 = vunpack.c.l.b16 %v338
    %v1409 = vunpack.c.h.b16 %v338
    %v1410 = vunpack.c.l.b16 %v339
    %v1411 = vunpack.c.l.b16 %v340
    %v1412 = vunpack.c.h.b16 %v340
    %v1413 = vunpack.c.l.b16 %v341
    %v1414 = vunpack.c.h.b16 %v341
    %v1415 = vunpack.c.l.b16 %v342
    %v1416 = vunpack.c.h.b16 %v342
    %v1417 = vunpack.c.l.b16 %v343
    %v1418 = vunpack.c.l.b16 %v344
    %v1419 = vunpack.c.h.b16 %v344
    %v1420 = vunpack.c.l.b16 %v345
    %v1421 = vunpack.c.h.b16 %v345
    %v1422 = vunpack.c.l.b16 %v346
    %v1423 = vunpack.c.h.b16 %v346
    %v1424 = vunpack.c.l.b16 %v347
    %v1425 = vunpack.c.l.b16 %v348
    %v1426 = vunpack.c.h.b16 %v348
    %v1427 = vunpack.c.l.b16 %v349
    %v1428 = vunpack.c.h.b16 %v349
    %v1429 = vunpack.c.l.b16 %v350
    %v1430 = vunpack.c.h.b16 %v350
    %v1431 = vunpack.c.l.b16 %v351
    %v1432 = vunpack.c.l.b16 %v352
    %v1433 = vunpack.c.h.b16 %v352
    %v1434 = vunpack.c.l.b16 %v353
    %v1435 = vunpack.c.h.b16 %v353
    %v1436 = vunpack.c.l.b16 %v354
    %v1437 = vunpack.c.h.b16 %v354
    %v1438 = vunpack.c.l.b16 %v355
    %v1439 = vunpack.c.l.b16 %v356
    %v1440 = vunpack.c.h.b16 %v356
    %v1441 = vunpack.c.l.b16 %v357
    %v1442 = vunpack.c.h.b16 %v357
    %v1443 = vunpack.c.l.b16 %v358
    %v1444 = vunpack.c.h.b16 %v358
    %v1445 = vunpack.c.l.b16 %v359
    %v1446 = vunpack.c.l.b16 %v360
    %v1447 = vunpack.c.h.b16 %v360
    %v1448 = vunpack.c.l.b16 %v361
    %v1449 = vunpack.c.h.b16 %v361
    %v1450 = vunpack.c.l.b16 %v362
    %v1451 = vunpack.c.h.b16 %v362
    %v1452 = vunpack.c.l.b16 %v363
    %v1453 = vunpack.c.l.b16 %v364
    %v1454 = vunpack.c.h.b16 %v364
    %v1455 = vunpack.c.l.b16 %v365
    %v1456 = vunpack.c.h.b16 %v365
    %v1457 = vunpack.c.l.b16 %v366
    %v1458 = vunpack.c.h.b16 %v366
    %v1459 = vunpack.c.l.b16 %v367
    %v1460 = vunpack.c.l.b16 %v368
    %v1461 = vunpack.c.h.b16 %v368
    %v1462 = vunpack.c.l.b16 %v369
    %v1463 = vunpack.c.h.b16 %v369
    %v1464 = vunpack.c.l.b16 %v370
    %v1465 = vunpack.c.h.b16 %v370
    %v1466 = vunpack.c.l.b16 %v371
    %v1467 = vunpack.c.l.b16 %v372
    %v1468 = vunpack.c.h.b16 %v372
    %v1469 = vunpack.c.l.b16 %v373
    %v1470 = vunpack.c.h.b16 %v373
    %v1471 = vunpack.c.l.b16 %v374
    %v1472 = vunpack.c.h.b16 %v374
    %v1473 = vunpack.c.l.b16 %v375
    %v1474 = vunpack.c.l.b16 %v376
    %v1475 = vunpack.c.h.b16 %v376
    %v1476 = vunpack.c.l.b16 %v377
    %v1477 = vunpack.c.h.b16 %v377
    %v1478 = vunpack.c.l.b16 %v378
    %v1479 = vunpack.c.h.b16 %v378
    %v1480 = vunpack.c.l.b16 %v379
    %v1481 = vunpack.c.l.b16 %v380
    %v1482 = vunpack.c.h.b16 %v380
    %v1483 = vunpack.c.l.b16 %v381
    %v1484 = vunpack.c.h.b16 %v381
    %v1485 = vunpack.c.l.b16 %v382
    %v1486 = vunpack.c.h.b16 %v382
    %v1487 = vunpack.c.l.b16 %v383
    %v1488 = vunpack.c.l.b16 %v384
    %v1489 = vunpack.c.h.b16 %v384
    %v1490 = vunpack.c.l.b16 %v385
    %v1491 = vunpack.c.h.b16 %v385
    %v1492 = vunpack.c.l.b16 %v386
    %v1493 = vunpack.c.h.b16 %v386
    %v1494 = vunpack.c.l.b16 %v387
    %v1495 = vunpack.c.l.b16 %v388
    %v1496 = vunpack.c.h.b16 %v388
    %v1497 = vunpack.c.l.b16 %v389
    %v1498 = vunpack.c.h.b16 %v389
    %v1499 = vunpack.c.l.b16 %v390
    %v1500 = vunpack.c.h.b16 %v390
    %v1501 = vunpack.c.l.b16 %v391
    %v1502 = vunpack.c.l.b16 %v392
    %v1503 = vunpack.c.h.b16 %v392
    %v1504 = vunpack.c.l.b16 %v393
    %v1505 = vunpack.c.h.b16 %v393
    %v1506 = vunpack.c.l.b16 %v394
    %v1507 = vunpack.c.h.b16 %v394
    %v1508 = vunpack.c.l.b16 %v395
    %v1509 = vunpack.c.l.b16 %v396
    %v1510 = vunpack.c.h.b16 %v396
    %v1511 = vunpack.c.l.b16 %v397
    %v1512 = vunpack.c.h.b16 %v397
    %v1513 = vunpack.c.l.b16 %v398
    %v1514 = vunpack.c.h.b16 %v398
    %v1515 = vunpack.c.l.b16 %v399
    %v1516 = vunpack.c.l.b16 %v400
    %v1517 = vunpack.c.h.b16 %v400
    %v1518 = vunpack.c.l.b16 %v401
    %v1519 = vunpack.c.h.b16 %v401
    %v1520 = vunpack.c.l.b16 %v402
    %v1521 = vunpack.c.h.b16 %v402
    %v1522 = vunpack.c.l.b16 %v403
    %v1523 = vunpack.c.l.b16 %v404
    %v1524 = vunpack.c.h.b16 %v404
    %v1525 = vunpack.c.l.b16 %v405
    %v1526 = vunpack.c.h.b16 %v405
    %v1527 = vunpack.c.l.b16 %v406
    %v1528 = vunpack.c.h.b16 %v406
    %v1529 = vunpack.c.l.b16 %v407
    %v1530 = vunpack.c.l.b16 %v408
    %v1531 = vunpack.c.h.b16 %v408
    %v1532 = vunpack.c.l.b16 %v409
    %v1533 = vunpack.c.h.b16 %v409
    %v1534 = vunpack.c.l.b16 %v410
    %v1535 = vunpack.c.h.b16 %v410
    %v1536 = vunpack.c.l.b16 %v411
    %v1537 = vunpack.c.l.b16 %v412
    %v1538 = vunpack.c.h.b16 %v412
    %v1539 = vunpack.c.l.b16 %v413
    %v1540 = vunpack.c.h.b16 %v413
    %v1541 = vunpack.c.l.b16 %v414
    %v1542 = vunpack.c.h.b16 %v414
    %v1543 = vunpack.c.l.b16 %v415
    %v1544 = vunpack.c.l.b16 %v416
    %v1545 = vunpack.c.h.b16 %v416
    %v1546 = vunpack.c.l.b16 %v417
    %v1547 = vunpack.c.h.b16 %v417
    %v1548 = vunpack.c.l.b16 %v418
    %v1549 = vunpack.c.h.b16 %v418
    %v1550 = vunpack.c.l.b16 %v419
    %v1551 = vunpack.c.l.b16 %v420
    %v1552 = vunpack.c.h.b16 %v420
    %v1553 = vunpack.c.l.b16 %v421
    %v1554 = vunpack.c.h.b16 %v421
    %v1555 = vunpack.c.l.b16 %v422
    %v1556 = vunpack.c.h.b16 %v422
    %v1557 = vunpack.c.l.b16 %v423
    %v1558 = vunpack.c.l.b16 %v424
    %v1559 = vunpack.c.h.b16 %v424
    %v1560 = vunpack.c.l.b16 %v425
    %v1561 = vunpack.c.h.b16 %v425
    %v1562 = vunpack.c.l.b16 %v426
    %v1563 = vunpack.c.h.b16 %v426
    %v1564 = vunpack.c.l.b16 %v427
    %v1565 = vunpack.c.l.b16 %v428
    %v1566 = vunpack.c.h.b16 %v428
    %v1567 = vunpack.c.l.b16 %v429
    %v1568 = vunpack.c.h.b16 %v429
    %v1569 = vunpack.c.l.b16 %v430
    %v1570 = vunpack.c.h.b16 %v430
    %v1571 = vunpack.c.l.b16 %v431
    %v1572 = vunpack.c.l.b16 %v432
    %v1573 = vunpack.c.h.b16 %v432
    %v1574 = vunpack.c.l.b16 %v433
    %v1575 = vunpack.c.h.b16 %v433
    %v1576 = vunpack.c.l.b16 %v434
    %v1577 = vunpack.c.h.b16 %v434
    %v1578 = vunpack.c.l.b16 %v435
    %v1579 = vunpack.c.l.b16 %v436
    %v1580 = vunpack.c.h.b16 %v436
    %v1581 = vunpack.c.l.b16 %v437
    %v1582 = vunpack.c.h.b16 %v437
    %v1583 = vunpack.c.l.b16 %v438
    %v1584 = vunpack.c.h.b16 %v438
    %v1585 = vunpack.c.l.b16 %v439
    %v1586 = vunpack.c.l.b16 %v440
    %v1587 = vunpack.c.h.b16 %v440
    %v1588 = vunpack.c.l.b16 %v441
    %v1589 = vunpack.c.h.b16 %v441
    %v1590 = vunpack.c.l.b16 %v442
    %v1591 = vunpack.c.h.b16 %v442
    %v1592 = vunpack.c.l.b16 %v443
    %v1593 = vunpack.c.l.b16 %v444
    %v1594 = vunpack.c.h.b16 %v444
    %v1595 = vunpack.c.l.b16 %v445
    %v1596 = vunpack.c.h.b16 %v445
    %v1597 = vunpack.c.l.b16 %v446
    %v1598 = vunpack.c.h.b16 %v446
    %v1599 = vunpack.c.l.b16 %v447
    %v1600 = vunpack.c.l.b16 %v448
    %v1601 = vunpack.c.h.b16 %v448
    %v1602 = vunpack.c.l.b16 %v449
    %v1603 = vunpack.c.h.b16 %v449
    %v1604 = vunpack.c.l.b16 %v450
    %v1605 = vunpack.c.h.b16 %v450
    %v1606 = vunpack.c.l.b16 %v451
    %v1607 = vunpack.c.l.b16 %v452
    %v1608 = vunpack.c.h.b16 %v452
    %v1609 = vunpack.c.l.b16 %v453
    %v1610 = vunpack.c.h.b16 %v453
    %v1611 = vunpack.c.l.b16 %v454
    %v1612 = vunpack.c.h.b16 %v454
    %v1613 = vunpack.c.l.b16 %v455
    %v1614 = vunpack.c.l.b16 %v456
    %v1615 = vunpack.c.h.b16 %v456
    %v1616 = vunpack.c.l.b16 %v457
    %v1617 = vunpack.c.h.b16 %v457
    %v1618 = vunpack.c.l.b16 %v458
    %v1619 = vunpack.c.h.b16 %v458
    %v1620 = vunpack.c.l.b16 %v459
    %v1621 = vunpack.c.l.b16 %v460
    %v1622 = vunpack.c.h.b16 %v460
    %v1623 = vunpack.c.l.b16 %v461
    %v1624 = vunpack.c.h.b16 %v461
    %v1625 = vunpack.c.l.b16 %v462
    %v1626 = vunpack.c.h.b16 %v462
    %v1627 = vunpack.c.l.b16 %v463
    %v1628 = vunpack.c.l.b16 %v464
    %v1629 = vunpack.c.h.b16 %v464
    %v1630 = vunpack.c.l.b16 %v465
    %v1631 = vunpack.c.h.b16 %v465
    %v1632 = vunpack.c.l.b16 %v466
    %v1633 = vunpack.c.h.b16 %v466
    %v1634 = vunpack.c.l.b16 %v467
    %v1635 = vunpack.c.l.b16 %v468
    %v1636 = vunpack.c.h.b16 %v468
    %v1637 = vunpack.c.l.b16 %v469
    %v1638 = vunpack.c.h.b16 %v469
    %v1639 = vunpack.c.l.b16 %v470
    %v1640 = vunpack.c.h.b16 %v470
    %v1641 = vunpack.c.l.b16 %v471
    %v1642 = vunpack.c.l.b16 %v472
    %v1643 = vunpack.c.h.b16 %v472
    %v1644 = vunpack.c.l.b16 %v473
    %v1645 = vunpack.c.h.b16 %v473
    %v1646 = vunpack.c.l.b16 %v474
    %v1647 = vunpack.c.h.b16 %v474
    %v1648 = vunpack.c.l.b16 %v475
    %v1649 = vunpack.c.l.b16 %v476
    %v1650 = vunpack.c.h.b16 %v476
    %v1651 = vunpack.c.l.b16 %v477
    %v1652 = vunpack.c.h.b16 %v477
    %v1653 = vunpack.c.l.b16 %v478
    %v1654 = vunpack.c.h.b16 %v478
    %v1655 = vunpack.c.l.b16 %v479
    %v1656 = vunpack.c.l.b16 %v480
    %v1657 = vunpack.c.h.b16 %v480
    %v1658 = vunpack.c.l.b16 %v481
    %v1659 = vunpack.c.h.b16 %v481
    %v1660 = vunpack.c.l.b16 %v482
    %v1661 = vunpack.c.h.b16 %v482
    %v1662 = vunpack.c.l.b16 %v483
    %v1663 = vunpack.c.l.b16 %v484
    %v1664 = vunpack.c.h.b16 %v484
    %v1665 = vunpack.c.l.b16 %v485
    %v1666 = vunpack.c.h.b16 %v485
    %v1667 = vunpack.c.l.b16 %v486
    %v1668 = vunpack.c.h.b16 %v486
    %v1669 = vunpack.c.l.b16 %v487
    %v1670 = vunpack.c.l.b16 %v488
    %v1671 = vunpack.c.h.b16 %v488
    %v1672 = vunpack.c.l.b16 %v489
    %v1673 = vunpack.c.h.b16 %v489
    %v1674 = vunpack.c.l.b16 %v490
    %v1675 = vunpack.c.h.b16 %v490
    %v1676 = vunpack.c.l.b16 %v491
    %v1677 = vunpack.c.l.b16 %v492
    %v1678 = vunpack.c.h.b16 %v492
    %v1679 = vunpack.c.l.b16 %v493
    %v1680 = vunpack.c.h.b16 %v493
    %v1681 = vunpack.c.l.b16 %v494
    %v1682 = vunpack.c.h.b16 %v494
    %v1683 = vunpack.c.l.b16 %v495
    %v1684 = vunpack.c.l.b16 %v496
    %v1685 = vunpack.c.h.b16 %v496
    %v1686 = vunpack.c.l.b16 %v497
    %v1687 = vunpack.c.h.b16 %v497
    %v1688 = vunpack.c.l.b16 %v498
    %v1689 = vunpack.c.h.b16 %v498
    %v1690 = vunpack.c.l.b16 %v499
    %v1691 = vunpack.c.l.b16 %v500
    %v1692 = vunpack.c.h.b16 %v500
    %v1693 = vunpack.c.l.b16 %v501
    %v1694 = vunpack.c.h.b16 %v501
    %v1695 = vunpack.c.l.b16 %v502
    %v1696 = vunpack.c.h.b16 %v502
    %v1697 = vunpack.c.l.b16 %v503
    %v1698 = vunpack.c.l.b16 %v504
    %v1699 = vunpack.c.h.b16 %v504
    %v1700 = vunpack.c.l.b16 %v505
    %v1701 = vunpack.c.h.b16 %v505
    %v1702 = vunpack.c.l.b16 %v506
    %v1703 = vunpack.c.h.b16 %v506
    %v1704 = vunpack.c.l.b16 %v507
    %v1705 = vunpack.c.l.b16 %v508
    %v1706 = vunpack.c.h.b16 %v508
    %v1707 = vunpack.c.l.b16 %v509
    %v1708 = vunpack.c.h.b16 %v509
    %v1709 = vunpack.c.l.b16 %v510
    %v1710 = vunpack.c.h.b16 %v510
    %v1711 = vunpack.c.l.b16 %v511
    %v1712 = vunpack.c.l.b16 %v512
    %v1713 = vunpack.c.h.b16 %v512
    %v1714 = vunpack.c.l.b16 %v513
    %v1715 = vunpack.c.h.b16 %v513
    %v1716 = vunpack.c.l.b16 %v514
    %v1717 = vunpack.c.h.b16 %v514
    %v1718 = vunpack.c.l.b16 %v515
    %v1719 = vunpack.c.l.b16 %v516
    %v1720 = vunpack.c.h.b16 %v516
    %v1721 = vunpack.c.l.b16 %v517
    %v1722 = vunpack.c.h.b16 %v517
    %v1723 = vunpack.c.l.b16 %v518
    %v1724 = vunpack.c.h.b16 %v518
    %v1725 = vunpack.c.l.b16 %v519
    %v1726 = vunpack.c.l.b16 %v520
    %v1727 = vunpack.c.h.b16 %v520
    %v1728 = vunpack.c.l.b16 %v521
    %v1729 = vunpack.c.h.b16 %v521
    %v1730 = vunpack.c.l.b16 %v522
    %v1731 = vunpack.c.h.b16 %v522
    %v1732 = vunpack.c.l.b16 %v523
    %v1733 = vunpack.c.l.b16 %v524
    %v1734 = vunpack.c.h.b16 %v524
    %v1735 = vunpack.c.l.b16 %v525
    %v1736 = vunpack.c.h.b16 %v525
    %v1737 = vunpack.c.l.b16 %v526
    %v1738 = vunpack.c.h.b16 %v526
    %v1739 = vunpack.c.l.b16 %v527
    %v1740 = vunpack.c.l.b16 %v528
    %v1741 = vunpack.c.h.b16 %v528
    %v1742 = vunpack.c.l.b16 %v529
    %v1743 = vunpack.c.h.b16 %v529
    %v1744 = vunpack.c.l.b16 %v530
    %v1745 = vunpack.c.h.b16 %v530
    %v1746 = vunpack.c.l.b16 %v531
    %v1747 = vunpack.c.l.b16 %v532
    %v1748 = vunpack.c.h.b16 %v532
    %v1749 = vunpack.c.l.b16 %v533
    %v1750 = vunpack.c.h.b16 %v533
    %v1751 = vunpack.c.l.b16 %v534
    %v1752 = vunpack.c.h.b16 %v534
    %v1753 = vunpack.c.l.b16 %v535
    %v1754 = vunpack.c.l.b16 %v536
    %v1755 = vunpack.c.h.b16 %v536
    %v1756 = vunpack.c.l.b16 %v537
    %v1757 = vunpack.c.h.b16 %v537
    %v1758 = vunpack.c.l.b16 %v538
    %v1759 = vunpack.c.h.b16 %v538
    %v1760 = vunpack.c.l.b16 %v539
    %v1761 = vunpack.c.l.b16 %v540
    %v1762 = vunpack.c.h.b16 %v540
    %v1763 = vunpack.c.l.b16 %v541
    %v1764 = vunpack.c.h.b16 %v541
    %v1765 = vunpack.c.l.b16 %v542
    %v1766 = vunpack.c.h.b16 %v542
    %v1767 = vunpack.c.l.b16 %v543
    %v1768 = vunpack.c.l.b16 %v544
    %v1769 = vunpack.c.h.b16 %v544
    %v1770 = vunpack.c.l.b16 %v545
    %v1771 = vunpack.c.h.b16 %v545
    %v1772 = vunpack.c.l.b16 %v546
    %v1773 = vunpack.c.h.b16 %v546
    %v1774 = vunpack.c.l.b16 %v547
    %v1775 = vunpack.c.l.b16 %v548
    %v1776 = vunpack.c.h.b16 %v548
    %v1777 = vunpack.c.l.b16 %v549
    %v1778 = vunpack.c.h.b16 %v549
    %v1779 = vunpack.c.l.b16 %v550
    %v1780 = vunpack.c.h.b16 %v550
    %v1781 = vunpack.c.l.b16 %v551
    %v1782 = vunpack.c.l.b16 %v552
    %v1783 = vunpack.c.h.b16 %v552
    %v1784 = vunpack.c.l.b16 %v553
    %v1785 = vunpack.c.h.b16 %v553
    %v1786 = vunpack.c.l.b16 %v554
    %v1787 = vunpack.c.h.b16 %v554
    %v1788 = vunpack.c.l.b16 %v555
    %v1789 = vunpack.c.l.b16 %v556
    %v1790 = vunpack.c.h.b16 %v556
    %v1791 = vunpack.c.l.b16 %v557
    %v1792 = vunpack.c.h.b16 %v557
    %v1793 = vunpack.c.l.b16 %v558
    %v1794 = vunpack.c.h.b16 %v558
    %v1795 = vunpack.c.l.b16 %v559
    %v1796 = vunpack.c.l.b16 %v560
    %v1797 = vunpack.c.h.b16 %v560
    %v1798 = vunpack.c.l.b16 %v561
    %v1799 = vunpack.c.h.b16 %v561
    %v1800 = vunpack.c.l.b16 %v562
    %v1801 = vunpack.c.h.b16 %v562
    %v1802 = vunpack.c.l.b16 %v563
    %v1803 = vunpack.c.l.b16 %v564
    %v1804 = vunpack.c.h.b16 %v564
    %v1805 = vunpack.c.l.b16 %v565
    %v1806 = vunpack.c.h.b16 %v565
    %v1807 = vunpack.c.l.b16 %v566
    %v1808 = vunpack.c.h.b16 %v566
    %v1809 = vunpack.c.l.b16 %v567
    %v1810 = vunpack.c.l.b16 %v568
    %v1811 = vunpack.c.h.b16 %v568
    %v1812 = vunpack.c.l.b16 %v569
    %v1813 = vunpack.c.h.b16 %v569
    %v1814 = vunpack.c.l.b16 %v570
    %v1815 = vunpack.c.h.b16 %v570
    %v1816 = vunpack.c.l.b16 %v571
    %v1817 = vunpack.c.l.b16 %v572
    %v1818 = vunpack.c.h.b16 %v572
    %v1819 = vunpack.c.l.b16 %v573
    %v1820 = vunpack.c.h.b16 %v573
    %v1821 = vunpack.c.l.b16 %v574
    %v1822 = vunpack.c.h.b16 %v574
    %v1823 = vunpack.c.l.b16 %v575
    %v1824 = vunpack.c.l.b16 %v576
    %v1825 = vunpack.c.h.b16 %v576
    %v1826 = vunpack.c.l.b16 %v577
    %v1827 = vunpack.c.h.b16 %v577
    %v1828 = vunpack.c.l.b16 %v578
    %v1829 = vunpack.c.h.b16 %v578
    %v1830 = vunpack.c.l.b16 %v579
    %v1831 = vunpack.c.l.b16 %v580
    %v1832 = vunpack.c.h.b16 %v580
    %v1833 = vunpack.c.l.b16 %v581
    %v1834 = vunpack.c.h.b16 %v581
    %v1835 = vunpack.c.l.b16 %v582
    %v1836 = vunpack.c.h.b16 %v582
    %v1837 = vunpack.c.l.b16 %v583
    %v1838 = vunpack.c.l.b16 %v584
    %v1839 = vunpack.c.h.b16 %v584
    %v1840 = vunpack.c.l.b16 %v585
    %v1841 = vunpack.c.h.b16 %v585
    %v1842 = vunpack.c.l.b16 %v586
    %v1843 = vunpack.c.h.b16 %v586
    %v1844 = vunpack.c.l.b16 %v587
    %v1845 = vpack.c.b16 %v1068, %v1061
    %v1846 = vpack.c.b16 %v1069, %v1062
    %v1847 = vpack.c.b16 %v1070, %v1063
    %v1848 = vpack.c.b16 %v1071, %v1064
    %v1849 = vpack.c.b16 %v1072, %v1065
    %v1850 = vpack.c.b16 %v1073, %v1066
    %v1851 = vpack.c.b16 %v1074, %v1067
    %v1852 = vpack.c.b16 %v1082, %v1075
    %v1853 = vpack.c.b16 %v1083, %v1076
    %v1854 = vpack.c.b16 %v1084, %v1077
    %v1855 = vpack.c.b16 %v1085, %v1078
    %v1856 = vpack.c.b16 %v1086, %v1079
    %v1857 = vpack.c.b16 %v1087, %v1080
    %v1858 = vpack.c.b16 %v1088, %v1081
    %v1859 = vpack.c.b16 %v1096, %v1089
    %v1860 = vpack.c.b16 %v1097, %v1090
    %v1861 = vpack.c.b16 %v1098, %v1091
    %v1862 = vpack.c.b16 %v1099, %v1092
    %v1863 = vpack.c.b16 %v1100, %v1093
    %v1864 = vpack.c.b16 %v1101, %v1094
    %v1865 = vpack.c.b16 %v1102, %v1095
    %v1866 = vpack.c.b16 %v1110, %v1103
    %v1867 = vpack.c.b16 %v1111, %v1104
    %v1868 = vpack.c.b16 %v1112, %v1105
    %v1869 = vpack.c.b16 %v1113, %v1106
    %v1870 = vpack.c.b16 %v1114, %v1107
    %v1871 = vpack.c.b16 %v1115, %v1108
    %v1872 = vpack.c.b16 %v1116, %v1109
    %v1873 = vpack.c.b16 %v1124, %v1117
    %v1874 = vpack.c.b16 %v1125, %v1118
    %v1875 = vpack.c.b16 %v1126, %v1119
    %v1876 = vpack.c.b16 %v1127, %v1120
    %v1877 = vpack.c.b16 %v1128, %v1121
    %v1878 = vpack.c.b16 %v1129, %v1122
    %v1879 = vpack.c.b16 %v1130, %v1123
    %v1880 = vpack.c.b16 %v1138, %v1131
    %v1881 = vpack.c.b16 %v1139, %v1132
    %v1882 = vpack.c.b16 %v1140, %v1133
    %v1883 = vpack.c.b16 %v1141, %v1134
    %v1884 = vpack.c.b16 %v1142, %v1135
    %v1885 = vpack.c.b16 %v1143, %v1136
    %v1886 = vpack.c.b16 %v1144, %v1137
    %v1887 = vpack.c.b16 %v1152, %v1145
    %v1888 = vpack.c.b16 %v1153, %v1146
    %v1889 = vpack.c.b16 %v1154, %v1147
    %v1890 = vpack.c.b16 %v1155, %v1148
    %v1891 = vpack.c.b16 %v1156, %v1149
    %v1892 = vpack.c.b16 %v1157, %v1150
    %v1893 = vpack.c.b16 %v1158, %v1151
    %v1894 = vpack.c.b16 %v1166, %v1159
    %v1895 = vpack.c.b16 %v1167, %v1160
    %v1896 = vpack.c.b16 %v1168, %v1161
    %v1897 = vpack.c.b16 %v1169, %v1162
    %v1898 = vpack.c.b16 %v1170, %v1163
    %v1899 = vpack.c.b16 %v1171, %v1164
    %v1900 = vpack.c.b16 %v1172, %v1165
    %v1901 = vpack.c.b16 %v1180, %v1173
    %v1902 = vpack.c.b16 %v1181, %v1174
    %v1903 = vpack.c.b16 %v1182, %v1175
    %v1904 = vpack.c.b16 %v1183, %v1176
    %v1905 = vpack.c.b16 %v1184, %v1177
    %v1906 = vpack.c.b16 %v1185, %v1178
    %v1907 = vpack.c.b16 %v1186, %v1179
    %v1908 = vpack.c.b16 %v1194, %v1187
    %v1909 = vpack.c.b16 %v1195, %v1188
    %v1910 = vpack.c.b16 %v1196, %v1189
    %v1911 = vpack.c.b16 %v1197, %v1190
    %v1912 = vpack.c.b16 %v1198, %v1191
    %v1913 = vpack.c.b16 %v1199, %v1192
    %v1914 = vpack.c.b16 %v1200, %v1193
    %v1915 = vpack.c.b16 %v1208, %v1201
    %v1916 = vpack.c.b16 %v1209, %v1202
    %v1917 = vpack.c.b16 %v1210, %v1203
    %v1918 = vpack.c.b16 %v1211, %v1204
    %v1919 = vpack.c.b16 %v1212, %v1205
    %v1920 = vpack.c.b16 %v1213, %v1206
    %v1921 = vpack.c.b16 %v1214, %v1207
    %v1922 = vpack.c.b16 %v1222, %v1215
    %v1923 = vpack.c.b16 %v1223, %v1216
    %v1924 = vpack.c.b16 %v1224, %v1217
    %v1925 = vpack.c.b16 %v1225, %v1218
    %v1926 = vpack.c.b16 %v1226, %v1219
    %v1927 = vpack.c.b16 %v1227, %v1220
    %v1928 = vpack.c.b16 %v1228, %v1221
    %v1929 = vpack.c.b16 %v1236, %v1229
    %v1930 = vpack.c.b16 %v1237, %v1230
    %v1931 = vpack.c.b16 %v1238, %v1231
    %v1932 = vpack.c.b16 %v1239, %v1232
    %v1933 = vpack.c.b16 %v1240, %v1233
    %v1934 = vpack.c.b16 %v1241, %v1234
    %v1935 = vpack.c.b16 %v1242, %v1235
    %v1936 = vpack.c.b16 %v1250, %v1243
    %v1937 = vpack.c.b16 %v1251, %v1244
    %v1938 = vpack.c.b16 %v1252, %v1245
    %v1939 = vpack.c.b16 %v1253, %v1246
    %v1940 = vpack.c.b16 %v1254, %v1247
    %v1941 = vpack.c.b16 %v1255, %v1248
    %v1942 = vpack.c.b16 %v1256, %v1249
    %v1943 = vpack.c.b16 %v1264, %v1257
    %v1944 = vpack.c.b16 %v1265, %v1258
    %v1945 = vpack.c.b16 %v1266, %v1259
    %v1946 = vpack.c.b16 %v1267, %v1260
    %v1947 = vpack.c.b16 %v1268, %v1261
    %v1948 = vpack.c.b16 %v1269, %v1262
    %v1949 = vpack.c.b16 %v1270, %v1263
    %v1950 = vpack.c.b16 %v1278, %v1271
    %v1951 = vpack.c.b16 %v1279, %v1272
    %v1952 = vpack.c.b16 %v1280, %v1273
    %v1953 = vpack.c.b16 %v1281, %v1274
    %v1954 = vpack.c.b16 %v1282, %v1275
    %v1955 = vpack.c.b16 %v1283, %v1276
    %v1956 = vpack.c.b16 %v1284, %v1277
    %v1957 = vpack.c.b16 %v1292, %v1285
    %v1958 = vpack.c.b16 %v1293, %v1286
    %v1959 = vpack.c.b16 %v1294, %v1287
    %v1960 = vpack.c.b16 %v1295, %v1288
    %v1961 = vpack.c.b16 %v1296, %v1289
    %v1962 = vpack.c.b16 %v1297, %v1290
    %v1963 = vpack.c.b16 %v1298, %v1291
    %v1964 = vpack.c.b16 %v1306, %v1299
    %v1965 = vpack.c.b16 %v1307, %v1300
    %v1966 = vpack.c.b16 %v1308, %v1301
    %v1967 = vpack.c.b16 %v1309, %v1302
    %v1968 = vpack.c.b16 %v1310, %v1303
    %v1969 = vpack.c.b16 %v1311, %v1304
    %v1970 = vpack.c.b16 %v1312, %v1305
    %v1971 = vpack.c.b16 %v1320, %v1313
    %v1972 = vpack.c.b16 %v1321, %v1314
    %v1973 = vpack.c.b16 %v1322, %v1315
    %v1974 = vpack.c.b16 %v1323, %v1316
    %v1975 = vpack.c.b16 %v1324, %v1317
    %v1976 = vpack.c.b16 %v1325, %v1318
    %v1977 = vpack.c.b16 %v1326, %v1319
    %v1978 = vpack.c.b16 %v1334, %v1327
    %v1979 = vpack.c.b16 %v1335, %v1328
    %v1980 = vpack.c.b16 %v1336, %v1329
    %v1981 = vpack.c.b16 %v1337, %v1330
    %v1982 = vpack.c.b16 %v1338, %v1331
    %v1983 = vpack.c.b16 %v1339, %v1332
    %v1984 = vpack.c.b16 %v1340, %v1333
    %v1985 = vpack.c.b16 %v1348, %v1341
    %v1986 = vpack.c.b16 %v1349, %v1342
    %v1987 = vpack.c.b16 %v1350, %v1343
    %v1988 = vpack.c.b16 %v1351, %v1344
    %v1989 = vpack.c.b16 %v1352, %v1345
    %v1990 = vpack.c.b16 %v1353, %v1346
    %v1991 = vpack.c.b16 %v1354, %v1347
    %v1992 = vpack.c.b16 %v1362, %v1355
    %v1993 = vpack.c.b16 %v1363, %v1356
    %v1994 = vpack.c.b16 %v1364, %v1357
    %v1995 = vpack.c.b16 %v1365, %v1358
    %v1996 = vpack.c.b16 %v1366, %v1359
    %v1997 = vpack.c.b16 %v1367, %v1360
    %v1998 = vpack.c.b16 %v1368, %v1361
    %v1999 = vpack.c.b16 %v1376, %v1369
    %v2000 = vpack.c.b16 %v1377, %v1370
    %v2001 = vpack.c.b16 %v1378, %v1371
    %v2002 = vpack.c.b16 %v1379, %v1372
    %v2003 = vpack.c.b16 %v1380, %v1373
    %v2004 = vpack.c.b16 %v1381, %v1374
    %v2005 = vpack.c.b16 %v1382, %v1375
    %v2006 = vpack.c.b16 %v1390, %v1383
    %v2007 = vpack.c.b16 %v1391, %v1384
    %v2008 = vpack.c.b16 %v1392, %v1385
    %v2009 = vpack.c.b16 %v1393, %v1386
    %v2010 = vpack.c.b16 %v1394, %v1387
    %v2011 = vpack.c.b16 %v1395, %v1388
    %v2012 = vpack.c.b16 %v1396, %v1389
    %v2013 = vpack.c.b16 %v1404, %v1397
    %v2014 = vpack.c.b16 %v1405, %v1398
    %v2015 = vpack.c.b16 %v1406, %v1399
    %v2016 = vpack.c.b16 %v1407, %v1400
    %v2017 = vpack.c.b16 %v1408, %v1401
    %v2018 = vpack.c.b16 %v1409, %v1402
    %v2019 = vpack.c.b16 %v1410, %v1403
    %v2020 = vpack.c.b16 %v1418, %v1411
    %v2021 = vpack.c.b16 %v1419, %v1412
    %v2022 = vpack.c.b16 %v1420, %v1413
    %v2023 = vpack.c.b16 %v1421, %v1414
    %v2024 = vpack.c.b16 %v1422, %v1415
    %v2025 = vpack.c.b16 %v1423, %v1416
    %v2026 = vpack.c.b16 %v1424, %v1417
    %v2027 = vpack.c.b16 %v1432, %v1425
    %v2028 = vpack.c.b16 %v1433, %v1426
    %v2029 = vpack.c.b16 %v1434, %v1427
    %v2030 = vpack.c.b16 %v1435, %v1428
    %v2031 = vpack.c.b16 %v1436, %v1429
    %v2032 = vpack.c.b16 %v1437, %v1430
    %v2033 = vpack.c.b16 %v1438, %v1431
    %v2034 = vpack.c.b16 %v1446, %v1439
    %v2035 = vpack.c.b16 %v1447, %v1440
    %v2036 = vpack.c.b16 %v1448, %v1441
    %v2037 = vpack.c.b16 %v1449, %v1442
    %v2038 = vpack.c.b16 %v1450, %v1443
    %v2039 = vpack.c.b16 %v1451, %v1444
    %v2040 = vpack.c.b16 %v1452, %v1445
    %v2041 = vpack.c.b16 %v1460, %v1453
    %v2042 = vpack.c.b16 %v1461, %v1454
    %v2043 = vpack.c.b16 %v1462, %v1455
    %v2044 = vpack.c.b16 %v1463, %v1456
    %v2045 = vpack.c.b16 %v1464, %v1457
    %v2046 = vpack.c.b16 %v1465, %v1458
    %v2047 = vpack.c.b16 %v1466, %v1459
    %v2048 = vpack.c.b16 %v1474, %v1467
    %v2049 = vpack.c.b16 %v1475, %v1468
    %v2050 = vpack.c.b16 %v1476, %v1469
    %v2051 = vpack.c.b16 %v1477, %v1470
    %v2052 = vpack.c.b16 %v1478, %v1471
    %v2053 = vpack.c.b16 %v1479, %v1472
    %v2054 = vpack.c.b16 %v1480, %v1473
    %v2055 = vpack.c.b16 %v1488, %v1481
    %v2056 = vpack.c.b16 %v1489, %v1482
    %v2057 = vpack.c.b16 %v1490, %v1483
    %v2058 = vpack.c.b16 %v1491, %v1484
    %v2059 = vpack.c.b16 %v1492, %v1485
    %v2060 = vpack.c.b16 %v1493, %v1486
    %v2061 = vpack.c.b16 %v1494, %v1487
    %v2062 = vpack.c.b16 %v1502, %v1495
    %v2063 = vpack.c.b16 %v1503, %v1496
    %v2064 = vpack.c.b16 %v1504, %v1497
    %v2065 = vpack.c.b16 %v1505, %v1498
    %v2066 = vpack.c.b16 %v1506, %v1499
    %v2067 = vpack.c.b16 %v1507, %v1500
    %v2068 = vpack.c.b16 %v1508, %v1501
    %v2069 = vpack.c.b16 %v1516, %v1509
    %v2070 = vpack.c.b16 %v1517, %v1510
    %v2071 = vpack.c.b16 %v1518, %v1511
    %v2072 = vpack.c.b16 %v1519, %v1512
    %v2073 = vpack.c.b16 %v1520, %v1513
    %v2074 = vpack.c.b16 %v1521, %v1514
    %v2075 = vpack.c.b16 %v1522, %v1515
    %v2076 = vpack.c.b16 %v1530, %v1523
    %v2077 = vpack.c.b16 %v1531, %v1524
    %v2078 = vpack.c.b16 %v1532, %v1525
    %v2079 = vpack.c.b16 %v1533, %v1526
    %v2080 = vpack.c.b16 %v1534, %v1527
    %v2081 = vpack.c.b16 %v1535, %v1528
    %v2082 = vpack.c.b16 %v1536, %v1529
    %v2083 = vpack.c.b16 %v1544, %v1537
    %v2084 = vpack.c.b16 %v1545, %v1538
    %v2085 = vpack.c.b16 %v1546, %v1539
    %v2086 = vpack.c.b16 %v1547, %v1540
    %v2087 = vpack.c.b16 %v1548, %v1541
    %v2088 = vpack.c.b16 %v1549, %v1542
    %v2089 = vpack.c.b16 %v1550, %v1543
    %v2090 = vpack.c.b16 %v1558, %v1551
    %v2091 = vpack.c.b16 %v1559, %v1552
    %v2092 = vpack.c.b16 %v1560, %v1553
    %v2093 = vpack.c.b16 %v1561, %v1554
    %v2094 = vpack.c.b16 %v1562, %v1555
    %v2095 = vpack.c.b16 %v1563, %v1556
    %v2096 = vpack.c.b16 %v1564, %v1557
    %v2097 = vpack.c.b16 %v1572, %v1565
    %v2098 = vpack.c.b16 %v1573, %v1566
    %v2099 = vpack.c.b16 %v1574, %v1567
    %v2100 = vpack.c.b16 %v1575, %v1568
    %v2101 = vpack.c.b16 %v1576, %v1569
    %v2102 = vpack.c.b16 %v1577, %v1570
    %v2103 = vpack.c.b16 %v1578, %v1571
    %v2104 = vpack.c.b16 %v1586, %v1579
    %v2105 = vpack.c.b16 %v1587, %v1580
    %v2106 = vpack.c.b16 %v1588, %v1581
    %v2107 = vpack.c.b16 %v1589, %v1582
    %v2108 = vpack.c.b16 %v1590, %v1583
    %v2109 = vpack.c.b16 %v1591, %v1584
    %v2110 = vpack.c.b16 %v1592, %v1585
    %v2111 = vpack.c.b16 %v1600, %v1593
    %v2112 = vpack.c.b16 %v1601, %v1594
    %v2113 = vpack.c.b16 %v1602, %v1595
    %v2114 = vpack.c.b16 %v1603, %v1596
    %v2115 = vpack.c.b16 %v1604, %v1597
    %v2116 = vpack.c.b16 %v1605, %v1598
    %v2117 = vpack.c.b16 %v1606, %v1599
    %v2118 = vpack.c.b16 %v1614, %v1607
    %v2119 = vpack.c.b16 %v1615, %v1608
    %v2120 = vpack.c.b16 %v1616, %v1609
    %v2121 = vpack.c.b16 %v1617, %v1610
    %v2122 = vpack.c.b16 %v1618, %v1611
    %v2123 = vpack.c.b16 %v1619, %v1612
    %v2124 = vpack.c.b16 %v1620, %v1613
    %v2125 = vpack.c.b16 %v1628, %v1621
    %v2126 = vpack.c.b16 %v1629, %v1622
    %v2127 = vpack.c.b16 %v1630, %v1623
    %v2128 = vpack.c.b16 %v1631, %v1624
    %v2129 = vpack.c.b16 %v1632, %v1625
    %v2130 = vpack.c.b16 %v1633, %v1626
    %v2131 = vpack.c.b16 %v1634, %v1627
    %v2132 = vpack.c.b16 %v1642, %v1635
    %v2133 = vpack.c.b16 %v1643, %v1636
    %v2134 = vpack.c.b16 %v1644, %v1637
    %v2135 = vpack.c.b16 %v1645, %v1638
    %v2136 = vpack.c.b16 %v1646, %v1639
    %v2137 = vpack.c.b16 %v1647, %v1640
    %v2138 = vpack.c.b16 %v1648, %v1641
    %v2139 = vpack.c.b16 %v1656, %v1649
    %v2140 = vpack.c.b16 %v1657, %v1650
    %v2141 = vpack.c.b16 %v1658, %v1651
    %v2142 = vpack.c.b16 %v1659, %v1652
    %v2143 = vpack.c.b16 %v1660, %v1653
    %v2144 = vpack.c.b16 %v1661, %v1654
    %v2145 = vpack.c.b16 %v1662, %v1655
    %v2146 = vpack.c.b16 %v1670, %v1663
    %v2147 = vpack.c.b16 %v1671, %v1664
    %v2148 = vpack.c.b16 %v1672, %v1665
    %v2149 = vpack.c.b16 %v1673, %v1666
    %v2150 = vpack.c.b16 %v1674, %v1667
    %v2151 = vpack.c.b16 %v1675, %v1668
    %v2152 = vpack.c.b16 %v1676, %v1669
    %v2153 = vpack.c.b16 %v1684, %v1677
    %v2154 = vpack.c.b16 %v1685, %v1678
    %v2155 = vpack.c.b16 %v1686, %v1679
    %v2156 = vpack.c.b16 %v1687, %v1680
    %v2157 = vpack.c.b16 %v1688, %v1681
    %v2158 = vpack.c.b16 %v1689, %v1682
    %v2159 = vpack.c.b16 %v1690, %v1683
    %v2160 = vpack.c.b16 %v1698, %v1691
    %v2161 = vpack.c.b16 %v1699, %v1692
    %v2162 = vpack.c.b16 %v1700, %v1693
    %v2163 = vpack.c.b16 %v1701, %v1694
    %v2164 = vpack.c.b16 %v1702, %v1695
    %v2165 = vpack.c.b16 %v1703, %v1696
    %v2166 = vpack.c.b16 %v1704, %v1697
    %v2167 = vpack.c.b16 %v1712, %v1705
    %v2168 = vpack.c.b16 %v1713, %v1706
    %v2169 = vpack.c.b16 %v1714, %v1707
    %v2170 = vpack.c.b16 %v1715, %v1708
    %v2171 = vpack.c.b16 %v1716, %v1709
    %v2172 = vpack.c.b16 %v1717, %v1710
    %v2173 = vpack.c.b16 %v1718, %v1711
    %v2174 = vpack.c.b16 %v1726, %v1719
    %v2175 = vpack.c.b16 %v1727, %v1720
    %v2176 = vpack.c.b16 %v1728, %v1721
    %v2177 = vpack.c.b16 %v1729, %v1722
    %v2178 = vpack.c.b16 %v1730, %v1723
    %v2179 = vpack.c.b16 %v1731, %v1724
    %v2180 = vpack.c.b16 %v1732, %v1725
    %v2181 = vpack.c.b16 %v1740, %v1733
    %v2182 = vpack.c.b16 %v1741, %v1734
    %v2183 = vpack.c.b16 %v1742, %v1735
    %v2184 = vpack.c.b16 %v1743, %v1736
    %v2185 = vpack.c.b16 %v1744, %v1737
    %v2186 = vpack.c.b16 %v1745, %v1738
    %v2187 = vpack.c.b16 %v1746, %v1739
    %v2188 = vpack.c.b16 %v1754, %v1747
    %v2189 = vpack.c.b16 %v1755, %v1748
    %v2190 = vpack.c.b16 %v1756, %v1749
    %v2191 = vpack.c.b16 %v1757, %v1750
    %v2192 = vpack.c.b16 %v1758, %v1751
    %v2193 = vpack.c.b16 %v1759, %v1752
    %v2194 = vpack.c.b16 %v1760, %v1753
    %v2195 = vpack.c.b16 %v1768, %v1761
    %v2196 = vpack.c.b16 %v1769, %v1762
    %v2197 = vpack.c.b16 %v1770, %v1763
    %v2198 = vpack.c.b16 %v1771, %v1764
    %v2199 = vpack.c.b16 %v1772, %v1765
    %v2200 = vpack.c.b16 %v1773, %v1766
    %v2201 = vpack.c.b16 %v1774, %v1767
    %v2202 = vpack.c.b16 %v1782, %v1775
    %v2203 = vpack.c.b16 %v1783, %v1776
    %v2204 = vpack.c.b16 %v1784, %v1777
    %v2205 = vpack.c.b16 %v1785, %v1778
    %v2206 = vpack.c.b16 %v1786, %v1779
    %v2207 = vpack.c.b16 %v1787, %v1780
    %v2208 = vpack.c.b16 %v1788, %v1781
    %v2209 = vpack.c.b16 %v1796, %v1789
    %v2210 = vpack.c.b16 %v1797, %v1790
    %v2211 = vpack.c.b16 %v1798, %v1791
    %v2212 = vpack.c.b16 %v1799, %v1792
    %v2213 = vpack.c.b16 %v1800, %v1793
    %v2214 = vpack.c.b16 %v1801, %v1794
    %v2215 = vpack.c.b16 %v1802, %v1795
    %v2216 = vpack.c.b16 %v1810, %v1803
    %v2217 = vpack.c.b16 %v1811, %v1804
    %v2218 = vpack.c.b16 %v1812, %v1805
    %v2219 = vpack.c.b16 %v1813, %v1806
    %v2220 = vpack.c.b16 %v1814, %v1807
    %v2221 = vpack.c.b16 %v1815, %v1808
    %v2222 = vpack.c.b16 %v1816, %v1809
    %v2223 = vpack.c.b16 %v1824, %v1817
    %v2224 = vpack.c.b16 %v1825, %v1818
    %v2225 = vpack.c.b16 %v1826, %v1819
    %v2226 = vpack.c.b16 %v1827, %v1820
    %v2227 = vpack.c.b16 %v1828, %v1821
    %v2228 = vpack.c.b16 %v1829, %v1822
    %v2229 = vpack.c.b16 %v1830, %v1823
    %v2230 = vpack.c.b16 %v1838, %v1831
    %v2231 = vpack.c.b16 %v1839, %v1832
    %v2232 = vpack.c.b16 %v1840, %v1833
    %v2233 = vpack.c.b16 %v1841, %v1834
    %v2234 = vpack.c.b16 %v1842, %v1835
    %v2235 = vpack.c.b16 %v1843, %v1836
    %v2236 = vpack.c.b16 %v1844, %v1837
    %2629 = vmatprep.subr.bf16.mxu0 %v1895
    %2630 = vmatpush1.bf16.msra.mxu0 %v1894
    %2631 = vmatprep.subr.bf16.mxu0 %v1888
    %2632 = vmatpush1.bf16.msra.mxu0 %v1887
    %2633 = vmatprep.subr.bf16.mxu0 %v1881
    %2634 = vmatpush1.bf16.msra.mxu0 %v1880
    %2635 = vmatprep.subr.bf16.mxu0 %v1874
    %2636 = vmatpush1.bf16.msra.mxu0 %v1873
    %2637 = vmatprep.subr.bf16.mxu0 %v1867
    %2638 = vmatpush1.bf16.msra.mxu0 %v1866
    %2639 = vmatprep.subr.bf16.mxu0 %v1860
    %2640 = vmatpush1.bf16.msra.mxu0 %v1859
    %2641 = vmatprep.subr.bf16.mxu0 %v1853
    %2642 = vmatpush1.bf16.msra.mxu0 %v1852
    %2643 = vmatprep.subr.bf16.mxu0 %v1846
    %2644 = vmatpush1.bf16.msra.mxu0 %v1845
    %2645 = vmatprep.subr.bf16.mxu0 %v1951
    %2646 = vmatpush2.bf16.msra.mxu0 %v1950
    %2647 = vmatprep.subr.bf16.mxu0 %v1944
    %2648 = vmatpush2.bf16.msra.mxu0 %v1943
    %2649 = vmatprep.subr.bf16.mxu0 %v1937
    %2650 = vmatpush2.bf16.msra.mxu0 %v1936
    %2651 = vmatprep.subr.bf16.mxu0 %v1930
    %2652 = vmatpush2.bf16.msra.mxu0 %v1929
    %2653 = vmatprep.subr.bf16.mxu0 %v1923
    %2654 = vmatpush2.bf16.msra.mxu0 %v1922
    %2655 = vmatprep.subr.bf16.mxu0 %v1916
    %2656 = vmatpush2.bf16.msra.mxu0 %v1915
    %2657 = vmatprep.subr.bf16.mxu0 %v1909
    %2658 = vmatpush2.bf16.msra.mxu0 %v1908
    %2659 = vmatprep.subr.bf16.mxu0 %v1902
    %2660 = vmatpush2.bf16.msra.mxu0 %v1901
    %2661 = vmatprep.mubr.bf16.mxu0 %v600
    %2662 = vmatmul.mubr.bf16.gmra.mxu0 %v599
    %v2663 = vpop.f32.mrf.mxu0
    %v2664 = vadd.f32 0.0, %v2663
    %v2665 = vpop.f32.mrf.mxu0
    %v2666 = vadd.f32 0.0, %v2665
    %v2667 = vpop.f32.mrf.mxu0
    %v2668 = vpop.f32.mrf.mxu0
    %2669 = vdwg.mxu0
    %2670 = vmatprep.subr.bf16.mxu0 %v2007
    %2671 = vmatpush1.bf16.msra.mxu0 %v2006
    %2672 = vmatprep.subr.bf16.mxu0 %v2000
    %2673 = vmatpush1.bf16.msra.mxu0 %v1999
    %2674 = vmatprep.subr.bf16.mxu0 %v1993
    %2675 = vmatpush1.bf16.msra.mxu0 %v1992
    %2676 = vmatprep.subr.bf16.mxu0 %v1986
    %2677 = vmatpush1.bf16.msra.mxu0 %v1985
    %2678 = vmatprep.subr.bf16.mxu0 %v1979
    %2679 = vmatpush1.bf16.msra.mxu0 %v1978
    %2680 = vmatprep.subr.bf16.mxu0 %v1972
    %2681 = vmatpush1.bf16.msra.mxu0 %v1971
    %2682 = vmatprep.subr.bf16.mxu0 %v1965
    %2683 = vmatpush1.bf16.msra.mxu0 %v1964
    %2684 = vmatprep.subr.bf16.mxu0 %v1958
    %2685 = vmatpush1.bf16.msra.mxu0 %v1957
    %2686 = vmatprep.subr.bf16.mxu0 %v2063
    %2687 = vmatpush2.bf16.msra.mxu0 %v2062
    %2688 = vmatprep.subr.bf16.mxu0 %v2056
    %2689 = vmatpush2.bf16.msra.mxu0 %v2055
    %2690 = vmatprep.subr.bf16.mxu0 %v2049
    %2691 = vmatpush2.bf16.msra.mxu0 %v2048
    %2692 = vmatprep.subr.bf16.mxu0 %v2042
    %2693 = vmatpush2.bf16.msra.mxu0 %v2041
    %2694 = vmatprep.subr.bf16.mxu0 %v2035
    %2695 = vmatpush2.bf16.msra.mxu0 %v2034
    %2696 = vmatprep.subr.bf16.mxu0 %v2028
    %2697 = vmatpush2.bf16.msra.mxu0 %v2027
    %2698 = vmatprep.subr.bf16.mxu0 %v2021
    %2699 = vmatpush2.bf16.msra.mxu0 %v2020
    %2700 = vmatprep.subr.bf16.mxu0 %v2014
    %2701 = vmatpush2.bf16.msra.mxu0 %v2013
    %2702 = vmatprep.mubr.bf16.mxu0 %v602
    %2703 = vmatmul.mubr.bf16.gmra.mxu0 %v601
    %v2704 = vpop.f32.mrf.mxu0
    %v2705 = vadd.f32 %v2664, %v2704
    %v2706 = vpop.f32.mrf.mxu0
    %v2707 = vadd.f32 %v2666, %v2706
    %v2708 = vpop.f32.mrf.mxu0
    %v2709 = vpop.f32.mrf.mxu0
    %2710 = vdwg.mxu0
    %2711 = vmatprep.subr.bf16.mxu0 %v2119
    %2712 = vmatpush1.bf16.msra.mxu0 %v2118
    %2713 = vmatprep.subr.bf16.mxu0 %v2112
    %2714 = vmatpush1.bf16.msra.mxu0 %v2111
    %2715 = vmatprep.subr.bf16.mxu0 %v2105
    %2716 = vmatpush1.bf16.msra.mxu0 %v2104
    %2717 = vmatprep.subr.bf16.mxu0 %v2098
    %2718 = vmatpush1.bf16.msra.mxu0 %v2097
    %2719 = vmatprep.subr.bf16.mxu0 %v2091
    %2720 = vmatpush1.bf16.msra.mxu0 %v2090
    %2721 = vmatprep.subr.bf16.mxu0 %v2084
    %2722 = vmatpush1.bf16.msra.mxu0 %v2083
    %2723 = vmatprep.subr.bf16.mxu0 %v2077
    %2724 = vmatpush1.bf16.msra.mxu0 %v2076
    %2725 = vmatprep.subr.bf16.mxu0 %v2070
    %2726 = vmatpush1.bf16.msra.mxu0 %v2069
    %2727 = vmatprep.subr.bf16.mxu0 %v2175
    %2728 = vmatpush2.bf16.msra.mxu0 %v2174
    %2729 = vmatprep.subr.bf16.mxu0 %v2168
    %2730 = vmatpush2.bf16.msra.mxu0 %v2167
    %2731 = vmatprep.subr.bf16.mxu0 %v2161
    %2732 = vmatpush2.bf16.msra.mxu0 %v2160
    %2733 = vmatprep.subr.bf16.mxu0 %v2154
    %2734 = vmatpush2.bf16.msra.mxu0 %v2153
    %2735 = vmatprep.subr.bf16.mxu0 %v2147
    %2736 = vmatpush2.bf16.msra.mxu0 %v2146
    %2737 = vmatprep.subr.bf16.mxu0 %v2140
    %2738 = vmatpush2.bf16.msra.mxu0 %v2139
    %2739 = vmatprep.subr.bf16.mxu0 %v2133
    %2740 = vmatpush2.bf16.msra.mxu0 %v2132
    %2741 = vmatprep.subr.bf16.mxu0 %v2126
    %2742 = vmatpush2.bf16.msra.mxu0 %v2125
    %2743 = vmatprep.mubr.bf16.mxu0 %v604
    %2744 = vmatmul.mubr.bf16.gmra.mxu0 %v603
    %v2745 = vpop.f32.mrf.mxu0
    %v2746 = vadd.f32 %v2705, %v2745
    %v2747 = vpop.f32.mrf.mxu0
    %v2748 = vadd.f32 %v2707, %v2747
    %v2749 = vpop.f32.mrf.mxu0
    %v2750 = vpop.f32.mrf.mxu0
    %2751 = vdwg.mxu0
    %2752 = vmatprep.subr.bf16.mxu0 %v2231
    %2753 = vmatpush1.bf16.msra.mxu0 %v2230
    %2754 = vmatprep.subr.bf16.mxu0 %v2224
    %2755 = vmatpush1.bf16.msra.mxu0 %v2223
    %2756 = vmatprep.subr.bf16.mxu0 %v2217
    %2757 = vmatpush1.bf16.msra.mxu0 %v2216
    %2758 = vmatprep.subr.bf16.mxu0 %v2210
    %2759 = vmatpush1.bf16.msra.mxu0 %v2209
    %2760 = vmatprep.subr.bf16.mxu0 %v2203
    %2761 = vmatpush1.bf16.msra.mxu0 %v2202
    %2762 = vmatprep.subr.bf16.mxu0 %v2196
    %2763 = vmatpush1.bf16.msra.mxu0 %v2195
    %2764 = vmatprep.subr.bf16.mxu0 %v2189
    %2765 = vmatpush1.bf16.msra.mxu0 %v2188
    %2766 = vmatprep.subr.bf16.mxu0 %v2182
    %2767 = vmatpush1.bf16.msra.mxu0 %v2181
    %2768 = vmatprep.subr.bf16.mxu0 0
    %2769 = vmatpush2.bf16.msra.mxu0 0
    %2770 = vmatprep.subr.bf16.mxu0 0
    %2771 = vmatpush2.bf16.msra.mxu0 0
    %2772 = vmatprep.subr.bf16.mxu0 0
    %2773 = vmatpush2.bf16.msra.mxu0 0
    %2774 = vmatprep.subr.bf16.mxu0 0
    %2775 = vmatpush2.bf16.msra.mxu0 0
    %2776 = vmatprep.subr.bf16.mxu0 0
    %2777 = vmatpush2.bf16.msra.mxu0 0
    %2778 = vmatprep.subr.bf16.mxu0 0
    %2779 = vmatpush2.bf16.msra.mxu0 0
    %2780 = vmatprep.subr.bf16.mxu0 0
    %2781 = vmatpush2.bf16.msra.mxu0 0
    %2782 = vmatprep.subr.bf16.mxu0 0
    %2783 = vmatpush2.bf16.msra.mxu0 0
    %2784 = vmatprep.mubr.bf16.mxu0 0
    %2785 = vmatmul.mubr.bf16.gmra.mxu0 %v605
    %v2786 = vpop.f32.mrf.mxu0
    %v2787 = vadd.f32 %v2746, %v2786
    %v2788 = vpop.f32.mrf.mxu0
    %v2789 = vadd.f32 %v2748, %v2788
    %v2790 = vpop.f32.mrf.mxu0
    %v2791 = vpop.f32.mrf.mxu0
    %2792 = vdwg.mxu0
    %2793 = vmatprep.subr.bf16.mxu0 %v1897
    %2794 = vmatpush1.bf16.msra.mxu0 %v1896
    %2795 = vmatprep.subr.bf16.mxu0 %v1890
    %2796 = vmatpush1.bf16.msra.mxu0 %v1889
    %2797 = vmatprep.subr.bf16.mxu0 %v1883
    %2798 = vmatpush1.bf16.msra.mxu0 %v1882
    %2799 = vmatprep.subr.bf16.mxu0 %v1876
    %2800 = vmatpush1.bf16.msra.mxu0 %v1875
    %2801 = vmatprep.subr.bf16.mxu0 %v1869
    %2802 = vmatpush1.bf16.msra.mxu0 %v1868
    %2803 = vmatprep.subr.bf16.mxu0 %v1862
    %2804 = vmatpush1.bf16.msra.mxu0 %v1861
    %2805 = vmatprep.subr.bf16.mxu0 %v1855
    %2806 = vmatpush1.bf16.msra.mxu0 %v1854
    %2807 = vmatprep.subr.bf16.mxu0 %v1848
    %2808 = vmatpush1.bf16.msra.mxu0 %v1847
    %2809 = vmatprep.subr.bf16.mxu0 %v1953
    %2810 = vmatpush2.bf16.msra.mxu0 %v1952
    %2811 = vmatprep.subr.bf16.mxu0 %v1946
    %2812 = vmatpush2.bf16.msra.mxu0 %v1945
    %2813 = vmatprep.subr.bf16.mxu0 %v1939
    %2814 = vmatpush2.bf16.msra.mxu0 %v1938
    %2815 = vmatprep.subr.bf16.mxu0 %v1932
    %2816 = vmatpush2.bf16.msra.mxu0 %v1931
    %2817 = vmatprep.subr.bf16.mxu0 %v1925
    %2818 = vmatpush2.bf16.msra.mxu0 %v1924
    %2819 = vmatprep.subr.bf16.mxu0 %v1918
    %2820 = vmatpush2.bf16.msra.mxu0 %v1917
    %2821 = vmatprep.subr.bf16.mxu0 %v1911
    %2822 = vmatpush2.bf16.msra.mxu0 %v1910
    %2823 = vmatprep.subr.bf16.mxu0 %v1904
    %2824 = vmatpush2.bf16.msra.mxu0 %v1903
    %2825 = vmatprep.mubr.bf16.mxu0 %v600
    %2826 = vmatmul.mubr.bf16.gmra.mxu0 %v599
    %v2827 = vpop.f32.mrf.mxu0
    %v2828 = vadd.f32 0.0, %v2827
    %v2829 = vpop.f32.mrf.mxu0
    %v2830 = vadd.f32 0.0, %v2829
    %v2831 = vpop.f32.mrf.mxu0
    %v2832 = vpop.f32.mrf.mxu0
    %2833 = vdwg.mxu0
    %2834 = vmatprep.subr.bf16.mxu0 %v2009
    %2835 = vmatpush1.bf16.msra.mxu0 %v2008
    %2836 = vmatprep.subr.bf16.mxu0 %v2002
    %2837 = vmatpush1.bf16.msra.mxu0 %v2001
    %2838 = vmatprep.subr.bf16.mxu0 %v1995
    %2839 = vmatpush1.bf16.msra.mxu0 %v1994
    %2840 = vmatprep.subr.bf16.mxu0 %v1988
    %2841 = vmatpush1.bf16.msra.mxu0 %v1987
    %2842 = vmatprep.subr.bf16.mxu0 %v1981
    %2843 = vmatpush1.bf16.msra.mxu0 %v1980
    %2844 = vmatprep.subr.bf16.mxu0 %v1974
    %2845 = vmatpush1.bf16.msra.mxu0 %v1973
    %2846 = vmatprep.subr.bf16.mxu0 %v1967
    %2847 = vmatpush1.bf16.msra.mxu0 %v1966
    %2848 = vmatprep.subr.bf16.mxu0 %v1960
    %2849 = vmatpush1.bf16.msra.mxu0 %v1959
    %2850 = vmatprep.subr.bf16.mxu0 %v2065
    %2851 = vmatpush2.bf16.msra.mxu0 %v2064
    %2852 = vmatprep.subr.bf16.mxu0 %v2058
    %2853 = vmatpush2.bf16.msra.mxu0 %v2057
    %2854 = vmatprep.subr.bf16.mxu0 %v2051
    %2855 = vmatpush2.bf16.msra.mxu0 %v2050
    %2856 = vmatprep.subr.bf16.mxu0 %v2044
    %2857 = vmatpush2.bf16.msra.mxu0 %v2043
    %2858 = vmatprep.subr.bf16.mxu0 %v2037
    %2859 = vmatpush2.bf16.msra.mxu0 %v2036
    %2860 = vmatprep.subr.bf16.mxu0 %v2030
    %2861 = vmatpush2.bf16.msra.mxu0 %v2029
    %2862 = vmatprep.subr.bf16.mxu0 %v2023
    %2863 = vmatpush2.bf16.msra.mxu0 %v2022
    %2864 = vmatprep.subr.bf16.mxu0 %v2016
    %2865 = vmatpush2.bf16.msra.mxu0 %v2015
    %2866 = vmatprep.mubr.bf16.mxu0 %v602
    %2867 = vmatmul.mubr.bf16.gmra.mxu0 %v601
    %v2868 = vpop.f32.mrf.mxu0
    %v2869 = vadd.f32 %v2828, %v2868
    %v2870 = vpop.f32.mrf.mxu0
    %v2871 = vadd.f32 %v2830, %v2870
    %v2872 = vpop.f32.mrf.mxu0
    %v2873 = vpop.f32.mrf.mxu0
    %2874 = vdwg.mxu0
    %2875 = vmatprep.subr.bf16.mxu0 %v2121
    %2876 = vmatpush1.bf16.msra.mxu0 %v2120
    %2877 = vmatprep.subr.bf16.mxu0 %v2114
    %2878 = vmatpush1.bf16.msra.mxu0 %v2113
    %2879 = vmatprep.subr.bf16.mxu0 %v2107
    %2880 = vmatpush1.bf16.msra.mxu0 %v2106
    %2881 = vmatprep.subr.bf16.mxu0 %v2100
    %2882 = vmatpush1.bf16.msra.mxu0 %v2099
    %2883 = vmatprep.subr.bf16.mxu0 %v2093
    %2884 = vmatpush1.bf16.msra.mxu0 %v2092
    %2885 = vmatprep.subr.bf16.mxu0 %v2086
    %2886 = vmatpush1.bf16.msra.mxu0 %v2085
    %2887 = vmatprep.subr.bf16.mxu0 %v2079
    %2888 = vmatpush1.bf16.msra.mxu0 %v2078
    %2889 = vmatprep.subr.bf16.mxu0 %v2072
    %2890 = vmatpush1.bf16.msra.mxu0 %v2071
    %2891 = vmatprep.subr.bf16.mxu0 %v2177
    %2892 = vmatpush2.bf16.msra.mxu0 %v2176
    %2893 = vmatprep.subr.bf16.mxu0 %v2170
    %2894 = vmatpush2.bf16.msra.mxu0 %v2169
    %2895 = vmatprep.subr.bf16.mxu0 %v2163
    %2896 = vmatpush2.bf16.msra.mxu0 %v2162
    %2897 = vmatprep.subr.bf16.mxu0 %v2156
    %2898 = vmatpush2.bf16.msra.mxu0 %v2155
    %2899 = vmatprep.subr.bf16.mxu0 %v2149
    %2900 = vmatpush2.bf16.msra.mxu0 %v2148
    %2901 = vmatprep.subr.bf16.mxu0 %v2142
    %2902 = vmatpush2.bf16.msra.mxu0 %v2141
    %2903 = vmatprep.subr.bf16.mxu0 %v2135
    %2904 = vmatpush2.bf16.msra.mxu0 %v2134
    %2905 = vmatprep.subr.bf16.mxu0 %v2128
    %2906 = vmatpush2.bf16.msra.mxu0 %v2127
    %2907 = vmatprep.mubr.bf16.mxu0 %v604
    %2908 = vmatmul.mubr.bf16.gmra.mxu0 %v603
    %v2909 = vpop.f32.mrf.mxu0
    %v2910 = vadd.f32 %v2869, %v2909
    %v2911 = vpop.f32.mrf.mxu0
    %v2912 = vadd.f32 %v2871, %v2911
    %v2913 = vpop.f32.mrf.mxu0
    %v2914 = vpop.f32.mrf.mxu0
    %2915 = vdwg.mxu0
    %2916 = vmatprep.subr.bf16.mxu0 %v2233
    %2917 = vmatpush1.bf16.msra.mxu0 %v2232
    %2918 = vmatprep.subr.bf16.mxu0 %v2226
    %2919 = vmatpush1.bf16.msra.mxu0 %v2225
    %2920 = vmatprep.subr.bf16.mxu0 %v2219
    %2921 = vmatpush1.bf16.msra.mxu0 %v2218
    %2922 = vmatprep.subr.bf16.mxu0 %v2212
    %2923 = vmatpush1.bf16.msra.mxu0 %v2211
    %2924 = vmatprep.subr.bf16.mxu0 %v2205
    %2925 = vmatpush1.bf16.msra.mxu0 %v2204
    %2926 = vmatprep.subr.bf16.mxu0 %v2198
    %2927 = vmatpush1.bf16.msra.mxu0 %v2197
    %2928 = vmatprep.subr.bf16.mxu0 %v2191
    %2929 = vmatpush1.bf16.msra.mxu0 %v2190
    %2930 = vmatprep.subr.bf16.mxu0 %v2184
    %2931 = vmatpush1.bf16.msra.mxu0 %v2183
    %2932 = vmatprep.subr.bf16.mxu0 0
    %2933 = vmatpush2.bf16.msra.mxu0 0
    %2934 = vmatprep.subr.bf16.mxu0 0
    %2935 = vmatpush2.bf16.msra.mxu0 0
    %2936 = vmatprep.subr.bf16.mxu0 0
    %2937 = vmatpush2.bf16.msra.mxu0 0
    %2938 = vmatprep.subr.bf16.mxu0 0
    %2939 = vmatpush2.bf16.msra.mxu0 0
    %2940 = vmatprep.subr.bf16.mxu0 0
    %2941 = vmatpush2.bf16.msra.mxu0 0
    %2942 = vmatprep.subr.bf16.mxu0 0
    %2943 = vmatpush2.bf16.msra.mxu0 0
    %2944 = vmatprep.subr.bf16.mxu0 0
    %2945 = vmatpush2.bf16.msra.mxu0 0
    %2946 = vmatprep.subr.bf16.mxu0 0
    %2947 = vmatpush2.bf16.msra.mxu0 0
    %2948 = vmatprep.mubr.bf16.mxu0 0
    %2949 = vmatmul.mubr.bf16.gmra.mxu0 %v605
    %v2950 = vpop.f32.mrf.mxu0
    %v2951 = vadd.f32 %v2910, %v2950
    %v2952 = vpop.f32.mrf.mxu0
    %v2953 = vadd.f32 %v2912, %v2952
    %v2954 = vpop.f32.mrf.mxu0
    %v2955 = vpop.f32.mrf.mxu0
    %2956 = vdwg.mxu0
    %2957 = vmatprep.subr.bf16.mxu0 %v1899
    %2958 = vmatpush1.bf16.msra.mxu0 %v1898
    %2959 = vmatprep.subr.bf16.mxu0 %v1892
    %2960 = vmatpush1.bf16.msra.mxu0 %v1891
    %2961 = vmatprep.subr.bf16.mxu0 %v1885
    %2962 = vmatpush1.bf16.msra.mxu0 %v1884
    %2963 = vmatprep.subr.bf16.mxu0 %v1878
    %2964 = vmatpush1.bf16.msra.mxu0 %v1877
    %2965 = vmatprep.subr.bf16.mxu0 %v1871
    %2966 = vmatpush1.bf16.msra.mxu0 %v1870
    %2967 = vmatprep.subr.bf16.mxu0 %v1864
    %2968 = vmatpush1.bf16.msra.mxu0 %v1863
    %2969 = vmatprep.subr.bf16.mxu0 %v1857
    %2970 = vmatpush1.bf16.msra.mxu0 %v1856
    %2971 = vmatprep.subr.bf16.mxu0 %v1850
    %2972 = vmatpush1.bf16.msra.mxu0 %v1849
    %2973 = vmatprep.subr.bf16.mxu0 %v1955
    %2974 = vmatpush2.bf16.msra.mxu0 %v1954
    %2975 = vmatprep.subr.bf16.mxu0 %v1948
    %2976 = vmatpush2.bf16.msra.mxu0 %v1947
    %2977 = vmatprep.subr.bf16.mxu0 %v1941
    %2978 = vmatpush2.bf16.msra.mxu0 %v1940
    %2979 = vmatprep.subr.bf16.mxu0 %v1934
    %2980 = vmatpush2.bf16.msra.mxu0 %v1933
    %2981 = vmatprep.subr.bf16.mxu0 %v1927
    %2982 = vmatpush2.bf16.msra.mxu0 %v1926
    %2983 = vmatprep.subr.bf16.mxu0 %v1920
    %2984 = vmatpush2.bf16.msra.mxu0 %v1919
    %2985 = vmatprep.subr.bf16.mxu0 %v1913
    %2986 = vmatpush2.bf16.msra.mxu0 %v1912
    %2987 = vmatprep.subr.bf16.mxu0 %v1906
    %2988 = vmatpush2.bf16.msra.mxu0 %v1905
    %2989 = vmatprep.mubr.bf16.mxu0 %v600
    %2990 = vmatmul.mubr.bf16.gmra.mxu0 %v599
    %v2991 = vpop.f32.mrf.mxu0
    %v2992 = vadd.f32 0.0, %v2991
    %v2993 = vpop.f32.mrf.mxu0
    %v2994 = vadd.f32 0.0, %v2993
    %v2995 = vpop.f32.mrf.mxu0
    %v2996 = vpop.f32.mrf.mxu0
    %2997 = vdwg.mxu0
    %2998 = vmatprep.subr.bf16.mxu0 %v2011
    %2999 = vmatpush1.bf16.msra.mxu0 %v2010
    %3000 = vmatprep.subr.bf16.mxu0 %v2004
    %3001 = vmatpush1.bf16.msra.mxu0 %v2003
    %3002 = vmatprep.subr.bf16.mxu0 %v1997
    %3003 = vmatpush1.bf16.msra.mxu0 %v1996
    %3004 = vmatprep.subr.bf16.mxu0 %v1990
    %3005 = vmatpush1.bf16.msra.mxu0 %v1989
    %3006 = vmatprep.subr.bf16.mxu0 %v1983
    %3007 = vmatpush1.bf16.msra.mxu0 %v1982
    %3008 = vmatprep.subr.bf16.mxu0 %v1976
    %3009 = vmatpush1.bf16.msra.mxu0 %v1975
    %3010 = vmatprep.subr.bf16.mxu0 %v1969
    %3011 = vmatpush1.bf16.msra.mxu0 %v1968
    %3012 = vmatprep.subr.bf16.mxu0 %v1962
    %3013 = vmatpush1.bf16.msra.mxu0 %v1961
    %3014 = vmatprep.subr.bf16.mxu0 %v2067
    %3015 = vmatpush2.bf16.msra.mxu0 %v2066
    %3016 = vmatprep.subr.bf16.mxu0 %v2060
    %3017 = vmatpush2.bf16.msra.mxu0 %v2059
    %3018 = vmatprep.subr.bf16.mxu0 %v2053
    %3019 = vmatpush2.bf16.msra.mxu0 %v2052
    %3020 = vmatprep.subr.bf16.mxu0 %v2046
    %3021 = vmatpush2.bf16.msra.mxu0 %v2045
    %3022 = vmatprep.subr.bf16.mxu0 %v2039
    %3023 = vmatpush2.bf16.msra.mxu0 %v2038
    %3024 = vmatprep.subr.bf16.mxu0 %v2032
    %3025 = vmatpush2.bf16.msra.mxu0 %v2031
    %3026 = vmatprep.subr.bf16.mxu0 %v2025
    %3027 = vmatpush2.bf16.msra.mxu0 %v2024
    %3028 = vmatprep.subr.bf16.mxu0 %v2018
    %3029 = vmatpush2.bf16.msra.mxu0 %v2017
    %3030 = vmatprep.mubr.bf16.mxu0 %v602
    %3031 = vmatmul.mubr.bf16.gmra.mxu0 %v601
    %v3032 = vpop.f32.mrf.mxu0
    %v3033 = vadd.f32 %v2992, %v3032
    %v3034 = vpop.f32.mrf.mxu0
    %v3035 = vadd.f32 %v2994, %v3034
    %v3036 = vpop.f32.mrf.mxu0
    %v3037 = vpop.f32.mrf.mxu0
    %3038 = vdwg.mxu0
    %3039 = vmatprep.subr.bf16.mxu0 %v2123
    %3040 = vmatpush1.bf16.msra.mxu0 %v2122
    %3041 = vmatprep.subr.bf16.mxu0 %v2116
    %3042 = vmatpush1.bf16.msra.mxu0 %v2115
    %3043 = vmatprep.subr.bf16.mxu0 %v2109
    %3044 = vmatpush1.bf16.msra.mxu0 %v2108
    %3045 = vmatprep.subr.bf16.mxu0 %v2102
    %3046 = vmatpush1.bf16.msra.mxu0 %v2101
    %3047 = vmatprep.subr.bf16.mxu0 %v2095
    %3048 = vmatpush1.bf16.msra.mxu0 %v2094
    %3049 = vmatprep.subr.bf16.mxu0 %v2088
    %3050 = vmatpush1.bf16.msra.mxu0 %v2087
    %3051 = vmatprep.subr.bf16.mxu0 %v2081
    %3052 = vmatpush1.bf16.msra.mxu0 %v2080
    %3053 = vmatprep.subr.bf16.mxu0 %v2074
    %3054 = vmatpush1.bf16.msra.mxu0 %v2073
    %3055 = vmatprep.subr.bf16.mxu0 %v2179
    %3056 = vmatpush2.bf16.msra.mxu0 %v2178
    %3057 = vmatprep.subr.bf16.mxu0 %v2172
    %3058 = vmatpush2.bf16.msra.mxu0 %v2171
    %3059 = vmatprep.subr.bf16.mxu0 %v2165
    %3060 = vmatpush2.bf16.msra.mxu0 %v2164
    %3061 = vmatprep.subr.bf16.mxu0 %v2158
    %3062 = vmatpush2.bf16.msra.mxu0 %v2157
    %3063 = vmatprep.subr.bf16.mxu0 %v2151
    %3064 = vmatpush2.bf16.msra.mxu0 %v2150
    %3065 = vmatprep.subr.bf16.mxu0 %v2144
    %3066 = vmatpush2.bf16.msra.mxu0 %v2143
    %3067 = vmatprep.subr.bf16.mxu0 %v2137
    %3068 = vmatpush2.bf16.msra.mxu0 %v2136
    %3069 = vmatprep.subr.bf16.mxu0 %v2130
    %3070 = vmatpush2.bf16.msra.mxu0 %v2129
    %3071 = vmatprep.mubr.bf16.mxu0 %v604
    %3072 = vmatmul.mubr.bf16.gmra.mxu0 %v603
    %v3073 = vpop.f32.mrf.mxu0
    %v3074 = vadd.f32 %v3033, %v3073
    %v3075 = vpop.f32.mrf.mxu0
    %v3076 = vadd.f32 %v3035, %v3075
    %v3077 = vpop.f32.mrf.mxu0
    %v3078 = vpop.f32.mrf.mxu0
    %3079 = vdwg.mxu0
    %3080 = vmatprep.subr.bf16.mxu0 %v2235
    %3081 = vmatpush1.bf16.msra.mxu0 %v2234
    %3082 = vmatprep.subr.bf16.mxu0 %v2228
    %3083 = vmatpush1.bf16.msra.mxu0 %v2227
    %3084 = vmatprep.subr.bf16.mxu0 %v2221
    %3085 = vmatpush1.bf16.msra.mxu0 %v2220
    %3086 = vmatprep.subr.bf16.mxu0 %v2214
    %3087 = vmatpush1.bf16.msra.mxu0 %v2213
    %3088 = vmatprep.subr.bf16.mxu0 %v2207
    %3089 = vmatpush1.bf16.msra.mxu0 %v2206
    %3090 = vmatprep.subr.bf16.mxu0 %v2200
    %3091 = vmatpush1.bf16.msra.mxu0 %v2199
    %3092 = vmatprep.subr.bf16.mxu0 %v2193
    %3093 = vmatpush1.bf16.msra.mxu0 %v2192
    %3094 = vmatprep.subr.bf16.mxu0 %v2186
    %3095 = vmatpush1.bf16.msra.mxu0 %v2185
    %3096 = vmatprep.subr.bf16.mxu0 0
    %3097 = vmatpush2.bf16.msra.mxu0 0
    %3098 = vmatprep.subr.bf16.mxu0 0
    %3099 = vmatpush2.bf16.msra.mxu0 0
    %3100 = vmatprep.subr.bf16.mxu0 0
    %3101 = vmatpush2.bf16.msra.mxu0 0
    %3102 = vmatprep.subr.bf16.mxu0 0
    %3103 = vmatpush2.bf16.msra.mxu0 0
    %3104 = vmatprep.subr.bf16.mxu0 0
    %3105 = vmatpush2.bf16.msra.mxu0 0
    %3106 = vmatprep.subr.bf16.mxu0 0
    %3107 = vmatpush2.bf16.msra.mxu0 0
    %3108 = vmatprep.subr.bf16.mxu0 0
    %3109 = vmatpush2.bf16.msra.mxu0 0
    %3110 = vmatprep.subr.bf16.mxu0 0
    %3111 = vmatpush2.bf16.msra.mxu0 0
    %3112 = vmatprep.mubr.bf16.mxu0 0
    %3113 = vmatmul.mubr.bf16.gmra.mxu0 %v605
    %v3114 = vpop.f32.mrf.mxu0
    %v3115 = vadd.f32 %v3074, %v3114
    %v3116 = vpop.f32.mrf.mxu0
    %v3117 = vadd.f32 %v3076, %v3116
    %v3118 = vpop.f32.mrf.mxu0
    %v3119 = vpop.f32.mrf.mxu0
    %3120 = vdwg.mxu0
    %3121 = vmatprep.subr.bf16.mxu0 0
    %3122 = vmatpush1.bf16.msra.mxu0 %v1900
    %3123 = vmatprep.subr.bf16.mxu0 0
    %3124 = vmatpush1.bf16.msra.mxu0 %v1893
    %3125 = vmatprep.subr.bf16.mxu0 0
    %3126 = vmatpush1.bf16.msra.mxu0 %v1886
    %3127 = vmatprep.subr.bf16.mxu0 0
    %3128 = vmatpush1.bf16.msra.mxu0 %v1879
    %3129 = vmatprep.subr.bf16.mxu0 0
    %3130 = vmatpush1.bf16.msra.mxu0 %v1872
    %3131 = vmatprep.subr.bf16.mxu0 0
    %3132 = vmatpush1.bf16.msra.mxu0 %v1865
    %3133 = vmatprep.subr.bf16.mxu0 0
    %3134 = vmatpush1.bf16.msra.mxu0 %v1858
    %3135 = vmatprep.subr.bf16.mxu0 0
    %3136 = vmatpush1.bf16.msra.mxu0 %v1851
    %3137 = vmatprep.subr.bf16.mxu0 0
    %3138 = vmatpush2.bf16.msra.mxu0 %v1956
    %3139 = vmatprep.subr.bf16.mxu0 0
    %3140 = vmatpush2.bf16.msra.mxu0 %v1949
    %3141 = vmatprep.subr.bf16.mxu0 0
    %3142 = vmatpush2.bf16.msra.mxu0 %v1942
    %3143 = vmatprep.subr.bf16.mxu0 0
    %3144 = vmatpush2.bf16.msra.mxu0 %v1935
    %3145 = vmatprep.subr.bf16.mxu0 0
    %3146 = vmatpush2.bf16.msra.mxu0 %v1928
    %3147 = vmatprep.subr.bf16.mxu0 0
    %3148 = vmatpush2.bf16.msra.mxu0 %v1921
    %3149 = vmatprep.subr.bf16.mxu0 0
    %3150 = vmatpush2.bf16.msra.mxu0 %v1914
    %3151 = vmatprep.subr.bf16.mxu0 0
    %3152 = vmatpush2.bf16.msra.mxu0 %v1907
    %3153 = vmatprep.mubr.bf16.mxu0 %v600
    %3154 = vmatmul.mubr.bf16.gmra.mxu0 %v599
    %v3155 = vpop.f32.mrf.mxu0
    %v3156 = vadd.f32 0.0, %v3155
    %v3157 = vpop.f32.mrf.mxu0
    %v3158 = vpop.f32.mrf.mxu0
    %v3159 = vpop.f32.mrf.mxu0
    %3160 = vdwg.mxu0
    %3161 = vmatprep.subr.bf16.mxu0 0
    %3162 = vmatpush1.bf16.msra.mxu0 %v2012
    %3163 = vmatprep.subr.bf16.mxu0 0
    %3164 = vmatpush1.bf16.msra.mxu0 %v2005
    %3165 = vmatprep.subr.bf16.mxu0 0
    %3166 = vmatpush1.bf16.msra.mxu0 %v1998
    %3167 = vmatprep.subr.bf16.mxu0 0
    %3168 = vmatpush1.bf16.msra.mxu0 %v1991
    %3169 = vmatprep.subr.bf16.mxu0 0
    %3170 = vmatpush1.bf16.msra.mxu0 %v1984
    %3171 = vmatprep.subr.bf16.mxu0 0
    %3172 = vmatpush1.bf16.msra.mxu0 %v1977
    %3173 = vmatprep.subr.bf16.mxu0 0
    %3174 = vmatpush1.bf16.msra.mxu0 %v1970
    %3175 = vmatprep.subr.bf16.mxu0 0
    %3176 = vmatpush1.bf16.msra.mxu0 %v1963
    %3177 = vmatprep.subr.bf16.mxu0 0
    %3178 = vmatpush2.bf16.msra.mxu0 %v2068
    %3179 = vmatprep.subr.bf16.mxu0 0
    %3180 = vmatpush2.bf16.msra.mxu0 %v2061
    %3181 = vmatprep.subr.bf16.mxu0 0
    %3182 = vmatpush2.bf16.msra.mxu0 %v2054
    %3183 = vmatprep.subr.bf16.mxu0 0
    %3184 = vmatpush2.bf16.msra.mxu0 %v2047
    %3185 = vmatprep.subr.bf16.mxu0 0
    %3186 = vmatpush2.bf16.msra.mxu0 %v2040
    %3187 = vmatprep.subr.bf16.mxu0 0
    %3188 = vmatpush2.bf16.msra.mxu0 %v2033
    %3189 = vmatprep.subr.bf16.mxu0 0
    %3190 = vmatpush2.bf16.msra.mxu0 %v2026
    %3191 = vmatprep.subr.bf16.mxu0 0
    %3192 = vmatpush2.bf16.msra.mxu0 %v2019
    %3193 = vmatprep.mubr.bf16.mxu0 %v602
    %3194 = vmatmul.mubr.bf16.gmra.mxu0 %v601
    %v3195 = vpop.f32.mrf.mxu0
    %v3196 = vadd.f32 %v3156, %v3195
    %v3197 = vpop.f32.mrf.mxu0
    %v3198 = vpop.f32.mrf.mxu0
    %v3199 = vpop.f32.mrf.mxu0
    %3200 = vdwg.mxu0
    %3201 = vmatprep.subr.bf16.mxu0 0
    %3202 = vmatpush1.bf16.msra.mxu0 %v2124
    %3203 = vmatprep.subr.bf16.mxu0 0
    %3204 = vmatpush1.bf16.msra.mxu0 %v2117
    %3205 = vmatprep.subr.bf16.mxu0 0
    %3206 = vmatpush1.bf16.msra.mxu0 %v2110
    %3207 = vmatprep.subr.bf16.mxu0 0
    %3208 = vmatpush1.bf16.msra.mxu0 %v2103
    %3209 = vmatprep.subr.bf16.mxu0 0
    %3210 = vmatpush1.bf16.msra.mxu0 %v2096
    %3211 = vmatprep.subr.bf16.mxu0 0
    %3212 = vmatpush1.bf16.msra.mxu0 %v2089
    %3213 = vmatprep.subr.bf16.mxu0 0
    %3214 = vmatpush1.bf16.msra.mxu0 %v2082
    %3215 = vmatprep.subr.bf16.mxu0 0
    %3216 = vmatpush1.bf16.msra.mxu0 %v2075
    %3217 = vmatprep.subr.bf16.mxu0 0
    %3218 = vmatpush2.bf16.msra.mxu0 %v2180
    %3219 = vmatprep.subr.bf16.mxu0 0
    %3220 = vmatpush2.bf16.msra.mxu0 %v2173
    %3221 = vmatprep.subr.bf16.mxu0 0
    %3222 = vmatpush2.bf16.msra.mxu0 %v2166
    %3223 = vmatprep.subr.bf16.mxu0 0
    %3224 = vmatpush2.bf16.msra.mxu0 %v2159
    %3225 = vmatprep.subr.bf16.mxu0 0
    %3226 = vmatpush2.bf16.msra.mxu0 %v2152
    %3227 = vmatprep.subr.bf16.mxu0 0
    %3228 = vmatpush2.bf16.msra.mxu0 %v2145
    %3229 = vmatprep.subr.bf16.mxu0 0
    %3230 = vmatpush2.bf16.msra.mxu0 %v2138
    %3231 = vmatprep.subr.bf16.mxu0 0
    %3232 = vmatpush2.bf16.msra.mxu0 %v2131
    %3233 = vmatprep.mubr.bf16.mxu0 %v604
    %3234 = vmatmul.mubr.bf16.gmra.mxu0 %v603
    %v3235 = vpop.f32.mrf.mxu0
    %v3236 = vadd.f32 %v3196, %v3235
    %v3237 = vpop.f32.mrf.mxu0
    %v3238 = vpop.f32.mrf.mxu0
    %v3239 = vpop.f32.mrf.mxu0
    %3240 = vdwg.mxu0
    %3241 = vmatprep.subr.bf16.mxu0 0
    %3242 = vmatpush1.bf16.msra.mxu0 %v2236
    %3243 = vmatprep.subr.bf16.mxu0 0
    %3244 = vmatpush1.bf16.msra.mxu0 %v2229
    %3245 = vmatprep.subr.bf16.mxu0 0
    %3246 = vmatpush1.bf16.msra.mxu0 %v2222
    %3247 = vmatprep.subr.bf16.mxu0 0
    %3248 = vmatpush1.bf16.msra.mxu0 %v2215
    %3249 = vmatprep.subr.bf16.mxu0 0
    %3250 = vmatpush1.bf16.msra.mxu0 %v2208
    %3251 = vmatprep.subr.bf16.mxu0 0
    %3252 = vmatpush1.bf16.msra.mxu0 %v2201
    %3253 = vmatprep.subr.bf16.mxu0 0
    %3254 = vmatpush1.bf16.msra.mxu0 %v2194
    %3255 = vmatprep.subr.bf16.mxu0 0
    %3256 = vmatpush1.bf16.msra.mxu0 %v2187
    %3257 = vmatprep.subr.bf16.mxu0 0
    %3258 = vmatpush2.bf16.msra.mxu0 0
    %3259 = vmatprep.subr.bf16.mxu0 0
    %3260 = vmatpush2.bf16.msra.mxu0 0
    %3261 = vmatprep.subr.bf16.mxu0 0
    %3262 = vmatpush2.bf16.msra.mxu0 0
    %3263 = vmatprep.subr.bf16.mxu0 0
    %3264 = vmatpush2.bf16.msra.mxu0 0
    %3265 = vmatprep.subr.bf16.mxu0 0
    %3266 = vmatpush2.bf16.msra.mxu0 0
    %3267 = vmatprep.subr.bf16.mxu0 0
    %3268 = vmatpush2.bf16.msra.mxu0 0
    %3269 = vmatprep.subr.bf16.mxu0 0
    %3270 = vmatpush2.bf16.msra.mxu0 0
    %3271 = vmatprep.subr.bf16.mxu0 0
    %3272 = vmatpush2.bf16.msra.mxu0 0
    %3273 = vmatprep.mubr.bf16.mxu0 0
    %3274 = vmatmul.mubr.bf16.gmra.mxu0 %v605
    %v3275 = vpop.f32.mrf.mxu0
    %v3276 = vadd.f32 %v3236, %v3275
    %v3277 = vpop.f32.mrf.mxu0
    %v3278 = vpop.f32.mrf.mxu0
    %v3279 = vpop.f32.mrf.mxu0
    %3280 = vdwg.mxu0
    %v3281 = vld [vmem:[#allocation10] sm:$0xff]
    %v3282 = vld [vmem:[#allocation11] sm:$0xff]
    %v3283 = vrot.slane %v2787, 4
    %v3284 = vadd.f32 %v2787, %v3283
    %v3285 = vrot.slane %v3284, 2
    %v3286 = vadd.f32 %v3284, %v3285
    %v3287 = vrot.slane %v3286, 1
    %v3288 = vadd.f32 %v3286, %v3287
    %v3289 = vrot.slane %v2789, 4
    %v3290 = vadd.f32 %v2789, %v3289
    %v3291 = vrot.slane %v3290, 2
    %v3292 = vadd.f32 %v3290, %v3291
    %v3293 = vrot.slane %v3292, 1
    %v3294 = vadd.f32 %v3292, %v3293
    %v3295 = vrot.slane %v2951, 4
    %v3296 = vadd.f32 %v2951, %v3295
    %v3297 = vrot.slane %v3296, 2
    %v3298 = vadd.f32 %v3296, %v3297
    %v3299 = vrot.slane %v3298, 1
    %v3300 = vadd.f32 %v3298, %v3299
    %v3301 = vrot.slane %v2953, 4
    %v3302 = vadd.f32 %v2953, %v3301
    %v3303 = vrot.slane %v3302, 2
    %v3304 = vadd.f32 %v3302, %v3303
    %v3305 = vrot.slane %v3304, 1
    %v3306 = vadd.f32 %v3304, %v3305
    %v3307 = vrot.slane %v3115, 4
    %v3308 = vadd.f32 %v3115, %v3307
    %v3309 = vrot.slane %v3308, 2
    %v3310 = vadd.f32 %v3308, %v3309
    %v3311 = vrot.slane %v3310, 1
    %v3312 = vadd.f32 %v3310, %v3311
    %v3313 = vrot.slane %v3117, 4
    %v3314 = vadd.f32 %v3117, %v3313
    %v3315 = vrot.slane %v3314, 2
    %v3316 = vadd.f32 %v3314, %v3315
    %v3317 = vrot.slane %v3316, 1
    %v3318 = vadd.f32 %v3316, %v3317
    %v3319 = vrot.slane %v3276, 4
    %v3320 = vadd.f32 %v3276, %v3319
    %v3321 = vrot.slane %v3320, 2
    %v3322 = vadd.f32 %v3320, %v3321
    %v3323 = vrot.slane %v3322, 1
    %v3324 = vadd.f32 %v3322, %v3323
    %v3325 = vrcp.pop 8.0
    %v3326 = vmul.f32 %v3288, %v3325
    %v3327 = vmul.f32 %v3294, %v3325
    %v3328 = vmul.f32 %v3300, %v3325
    %v3329 = vmul.f32 %v3306, %v3325
    %v3330 = vmul.f32 %v3312, %v3325
    %v3331 = vmul.f32 %v3318, %v3325
    %v3332 = vmul.f32 %v3324, %v3325
    %v3333 = vmul.f32 %v2787, %v2787
    %v3334 = vmul.f32 %v2789, %v2789
    %v3335 = vmul.f32 %v2951, %v2951
    %v3336 = vmul.f32 %v2953, %v2953
    %v3337 = vmul.f32 %v3115, %v3115
    %v3338 = vmul.f32 %v3117, %v3117
    %v3339 = vmul.f32 %v3276, %v3276
    %v3340 = vrot.slane %v3333, 4
    %v3341 = vadd.f32 %v3333, %v3340
    %v3342 = vrot.slane %v3341, 2
    %v3343 = vadd.f32 %v3341, %v3342
    %v3344 = vrot.slane %v3343, 1
    %v3345 = vadd.f32 %v3343, %v3344
    %v3346 = vrot.slane %v3334, 4
    %v3347 = vadd.f32 %v3334, %v3346
    %v3348 = vrot.slane %v3347, 2
    %v3349 = vadd.f32 %v3347, %v3348
    %v3350 = vrot.slane %v3349, 1
    %v3351 = vadd.f32 %v3349, %v3350
    %v3352 = vrot.slane %v3335, 4
    %v3353 = vadd.f32 %v3335, %v3352
    %v3354 = vrot.slane %v3353, 2
    %v3355 = vadd.f32 %v3353, %v3354
    %v3356 = vrot.slane %v3355, 1
    %v3357 = vadd.f32 %v3355, %v3356
    %v3358 = vrot.slane %v3336, 4
    %v3359 = vadd.f32 %v3336, %v3358
    %v3360 = vrot.slane %v3359, 2
    %v3361 = vadd.f32 %v3359, %v3360
    %v3362 = vrot.slane %v3361, 1
    %v3363 = vadd.f32 %v3361, %v3362
    %v3364 = vrot.slane %v3337, 4
    %v3365 = vadd.f32 %v3337, %v3364
    %v3366 = vrot.slane %v3365, 2
    %v3367 = vadd.f32 %v3365, %v3366
    %v3368 = vrot.slane %v3367, 1
    %v3369 = vadd.f32 %v3367, %v3368
    %v3370 = vrot.slane %v3338, 4
    %v3371 = vadd.f32 %v3338, %v3370
    %v3372 = vrot.slane %v3371, 2
    %v3373 = vadd.f32 %v3371, %v3372
    %v3374 = vrot.slane %v3373, 1
    %v3375 = vadd.f32 %v3373, %v3374
    %v3376 = vrot.slane %v3339, 4
    %v3377 = vadd.f32 %v3339, %v3376
    %v3378 = vrot.slane %v3377, 2
    %v3379 = vadd.f32 %v3377, %v3378
    %v3380 = vrot.slane %v3379, 1
    %v3381 = vadd.f32 %v3379, %v3380
    %v3382 = vmul.f32 %v3345, %v3325
    %v3383 = vmul.f32 %v3351, %v3325
    %v3384 = vmul.f32 %v3357, %v3325
    %v3385 = vmul.f32 %v3363, %v3325
    %v3386 = vmul.f32 %v3369, %v3325
    %v3387 = vmul.f32 %v3375, %v3325
    %v3388 = vmul.f32 %v3381, %v3325
    %v3389 = vmul.f32 %v3326, %v3326
    %v3390 = vmul.f32 %v3327, %v3327
    %v3391 = vmul.f32 %v3328, %v3328
    %v3392 = vmul.f32 %v3329, %v3329
    %v3393 = vmul.f32 %v3330, %v3330
    %v3394 = vmul.f32 %v3331, %v3331
    %v3395 = vmul.f32 %v3332, %v3332
    %v3396 = vsub.f32 %v3382, %v3389
    %v3397 = vsub.f32 %v3383, %v3390
    %v3398 = vsub.f32 %v3384, %v3391
    %v3399 = vsub.f32 %v3385, %v3392
    %v3400 = vsub.f32 %v3386, %v3393
    %v3401 = vsub.f32 %v3387, %v3394
    %v3402 = vsub.f32 %v3388, %v3395
    %v3403 = vmax.f32 %v3396, 0.0
    %v3404 = vmax.f32 %v3397, 0.0
    %v3405 = vmax.f32 %v3398, 0.0
    %v3406 = vmax.f32 %v3399, 0.0
    %v3407 = vmax.f32 %v3400, 0.0
    %v3408 = vmax.f32 %v3401, 0.0
    %v3409 = vmax.f32 %v3402, 0.0
    %v3410 = vadd.f32 %v3403, 1e-05
    %v3411 = vadd.f32 %v3404, 1e-05
    %v3412 = vadd.f32 %v3405, 1e-05
    %v3413 = vadd.f32 %v3406, 1e-05
    %v3414 = vadd.f32 %v3407, 1e-05
    %v3415 = vadd.f32 %v3408, 1e-05
    %v3416 = vadd.f32 %v3409, 1e-05
    %v3417 = vrsqrt.pop %v3410
    %v3418 = vrsqrt.pop %v3411
    %v3419 = vrsqrt.pop %v3412
    %v3420 = vrsqrt.pop %v3413
    %v3421 = vrsqrt.pop %v3414
    %v3422 = vrsqrt.pop %v3415
    %v3423 = vrsqrt.pop %v3416
    %v3431 = vcombine.low %v3417, %v3418
    %v3432 = vcombine.low %v3419, %v3420
    %v3433 = vcombine.low %v3421, %v3422
    %v3435 = vunpack.c.l.s4 1966171168
    %v3436 = vunpack.c.0.s8 %v3435
    %v3437 = vlaneseq
    %v3438 = vshrl.u32 %v3437, 7
    %v3439 = vsub.s32 %v3436, %v3438
    %v3440 = vrot.slane %v3431, %v3439
    %v3442 = vunpack.c.l.s4 1966171168
    %v3443 = vunpack.c.0.s8 %v3442
    %v3444 = vlaneseq
    %v3445 = vshrl.u32 %v3444, 7
    %v3446 = vsub.s32 %v3443, %v3445
    %v3447 = vrot.slane %v3432, %v3446
    %v3449 = vunpack.c.l.s4 1966171168
    %v3450 = vunpack.c.0.s8 %v3449
    %v3451 = vlaneseq
    %v3452 = vshrl.u32 %v3451, 7
    %v3453 = vsub.s32 %v3450, %v3452
    %v3454 = vrot.slane %v3433, %v3453
    %v3456 = vunpack.c.l.s4 1966171168
    %v3457 = vunpack.c.0.s8 %v3456
    %v3458 = vlaneseq
    %v3459 = vshrl.u32 %v3458, 7
    %v3460 = vsub.s32 %v3457, %v3459
    %v3461 = vrot.slane %v3423, %v3460
    %v3462 = vcombine.low %v3440, %v3447
    %v3463 = vcombine.low %v3454, %v3461
    %v3465 = vunpack.c.l.s4 1966171168
    %v3466 = vunpack.c.0.s8 %v3465
    %v3467 = vlaneseq
    %v3468 = vshrl.u32 %v3467, 7
    %v3469 = vsub.s32 %v3466, %v3468
    %v3470 = vrot.slane %v3462, %v3469
    %v3472 = vunpack.c.l.s4 1966171168
    %v3473 = vunpack.c.0.s8 %v3472
    %v3474 = vlaneseq
    %v3475 = vshrl.u32 %v3474, 7
    %v3476 = vsub.s32 %v3473, %v3475
    %v3477 = vrot.slane %v3463, %v3476
    %v3478 = vcombine.low %v3470, %v3477
    %v3480 = vmul.f32 %v3281, %v3478
    %v3482 = vlaneseq
    %v3483 = vshrl.u32 %v3482, 7
    %v3484 = vsub.s32 0, %v3483
    %v3485 = vrot.slane %v3480, %v3484
    %v3486 = vlaneseq
    %v3487 = vshrl.u32 %v3486, 7
    %v3488 = vsub.s32 1, %v3487
    %v3489 = vrot.slane %v3480, %v3488
    %v3490 = vlaneseq
    %v3491 = vshrl.u32 %v3490, 7
    %v3492 = vsub.s32 2, %v3491
    %v3493 = vrot.slane %v3480, %v3492
    %v3494 = vlaneseq
    %v3495 = vshrl.u32 %v3494, 7
    %v3496 = vsub.s32 3, %v3495
    %v3497 = vrot.slane %v3480, %v3496
    %v3498 = vlaneseq
    %v3499 = vshrl.u32 %v3498, 7
    %v3500 = vsub.s32 4, %v3499
    %v3501 = vrot.slane %v3480, %v3500
    %v3502 = vlaneseq
    %v3503 = vshrl.u32 %v3502, 7
    %v3504 = vsub.s32 5, %v3503
    %v3505 = vrot.slane %v3480, %v3504
    %v3506 = vlaneseq
    %v3507 = vshrl.u32 %v3506, 7
    %v3508 = vsub.s32 6, %v3507
    %v3509 = vrot.slane %v3480, %v3508
    %v3517 = vmul.f32 %v3326, %v3485
    %v3518 = vmul.f32 %v3327, %v3489
    %v3519 = vmul.f32 %v3328, %v3493
    %v3520 = vmul.f32 %v3329, %v3497
    %v3521 = vmul.f32 %v3330, %v3501
    %v3522 = vmul.f32 %v3331, %v3505
    %v3523 = vmul.f32 %v3332, %v3509
    %v3531 = vcombine.low %v3517, %v3518
    %v3532 = vcombine.low %v3519, %v3520
    %v3533 = vcombine.low %v3521, %v3522
    %v3535 = vunpack.c.l.s4 1966171168
    %v3536 = vunpack.c.0.s8 %v3535
    %v3537 = vlaneseq
    %v3538 = vshrl.u32 %v3537, 7
    %v3539 = vsub.s32 %v3536, %v3538
    %v3540 = vrot.slane %v3531, %v3539
    %v3542 = vunpack.c.l.s4 1966171168
    %v3543 = vunpack.c.0.s8 %v3542
    %v3544 = vlaneseq
    %v3545 = vshrl.u32 %v3544, 7
    %v3546 = vsub.s32 %v3543, %v3545
    %v3547 = vrot.slane %v3532, %v3546
    %v3549 = vunpack.c.l.s4 1966171168
    %v3550 = vunpack.c.0.s8 %v3549
    %v3551 = vlaneseq
    %v3552 = vshrl.u32 %v3551, 7
    %v3553 = vsub.s32 %v3550, %v3552
    %v3554 = vrot.slane %v3533, %v3553
    %v3556 = vunpack.c.l.s4 1966171168
    %v3557 = vunpack.c.0.s8 %v3556
    %v3558 = vlaneseq
    %v3559 = vshrl.u32 %v3558, 7
    %v3560 = vsub.s32 %v3557, %v3559
    %v3561 = vrot.slane %v3523, %v3560
    %v3562 = vcombine.low %v3540, %v3547
    %v3563 = vcombine.low %v3554, %v3561
    %v3565 = vunpack.c.l.s4 1966171168
    %v3566 = vunpack.c.0.s8 %v3565
    %v3567 = vlaneseq
    %v3568 = vshrl.u32 %v3567, 7
    %v3569 = vsub.s32 %v3566, %v3568
    %v3570 = vrot.slane %v3562, %v3569
    %v3572 = vunpack.c.l.s4 1966171168
    %v3573 = vunpack.c.0.s8 %v3572
    %v3574 = vlaneseq
    %v3575 = vshrl.u32 %v3574, 7
    %v3576 = vsub.s32 %v3573, %v3575
    %v3577 = vrot.slane %v3563, %v3576
    %v3578 = vcombine.low %v3570, %v3577
    %v3580 = vsub.f32 %v3282, %v3578
    %v3581 = vmul.f32 %v2787, %v3485
    %v3582 = vmul.f32 %v2789, %v3489
    %v3583 = vmul.f32 %v2951, %v3493
    %v3584 = vmul.f32 %v2953, %v3497
    %v3585 = vmul.f32 %v3115, %v3501
    %v3586 = vmul.f32 %v3117, %v3505
    %v3587 = vmul.f32 %v3276, %v3509
    %v3589 = vlaneseq
    %v3590 = vshrl.u32 %v3589, 7
    %v3591 = vsub.s32 0, %v3590
    %v3592 = vrot.slane %v3580, %v3591
    %v3593 = vlaneseq
    %v3594 = vshrl.u32 %v3593, 7
    %v3595 = vsub.s32 1, %v3594
    %v3596 = vrot.slane %v3580, %v3595
    %v3597 = vlaneseq
    %v3598 = vshrl.u32 %v3597, 7
    %v3599 = vsub.s32 2, %v3598
    %v3600 = vrot.slane %v3580, %v3599
    %v3601 = vlaneseq
    %v3602 = vshrl.u32 %v3601, 7
    %v3603 = vsub.s32 3, %v3602
    %v3604 = vrot.slane %v3580, %v3603
    %v3605 = vlaneseq
    %v3606 = vshrl.u32 %v3605, 7
    %v3607 = vsub.s32 4, %v3606
    %v3608 = vrot.slane %v3580, %v3607
    %v3609 = vlaneseq
    %v3610 = vshrl.u32 %v3609, 7
    %v3611 = vsub.s32 5, %v3610
    %v3612 = vrot.slane %v3580, %v3611
    %v3613 = vlaneseq
    %v3614 = vshrl.u32 %v3613, 7
    %v3615 = vsub.s32 6, %v3614
    %v3616 = vrot.slane %v3580, %v3615
    %v3624 = vadd.f32 %v3581, %v3592
    %v3625 = vadd.f32 %v3582, %v3596
    %v3626 = vadd.f32 %v3583, %v3600
    %v3627 = vadd.f32 %v3584, %v3604
    %v3628 = vadd.f32 %v3585, %v3608
    %v3629 = vadd.f32 %v3586, %v3612
    %v3630 = vadd.f32 %v3587, %v3616
    %v3631 = vmax.f32 %v3624, 0.0
    %v3632 = vmax.f32 %v3625, 0.0
    %v3633 = vmax.f32 %v3626, 0.0
    %v3634 = vmax.f32 %v3627, 0.0
    %v3635 = vmax.f32 %v3628, 0.0
    %v3636 = vmax.f32 %v3629, 0.0
    %v3637 = vmax.f32 %v3630, 0.0
    %v3638 = vpack.c.bf16 %v3631, %v3631
    %v3639 = vpack.c.bf16 %v3632, %v3632
    %v3640 = vpack.c.bf16 %v3633, %v3633
    %v3641 = vpack.c.bf16 %v3634, %v3634
    %v3642 = vpack.c.bf16 %v3635, %v3635
    %v3643 = vpack.c.bf16 %v3636, %v3636
    %v3644 = vpack.c.bf16 %v3637, %v3637
    %s3645 = smul.u32 4, 112
    %s3646 = smul.u32 %s3645, 7
    %s3647 = sshll.u32 %s3646, 4
    %3648 = dma.done [#allocation4], %s3647
    %v3649 = vld [vmem:[#allocation2] sm:$0xff]
    %v3650 = vld [vmem:[#allocation2 + $0x8] sm:$0xff]
    %v3651 = vld [vmem:[#allocation2 + $0x10] sm:$0xff]
    %v3652 = vld [vmem:[#allocation2 + $0x18] sm:$0xf]
    %v3653 = vld [vmem:[#allocation2 + $0x1c] sm:$0xff]
    %v3654 = vld [vmem:[#allocation2 + $0x24] sm:$0xff]
    %v3655 = vld [vmem:[#allocation2 + $0x2c] sm:$0xff]
    %v3656 = vld [vmem:[#allocation2 + $0x34] sm:$0xf]
    %v3657 = vld [vmem:[#allocation2 + $0x38] sm:$0xff]
    %v3658 = vld [vmem:[#allocation2 + $0x40] sm:$0xff]
    %v3659 = vld [vmem:[#allocation2 + $0x48] sm:$0xff]
    %v3660 = vld [vmem:[#allocation2 + $0x50] sm:$0xf]
    %v3661 = vld [vmem:[#allocation2 + $0x54] sm:$0xff]
    %v3662 = vld [vmem:[#allocation2 + $0x5c] sm:$0xff]
    %v3663 = vld [vmem:[#allocation2 + $0x64] sm:$0xff]
    %v3664 = vld [vmem:[#allocation2 + $0x6c] sm:$0xf]
    %v3665 = vld [vmem:[#allocation2 + $0x70] sm:$0xff]
    %v3666 = vld [vmem:[#allocation2 + $0x78] sm:$0xff]
    %v3667 = vld [vmem:[#allocation2 + $0x80] sm:$0xff]
    %v3668 = vld [vmem:[#allocation2 + $0x88] sm:$0xf]
    %v3669 = vld [vmem:[#allocation2 + $0x8c] sm:$0xff]
    %v3670 = vld [vmem:[#allocation2 + $0x94] sm:$0xff]
    %v3671 = vld [vmem:[#allocation2 + $0x9c] sm:$0xff]
    %v3672 = vld [vmem:[#allocation2 + $0xa4] sm:$0xf]
    %v3673 = vld [vmem:[#allocation2 + $0xa8] sm:$0xff]
    %v3674 = vld [vmem:[#allocation2 + $0xb0] sm:$0xff]
    %v3675 = vld [vmem:[#allocation2 + $0xb8] sm:$0xff]
    %v3676 = vld [vmem:[#allocation2 + $0xc0] sm:$0xf]
    %v3677 = vld [vmem:[#allocation2 + $0xc4] sm:$0xff]
    %v3678 = vld [vmem:[#allocation2 + $0xcc] sm:$0xff]
    %v3679 = vld [vmem:[#allocation2 + $0xd4] sm:$0xff]
    %v3680 = vld [vmem:[#allocation2 + $0xdc] sm:$0xf]
    %v3681 = vld [vmem:[#allocation2 + $0xe0] sm:$0xff]
    %v3682 = vld [vmem:[#allocation2 + $0xe8] sm:$0xff]
    %v3683 = vld [vmem:[#allocation2 + $0xf0] sm:$0xff]
    %v3684 = vld [vmem:[#allocation2 + $0xf8] sm:$0xf]
    %v3685 = vld [vmem:[#allocation2 + $0xfc] sm:$0xff]
    %v3686 = vld [vmem:[#allocation2 + $0x104] sm:$0xff]
    %v3687 = vld [vmem:[#allocation2 + $0x10c] sm:$0xff]
    %v3688 = vld [vmem:[#allocation2 + $0x114] sm:$0xf]
    %v3689 = vld [vmem:[#allocation2 + $0x118] sm:$0xff]
    %v3690 = vld [vmem:[#allocation2 + $0x120] sm:$0xff]
    %v3691 = vld [vmem:[#allocation2 + $0x128] sm:$0xff]
    %v3692 = vld [vmem:[#allocation2 + $0x130] sm:$0xf]
    %v3693 = vld [vmem:[#allocation2 + $0x134] sm:$0xff]
    %v3694 = vld [vmem:[#allocation2 + $0x13c] sm:$0xff]
    %v3695 = vld [vmem:[#allocation2 + $0x144] sm:$0xff]
    %v3696 = vld [vmem:[#allocation2 + $0x14c] sm:$0xf]
    %v3697 = vld [vmem:[#allocation2 + $0x150] sm:$0xff]
    %v3698 = vld [vmem:[#allocation2 + $0x158] sm:$0xff]
    %v3699 = vld [vmem:[#allocation2 + $0x160] sm:$0xff]
    %v3700 = vld [vmem:[#allocation2 + $0x168] sm:$0xf]
    %v3701 = vld [vmem:[#allocation2 + $0x16c] sm:$0xff]
    %v3702 = vld [vmem:[#allocation2 + $0x174] sm:$0xff]
    %v3703 = vld [vmem:[#allocation2 + $0x17c] sm:$0xff]
    %v3704 = vld [vmem:[#allocation2 + $0x184] sm:$0xf]
    %v3705 = vld [vmem:[#allocation2 + $0x188] sm:$0xff]
    %v3706 = vld [vmem:[#allocation2 + $0x190] sm:$0xff]
    %v3707 = vld [vmem:[#allocation2 + $0x198] sm:$0xff]
    %v3708 = vld [vmem:[#allocation2 + $0x1a0] sm:$0xf]
    %v3709 = vld [vmem:[#allocation2 + $0x1a4] sm:$0xff]
    %v3710 = vld [vmem:[#allocation2 + $0x1ac] sm:$0xff]
    %v3711 = vld [vmem:[#allocation2 + $0x1b4] sm:$0xff]
    %v3712 = vld [vmem:[#allocation2 + $0x1bc] sm:$0xf]
    %v3713 = vld [vmem:[#allocation2 + $0x1c0] sm:$0xff]
    %v3714 = vld [vmem:[#allocation2 + $0x1c8] sm:$0xff]
    %v3715 = vld [vmem:[#allocation2 + $0x1d0] sm:$0xff]
    %v3716 = vld [vmem:[#allocation2 + $0x1d8] sm:$0xf]
    %v3717 = vld [vmem:[#allocation2 + $0x1dc] sm:$0xff]
    %v3718 = vld [vmem:[#allocation2 + $0x1e4] sm:$0xff]
    %v3719 = vld [vmem:[#allocation2 + $0x1ec] sm:$0xff]
    %v3720 = vld [vmem:[#allocation2 + $0x1f4] sm:$0xf]
    %v3721 = vld [vmem:[#allocation2 + $0x1f8] sm:$0xff]
    %v3722 = vld [vmem:[#allocation2 + $0x200] sm:$0xff]
    %v3723 = vld [vmem:[#allocation2 + $0x208] sm:$0xff]
    %v3724 = vld [vmem:[#allocation2 + $0x210] sm:$0xf]
    %v3725 = vld [vmem:[#allocation2 + $0x214] sm:$0xff]
    %v3726 = vld [vmem:[#allocation2 + $0x21c] sm:$0xff]
    %v3727 = vld [vmem:[#allocation2 + $0x224] sm:$0xff]
    %v3728 = vld [vmem:[#allocation2 + $0x22c] sm:$0xf]
    %v3729 = vld [vmem:[#allocation2 + $0x230] sm:$0xff]
    %v3730 = vld [vmem:[#allocation2 + $0x238] sm:$0xff]
    %v3731 = vld [vmem:[#allocation2 + $0x240] sm:$0xff]
    %v3732 = vld [vmem:[#allocation2 + $0x248] sm:$0xf]
    %v3733 = vld [vmem:[#allocation2 + $0x24c] sm:$0xff]
    %v3734 = vld [vmem:[#allocation2 + $0x254] sm:$0xff]
    %v3735 = vld [vmem:[#allocation2 + $0x25c] sm:$0xff]
    %v3736 = vld [vmem:[#allocation2 + $0x264] sm:$0xf]
    %v3737 = vld [vmem:[#allocation2 + $0x268] sm:$0xff]
    %v3738 = vld [vmem:[#allocation2 + $0x270] sm:$0xff]
    %v3739 = vld [vmem:[#allocation2 + $0x278] sm:$0xff]
    %v3740 = vld [vmem:[#allocation2 + $0x280] sm:$0xf]
    %v3741 = vld [vmem:[#allocation2 + $0x284] sm:$0xff]
    %v3742 = vld [vmem:[#allocation2 + $0x28c] sm:$0xff]
    %v3743 = vld [vmem:[#allocation2 + $0x294] sm:$0xff]
    %v3744 = vld [vmem:[#allocation2 + $0x29c] sm:$0xf]
    %v3745 = vld [vmem:[#allocation2 + $0x2a0] sm:$0xff]
    %v3746 = vld [vmem:[#allocation2 + $0x2a8] sm:$0xff]
    %v3747 = vld [vmem:[#allocation2 + $0x2b0] sm:$0xff]
    %v3748 = vld [vmem:[#allocation2 + $0x2b8] sm:$0xf]
    %v3749 = vld [vmem:[#allocation2 + $0x2bc] sm:$0xff]
    %v3750 = vld [vmem:[#allocation2 + $0x2c4] sm:$0xff]
    %v3751 = vld [vmem:[#allocation2 + $0x2cc] sm:$0xff]
    %v3752 = vld [vmem:[#allocation2 + $0x2d4] sm:$0xf]
    %v3753 = vld [vmem:[#allocation2 + $0x2d8] sm:$0xff]
    %v3754 = vld [vmem:[#allocation2 + $0x2e0] sm:$0xff]
    %v3755 = vld [vmem:[#allocation2 + $0x2e8] sm:$0xff]
    %v3756 = vld [vmem:[#allocation2 + $0x2f0] sm:$0xf]
    %v3757 = vld [vmem:[#allocation2 + $0x2f4] sm:$0xff]
    %v3758 = vld [vmem:[#allocation2 + $0x2fc] sm:$0xff]
    %v3759 = vld [vmem:[#allocation2 + $0x304] sm:$0xff]
    %v3760 = vld [vmem:[#allocation2 + $0x30c] sm:$0xf]
    %v3761 = vld [vmem:[#allocation2 + $0x310] sm:$0xff]
    %v3762 = vld [vmem:[#allocation2 + $0x318] sm:$0xff]
    %v3763 = vld [vmem:[#allocation2 + $0x320] sm:$0xff]
    %v3764 = vld [vmem:[#allocation2 + $0x328] sm:$0xf]
    %v3765 = vld [vmem:[#allocation2 + $0x32c] sm:$0xff]
    %v3766 = vld [vmem:[#allocation2 + $0x334] sm:$0xff]
    %v3767 = vld [vmem:[#allocation2 + $0x33c] sm:$0xff]
    %v3768 = vld [vmem:[#allocation2 + $0x344] sm:$0xf]
    %v3769 = vld [vmem:[#allocation2 + $0x348] sm:$0xff]
    %v3770 = vld [vmem:[#allocation2 + $0x350] sm:$0xff]
    %v3771 = vld [vmem:[#allocation2 + $0x358] sm:$0xff]
    %v3772 = vld [vmem:[#allocation2 + $0x360] sm:$0xf]
    %v3773 = vld [vmem:[#allocation2 + $0x364] sm:$0xff]
    %v3774 = vld [vmem:[#allocation2 + $0x36c] sm:$0xff]
    %v3775 = vld [vmem:[#allocation2 + $0x374] sm:$0xff]
    %v3776 = vld [vmem:[#allocation2 + $0x37c] sm:$0xf]
    %v3777 = vld [vmem:[#allocation2 + $0x380] sm:$0xff]
    %v3778 = vld [vmem:[#allocation2 + $0x388] sm:$0xff]
    %v3779 = vld [vmem:[#allocation2 + $0x390] sm:$0xff]
    %v3780 = vld [vmem:[#allocation2 + $0x398] sm:$0xf]
    %v3781 = vld [vmem:[#allocation2 + $0x39c] sm:$0xff]
    %v3782 = vld [vmem:[#allocation2 + $0x3a4] sm:$0xff]
    %v3783 = vld [vmem:[#allocation2 + $0x3ac] sm:$0xff]
    %v3784 = vld [vmem:[#allocation2 + $0x3b4] sm:$0xf]
    %v3785 = vld [vmem:[#allocation2 + $0x3b8] sm:$0xff]
    %v3786 = vld [vmem:[#allocation2 + $0x3c0] sm:$0xff]
    %v3787 = vld [vmem:[#allocation2 + $0x3c8] sm:$0xff]
    %v3788 = vld [vmem:[#allocation2 + $0x3d0] sm:$0xf]
    %v3789 = vld [vmem:[#allocation2 + $0x3d4] sm:$0xff]
    %v3790 = vld [vmem:[#allocation2 + $0x3dc] sm:$0xff]
    %v3791 = vld [vmem:[#allocation2 + $0x3e4] sm:$0xff]
    %v3792 = vld [vmem:[#allocation2 + $0x3ec] sm:$0xf]
    %v3793 = vld [vmem:[#allocation2 + $0x3f0] sm:$0xff]
    %v3794 = vld [vmem:[#allocation2 + $0x3f8] sm:$0xff]
    %v3795 = vld [vmem:[#allocation2 + $0x400] sm:$0xff]
    %v3796 = vld [vmem:[#allocation2 + $0x408] sm:$0xf]
    %v3797 = vld [vmem:[#allocation2 + $0x40c] sm:$0xff]
    %v3798 = vld [vmem:[#allocation2 + $0x414] sm:$0xff]
    %v3799 = vld [vmem:[#allocation2 + $0x41c] sm:$0xff]
    %v3800 = vld [vmem:[#allocation2 + $0x424] sm:$0xf]
    %v3801 = vld [vmem:[#allocation2 + $0x428] sm:$0xff]
    %v3802 = vld [vmem:[#allocation2 + $0x430] sm:$0xff]
    %v3803 = vld [vmem:[#allocation2 + $0x438] sm:$0xff]
    %v3804 = vld [vmem:[#allocation2 + $0x440] sm:$0xf]
    %v3805 = vld [vmem:[#allocation2 + $0x444] sm:$0xff]
    %v3806 = vld [vmem:[#allocation2 + $0x44c] sm:$0xff]
    %v3807 = vld [vmem:[#allocation2 + $0x454] sm:$0xff]
    %v3808 = vld [vmem:[#allocation2 + $0x45c] sm:$0xf]
    %v3809 = vld [vmem:[#allocation2 + $0x460] sm:$0xff]
    %v3810 = vld [vmem:[#allocation2 + $0x468] sm:$0xff]
    %v3811 = vld [vmem:[#allocation2 + $0x470] sm:$0xff]
    %v3812 = vld [vmem:[#allocation2 + $0x478] sm:$0xf]
    %v3813 = vld [vmem:[#allocation2 + $0x47c] sm:$0xff]
    %v3814 = vld [vmem:[#allocation2 + $0x484] sm:$0xff]
    %v3815 = vld [vmem:[#allocation2 + $0x48c] sm:$0xff]
    %v3816 = vld [vmem:[#allocation2 + $0x494] sm:$0xf]
    %v3817 = vld [vmem:[#allocation2 + $0x498] sm:$0xff]
    %v3818 = vld [vmem:[#allocation2 + $0x4a0] sm:$0xff]
    %v3819 = vld [vmem:[#allocation2 + $0x4a8] sm:$0xff]
    %v3820 = vld [vmem:[#allocation2 + $0x4b0] sm:$0xf]
    %v3821 = vld [vmem:[#allocation2 + $0x4b4] sm:$0xff]
    %v3822 = vld [vmem:[#allocation2 + $0x4bc] sm:$0xff]
    %v3823 = vld [vmem:[#allocation2 + $0x4c4] sm:$0xff]
    %v3824 = vld [vmem:[#allocation2 + $0x4cc] sm:$0xf]
    %v3825 = vld [vmem:[#allocation2 + $0x4d0] sm:$0xff]
    %v3826 = vld [vmem:[#allocation2 + $0x4d8] sm:$0xff]
    %v3827 = vld [vmem:[#allocation2 + $0x4e0] sm:$0xff]
    %v3828 = vld [vmem:[#allocation2 + $0x4e8] sm:$0xf]
    %v3829 = vld [vmem:[#allocation2 + $0x4ec] sm:$0xff]
    %v3830 = vld [vmem:[#allocation2 + $0x4f4] sm:$0xff]
    %v3831 = vld [vmem:[#allocation2 + $0x4fc] sm:$0xff]
    %v3832 = vld [vmem:[#allocation2 + $0x504] sm:$0xf]
    %v3833 = vld [vmem:[#allocation2 + $0x508] sm:$0xff]
    %v3834 = vld [vmem:[#allocation2 + $0x510] sm:$0xff]
    %v3835 = vld [vmem:[#allocation2 + $0x518] sm:$0xff]
    %v3836 = vld [vmem:[#allocation2 + $0x520] sm:$0xf]
    %v3837 = vld [vmem:[#allocation2 + $0x524] sm:$0xff]
    %v3838 = vld [vmem:[#allocation2 + $0x52c] sm:$0xff]
    %v3839 = vld [vmem:[#allocation2 + $0x534] sm:$0xff]
    %v3840 = vld [vmem:[#allocation2 + $0x53c] sm:$0xf]
    %v3841 = vld [vmem:[#allocation2 + $0x540] sm:$0xff]
    %v3842 = vld [vmem:[#allocation2 + $0x548] sm:$0xff]
    %v3843 = vld [vmem:[#allocation2 + $0x550] sm:$0xff]
    %v3844 = vld [vmem:[#allocation2 + $0x558] sm:$0xf]
    %v3845 = vld [vmem:[#allocation2 + $0x55c] sm:$0xff]
    %v3846 = vld [vmem:[#allocation2 + $0x564] sm:$0xff]
    %v3847 = vld [vmem:[#allocation2 + $0x56c] sm:$0xff]
    %v3848 = vld [vmem:[#allocation2 + $0x574] sm:$0xf]
    %v3849 = vld [vmem:[#allocation2 + $0x578] sm:$0xff]
    %v3850 = vld [vmem:[#allocation2 + $0x580] sm:$0xff]
    %v3851 = vld [vmem:[#allocation2 + $0x588] sm:$0xff]
    %v3852 = vld [vmem:[#allocation2 + $0x590] sm:$0xf]
    %v3853 = vld [vmem:[#allocation2 + $0x594] sm:$0xff]
    %v3854 = vld [vmem:[#allocation2 + $0x59c] sm:$0xff]
    %v3855 = vld [vmem:[#allocation2 + $0x5a4] sm:$0xff]
    %v3856 = vld [vmem:[#allocation2 + $0x5ac] sm:$0xf]
    %v3857 = vld [vmem:[#allocation2 + $0x5b0] sm:$0xff]
    %v3858 = vld [vmem:[#allocation2 + $0x5b8] sm:$0xff]
    %v3859 = vld [vmem:[#allocation2 + $0x5c0] sm:$0xff]
    %v3860 = vld [vmem:[#allocation2 + $0x5c8] sm:$0xf]
    %v3861 = vld [vmem:[#allocation2 + $0x5cc] sm:$0xff]
    %v3862 = vld [vmem:[#allocation2 + $0x5d4] sm:$0xff]
    %v3863 = vld [vmem:[#allocation2 + $0x5dc] sm:$0xff]
    %v3864 = vld [vmem:[#allocation2 + $0x5e4] sm:$0xf]
    %v3865 = vld [vmem:[#allocation2 + $0x5e8] sm:$0xff]
    %v3866 = vld [vmem:[#allocation2 + $0x5f0] sm:$0xff]
    %v3867 = vld [vmem:[#allocation2 + $0x5f8] sm:$0xff]
    %v3868 = vld [vmem:[#allocation2 + $0x600] sm:$0xf]
    %v3869 = vld [vmem:[#allocation2 + $0x604] sm:$0xff]
    %v3870 = vld [vmem:[#allocation2 + $0x60c] sm:$0xff]
    %v3871 = vld [vmem:[#allocation2 + $0x614] sm:$0xff]
    %v3872 = vld [vmem:[#allocation2 + $0x61c] sm:$0xf]
    %v3873 = vld [vmem:[#allocation2 + $0x620] sm:$0xff]
    %v3874 = vld [vmem:[#allocation2 + $0x628] sm:$0xff]
    %v3875 = vld [vmem:[#allocation2 + $0x630] sm:$0xff]
    %v3876 = vld [vmem:[#allocation2 + $0x638] sm:$0xf]
    %v3877 = vld [vmem:[#allocation2 + $0x63c] sm:$0xff]
    %v3878 = vld [vmem:[#allocation2 + $0x644] sm:$0xff]
    %v3879 = vld [vmem:[#allocation2 + $0x64c] sm:$0xff]
    %v3880 = vld [vmem:[#allocation2 + $0x654] sm:$0xf]
    %v3881 = vld [vmem:[#allocation2 + $0x658] sm:$0xff]
    %v3882 = vld [vmem:[#allocation2 + $0x660] sm:$0xff]
    %v3883 = vld [vmem:[#allocation2 + $0x668] sm:$0xff]
    %v3884 = vld [vmem:[#allocation2 + $0x670] sm:$0xf]
    %v3885 = vld [vmem:[#allocation2 + $0x674] sm:$0xff]
    %v3886 = vld [vmem:[#allocation2 + $0x67c] sm:$0xff]
    %v3887 = vld [vmem:[#allocation2 + $0x684] sm:$0xff]
    %v3888 = vld [vmem:[#allocation2 + $0x68c] sm:$0xf]
    %v3889 = vld [vmem:[#allocation2 + $0x690] sm:$0xff]
    %v3890 = vld [vmem:[#allocation2 + $0x698] sm:$0xff]
    %v3891 = vld [vmem:[#allocation2 + $0x6a0] sm:$0xff]
    %v3892 = vld [vmem:[#allocation2 + $0x6a8] sm:$0xf]
    %v3893 = vld [vmem:[#allocation2 + $0x6ac] sm:$0xff]
    %v3894 = vld [vmem:[#allocation2 + $0x6b4] sm:$0xff]
    %v3895 = vld [vmem:[#allocation2 + $0x6bc] sm:$0xff]
    %v3896 = vld [vmem:[#allocation2 + $0x6c4] sm:$0xf]
    %v3897 = vld [vmem:[#allocation2 + $0x6c8] sm:$0xff]
    %v3898 = vld [vmem:[#allocation2 + $0x6d0] sm:$0xff]
    %v3899 = vld [vmem:[#allocation2 + $0x6d8] sm:$0xff]
    %v3900 = vld [vmem:[#allocation2 + $0x6e0] sm:$0xf]
    %v3901 = vld [vmem:[#allocation2 + $0x6e4] sm:$0xff]
    %v3902 = vld [vmem:[#allocation2 + $0x6ec] sm:$0xff]
    %v3903 = vld [vmem:[#allocation2 + $0x6f4] sm:$0xff]
    %v3904 = vld [vmem:[#allocation2 + $0x6fc] sm:$0xf]
    %v3905 = vld [vmem:[#allocation2 + $0x700] sm:$0xff]
    %v3906 = vld [vmem:[#allocation2 + $0x708] sm:$0xff]
    %v3907 = vld [vmem:[#allocation2 + $0x710] sm:$0xff]
    %v3908 = vld [vmem:[#allocation2 + $0x718] sm:$0xf]
    %v3909 = vld [vmem:[#allocation2 + $0x71c] sm:$0xff]
    %v3910 = vld [vmem:[#allocation2 + $0x724] sm:$0xff]
    %v3911 = vld [vmem:[#allocation2 + $0x72c] sm:$0xff]
    %v3912 = vld [vmem:[#allocation2 + $0x734] sm:$0xf]
    %v3913 = vld [vmem:[#allocation2 + $0x738] sm:$0xff]
    %v3914 = vld [vmem:[#allocation2 + $0x740] sm:$0xff]
    %v3915 = vld [vmem:[#allocation2 + $0x748] sm:$0xff]
    %v3916 = vld [vmem:[#allocation2 + $0x750] sm:$0xf]
    %v3917 = vld [vmem:[#allocation2 + $0x754] sm:$0xff]
    %v3918 = vld [vmem:[#allocation2 + $0x75c] sm:$0xff]
    %v3919 = vld [vmem:[#allocation2 + $0x764] sm:$0xff]
    %v3920 = vld [vmem:[#allocation2 + $0x76c] sm:$0xf]
    %v3921 = vld [vmem:[#allocation2 + $0x770] sm:$0xff]
    %v3922 = vld [vmem:[#allocation2 + $0x778] sm:$0xff]
    %v3923 = vld [vmem:[#allocation2 + $0x780] sm:$0xff]
    %v3924 = vld [vmem:[#allocation2 + $0x788] sm:$0xf]
    %v3925 = vld [vmem:[#allocation2 + $0x78c] sm:$0xff]
    %v3926 = vld [vmem:[#allocation2 + $0x794] sm:$0xff]
    %v3927 = vld [vmem:[#allocation2 + $0x79c] sm:$0xff]
    %v3928 = vld [vmem:[#allocation2 + $0x7a4] sm:$0xf]
    %v3929 = vld [vmem:[#allocation2 + $0x7a8] sm:$0xff]
    %v3930 = vld [vmem:[#allocation2 + $0x7b0] sm:$0xff]
    %v3931 = vld [vmem:[#allocation2 + $0x7b8] sm:$0xff]
    %v3932 = vld [vmem:[#allocation2 + $0x7c0] sm:$0xf]
    %v3933 = vld [vmem:[#allocation2 + $0x7c4] sm:$0xff]
    %v3934 = vld [vmem:[#allocation2 + $0x7cc] sm:$0xff]
    %v3935 = vld [vmem:[#allocation2 + $0x7d4] sm:$0xff]
    %v3936 = vld [vmem:[#allocation2 + $0x7dc] sm:$0xf]
    %v3937 = vld [vmem:[#allocation2 + $0x7e0] sm:$0xff]
    %v3938 = vld [vmem:[#allocation2 + $0x7e8] sm:$0xff]
    %v3939 = vld [vmem:[#allocation2 + $0x7f0] sm:$0xff]
    %v3940 = vld [vmem:[#allocation2 + $0x7f8] sm:$0xf]
    %v3941 = vld [vmem:[#allocation2 + $0x7fc] sm:$0xff]
    %v3942 = vld [vmem:[#allocation2 + $0x804] sm:$0xff]
    %v3943 = vld [vmem:[#allocation2 + $0x80c] sm:$0xff]
    %v3944 = vld [vmem:[#allocation2 + $0x814] sm:$0xf]
    %v3945 = vld [vmem:[#allocation2 + $0x818] sm:$0xff]
    %v3946 = vld [vmem:[#allocation2 + $0x820] sm:$0xff]
    %v3947 = vld [vmem:[#allocation2 + $0x828] sm:$0xff]
    %v3948 = vld [vmem:[#allocation2 + $0x830] sm:$0xf]
    %v3949 = vld [vmem:[#allocation2 + $0x834] sm:$0xff]
    %v3950 = vld [vmem:[#allocation2 + $0x83c] sm:$0xff]
    %v3951 = vld [vmem:[#allocation2 + $0x844] sm:$0xff]
    %v3952 = vld [vmem:[#allocation2 + $0x84c] sm:$0xf]
    %v3953 = vld [vmem:[#allocation2 + $0x850] sm:$0xff]
    %v3954 = vld [vmem:[#allocation2 + $0x858] sm:$0xff]
    %v3955 = vld [vmem:[#allocation2 + $0x860] sm:$0xff]
    %v3956 = vld [vmem:[#allocation2 + $0x868] sm:$0xf]
    %v3957 = vld [vmem:[#allocation2 + $0x86c] sm:$0xff]
    %v3958 = vld [vmem:[#allocation2 + $0x874] sm:$0xff]
    %v3959 = vld [vmem:[#allocation2 + $0x87c] sm:$0xff]
    %v3960 = vld [vmem:[#allocation2 + $0x884] sm:$0xf]
    %v3961 = vld [vmem:[#allocation2 + $0x888] sm:$0xff]
    %v3962 = vld [vmem:[#allocation2 + $0x890] sm:$0xff]
    %v3963 = vld [vmem:[#allocation2 + $0x898] sm:$0xff]
    %v3964 = vld [vmem:[#allocation2 + $0x8a0] sm:$0xf]
    %v3965 = vld [vmem:[#allocation2 + $0x8a4] sm:$0xff]
    %v3966 = vld [vmem:[#allocation2 + $0x8ac] sm:$0xff]
    %v3967 = vld [vmem:[#allocation2 + $0x8b4] sm:$0xff]
    %v3968 = vld [vmem:[#allocation2 + $0x8bc] sm:$0xf]
    %v3969 = vld [vmem:[#allocation2 + $0x8c0] sm:$0xff]
    %v3970 = vld [vmem:[#allocation2 + $0x8c8] sm:$0xff]
    %v3971 = vld [vmem:[#allocation2 + $0x8d0] sm:$0xff]
    %v3972 = vld [vmem:[#allocation2 + $0x8d8] sm:$0xf]
    %v3973 = vld [vmem:[#allocation2 + $0x8dc] sm:$0xff]
    %v3974 = vld [vmem:[#allocation2 + $0x8e4] sm:$0xff]
    %v3975 = vld [vmem:[#allocation2 + $0x8ec] sm:$0xff]
    %v3976 = vld [vmem:[#allocation2 + $0x8f4] sm:$0xf]
    %v3977 = vld [vmem:[#allocation2 + $0x8f8] sm:$0xff]
    %v3978 = vld [vmem:[#allocation2 + $0x900] sm:$0xff]
    %v3979 = vld [vmem:[#allocation2 + $0x908] sm:$0xff]
    %v3980 = vld [vmem:[#allocation2 + $0x910] sm:$0xf]
    %v3981 = vld [vmem:[#allocation2 + $0x914] sm:$0xff]
    %v3982 = vld [vmem:[#allocation2 + $0x91c] sm:$0xff]
    %v3983 = vld [vmem:[#allocation2 + $0x924] sm:$0xff]
    %v3984 = vld [vmem:[#allocation2 + $0x92c] sm:$0xf]
    %v3985 = vld [vmem:[#allocation2 + $0x930] sm:$0xff]
    %v3986 = vld [vmem:[#allocation2 + $0x938] sm:$0xff]
    %v3987 = vld [vmem:[#allocation2 + $0x940] sm:$0xff]
    %v3988 = vld [vmem:[#allocation2 + $0x948] sm:$0xf]
    %v3989 = vld [vmem:[#allocation2 + $0x94c] sm:$0xff]
    %v3990 = vld [vmem:[#allocation2 + $0x954] sm:$0xff]
    %v3991 = vld [vmem:[#allocation2 + $0x95c] sm:$0xff]
    %v3992 = vld [vmem:[#allocation2 + $0x964] sm:$0xf]
    %v3993 = vld [vmem:[#allocation2 + $0x968] sm:$0xff]
    %v3994 = vld [vmem:[#allocation2 + $0x970] sm:$0xff]
    %v3995 = vld [vmem:[#allocation2 + $0x978] sm:$0xff]
    %v3996 = vld [vmem:[#allocation2 + $0x980] sm:$0xf]
    %v3997 = vld [vmem:[#allocation2 + $0x984] sm:$0xff]
    %v3998 = vld [vmem:[#allocation2 + $0x98c] sm:$0xff]
    %v3999 = vld [vmem:[#allocation2 + $0x994] sm:$0xff]
    %v4000 = vld [vmem:[#allocation2 + $0x99c] sm:$0xf]
    %v4001 = vld [vmem:[#allocation2 + $0x9a0] sm:$0xff]
    %v4002 = vld [vmem:[#allocation2 + $0x9a8] sm:$0xff]
    %v4003 = vld [vmem:[#allocation2 + $0x9b0] sm:$0xff]
    %v4004 = vld [vmem:[#allocation2 + $0x9b8] sm:$0xf]
    %v4005 = vld [vmem:[#allocation2 + $0x9bc] sm:$0xff]
    %v4006 = vld [vmem:[#allocation2 + $0x9c4] sm:$0xff]
    %v4007 = vld [vmem:[#allocation2 + $0x9cc] sm:$0xff]
    %v4008 = vld [vmem:[#allocation2 + $0x9d4] sm:$0xf]
    %v4009 = vld [vmem:[#allocation2 + $0x9d8] sm:$0xff]
    %v4010 = vld [vmem:[#allocation2 + $0x9e0] sm:$0xff]
    %v4011 = vld [vmem:[#allocation2 + $0x9e8] sm:$0xff]
    %v4012 = vld [vmem:[#allocation2 + $0x9f0] sm:$0xf]
    %v4013 = vld [vmem:[#allocation2 + $0x9f4] sm:$0xff]
    %v4014 = vld [vmem:[#allocation2 + $0x9fc] sm:$0xff]
    %v4015 = vld [vmem:[#allocation2 + $0xa04] sm:$0xff]
    %v4016 = vld [vmem:[#allocation2 + $0xa0c] sm:$0xf]
    %v4017 = vld [vmem:[#allocation2 + $0xa10] sm:$0xff]
    %v4018 = vld [vmem:[#allocation2 + $0xa18] sm:$0xff]
    %v4019 = vld [vmem:[#allocation2 + $0xa20] sm:$0xff]
    %v4020 = vld [vmem:[#allocation2 + $0xa28] sm:$0xf]
    %v4021 = vld [vmem:[#allocation2 + $0xa2c] sm:$0xff]
    %v4022 = vld [vmem:[#allocation2 + $0xa34] sm:$0xff]
    %v4023 = vld [vmem:[#allocation2 + $0xa3c] sm:$0xff]
    %v4024 = vld [vmem:[#allocation2 + $0xa44] sm:$0xf]
    %v4025 = vld [vmem:[#allocation2 + $0xa48] sm:$0xff]
    %v4026 = vld [vmem:[#allocation2 + $0xa50] sm:$0xff]
    %v4027 = vld [vmem:[#allocation2 + $0xa58] sm:$0xff]
    %v4028 = vld [vmem:[#allocation2 + $0xa60] sm:$0xf]
    %v4029 = vld [vmem:[#allocation2 + $0xa64] sm:$0xff]
    %v4030 = vld [vmem:[#allocation2 + $0xa6c] sm:$0xff]
    %v4031 = vld [vmem:[#allocation2 + $0xa74] sm:$0xff]
    %v4032 = vld [vmem:[#allocation2 + $0xa7c] sm:$0xf]
    %v4033 = vld [vmem:[#allocation2 + $0xa80] sm:$0xff]
    %v4034 = vld [vmem:[#allocation2 + $0xa88] sm:$0xff]
    %v4035 = vld [vmem:[#allocation2 + $0xa90] sm:$0xff]
    %v4036 = vld [vmem:[#allocation2 + $0xa98] sm:$0xf]
    %v4037 = vld [vmem:[#allocation2 + $0xa9c] sm:$0xff]
    %v4038 = vld [vmem:[#allocation2 + $0xaa4] sm:$0xff]
    %v4039 = vld [vmem:[#allocation2 + $0xaac] sm:$0xff]
    %v4040 = vld [vmem:[#allocation2 + $0xab4] sm:$0xf]
    %v4041 = vld [vmem:[#allocation2 + $0xab8] sm:$0xff]
    %v4042 = vld [vmem:[#allocation2 + $0xac0] sm:$0xff]
    %v4043 = vld [vmem:[#allocation2 + $0xac8] sm:$0xff]
    %v4044 = vld [vmem:[#allocation2 + $0xad0] sm:$0xf]
    %v4045 = vld [vmem:[#allocation2 + $0xad4] sm:$0xff]
    %v4046 = vld [vmem:[#allocation2 + $0xadc] sm:$0xff]
    %v4047 = vld [vmem:[#allocation2 + $0xae4] sm:$0xff]
    %v4048 = vld [vmem:[#allocation2 + $0xaec] sm:$0xf]
    %v4049 = vld [vmem:[#allocation2 + $0xaf0] sm:$0xff]
    %v4050 = vld [vmem:[#allocation2 + $0xaf8] sm:$0xff]
    %v4051 = vld [vmem:[#allocation2 + $0xb00] sm:$0xff]
    %v4052 = vld [vmem:[#allocation2 + $0xb08] sm:$0xf]
    %v4053 = vld [vmem:[#allocation2 + $0xb0c] sm:$0xff]
    %v4054 = vld [vmem:[#allocation2 + $0xb14] sm:$0xff]
    %v4055 = vld [vmem:[#allocation2 + $0xb1c] sm:$0xff]
    %v4056 = vld [vmem:[#allocation2 + $0xb24] sm:$0xf]
    %v4057 = vld [vmem:[#allocation2 + $0xb28] sm:$0xff]
    %v4058 = vld [vmem:[#allocation2 + $0xb30] sm:$0xff]
    %v4059 = vld [vmem:[#allocation2 + $0xb38] sm:$0xff]
    %v4060 = vld [vmem:[#allocation2 + $0xb40] sm:$0xf]
    %v4061 = vld [vmem:[#allocation2 + $0xb44] sm:$0xff]
    %v4062 = vld [vmem:[#allocation2 + $0xb4c] sm:$0xff]
    %v4063 = vld [vmem:[#allocation2 + $0xb54] sm:$0xff]
    %v4064 = vld [vmem:[#allocation2 + $0xb5c] sm:$0xf]
    %v4065 = vld [vmem:[#allocation2 + $0xb60] sm:$0xff]
    %v4066 = vld [vmem:[#allocation2 + $0xb68] sm:$0xff]
    %v4067 = vld [vmem:[#allocation2 + $0xb70] sm:$0xff]
    %v4068 = vld [vmem:[#allocation2 + $0xb78] sm:$0xf]
    %v4069 = vld [vmem:[#allocation2 + $0xb7c] sm:$0xff]
    %v4070 = vld [vmem:[#allocation2 + $0xb84] sm:$0xff]
    %v4071 = vld [vmem:[#allocation2 + $0xb8c] sm:$0xff]
    %v4072 = vld [vmem:[#allocation2 + $0xb94] sm:$0xf]
    %v4073 = vld [vmem:[#allocation2 + $0xb98] sm:$0xff]
    %v4074 = vld [vmem:[#allocation2 + $0xba0] sm:$0xff]
    %v4075 = vld [vmem:[#allocation2 + $0xba8] sm:$0xff]
    %v4076 = vld [vmem:[#allocation2 + $0xbb0] sm:$0xf]
    %v4077 = vld [vmem:[#allocation2 + $0xbb4] sm:$0xff]
    %v4078 = vld [vmem:[#allocation2 + $0xbbc] sm:$0xff]
    %v4079 = vld [vmem:[#allocation2 + $0xbc4] sm:$0xff]
    %v4080 = vld [vmem:[#allocation2 + $0xbcc] sm:$0xf]
    %v4081 = vld [vmem:[#allocation2 + $0xbd0] sm:$0xff]
    %v4082 = vld [vmem:[#allocation2 + $0xbd8] sm:$0xff]
    %v4083 = vld [vmem:[#allocation2 + $0xbe0] sm:$0xff]
    %v4084 = vld [vmem:[#allocation2 + $0xbe8] sm:$0xf]
    %v4085 = vld [vmem:[#allocation2 + $0xbec] sm:$0xff]
    %v4086 = vld [vmem:[#allocation2 + $0xbf4] sm:$0xff]
    %v4087 = vld [vmem:[#allocation2 + $0xbfc] sm:$0xff]
    %v4088 = vld [vmem:[#allocation2 + $0xc04] sm:$0xf]
    %v4089 = vld [vmem:[#allocation2 + $0xc08] sm:$0xff]
    %v4090 = vld [vmem:[#allocation2 + $0xc10] sm:$0xff]
    %v4091 = vld [vmem:[#allocation2 + $0xc18] sm:$0xff]
    %v4092 = vld [vmem:[#allocation2 + $0xc20] sm:$0xf]
    %v4093 = vld [vmem:[#allocation2 + $0xc24] sm:$0xff]
    %v4094 = vld [vmem:[#allocation2 + $0xc2c] sm:$0xff]
    %v4095 = vld [vmem:[#allocation2 + $0xc34] sm:$0xff]
    %v4096 = vld [vmem:[#allocation2 + $0xc3c] sm:$0xf]
    %v4545 = vunpack.c.l.b16 %v3649
    %v4546 = vunpack.c.h.b16 %v3649
    %v4547 = vunpack.c.l.b16 %v3650
    %v4548 = vunpack.c.h.b16 %v3650
    %v4549 = vunpack.c.l.b16 %v3651
    %v4550 = vunpack.c.h.b16 %v3651
    %v4551 = vunpack.c.l.b16 %v3652
    %v4552 = vunpack.c.l.b16 %v3653
    %v4553 = vunpack.c.h.b16 %v3653
    %v4554 = vunpack.c.l.b16 %v3654
    %v4555 = vunpack.c.h.b16 %v3654
    %v4556 = vunpack.c.l.b16 %v3655
    %v4557 = vunpack.c.h.b16 %v3655
    %v4558 = vunpack.c.l.b16 %v3656
    %v4559 = vunpack.c.l.b16 %v3657
    %v4560 = vunpack.c.h.b16 %v3657
    %v4561 = vunpack.c.l.b16 %v3658
    %v4562 = vunpack.c.h.b16 %v3658
    %v4563 = vunpack.c.l.b16 %v3659
    %v4564 = vunpack.c.h.b16 %v3659
    %v4565 = vunpack.c.l.b16 %v3660
    %v4566 = vunpack.c.l.b16 %v3661
    %v4567 = vunpack.c.h.b16 %v3661
    %v4568 = vunpack.c.l.b16 %v3662
    %v4569 = vunpack.c.h.b16 %v3662
    %v4570 = vunpack.c.l.b16 %v3663
    %v4571 = vunpack.c.h.b16 %v3663
    %v4572 = vunpack.c.l.b16 %v3664
    %v4573 = vunpack.c.l.b16 %v3665
    %v4574 = vunpack.c.h.b16 %v3665
    %v4575 = vunpack.c.l.b16 %v3666
    %v4576 = vunpack.c.h.b16 %v3666
    %v4577 = vunpack.c.l.b16 %v3667
    %v4578 = vunpack.c.h.b16 %v3667
    %v4579 = vunpack.c.l.b16 %v3668
    %v4580 = vunpack.c.l.b16 %v3669
    %v4581 = vunpack.c.h.b16 %v3669
    %v4582 = vunpack.c.l.b16 %v3670
    %v4583 = vunpack.c.h.b16 %v3670
    %v4584 = vunpack.c.l.b16 %v3671
    %v4585 = vunpack.c.h.b16 %v3671
    %v4586 = vunpack.c.l.b16 %v3672
    %v4587 = vunpack.c.l.b16 %v3673
    %v4588 = vunpack.c.h.b16 %v3673
    %v4589 = vunpack.c.l.b16 %v3674
    %v4590 = vunpack.c.h.b16 %v3674
    %v4591 = vunpack.c.l.b16 %v3675
    %v4592 = vunpack.c.h.b16 %v3675
    %v4593 = vunpack.c.l.b16 %v3676
    %v4594 = vunpack.c.l.b16 %v3677
    %v4595 = vunpack.c.h.b16 %v3677
    %v4596 = vunpack.c.l.b16 %v3678
    %v4597 = vunpack.c.h.b16 %v3678
    %v4598 = vunpack.c.l.b16 %v3679
    %v4599 = vunpack.c.h.b16 %v3679
    %v4600 = vunpack.c.l.b16 %v3680
    %v4601 = vunpack.c.l.b16 %v3681
    %v4602 = vunpack.c.h.b16 %v3681
    %v4603 = vunpack.c.l.b16 %v3682
    %v4604 = vunpack.c.h.b16 %v3682
    %v4605 = vunpack.c.l.b16 %v3683
    %v4606 = vunpack.c.h.b16 %v3683
    %v4607 = vunpack.c.l.b16 %v3684
    %v4608 = vunpack.c.l.b16 %v3685
    %v4609 = vunpack.c.h.b16 %v3685
    %v4610 = vunpack.c.l.b16 %v3686
    %v4611 = vunpack.c.h.b16 %v3686
    %v4612 = vunpack.c.l.b16 %v3687
    %v4613 = vunpack.c.h.b16 %v3687
    %v4614 = vunpack.c.l.b16 %v3688
    %v4615 = vunpack.c.l.b16 %v3689
    %v4616 = vunpack.c.h.b16 %v3689
    %v4617 = vunpack.c.l.b16 %v3690
    %v4618 = vunpack.c.h.b16 %v3690
    %v4619 = vunpack.c.l.b16 %v3691
    %v4620 = vunpack.c.h.b16 %v3691
    %v4621 = vunpack.c.l.b16 %v3692
    %v4622 = vunpack.c.l.b16 %v3693
    %v4623 = vunpack.c.h.b16 %v3693
    %v4624 = vunpack.c.l.b16 %v3694
    %v4625 = vunpack.c.h.b16 %v3694
    %v4626 = vunpack.c.l.b16 %v3695
    %v4627 = vunpack.c.h.b16 %v3695
    %v4628 = vunpack.c.l.b16 %v3696
    %v4629 = vunpack.c.l.b16 %v3697
    %v4630 = vunpack.c.h.b16 %v3697
    %v4631 = vunpack.c.l.b16 %v3698
    %v4632 = vunpack.c.h.b16 %v3698
    %v4633 = vunpack.c.l.b16 %v3699
    %v4634 = vunpack.c.h.b16 %v3699
    %v4635 = vunpack.c.l.b16 %v3700
    %v4636 = vunpack.c.l.b16 %v3701
    %v4637 = vunpack.c.h.b16 %v3701
    %v4638 = vunpack.c.l.b16 %v3702
    %v4639 = vunpack.c.h.b16 %v3702
    %v4640 = vunpack.c.l.b16 %v3703
    %v4641 = vunpack.c.h.b16 %v3703
    %v4642 = vunpack.c.l.b16 %v3704
    %v4643 = vunpack.c.l.b16 %v3705
    %v4644 = vunpack.c.h.b16 %v3705
    %v4645 = vunpack.c.l.b16 %v3706
    %v4646 = vunpack.c.h.b16 %v3706
    %v4647 = vunpack.c.l.b16 %v3707
    %v4648 = vunpack.c.h.b16 %v3707
    %v4649 = vunpack.c.l.b16 %v3708
    %v4650 = vunpack.c.l.b16 %v3709
    %v4651 = vunpack.c.h.b16 %v3709
    %v4652 = vunpack.c.l.b16 %v3710
    %v4653 = vunpack.c.h.b16 %v3710
    %v4654 = vunpack.c.l.b16 %v3711
    %v4655 = vunpack.c.h.b16 %v3711
    %v4656 = vunpack.c.l.b16 %v3712
    %v4657 = vunpack.c.l.b16 %v3713
    %v4658 = vunpack.c.h.b16 %v3713
    %v4659 = vunpack.c.l.b16 %v3714
    %v4660 = vunpack.c.h.b16 %v3714
    %v4661 = vunpack.c.l.b16 %v3715
    %v4662 = vunpack.c.h.b16 %v3715
    %v4663 = vunpack.c.l.b16 %v3716
    %v4664 = vunpack.c.l.b16 %v3717
    %v4665 = vunpack.c.h.b16 %v3717
    %v4666 = vunpack.c.l.b16 %v3718
    %v4667 = vunpack.c.h.b16 %v3718
    %v4668 = vunpack.c.l.b16 %v3719
    %v4669 = vunpack.c.h.b16 %v3719
    %v4670 = vunpack.c.l.b16 %v3720
    %v4671 = vunpack.c.l.b16 %v3721
    %v4672 = vunpack.c.h.b16 %v3721
    %v4673 = vunpack.c.l.b16 %v3722
    %v4674 = vunpack.c.h.b16 %v3722
    %v4675 = vunpack.c.l.b16 %v3723
    %v4676 = vunpack.c.h.b16 %v3723
    %v4677 = vunpack.c.l.b16 %v3724
    %v4678 = vunpack.c.l.b16 %v3725
    %v4679 = vunpack.c.h.b16 %v3725
    %v4680 = vunpack.c.l.b16 %v3726
    %v4681 = vunpack.c.h.b16 %v3726
    %v4682 = vunpack.c.l.b16 %v3727
    %v4683 = vunpack.c.h.b16 %v3727
    %v4684 = vunpack.c.l.b16 %v3728
    %v4685 = vunpack.c.l.b16 %v3729
    %v4686 = vunpack.c.h.b16 %v3729
    %v4687 = vunpack.c.l.b16 %v3730
    %v4688 = vunpack.c.h.b16 %v3730
    %v4689 = vunpack.c.l.b16 %v3731
    %v4690 = vunpack.c.h.b16 %v3731
    %v4691 = vunpack.c.l.b16 %v3732
    %v4692 = vunpack.c.l.b16 %v3733
    %v4693 = vunpack.c.h.b16 %v3733
    %v4694 = vunpack.c.l.b16 %v3734
    %v4695 = vunpack.c.h.b16 %v3734
    %v4696 = vunpack.c.l.b16 %v3735
    %v4697 = vunpack.c.h.b16 %v3735
    %v4698 = vunpack.c.l.b16 %v3736
    %v4699 = vunpack.c.l.b16 %v3737
    %v4700 = vunpack.c.h.b16 %v3737
    %v4701 = vunpack.c.l.b16 %v3738
    %v4702 = vunpack.c.h.b16 %v3738
    %v4703 = vunpack.c.l.b16 %v3739
    %v4704 = vunpack.c.h.b16 %v3739
    %v4705 = vunpack.c.l.b16 %v3740
    %v4706 = vunpack.c.l.b16 %v3741
    %v4707 = vunpack.c.h.b16 %v3741
    %v4708 = vunpack.c.l.b16 %v3742
    %v4709 = vunpack.c.h.b16 %v3742
    %v4710 = vunpack.c.l.b16 %v3743
    %v4711 = vunpack.c.h.b16 %v3743
    %v4712 = vunpack.c.l.b16 %v3744
    %v4713 = vunpack.c.l.b16 %v3745
    %v4714 = vunpack.c.h.b16 %v3745
    %v4715 = vunpack.c.l.b16 %v3746
    %v4716 = vunpack.c.h.b16 %v3746
    %v4717 = vunpack.c.l.b16 %v3747
    %v4718 = vunpack.c.h.b16 %v3747
    %v4719 = vunpack.c.l.b16 %v3748
    %v4720 = vunpack.c.l.b16 %v3749
    %v4721 = vunpack.c.h.b16 %v3749
    %v4722 = vunpack.c.l.b16 %v3750
    %v4723 = vunpack.c.h.b16 %v3750
    %v4724 = vunpack.c.l.b16 %v3751
    %v4725 = vunpack.c.h.b16 %v3751
    %v4726 = vunpack.c.l.b16 %v3752
    %v4727 = vunpack.c.l.b16 %v3753
    %v4728 = vunpack.c.h.b16 %v3753
    %v4729 = vunpack.c.l.b16 %v3754
    %v4730 = vunpack.c.h.b16 %v3754
    %v4731 = vunpack.c.l.b16 %v3755
    %v4732 = vunpack.c.h.b16 %v3755
    %v4733 = vunpack.c.l.b16 %v3756
    %v4734 = vunpack.c.l.b16 %v3757
    %v4735 = vunpack.c.h.b16 %v3757
    %v4736 = vunpack.c.l.b16 %v3758
    %v4737 = vunpack.c.h.b16 %v3758
    %v4738 = vunpack.c.l.b16 %v3759
    %v4739 = vunpack.c.h.b16 %v3759
    %v4740 = vunpack.c.l.b16 %v3760
    %v4741 = vunpack.c.l.b16 %v3761
    %v4742 = vunpack.c.h.b16 %v3761
    %v4743 = vunpack.c.l.b16 %v3762
    %v4744 = vunpack.c.h.b16 %v3762
    %v4745 = vunpack.c.l.b16 %v3763
    %v4746 = vunpack.c.h.b16 %v3763
    %v4747 = vunpack.c.l.b16 %v3764
    %v4748 = vunpack.c.l.b16 %v3765
    %v4749 = vunpack.c.h.b16 %v3765
    %v4750 = vunpack.c.l.b16 %v3766
    %v4751 = vunpack.c.h.b16 %v3766
    %v4752 = vunpack.c.l.b16 %v3767
    %v4753 = vunpack.c.h.b16 %v3767
    %v4754 = vunpack.c.l.b16 %v3768
    %v4755 = vunpack.c.l.b16 %v3769
    %v4756 = vunpack.c.h.b16 %v3769
    %v4757 = vunpack.c.l.b16 %v3770
    %v4758 = vunpack.c.h.b16 %v3770
    %v4759 = vunpack.c.l.b16 %v3771
    %v4760 = vunpack.c.h.b16 %v3771
    %v4761 = vunpack.c.l.b16 %v3772
    %v4762 = vunpack.c.l.b16 %v3773
    %v4763 = vunpack.c.h.b16 %v3773
    %v4764 = vunpack.c.l.b16 %v3774
    %v4765 = vunpack.c.h.b16 %v3774
    %v4766 = vunpack.c.l.b16 %v3775
    %v4767 = vunpack.c.h.b16 %v3775
    %v4768 = vunpack.c.l.b16 %v3776
    %v4769 = vunpack.c.l.b16 %v3777
    %v4770 = vunpack.c.h.b16 %v3777
    %v4771 = vunpack.c.l.b16 %v3778
    %v4772 = vunpack.c.h.b16 %v3778
    %v4773 = vunpack.c.l.b16 %v3779
    %v4774 = vunpack.c.h.b16 %v3779
    %v4775 = vunpack.c.l.b16 %v3780
    %v4776 = vunpack.c.l.b16 %v3781
    %v4777 = vunpack.c.h.b16 %v3781
    %v4778 = vunpack.c.l.b16 %v3782
    %v4779 = vunpack.c.h.b16 %v3782
    %v4780 = vunpack.c.l.b16 %v3783
    %v4781 = vunpack.c.h.b16 %v3783
    %v4782 = vunpack.c.l.b16 %v3784
    %v4783 = vunpack.c.l.b16 %v3785
    %v4784 = vunpack.c.h.b16 %v3785
    %v4785 = vunpack.c.l.b16 %v3786
    %v4786 = vunpack.c.h.b16 %v3786
    %v4787 = vunpack.c.l.b16 %v3787
    %v4788 = vunpack.c.h.b16 %v3787
    %v4789 = vunpack.c.l.b16 %v3788
    %v4790 = vunpack.c.l.b16 %v3789
    %v4791 = vunpack.c.h.b16 %v3789
    %v4792 = vunpack.c.l.b16 %v3790
    %v4793 = vunpack.c.h.b16 %v3790
    %v4794 = vunpack.c.l.b16 %v3791
    %v4795 = vunpack.c.h.b16 %v3791
    %v4796 = vunpack.c.l.b16 %v3792
    %v4797 = vunpack.c.l.b16 %v3793
    %v4798 = vunpack.c.h.b16 %v3793
    %v4799 = vunpack.c.l.b16 %v3794
    %v4800 = vunpack.c.h.b16 %v3794
    %v4801 = vunpack.c.l.b16 %v3795
    %v4802 = vunpack.c.h.b16 %v3795
    %v4803 = vunpack.c.l.b16 %v3796
    %v4804 = vunpack.c.l.b16 %v3797
    %v4805 = vunpack.c.h.b16 %v3797
    %v4806 = vunpack.c.l.b16 %v3798
    %v4807 = vunpack.c.h.b16 %v3798
    %v4808 = vunpack.c.l.b16 %v3799
    %v4809 = vunpack.c.h.b16 %v3799
    %v4810 = vunpack.c.l.b16 %v3800
    %v4811 = vunpack.c.l.b16 %v3801
    %v4812 = vunpack.c.h.b16 %v3801
    %v4813 = vunpack.c.l.b16 %v3802
    %v4814 = vunpack.c.h.b16 %v3802
    %v4815 = vunpack.c.l.b16 %v3803
    %v4816 = vunpack.c.h.b16 %v3803
    %v4817 = vunpack.c.l.b16 %v3804
    %v4818 = vunpack.c.l.b16 %v3805
    %v4819 = vunpack.c.h.b16 %v3805
    %v4820 = vunpack.c.l.b16 %v3806
    %v4821 = vunpack.c.h.b16 %v3806
    %v4822 = vunpack.c.l.b16 %v3807
    %v4823 = vunpack.c.h.b16 %v3807
    %v4824 = vunpack.c.l.b16 %v3808
    %v4825 = vunpack.c.l.b16 %v3809
    %v4826 = vunpack.c.h.b16 %v3809
    %v4827 = vunpack.c.l.b16 %v3810
    %v4828 = vunpack.c.h.b16 %v3810
    %v4829 = vunpack.c.l.b16 %v3811
    %v4830 = vunpack.c.h.b16 %v3811
    %v4831 = vunpack.c.l.b16 %v3812
    %v4832 = vunpack.c.l.b16 %v3813
    %v4833 = vunpack.c.h.b16 %v3813
    %v4834 = vunpack.c.l.b16 %v3814
    %v4835 = vunpack.c.h.b16 %v3814
    %v4836 = vunpack.c.l.b16 %v3815
    %v4837 = vunpack.c.h.b16 %v3815
    %v4838 = vunpack.c.l.b16 %v3816
    %v4839 = vunpack.c.l.b16 %v3817
    %v4840 = vunpack.c.h.b16 %v3817
    %v4841 = vunpack.c.l.b16 %v3818
    %v4842 = vunpack.c.h.b16 %v3818
    %v4843 = vunpack.c.l.b16 %v3819
    %v4844 = vunpack.c.h.b16 %v3819
    %v4845 = vunpack.c.l.b16 %v3820
    %v4846 = vunpack.c.l.b16 %v3821
    %v4847 = vunpack.c.h.b16 %v3821
    %v4848 = vunpack.c.l.b16 %v3822
    %v4849 = vunpack.c.h.b16 %v3822
    %v4850 = vunpack.c.l.b16 %v3823
    %v4851 = vunpack.c.h.b16 %v3823
    %v4852 = vunpack.c.l.b16 %v3824
    %v4853 = vunpack.c.l.b16 %v3825
    %v4854 = vunpack.c.h.b16 %v3825
    %v4855 = vunpack.c.l.b16 %v3826
    %v4856 = vunpack.c.h.b16 %v3826
    %v4857 = vunpack.c.l.b16 %v3827
    %v4858 = vunpack.c.h.b16 %v3827
    %v4859 = vunpack.c.l.b16 %v3828
    %v4860 = vunpack.c.l.b16 %v3829
    %v4861 = vunpack.c.h.b16 %v3829
    %v4862 = vunpack.c.l.b16 %v3830
    %v4863 = vunpack.c.h.b16 %v3830
    %v4864 = vunpack.c.l.b16 %v3831
    %v4865 = vunpack.c.h.b16 %v3831
    %v4866 = vunpack.c.l.b16 %v3832
    %v4867 = vunpack.c.l.b16 %v3833
    %v4868 = vunpack.c.h.b16 %v3833
    %v4869 = vunpack.c.l.b16 %v3834
    %v4870 = vunpack.c.h.b16 %v3834
    %v4871 = vunpack.c.l.b16 %v3835
    %v4872 = vunpack.c.h.b16 %v3835
    %v4873 = vunpack.c.l.b16 %v3836
    %v4874 = vunpack.c.l.b16 %v3837
    %v4875 = vunpack.c.h.b16 %v3837
    %v4876 = vunpack.c.l.b16 %v3838
    %v4877 = vunpack.c.h.b16 %v3838
    %v4878 = vunpack.c.l.b16 %v3839
    %v4879 = vunpack.c.h.b16 %v3839
    %v4880 = vunpack.c.l.b16 %v3840
    %v4881 = vunpack.c.l.b16 %v3841
    %v4882 = vunpack.c.h.b16 %v3841
    %v4883 = vunpack.c.l.b16 %v3842
    %v4884 = vunpack.c.h.b16 %v3842
    %v4885 = vunpack.c.l.b16 %v3843
    %v4886 = vunpack.c.h.b16 %v3843
    %v4887 = vunpack.c.l.b16 %v3844
    %v4888 = vunpack.c.l.b16 %v3845
    %v4889 = vunpack.c.h.b16 %v3845
    %v4890 = vunpack.c.l.b16 %v3846
    %v4891 = vunpack.c.h.b16 %v3846
    %v4892 = vunpack.c.l.b16 %v3847
    %v4893 = vunpack.c.h.b16 %v3847
    %v4894 = vunpack.c.l.b16 %v3848
    %v4895 = vunpack.c.l.b16 %v3849
    %v4896 = vunpack.c.h.b16 %v3849
    %v4897 = vunpack.c.l.b16 %v3850
    %v4898 = vunpack.c.h.b16 %v3850
    %v4899 = vunpack.c.l.b16 %v3851
    %v4900 = vunpack.c.h.b16 %v3851
    %v4901 = vunpack.c.l.b16 %v3852
    %v4902 = vunpack.c.l.b16 %v3853
    %v4903 = vunpack.c.h.b16 %v3853
    %v4904 = vunpack.c.l.b16 %v3854
    %v4905 = vunpack.c.h.b16 %v3854
    %v4906 = vunpack.c.l.b16 %v3855
    %v4907 = vunpack.c.h.b16 %v3855
    %v4908 = vunpack.c.l.b16 %v3856
    %v4909 = vunpack.c.l.b16 %v3857
    %v4910 = vunpack.c.h.b16 %v3857
    %v4911 = vunpack.c.l.b16 %v3858
    %v4912 = vunpack.c.h.b16 %v3858
    %v4913 = vunpack.c.l.b16 %v3859
    %v4914 = vunpack.c.h.b16 %v3859
    %v4915 = vunpack.c.l.b16 %v3860
    %v4916 = vunpack.c.l.b16 %v3861
    %v4917 = vunpack.c.h.b16 %v3861
    %v4918 = vunpack.c.l.b16 %v3862
    %v4919 = vunpack.c.h.b16 %v3862
    %v4920 = vunpack.c.l.b16 %v3863
    %v4921 = vunpack.c.h.b16 %v3863
    %v4922 = vunpack.c.l.b16 %v3864
    %v4923 = vunpack.c.l.b16 %v3865
    %v4924 = vunpack.c.h.b16 %v3865
    %v4925 = vunpack.c.l.b16 %v3866
    %v4926 = vunpack.c.h.b16 %v3866
    %v4927 = vunpack.c.l.b16 %v3867
    %v4928 = vunpack.c.h.b16 %v3867
    %v4929 = vunpack.c.l.b16 %v3868
    %v4930 = vunpack.c.l.b16 %v3869
    %v4931 = vunpack.c.h.b16 %v3869
    %v4932 = vunpack.c.l.b16 %v3870
    %v4933 = vunpack.c.h.b16 %v3870
    %v4934 = vunpack.c.l.b16 %v3871
    %v4935 = vunpack.c.h.b16 %v3871
    %v4936 = vunpack.c.l.b16 %v3872
    %v4937 = vunpack.c.l.b16 %v3873
    %v4938 = vunpack.c.h.b16 %v3873
    %v4939 = vunpack.c.l.b16 %v3874
    %v4940 = vunpack.c.h.b16 %v3874
    %v4941 = vunpack.c.l.b16 %v3875
    %v4942 = vunpack.c.h.b16 %v3875
    %v4943 = vunpack.c.l.b16 %v3876
    %v4944 = vunpack.c.l.b16 %v3877
    %v4945 = vunpack.c.h.b16 %v3877
    %v4946 = vunpack.c.l.b16 %v3878
    %v4947 = vunpack.c.h.b16 %v3878
    %v4948 = vunpack.c.l.b16 %v3879
    %v4949 = vunpack.c.h.b16 %v3879
    %v4950 = vunpack.c.l.b16 %v3880
    %v4951 = vunpack.c.l.b16 %v3881
    %v4952 = vunpack.c.h.b16 %v3881
    %v4953 = vunpack.c.l.b16 %v3882
    %v4954 = vunpack.c.h.b16 %v3882
    %v4955 = vunpack.c.l.b16 %v3883
    %v4956 = vunpack.c.h.b16 %v3883
    %v4957 = vunpack.c.l.b16 %v3884
    %v4958 = vunpack.c.l.b16 %v3885
    %v4959 = vunpack.c.h.b16 %v3885
    %v4960 = vunpack.c.l.b16 %v3886
    %v4961 = vunpack.c.h.b16 %v3886
    %v4962 = vunpack.c.l.b16 %v3887
    %v4963 = vunpack.c.h.b16 %v3887
    %v4964 = vunpack.c.l.b16 %v3888
    %v4965 = vunpack.c.l.b16 %v3889
    %v4966 = vunpack.c.h.b16 %v3889
    %v4967 = vunpack.c.l.b16 %v3890
    %v4968 = vunpack.c.h.b16 %v3890
    %v4969 = vunpack.c.l.b16 %v3891
    %v4970 = vunpack.c.h.b16 %v3891
    %v4971 = vunpack.c.l.b16 %v3892
    %v4972 = vunpack.c.l.b16 %v3893
    %v4973 = vunpack.c.h.b16 %v3893
    %v4974 = vunpack.c.l.b16 %v3894
    %v4975 = vunpack.c.h.b16 %v3894
    %v4976 = vunpack.c.l.b16 %v3895
    %v4977 = vunpack.c.h.b16 %v3895
    %v4978 = vunpack.c.l.b16 %v3896
    %v4979 = vunpack.c.l.b16 %v3897
    %v4980 = vunpack.c.h.b16 %v3897
    %v4981 = vunpack.c.l.b16 %v3898
    %v4982 = vunpack.c.h.b16 %v3898
    %v4983 = vunpack.c.l.b16 %v3899
    %v4984 = vunpack.c.h.b16 %v3899
    %v4985 = vunpack.c.l.b16 %v3900
    %v4986 = vunpack.c.l.b16 %v3901
    %v4987 = vunpack.c.h.b16 %v3901
    %v4988 = vunpack.c.l.b16 %v3902
    %v4989 = vunpack.c.h.b16 %v3902
    %v4990 = vunpack.c.l.b16 %v3903
    %v4991 = vunpack.c.h.b16 %v3903
    %v4992 = vunpack.c.l.b16 %v3904
    %v4993 = vunpack.c.l.b16 %v3905
    %v4994 = vunpack.c.h.b16 %v3905
    %v4995 = vunpack.c.l.b16 %v3906
    %v4996 = vunpack.c.h.b16 %v3906
    %v4997 = vunpack.c.l.b16 %v3907
    %v4998 = vunpack.c.h.b16 %v3907
    %v4999 = vunpack.c.l.b16 %v3908
    %v5000 = vunpack.c.l.b16 %v3909
    %v5001 = vunpack.c.h.b16 %v3909
    %v5002 = vunpack.c.l.b16 %v3910
    %v5003 = vunpack.c.h.b16 %v3910
    %v5004 = vunpack.c.l.b16 %v3911
    %v5005 = vunpack.c.h.b16 %v3911
    %v5006 = vunpack.c.l.b16 %v3912
    %v5007 = vunpack.c.l.b16 %v3913
    %v5008 = vunpack.c.h.b16 %v3913
    %v5009 = vunpack.c.l.b16 %v3914
    %v5010 = vunpack.c.h.b16 %v3914
    %v5011 = vunpack.c.l.b16 %v3915
    %v5012 = vunpack.c.h.b16 %v3915
    %v5013 = vunpack.c.l.b16 %v3916
    %v5014 = vunpack.c.l.b16 %v3917
    %v5015 = vunpack.c.h.b16 %v3917
    %v5016 = vunpack.c.l.b16 %v3918
    %v5017 = vunpack.c.h.b16 %v3918
    %v5018 = vunpack.c.l.b16 %v3919
    %v5019 = vunpack.c.h.b16 %v3919
    %v5020 = vunpack.c.l.b16 %v3920
    %v5021 = vunpack.c.l.b16 %v3921
    %v5022 = vunpack.c.h.b16 %v3921
    %v5023 = vunpack.c.l.b16 %v3922
    %v5024 = vunpack.c.h.b16 %v3922
    %v5025 = vunpack.c.l.b16 %v3923
    %v5026 = vunpack.c.h.b16 %v3923
    %v5027 = vunpack.c.l.b16 %v3924
    %v5028 = vunpack.c.l.b16 %v3925
    %v5029 = vunpack.c.h.b16 %v3925
    %v5030 = vunpack.c.l.b16 %v3926
    %v5031 = vunpack.c.h.b16 %v3926
    %v5032 = vunpack.c.l.b16 %v3927
    %v5033 = vunpack.c.h.b16 %v3927
    %v5034 = vunpack.c.l.b16 %v3928
    %v5035 = vunpack.c.l.b16 %v3929
    %v5036 = vunpack.c.h.b16 %v3929
    %v5037 = vunpack.c.l.b16 %v3930
    %v5038 = vunpack.c.h.b16 %v3930
    %v5039 = vunpack.c.l.b16 %v3931
    %v5040 = vunpack.c.h.b16 %v3931
    %v5041 = vunpack.c.l.b16 %v3932
    %v5042 = vunpack.c.l.b16 %v3933
    %v5043 = vunpack.c.h.b16 %v3933
    %v5044 = vunpack.c.l.b16 %v3934
    %v5045 = vunpack.c.h.b16 %v3934
    %v5046 = vunpack.c.l.b16 %v3935
    %v5047 = vunpack.c.h.b16 %v3935
    %v5048 = vunpack.c.l.b16 %v3936
    %v5049 = vunpack.c.l.b16 %v3937
    %v5050 = vunpack.c.h.b16 %v3937
    %v5051 = vunpack.c.l.b16 %v3938
    %v5052 = vunpack.c.h.b16 %v3938
    %v5053 = vunpack.c.l.b16 %v3939
    %v5054 = vunpack.c.h.b16 %v3939
    %v5055 = vunpack.c.l.b16 %v3940
    %v5056 = vunpack.c.l.b16 %v3941
    %v5057 = vunpack.c.h.b16 %v3941
    %v5058 = vunpack.c.l.b16 %v3942
    %v5059 = vunpack.c.h.b16 %v3942
    %v5060 = vunpack.c.l.b16 %v3943
    %v5061 = vunpack.c.h.b16 %v3943
    %v5062 = vunpack.c.l.b16 %v3944
    %v5063 = vunpack.c.l.b16 %v3945
    %v5064 = vunpack.c.h.b16 %v3945
    %v5065 = vunpack.c.l.b16 %v3946
    %v5066 = vunpack.c.h.b16 %v3946
    %v5067 = vunpack.c.l.b16 %v3947
    %v5068 = vunpack.c.h.b16 %v3947
    %v5069 = vunpack.c.l.b16 %v3948
    %v5070 = vunpack.c.l.b16 %v3949
    %v5071 = vunpack.c.h.b16 %v3949
    %v5072 = vunpack.c.l.b16 %v3950
    %v5073 = vunpack.c.h.b16 %v3950
    %v5074 = vunpack.c.l.b16 %v3951
    %v5075 = vunpack.c.h.b16 %v3951
    %v5076 = vunpack.c.l.b16 %v3952
    %v5077 = vunpack.c.l.b16 %v3953
    %v5078 = vunpack.c.h.b16 %v3953
    %v5079 = vunpack.c.l.b16 %v3954
    %v5080 = vunpack.c.h.b16 %v3954
    %v5081 = vunpack.c.l.b16 %v3955
    %v5082 = vunpack.c.h.b16 %v3955
    %v5083 = vunpack.c.l.b16 %v3956
    %v5084 = vunpack.c.l.b16 %v3957
    %v5085 = vunpack.c.h.b16 %v3957
    %v5086 = vunpack.c.l.b16 %v3958
    %v5087 = vunpack.c.h.b16 %v3958
    %v5088 = vunpack.c.l.b16 %v3959
    %v5089 = vunpack.c.h.b16 %v3959
    %v5090 = vunpack.c.l.b16 %v3960
    %v5091 = vunpack.c.l.b16 %v3961
    %v5092 = vunpack.c.h.b16 %v3961
    %v5093 = vunpack.c.l.b16 %v3962
    %v5094 = vunpack.c.h.b16 %v3962
    %v5095 = vunpack.c.l.b16 %v3963
    %v5096 = vunpack.c.h.b16 %v3963
    %v5097 = vunpack.c.l.b16 %v3964
    %v5098 = vunpack.c.l.b16 %v3965
    %v5099 = vunpack.c.h.b16 %v3965
    %v5100 = vunpack.c.l.b16 %v3966
    %v5101 = vunpack.c.h.b16 %v3966
    %v5102 = vunpack.c.l.b16 %v3967
    %v5103 = vunpack.c.h.b16 %v3967
    %v5104 = vunpack.c.l.b16 %v3968
    %v5105 = vunpack.c.l.b16 %v3969
    %v5106 = vunpack.c.h.b16 %v3969
    %v5107 = vunpack.c.l.b16 %v3970
    %v5108 = vunpack.c.h.b16 %v3970
    %v5109 = vunpack.c.l.b16 %v3971
    %v5110 = vunpack.c.h.b16 %v3971
    %v5111 = vunpack.c.l.b16 %v3972
    %v5112 = vunpack.c.l.b16 %v3973
    %v5113 = vunpack.c.h.b16 %v3973
    %v5114 = vunpack.c.l.b16 %v3974
    %v5115 = vunpack.c.h.b16 %v3974
    %v5116 = vunpack.c.l.b16 %v3975
    %v5117 = vunpack.c.h.b16 %v3975
    %v5118 = vunpack.c.l.b16 %v3976
    %v5119 = vunpack.c.l.b16 %v3977
    %v5120 = vunpack.c.h.b16 %v3977
    %v5121 = vunpack.c.l.b16 %v3978
    %v5122 = vunpack.c.h.b16 %v3978
    %v5123 = vunpack.c.l.b16 %v3979
    %v5124 = vunpack.c.h.b16 %v3979
    %v5125 = vunpack.c.l.b16 %v3980
    %v5126 = vunpack.c.l.b16 %v3981
    %v5127 = vunpack.c.h.b16 %v3981
    %v5128 = vunpack.c.l.b16 %v3982
    %v5129 = vunpack.c.h.b16 %v3982
    %v5130 = vunpack.c.l.b16 %v3983
    %v5131 = vunpack.c.h.b16 %v3983
    %v5132 = vunpack.c.l.b16 %v3984
    %v5133 = vunpack.c.l.b16 %v3985
    %v5134 = vunpack.c.h.b16 %v3985
    %v5135 = vunpack.c.l.b16 %v3986
    %v5136 = vunpack.c.h.b16 %v3986
    %v5137 = vunpack.c.l.b16 %v3987
    %v5138 = vunpack.c.h.b16 %v3987
    %v5139 = vunpack.c.l.b16 %v3988
    %v5140 = vunpack.c.l.b16 %v3989
    %v5141 = vunpack.c.h.b16 %v3989
    %v5142 = vunpack.c.l.b16 %v3990
    %v5143 = vunpack.c.h.b16 %v3990
    %v5144 = vunpack.c.l.b16 %v3991
    %v5145 = vunpack.c.h.b16 %v3991
    %v5146 = vunpack.c.l.b16 %v3992
    %v5147 = vunpack.c.l.b16 %v3993
    %v5148 = vunpack.c.h.b16 %v3993
    %v5149 = vunpack.c.l.b16 %v3994
    %v5150 = vunpack.c.h.b16 %v3994
    %v5151 = vunpack.c.l.b16 %v3995
    %v5152 = vunpack.c.h.b16 %v3995
    %v5153 = vunpack.c.l.b16 %v3996
    %v5154 = vunpack.c.l.b16 %v3997
    %v5155 = vunpack.c.h.b16 %v3997
    %v5156 = vunpack.c.l.b16 %v3998
    %v5157 = vunpack.c.h.b16 %v3998
    %v5158 = vunpack.c.l.b16 %v3999
    %v5159 = vunpack.c.h.b16 %v3999
    %v5160 = vunpack.c.l.b16 %v4000
    %v5161 = vunpack.c.l.b16 %v4001
    %v5162 = vunpack.c.h.b16 %v4001
    %v5163 = vunpack.c.l.b16 %v4002
    %v5164 = vunpack.c.h.b16 %v4002
    %v5165 = vunpack.c.l.b16 %v4003
    %v5166 = vunpack.c.h.b16 %v4003
    %v5167 = vunpack.c.l.b16 %v4004
    %v5168 = vunpack.c.l.b16 %v4005
    %v5169 = vunpack.c.h.b16 %v4005
    %v5170 = vunpack.c.l.b16 %v4006
    %v5171 = vunpack.c.h.b16 %v4006
    %v5172 = vunpack.c.l.b16 %v4007
    %v5173 = vunpack.c.h.b16 %v4007
    %v5174 = vunpack.c.l.b16 %v4008
    %v5175 = vunpack.c.l.b16 %v4009
    %v5176 = vunpack.c.h.b16 %v4009
    %v5177 = vunpack.c.l.b16 %v4010
    %v5178 = vunpack.c.h.b16 %v4010
    %v5179 = vunpack.c.l.b16 %v4011
    %v5180 = vunpack.c.h.b16 %v4011
    %v5181 = vunpack.c.l.b16 %v4012
    %v5182 = vunpack.c.l.b16 %v4013
    %v5183 = vunpack.c.h.b16 %v4013
    %v5184 = vunpack.c.l.b16 %v4014
    %v5185 = vunpack.c.h.b16 %v4014
    %v5186 = vunpack.c.l.b16 %v4015
    %v5187 = vunpack.c.h.b16 %v4015
    %v5188 = vunpack.c.l.b16 %v4016
    %v5189 = vunpack.c.l.b16 %v4017
    %v5190 = vunpack.c.h.b16 %v4017
    %v5191 = vunpack.c.l.b16 %v4018
    %v5192 = vunpack.c.h.b16 %v4018
    %v5193 = vunpack.c.l.b16 %v4019
    %v5194 = vunpack.c.h.b16 %v4019
    %v5195 = vunpack.c.l.b16 %v4020
    %v5196 = vunpack.c.l.b16 %v4021
    %v5197 = vunpack.c.h.b16 %v4021
    %v5198 = vunpack.c.l.b16 %v4022
    %v5199 = vunpack.c.h.b16 %v4022
    %v5200 = vunpack.c.l.b16 %v4023
    %v5201 = vunpack.c.h.b16 %v4023
    %v5202 = vunpack.c.l.b16 %v4024
    %v5203 = vunpack.c.l.b16 %v4025
    %v5204 = vunpack.c.h.b16 %v4025
    %v5205 = vunpack.c.l.b16 %v4026
    %v5206 = vunpack.c.h.b16 %v4026
    %v5207 = vunpack.c.l.b16 %v4027
    %v5208 = vunpack.c.h.b16 %v4027
    %v5209 = vunpack.c.l.b16 %v4028
    %v5210 = vunpack.c.l.b16 %v4029
    %v5211 = vunpack.c.h.b16 %v4029
    %v5212 = vunpack.c.l.b16 %v4030
    %v5213 = vunpack.c.h.b16 %v4030
    %v5214 = vunpack.c.l.b16 %v4031
    %v5215 = vunpack.c.h.b16 %v4031
    %v5216 = vunpack.c.l.b16 %v4032
    %v5217 = vunpack.c.l.b16 %v4033
    %v5218 = vunpack.c.h.b16 %v4033
    %v5219 = vunpack.c.l.b16 %v4034
    %v5220 = vunpack.c.h.b16 %v4034
    %v5221 = vunpack.c.l.b16 %v4035
    %v5222 = vunpack.c.h.b16 %v4035
    %v5223 = vunpack.c.l.b16 %v4036
    %v5224 = vunpack.c.l.b16 %v4037
    %v5225 = vunpack.c.h.b16 %v4037
    %v5226 = vunpack.c.l.b16 %v4038
    %v5227 = vunpack.c.h.b16 %v4038
    %v5228 = vunpack.c.l.b16 %v4039
    %v5229 = vunpack.c.h.b16 %v4039
    %v5230 = vunpack.c.l.b16 %v4040
    %v5231 = vunpack.c.l.b16 %v4041
    %v5232 = vunpack.c.h.b16 %v4041
    %v5233 = vunpack.c.l.b16 %v4042
    %v5234 = vunpack.c.h.b16 %v4042
    %v5235 = vunpack.c.l.b16 %v4043
    %v5236 = vunpack.c.h.b16 %v4043
    %v5237 = vunpack.c.l.b16 %v4044
    %v5238 = vunpack.c.l.b16 %v4045
    %v5239 = vunpack.c.h.b16 %v4045
    %v5240 = vunpack.c.l.b16 %v4046
    %v5241 = vunpack.c.h.b16 %v4046
    %v5242 = vunpack.c.l.b16 %v4047
    %v5243 = vunpack.c.h.b16 %v4047
    %v5244 = vunpack.c.l.b16 %v4048
    %v5245 = vunpack.c.l.b16 %v4049
    %v5246 = vunpack.c.h.b16 %v4049
    %v5247 = vunpack.c.l.b16 %v4050
    %v5248 = vunpack.c.h.b16 %v4050
    %v5249 = vunpack.c.l.b16 %v4051
    %v5250 = vunpack.c.h.b16 %v4051
    %v5251 = vunpack.c.l.b16 %v4052
    %v5252 = vunpack.c.l.b16 %v4053
    %v5253 = vunpack.c.h.b16 %v4053
    %v5254 = vunpack.c.l.b16 %v4054
    %v5255 = vunpack.c.h.b16 %v4054
    %v5256 = vunpack.c.l.b16 %v4055
    %v5257 = vunpack.c.h.b16 %v4055
    %v5258 = vunpack.c.l.b16 %v4056
    %v5259 = vunpack.c.l.b16 %v4057
    %v5260 = vunpack.c.h.b16 %v4057
    %v5261 = vunpack.c.l.b16 %v4058
    %v5262 = vunpack.c.h.b16 %v4058
    %v5263 = vunpack.c.l.b16 %v4059
    %v5264 = vunpack.c.h.b16 %v4059
    %v5265 = vunpack.c.l.b16 %v4060
    %v5266 = vunpack.c.l.b16 %v4061
    %v5267 = vunpack.c.h.b16 %v4061
    %v5268 = vunpack.c.l.b16 %v4062
    %v5269 = vunpack.c.h.b16 %v4062
    %v5270 = vunpack.c.l.b16 %v4063
    %v5271 = vunpack.c.h.b16 %v4063
    %v5272 = vunpack.c.l.b16 %v4064
    %v5273 = vunpack.c.l.b16 %v4065
    %v5274 = vunpack.c.h.b16 %v4065
    %v5275 = vunpack.c.l.b16 %v4066
    %v5276 = vunpack.c.h.b16 %v4066
    %v5277 = vunpack.c.l.b16 %v4067
    %v5278 = vunpack.c.h.b16 %v4067
    %v5279 = vunpack.c.l.b16 %v4068
    %v5280 = vunpack.c.l.b16 %v4069
    %v5281 = vunpack.c.h.b16 %v4069
    %v5282 = vunpack.c.l.b16 %v4070
    %v5283 = vunpack.c.h.b16 %v4070
    %v5284 = vunpack.c.l.b16 %v4071
    %v5285 = vunpack.c.h.b16 %v4071
    %v5286 = vunpack.c.l.b16 %v4072
    %v5287 = vunpack.c.l.b16 %v4073
    %v5288 = vunpack.c.h.b16 %v4073
    %v5289 = vunpack.c.l.b16 %v4074
    %v5290 = vunpack.c.h.b16 %v4074
    %v5291 = vunpack.c.l.b16 %v4075
    %v5292 = vunpack.c.h.b16 %v4075
    %v5293 = vunpack.c.l.b16 %v4076
    %v5294 = vunpack.c.l.b16 %v4077
    %v5295 = vunpack.c.h.b16 %v4077
    %v5296 = vunpack.c.l.b16 %v4078
    %v5297 = vunpack.c.h.b16 %v4078
    %v5298 = vunpack.c.l.b16 %v4079
    %v5299 = vunpack.c.h.b16 %v4079
    %v5300 = vunpack.c.l.b16 %v4080
    %v5301 = vunpack.c.l.b16 %v4081
    %v5302 = vunpack.c.h.b16 %v4081
    %v5303 = vunpack.c.l.b16 %v4082
    %v5304 = vunpack.c.h.b16 %v4082
    %v5305 = vunpack.c.l.b16 %v4083
    %v5306 = vunpack.c.h.b16 %v4083
    %v5307 = vunpack.c.l.b16 %v4084
    %v5308 = vunpack.c.l.b16 %v4085
    %v5309 = vunpack.c.h.b16 %v4085
    %v5310 = vunpack.c.l.b16 %v4086
    %v5311 = vunpack.c.h.b16 %v4086
    %v5312 = vunpack.c.l.b16 %v4087
    %v5313 = vunpack.c.h.b16 %v4087
    %v5314 = vunpack.c.l.b16 %v4088
    %v5315 = vunpack.c.l.b16 %v4089
    %v5316 = vunpack.c.h.b16 %v4089
    %v5317 = vunpack.c.l.b16 %v4090
    %v5318 = vunpack.c.h.b16 %v4090
    %v5319 = vunpack.c.l.b16 %v4091
    %v5320 = vunpack.c.h.b16 %v4091
    %v5321 = vunpack.c.l.b16 %v4092
    %v5322 = vunpack.c.l.b16 %v4093
    %v5323 = vunpack.c.h.b16 %v4093
    %v5324 = vunpack.c.l.b16 %v4094
    %v5325 = vunpack.c.h.b16 %v4094
    %v5326 = vunpack.c.l.b16 %v4095
    %v5327 = vunpack.c.h.b16 %v4095
    %v5328 = vunpack.c.l.b16 %v4096
    %v5329 = vpack.c.b16 %v4552, %v4545
    %v5330 = vpack.c.b16 %v4553, %v4546
    %v5331 = vpack.c.b16 %v4554, %v4547
    %v5332 = vpack.c.b16 %v4555, %v4548
    %v5333 = vpack.c.b16 %v4556, %v4549
    %v5334 = vpack.c.b16 %v4557, %v4550
    %v5335 = vpack.c.b16 %v4558, %v4551
    %v5336 = vpack.c.b16 %v4566, %v4559
    %v5337 = vpack.c.b16 %v4567, %v4560
    %v5338 = vpack.c.b16 %v4568, %v4561
    %v5339 = vpack.c.b16 %v4569, %v4562
    %v5340 = vpack.c.b16 %v4570, %v4563
    %v5341 = vpack.c.b16 %v4571, %v4564
    %v5342 = vpack.c.b16 %v4572, %v4565
    %v5343 = vpack.c.b16 %v4580, %v4573
    %v5344 = vpack.c.b16 %v4581, %v4574
    %v5345 = vpack.c.b16 %v4582, %v4575
    %v5346 = vpack.c.b16 %v4583, %v4576
    %v5347 = vpack.c.b16 %v4584, %v4577
    %v5348 = vpack.c.b16 %v4585, %v4578
    %v5349 = vpack.c.b16 %v4586, %v4579
    %v5350 = vpack.c.b16 %v4594, %v4587
    %v5351 = vpack.c.b16 %v4595, %v4588
    %v5352 = vpack.c.b16 %v4596, %v4589
    %v5353 = vpack.c.b16 %v4597, %v4590
    %v5354 = vpack.c.b16 %v4598, %v4591
    %v5355 = vpack.c.b16 %v4599, %v4592
    %v5356 = vpack.c.b16 %v4600, %v4593
    %v5357 = vpack.c.b16 %v4608, %v4601
    %v5358 = vpack.c.b16 %v4609, %v4602
    %v5359 = vpack.c.b16 %v4610, %v4603
    %v5360 = vpack.c.b16 %v4611, %v4604
    %v5361 = vpack.c.b16 %v4612, %v4605
    %v5362 = vpack.c.b16 %v4613, %v4606
    %v5363 = vpack.c.b16 %v4614, %v4607
    %v5364 = vpack.c.b16 %v4622, %v4615
    %v5365 = vpack.c.b16 %v4623, %v4616
    %v5366 = vpack.c.b16 %v4624, %v4617
    %v5367 = vpack.c.b16 %v4625, %v4618
    %v5368 = vpack.c.b16 %v4626, %v4619
    %v5369 = vpack.c.b16 %v4627, %v4620
    %v5370 = vpack.c.b16 %v4628, %v4621
    %v5371 = vpack.c.b16 %v4636, %v4629
    %v5372 = vpack.c.b16 %v4637, %v4630
    %v5373 = vpack.c.b16 %v4638, %v4631
    %v5374 = vpack.c.b16 %v4639, %v4632
    %v5375 = vpack.c.b16 %v4640, %v4633
    %v5376 = vpack.c.b16 %v4641, %v4634
    %v5377 = vpack.c.b16 %v4642, %v4635
    %v5378 = vpack.c.b16 %v4650, %v4643
    %v5379 = vpack.c.b16 %v4651, %v4644
    %v5380 = vpack.c.b16 %v4652, %v4645
    %v5381 = vpack.c.b16 %v4653, %v4646
    %v5382 = vpack.c.b16 %v4654, %v4647
    %v5383 = vpack.c.b16 %v4655, %v4648
    %v5384 = vpack.c.b16 %v4656, %v4649
    %v5385 = vpack.c.b16 %v4664, %v4657
    %v5386 = vpack.c.b16 %v4665, %v4658
    %v5387 = vpack.c.b16 %v4666, %v4659
    %v5388 = vpack.c.b16 %v4667, %v4660
    %v5389 = vpack.c.b16 %v4668, %v4661
    %v5390 = vpack.c.b16 %v4669, %v4662
    %v5391 = vpack.c.b16 %v4670, %v4663
    %v5392 = vpack.c.b16 %v4678, %v4671
    %v5393 = vpack.c.b16 %v4679, %v4672
    %v5394 = vpack.c.b16 %v4680, %v4673
    %v5395 = vpack.c.b16 %v4681, %v4674
    %v5396 = vpack.c.b16 %v4682, %v4675
    %v5397 = vpack.c.b16 %v4683, %v4676
    %v5398 = vpack.c.b16 %v4684, %v4677
    %v5399 = vpack.c.b16 %v4692, %v4685
    %v5400 = vpack.c.b16 %v4693, %v4686
    %v5401 = vpack.c.b16 %v4694, %v4687
    %v5402 = vpack.c.b16 %v4695, %v4688
    %v5403 = vpack.c.b16 %v4696, %v4689
    %v5404 = vpack.c.b16 %v4697, %v4690
    %v5405 = vpack.c.b16 %v4698, %v4691
    %v5406 = vpack.c.b16 %v4706, %v4699
    %v5407 = vpack.c.b16 %v4707, %v4700
    %v5408 = vpack.c.b16 %v4708, %v4701
    %v5409 = vpack.c.b16 %v4709, %v4702
    %v5410 = vpack.c.b16 %v4710, %v4703
    %v5411 = vpack.c.b16 %v4711, %v4704
    %v5412 = vpack.c.b16 %v4712, %v4705
    %v5413 = vpack.c.b16 %v4720, %v4713
    %v5414 = vpack.c.b16 %v4721, %v4714
    %v5415 = vpack.c.b16 %v4722, %v4715
    %v5416 = vpack.c.b16 %v4723, %v4716
    %v5417 = vpack.c.b16 %v4724, %v4717
    %v5418 = vpack.c.b16 %v4725, %v4718
    %v5419 = vpack.c.b16 %v4726, %v4719
    %v5420 = vpack.c.b16 %v4734, %v4727
    %v5421 = vpack.c.b16 %v4735, %v4728
    %v5422 = vpack.c.b16 %v4736, %v4729
    %v5423 = vpack.c.b16 %v4737, %v4730
    %v5424 = vpack.c.b16 %v4738, %v4731
    %v5425 = vpack.c.b16 %v4739, %v4732
    %v5426 = vpack.c.b16 %v4740, %v4733
    %v5427 = vpack.c.b16 %v4748, %v4741
    %v5428 = vpack.c.b16 %v4749, %v4742
    %v5429 = vpack.c.b16 %v4750, %v4743
    %v5430 = vpack.c.b16 %v4751, %v4744
    %v5431 = vpack.c.b16 %v4752, %v4745
    %v5432 = vpack.c.b16 %v4753, %v4746
    %v5433 = vpack.c.b16 %v4754, %v4747
    %v5434 = vpack.c.b16 %v4762, %v4755
    %v5435 = vpack.c.b16 %v4763, %v4756
    %v5436 = vpack.c.b16 %v4764, %v4757
    %v5437 = vpack.c.b16 %v4765, %v4758
    %v5438 = vpack.c.b16 %v4766, %v4759
    %v5439 = vpack.c.b16 %v4767, %v4760
    %v5440 = vpack.c.b16 %v4768, %v4761
    %v5441 = vpack.c.b16 %v4776, %v4769
    %v5442 = vpack.c.b16 %v4777, %v4770
    %v5443 = vpack.c.b16 %v4778, %v4771
    %v5444 = vpack.c.b16 %v4779, %v4772
    %v5445 = vpack.c.b16 %v4780, %v4773
    %v5446 = vpack.c.b16 %v4781, %v4774
    %v5447 = vpack.c.b16 %v4782, %v4775
    %v5448 = vpack.c.b16 %v4790, %v4783
    %v5449 = vpack.c.b16 %v4791, %v4784
    %v5450 = vpack.c.b16 %v4792, %v4785
    %v5451 = vpack.c.b16 %v4793, %v4786
    %v5452 = vpack.c.b16 %v4794, %v4787
    %v5453 = vpack.c.b16 %v4795, %v4788
    %v5454 = vpack.c.b16 %v4796, %v4789
    %v5455 = vpack.c.b16 %v4804, %v4797
    %v5456 = vpack.c.b16 %v4805, %v4798
    %v5457 = vpack.c.b16 %v4806, %v4799
    %v5458 = vpack.c.b16 %v4807, %v4800
    %v5459 = vpack.c.b16 %v4808, %v4801
    %v5460 = vpack.c.b16 %v4809, %v4802
    %v5461 = vpack.c.b16 %v4810, %v4803
    %v5462 = vpack.c.b16 %v4818, %v4811
    %v5463 = vpack.c.b16 %v4819, %v4812
    %v5464 = vpack.c.b16 %v4820, %v4813
    %v5465 = vpack.c.b16 %v4821, %v4814
    %v5466 = vpack.c.b16 %v4822, %v4815
    %v5467 = vpack.c.b16 %v4823, %v4816
    %v5468 = vpack.c.b16 %v4824, %v4817
    %v5469 = vpack.c.b16 %v4832, %v4825
    %v5470 = vpack.c.b16 %v4833, %v4826
    %v5471 = vpack.c.b16 %v4834, %v4827
    %v5472 = vpack.c.b16 %v4835, %v4828
    %v5473 = vpack.c.b16 %v4836, %v4829
    %v5474 = vpack.c.b16 %v4837, %v4830
    %v5475 = vpack.c.b16 %v4838, %v4831
    %v5476 = vpack.c.b16 %v4846, %v4839
    %v5477 = vpack.c.b16 %v4847, %v4840
    %v5478 = vpack.c.b16 %v4848, %v4841
    %v5479 = vpack.c.b16 %v4849, %v4842
    %v5480 = vpack.c.b16 %v4850, %v4843
    %v5481 = vpack.c.b16 %v4851, %v4844
    %v5482 = vpack.c.b16 %v4852, %v4845
    %v5483 = vpack.c.b16 %v4860, %v4853
    %v5484 = vpack.c.b16 %v4861, %v4854
    %v5485 = vpack.c.b16 %v4862, %v4855
    %v5486 = vpack.c.b16 %v4863, %v4856
    %v5487 = vpack.c.b16 %v4864, %v4857
    %v5488 = vpack.c.b16 %v4865, %v4858
    %v5489 = vpack.c.b16 %v4866, %v4859
    %v5490 = vpack.c.b16 %v4874, %v4867
    %v5491 = vpack.c.b16 %v4875, %v4868
    %v5492 = vpack.c.b16 %v4876, %v4869
    %v5493 = vpack.c.b16 %v4877, %v4870
    %v5494 = vpack.c.b16 %v4878, %v4871
    %v5495 = vpack.c.b16 %v4879, %v4872
    %v5496 = vpack.c.b16 %v4880, %v4873
    %v5497 = vpack.c.b16 %v4888, %v4881
    %v5498 = vpack.c.b16 %v4889, %v4882
    %v5499 = vpack.c.b16 %v4890, %v4883
    %v5500 = vpack.c.b16 %v4891, %v4884
    %v5501 = vpack.c.b16 %v4892, %v4885
    %v5502 = vpack.c.b16 %v4893, %v4886
    %v5503 = vpack.c.b16 %v4894, %v4887
    %v5504 = vpack.c.b16 %v4902, %v4895
    %v5505 = vpack.c.b16 %v4903, %v4896
    %v5506 = vpack.c.b16 %v4904, %v4897
    %v5507 = vpack.c.b16 %v4905, %v4898
    %v5508 = vpack.c.b16 %v4906, %v4899
    %v5509 = vpack.c.b16 %v4907, %v4900
    %v5510 = vpack.c.b16 %v4908, %v4901
    %v5511 = vpack.c.b16 %v4916, %v4909
    %v5512 = vpack.c.b16 %v4917, %v4910
    %v5513 = vpack.c.b16 %v4918, %v4911
    %v5514 = vpack.c.b16 %v4919, %v4912
    %v5515 = vpack.c.b16 %v4920, %v4913
    %v5516 = vpack.c.b16 %v4921, %v4914
    %v5517 = vpack.c.b16 %v4922, %v4915
    %v5518 = vpack.c.b16 %v4930, %v4923
    %v5519 = vpack.c.b16 %v4931, %v4924
    %v5520 = vpack.c.b16 %v4932, %v4925
    %v5521 = vpack.c.b16 %v4933, %v4926
    %v5522 = vpack.c.b16 %v4934, %v4927
    %v5523 = vpack.c.b16 %v4935, %v4928
    %v5524 = vpack.c.b16 %v4936, %v4929
    %v5525 = vpack.c.b16 %v4944, %v4937
    %v5526 = vpack.c.b16 %v4945, %v4938
    %v5527 = vpack.c.b16 %v4946, %v4939
    %v5528 = vpack.c.b16 %v4947, %v4940
    %v5529 = vpack.c.b16 %v4948, %v4941
    %v5530 = vpack.c.b16 %v4949, %v4942
    %v5531 = vpack.c.b16 %v4950, %v4943
    %v5532 = vpack.c.b16 %v4958, %v4951
    %v5533 = vpack.c.b16 %v4959, %v4952
    %v5534 = vpack.c.b16 %v4960, %v4953
    %v5535 = vpack.c.b16 %v4961, %v4954
    %v5536 = vpack.c.b16 %v4962, %v4955
    %v5537 = vpack.c.b16 %v4963, %v4956
    %v5538 = vpack.c.b16 %v4964, %v4957
    %v5539 = vpack.c.b16 %v4972, %v4965
    %v5540 = vpack.c.b16 %v4973, %v4966
    %v5541 = vpack.c.b16 %v4974, %v4967
    %v5542 = vpack.c.b16 %v4975, %v4968
    %v5543 = vpack.c.b16 %v4976, %v4969
    %v5544 = vpack.c.b16 %v4977, %v4970
    %v5545 = vpack.c.b16 %v4978, %v4971
    %v5546 = vpack.c.b16 %v4986, %v4979
    %v5547 = vpack.c.b16 %v4987, %v4980
    %v5548 = vpack.c.b16 %v4988, %v4981
    %v5549 = vpack.c.b16 %v4989, %v4982
    %v5550 = vpack.c.b16 %v4990, %v4983
    %v5551 = vpack.c.b16 %v4991, %v4984
    %v5552 = vpack.c.b16 %v4992, %v4985
    %v5553 = vpack.c.b16 %v5000, %v4993
    %v5554 = vpack.c.b16 %v5001, %v4994
    %v5555 = vpack.c.b16 %v5002, %v4995
    %v5556 = vpack.c.b16 %v5003, %v4996
    %v5557 = vpack.c.b16 %v5004, %v4997
    %v5558 = vpack.c.b16 %v5005, %v4998
    %v5559 = vpack.c.b16 %v5006, %v4999
    %v5560 = vpack.c.b16 %v5014, %v5007
    %v5561 = vpack.c.b16 %v5015, %v5008
    %v5562 = vpack.c.b16 %v5016, %v5009
    %v5563 = vpack.c.b16 %v5017, %v5010
    %v5564 = vpack.c.b16 %v5018, %v5011
    %v5565 = vpack.c.b16 %v5019, %v5012
    %v5566 = vpack.c.b16 %v5020, %v5013
    %v5567 = vpack.c.b16 %v5028, %v5021
    %v5568 = vpack.c.b16 %v5029, %v5022
    %v5569 = vpack.c.b16 %v5030, %v5023
    %v5570 = vpack.c.b16 %v5031, %v5024
    %v5571 = vpack.c.b16 %v5032, %v5025
    %v5572 = vpack.c.b16 %v5033, %v5026
    %v5573 = vpack.c.b16 %v5034, %v5027
    %v5574 = vpack.c.b16 %v5042, %v5035
    %v5575 = vpack.c.b16 %v5043, %v5036
    %v5576 = vpack.c.b16 %v5044, %v5037
    %v5577 = vpack.c.b16 %v5045, %v5038
    %v5578 = vpack.c.b16 %v5046, %v5039
    %v5579 = vpack.c.b16 %v5047, %v5040
    %v5580 = vpack.c.b16 %v5048, %v5041
    %v5581 = vpack.c.b16 %v5056, %v5049
    %v5582 = vpack.c.b16 %v5057, %v5050
    %v5583 = vpack.c.b16 %v5058, %v5051
    %v5584 = vpack.c.b16 %v5059, %v5052
    %v5585 = vpack.c.b16 %v5060, %v5053
    %v5586 = vpack.c.b16 %v5061, %v5054
    %v5587 = vpack.c.b16 %v5062, %v5055
    %v5588 = vpack.c.b16 %v5070, %v5063
    %v5589 = vpack.c.b16 %v5071, %v5064
    %v5590 = vpack.c.b16 %v5072, %v5065
    %v5591 = vpack.c.b16 %v5073, %v5066
    %v5592 = vpack.c.b16 %v5074, %v5067
    %v5593 = vpack.c.b16 %v5075, %v5068
    %v5594 = vpack.c.b16 %v5076, %v5069
    %v5595 = vpack.c.b16 %v5084, %v5077
    %v5596 = vpack.c.b16 %v5085, %v5078
    %v5597 = vpack.c.b16 %v5086, %v5079
    %v5598 = vpack.c.b16 %v5087, %v5080
    %v5599 = vpack.c.b16 %v5088, %v5081
    %v5600 = vpack.c.b16 %v5089, %v5082
    %v5601 = vpack.c.b16 %v5090, %v5083
    %v5602 = vpack.c.b16 %v5098, %v5091
    %v5603 = vpack.c.b16 %v5099, %v5092
    %v5604 = vpack.c.b16 %v5100, %v5093
    %v5605 = vpack.c.b16 %v5101, %v5094
    %v5606 = vpack.c.b16 %v5102, %v5095
    %v5607 = vpack.c.b16 %v5103, %v5096
    %v5608 = vpack.c.b16 %v5104, %v5097
    %v5609 = vpack.c.b16 %v5112, %v5105
    %v5610 = vpack.c.b16 %v5113, %v5106
    %v5611 = vpack.c.b16 %v5114, %v5107
    %v5612 = vpack.c.b16 %v5115, %v5108
    %v5613 = vpack.c.b16 %v5116, %v5109
    %v5614 = vpack.c.b16 %v5117, %v5110
    %v5615 = vpack.c.b16 %v5118, %v5111
    %v5616 = vpack.c.b16 %v5126, %v5119
    %v5617 = vpack.c.b16 %v5127, %v5120
    %v5618 = vpack.c.b16 %v5128, %v5121
    %v5619 = vpack.c.b16 %v5129, %v5122
    %v5620 = vpack.c.b16 %v5130, %v5123
    %v5621 = vpack.c.b16 %v5131, %v5124
    %v5622 = vpack.c.b16 %v5132, %v5125
    %v5623 = vpack.c.b16 %v5140, %v5133
    %v5624 = vpack.c.b16 %v5141, %v5134
    %v5625 = vpack.c.b16 %v5142, %v5135
    %v5626 = vpack.c.b16 %v5143, %v5136
    %v5627 = vpack.c.b16 %v5144, %v5137
    %v5628 = vpack.c.b16 %v5145, %v5138
    %v5629 = vpack.c.b16 %v5146, %v5139
    %v5630 = vpack.c.b16 %v5154, %v5147
    %v5631 = vpack.c.b16 %v5155, %v5148
    %v5632 = vpack.c.b16 %v5156, %v5149
    %v5633 = vpack.c.b16 %v5157, %v5150
    %v5634 = vpack.c.b16 %v5158, %v5151
    %v5635 = vpack.c.b16 %v5159, %v5152
    %v5636 = vpack.c.b16 %v5160, %v5153
    %v5637 = vpack.c.b16 %v5168, %v5161
    %v5638 = vpack.c.b16 %v5169, %v5162
    %v5639 = vpack.c.b16 %v5170, %v5163
    %v5640 = vpack.c.b16 %v5171, %v5164
    %v5641 = vpack.c.b16 %v5172, %v5165
    %v5642 = vpack.c.b16 %v5173, %v5166
    %v5643 = vpack.c.b16 %v5174, %v5167
    %v5644 = vpack.c.b16 %v5182, %v5175
    %v5645 = vpack.c.b16 %v5183, %v5176
    %v5646 = vpack.c.b16 %v5184, %v5177
    %v5647 = vpack.c.b16 %v5185, %v5178
    %v5648 = vpack.c.b16 %v5186, %v5179
    %v5649 = vpack.c.b16 %v5187, %v5180
    %v5650 = vpack.c.b16 %v5188, %v5181
    %v5651 = vpack.c.b16 %v5196, %v5189
    %v5652 = vpack.c.b16 %v5197, %v5190
    %v5653 = vpack.c.b16 %v5198, %v5191
    %v5654 = vpack.c.b16 %v5199, %v5192
    %v5655 = vpack.c.b16 %v5200, %v5193
    %v5656 = vpack.c.b16 %v5201, %v5194
    %v5657 = vpack.c.b16 %v5202, %v5195
    %v5658 = vpack.c.b16 %v5210, %v5203
    %v5659 = vpack.c.b16 %v5211, %v5204
    %v5660 = vpack.c.b16 %v5212, %v5205
    %v5661 = vpack.c.b16 %v5213, %v5206
    %v5662 = vpack.c.b16 %v5214, %v5207
    %v5663 = vpack.c.b16 %v5215, %v5208
    %v5664 = vpack.c.b16 %v5216, %v5209
    %v5665 = vpack.c.b16 %v5224, %v5217
    %v5666 = vpack.c.b16 %v5225, %v5218
    %v5667 = vpack.c.b16 %v5226, %v5219
    %v5668 = vpack.c.b16 %v5227, %v5220
    %v5669 = vpack.c.b16 %v5228, %v5221
    %v5670 = vpack.c.b16 %v5229, %v5222
    %v5671 = vpack.c.b16 %v5230, %v5223
    %v5672 = vpack.c.b16 %v5238, %v5231
    %v5673 = vpack.c.b16 %v5239, %v5232
    %v5674 = vpack.c.b16 %v5240, %v5233
    %v5675 = vpack.c.b16 %v5241, %v5234
    %v5676 = vpack.c.b16 %v5242, %v5235
    %v5677 = vpack.c.b16 %v5243, %v5236
    %v5678 = vpack.c.b16 %v5244, %v5237
    %v5679 = vpack.c.b16 %v5252, %v5245
    %v5680 = vpack.c.b16 %v5253, %v5246
    %v5681 = vpack.c.b16 %v5254, %v5247
    %v5682 = vpack.c.b16 %v5255, %v5248
    %v5683 = vpack.c.b16 %v5256, %v5249
    %v5684 = vpack.c.b16 %v5257, %v5250
    %v5685 = vpack.c.b16 %v5258, %v5251
    %v5686 = vpack.c.b16 %v5266, %v5259
    %v5687 = vpack.c.b16 %v5267, %v5260
    %v5688 = vpack.c.b16 %v5268, %v5261
    %v5689 = vpack.c.b16 %v5269, %v5262
    %v5690 = vpack.c.b16 %v5270, %v5263
    %v5691 = vpack.c.b16 %v5271, %v5264
    %v5692 = vpack.c.b16 %v5272, %v5265
    %v5693 = vpack.c.b16 %v5280, %v5273
    %v5694 = vpack.c.b16 %v5281, %v5274
    %v5695 = vpack.c.b16 %v5282, %v5275
    %v5696 = vpack.c.b16 %v5283, %v5276
    %v5697 = vpack.c.b16 %v5284, %v5277
    %v5698 = vpack.c.b16 %v5285, %v5278
    %v5699 = vpack.c.b16 %v5286, %v5279
    %v5700 = vpack.c.b16 %v5294, %v5287
    %v5701 = vpack.c.b16 %v5295, %v5288
    %v5702 = vpack.c.b16 %v5296, %v5289
    %v5703 = vpack.c.b16 %v5297, %v5290
    %v5704 = vpack.c.b16 %v5298, %v5291
    %v5705 = vpack.c.b16 %v5299, %v5292
    %v5706 = vpack.c.b16 %v5300, %v5293
    %v5707 = vpack.c.b16 %v5308, %v5301
    %v5708 = vpack.c.b16 %v5309, %v5302
    %v5709 = vpack.c.b16 %v5310, %v5303
    %v5710 = vpack.c.b16 %v5311, %v5304
    %v5711 = vpack.c.b16 %v5312, %v5305
    %v5712 = vpack.c.b16 %v5313, %v5306
    %v5713 = vpack.c.b16 %v5314, %v5307
    %v5714 = vpack.c.b16 %v5322, %v5315
    %v5715 = vpack.c.b16 %v5323, %v5316
    %v5716 = vpack.c.b16 %v5324, %v5317
    %v5717 = vpack.c.b16 %v5325, %v5318
    %v5718 = vpack.c.b16 %v5326, %v5319
    %v5719 = vpack.c.b16 %v5327, %v5320
    %v5720 = vpack.c.b16 %v5328, %v5321
    %6113 = vmatprep.subr.bf16.mxu0 %v5379
    %6114 = vmatpush1.bf16.msra.mxu0 %v5378
    %6115 = vmatprep.subr.bf16.mxu0 %v5372
    %6116 = vmatpush1.bf16.msra.mxu0 %v5371
    %6117 = vmatprep.subr.bf16.mxu0 %v5365
    %6118 = vmatpush1.bf16.msra.mxu0 %v5364
    %6119 = vmatprep.subr.bf16.mxu0 %v5358
    %6120 = vmatpush1.bf16.msra.mxu0 %v5357
    %6121 = vmatprep.subr.bf16.mxu0 %v5351
    %6122 = vmatpush1.bf16.msra.mxu0 %v5350
    %6123 = vmatprep.subr.bf16.mxu0 %v5344
    %6124 = vmatpush1.bf16.msra.mxu0 %v5343
    %6125 = vmatprep.subr.bf16.mxu0 %v5337
    %6126 = vmatpush1.bf16.msra.mxu0 %v5336
    %6127 = vmatprep.subr.bf16.mxu0 %v5330
    %6128 = vmatpush1.bf16.msra.mxu0 %v5329
    %6129 = vmatprep.subr.bf16.mxu0 %v5435
    %6130 = vmatpush2.bf16.msra.mxu0 %v5434
    %6131 = vmatprep.subr.bf16.mxu0 %v5428
    %6132 = vmatpush2.bf16.msra.mxu0 %v5427
    %6133 = vmatprep.subr.bf16.mxu0 %v5421
    %6134 = vmatpush2.bf16.msra.mxu0 %v5420
    %6135 = vmatprep.subr.bf16.mxu0 %v5414
    %6136 = vmatpush2.bf16.msra.mxu0 %v5413
    %6137 = vmatprep.subr.bf16.mxu0 %v5407
    %6138 = vmatpush2.bf16.msra.mxu0 %v5406
    %6139 = vmatprep.subr.bf16.mxu0 %v5400
    %6140 = vmatpush2.bf16.msra.mxu0 %v5399
    %6141 = vmatprep.subr.bf16.mxu0 %v5393
    %6142 = vmatpush2.bf16.msra.mxu0 %v5392
    %6143 = vmatprep.subr.bf16.mxu0 %v5386
    %6144 = vmatpush2.bf16.msra.mxu0 %v5385
    %6145 = vmatprep.mubr.bf16.mxu0 %v3639
    %6146 = vmatmul.mubr.bf16.gmra.mxu0 %v3638
    %v6147 = vpop.f32.mrf.mxu0
    %v6148 = vadd.f32 0.0, %v6147
    %v6149 = vpop.f32.mrf.mxu0
    %v6150 = vadd.f32 0.0, %v6149
    %v6151 = vpop.f32.mrf.mxu0
    %v6152 = vpop.f32.mrf.mxu0
    %6153 = vdwg.mxu0
    %6154 = vmatprep.subr.bf16.mxu0 %v5491
    %6155 = vmatpush1.bf16.msra.mxu0 %v5490
    %6156 = vmatprep.subr.bf16.mxu0 %v5484
    %6157 = vmatpush1.bf16.msra.mxu0 %v5483
    %6158 = vmatprep.subr.bf16.mxu0 %v5477
    %6159 = vmatpush1.bf16.msra.mxu0 %v5476
    %6160 = vmatprep.subr.bf16.mxu0 %v5470
    %6161 = vmatpush1.bf16.msra.mxu0 %v5469
    %6162 = vmatprep.subr.bf16.mxu0 %v5463
    %6163 = vmatpush1.bf16.msra.mxu0 %v5462
    %6164 = vmatprep.subr.bf16.mxu0 %v5456
    %6165 = vmatpush1.bf16.msra.mxu0 %v5455
    %6166 = vmatprep.subr.bf16.mxu0 %v5449
    %6167 = vmatpush1.bf16.msra.mxu0 %v5448
    %6168 = vmatprep.subr.bf16.mxu0 %v5442
    %6169 = vmatpush1.bf16.msra.mxu0 %v5441
    %6170 = vmatprep.subr.bf16.mxu0 %v5547
    %6171 = vmatpush2.bf16.msra.mxu0 %v5546
    %6172 = vmatprep.subr.bf16.mxu0 %v5540
    %6173 = vmatpush2.bf16.msra.mxu0 %v5539
    %6174 = vmatprep.subr.bf16.mxu0 %v5533
    %6175 = vmatpush2.bf16.msra.mxu0 %v5532
    %6176 = vmatprep.subr.bf16.mxu0 %v5526
    %6177 = vmatpush2.bf16.msra.mxu0 %v5525
    %6178 = vmatprep.subr.bf16.mxu0 %v5519
    %6179 = vmatpush2.bf16.msra.mxu0 %v5518
    %6180 = vmatprep.subr.bf16.mxu0 %v5512
    %6181 = vmatpush2.bf16.msra.mxu0 %v5511
    %6182 = vmatprep.subr.bf16.mxu0 %v5505
    %6183 = vmatpush2.bf16.msra.mxu0 %v5504
    %6184 = vmatprep.subr.bf16.mxu0 %v5498
    %6185 = vmatpush2.bf16.msra.mxu0 %v5497
    %6186 = vmatprep.mubr.bf16.mxu0 %v3641
    %6187 = vmatmul.mubr.bf16.gmra.mxu0 %v3640
    %v6188 = vpop.f32.mrf.mxu0
    %v6189 = vadd.f32 %v6148, %v6188
    %v6190 = vpop.f32.mrf.mxu0
    %v6191 = vadd.f32 %v6150, %v6190
    %v6192 = vpop.f32.mrf.mxu0
    %v6193 = vpop.f32.mrf.mxu0
    %6194 = vdwg.mxu0
    %6195 = vmatprep.subr.bf16.mxu0 %v5603
    %6196 = vmatpush1.bf16.msra.mxu0 %v5602
    %6197 = vmatprep.subr.bf16.mxu0 %v5596
    %6198 = vmatpush1.bf16.msra.mxu0 %v5595
    %6199 = vmatprep.subr.bf16.mxu0 %v5589
    %6200 = vmatpush1.bf16.msra.mxu0 %v5588
    %6201 = vmatprep.subr.bf16.mxu0 %v5582
    %6202 = vmatpush1.bf16.msra.mxu0 %v5581
    %6203 = vmatprep.subr.bf16.mxu0 %v5575
    %6204 = vmatpush1.bf16.msra.mxu0 %v5574
    %6205 = vmatprep.subr.bf16.mxu0 %v5568
    %6206 = vmatpush1.bf16.msra.mxu0 %v5567
    %6207 = vmatprep.subr.bf16.mxu0 %v5561
    %6208 = vmatpush1.bf16.msra.mxu0 %v5560
    %6209 = vmatprep.subr.bf16.mxu0 %v5554
    %6210 = vmatpush1.bf16.msra.mxu0 %v5553
    %6211 = vmatprep.subr.bf16.mxu0 %v5659
    %6212 = vmatpush2.bf16.msra.mxu0 %v5658
    %6213 = vmatprep.subr.bf16.mxu0 %v5652
    %6214 = vmatpush2.bf16.msra.mxu0 %v5651
    %6215 = vmatprep.subr.bf16.mxu0 %v5645
    %6216 = vmatpush2.bf16.msra.mxu0 %v5644
    %6217 = vmatprep.subr.bf16.mxu0 %v5638
    %6218 = vmatpush2.bf16.msra.mxu0 %v5637
    %6219 = vmatprep.subr.bf16.mxu0 %v5631
    %6220 = vmatpush2.bf16.msra.mxu0 %v5630
    %6221 = vmatprep.subr.bf16.mxu0 %v5624
    %6222 = vmatpush2.bf16.msra.mxu0 %v5623
    %6223 = vmatprep.subr.bf16.mxu0 %v5617
    %6224 = vmatpush2.bf16.msra.mxu0 %v5616
    %6225 = vmatprep.subr.bf16.mxu0 %v5610
    %6226 = vmatpush2.bf16.msra.mxu0 %v5609
    %6227 = vmatprep.mubr.bf16.mxu0 %v3643
    %6228 = vmatmul.mubr.bf16.gmra.mxu0 %v3642
    %v6229 = vpop.f32.mrf.mxu0
    %v6230 = vadd.f32 %v6189, %v6229
    %v6231 = vpop.f32.mrf.mxu0
    %v6232 = vadd.f32 %v6191, %v6231
    %v6233 = vpop.f32.mrf.mxu0
    %v6234 = vpop.f32.mrf.mxu0
    %6235 = vdwg.mxu0
    %6236 = vmatprep.subr.bf16.mxu0 %v5715
    %6237 = vmatpush1.bf16.msra.mxu0 %v5714
    %6238 = vmatprep.subr.bf16.mxu0 %v5708
    %6239 = vmatpush1.bf16.msra.mxu0 %v5707
    %6240 = vmatprep.subr.bf16.mxu0 %v5701
    %6241 = vmatpush1.bf16.msra.mxu0 %v5700
    %6242 = vmatprep.subr.bf16.mxu0 %v5694
    %6243 = vmatpush1.bf16.msra.mxu0 %v5693
    %6244 = vmatprep.subr.bf16.mxu0 %v5687
    %6245 = vmatpush1.bf16.msra.mxu0 %v5686
    %6246 = vmatprep.subr.bf16.mxu0 %v5680
    %6247 = vmatpush1.bf16.msra.mxu0 %v5679
    %6248 = vmatprep.subr.bf16.mxu0 %v5673
    %6249 = vmatpush1.bf16.msra.mxu0 %v5672
    %6250 = vmatprep.subr.bf16.mxu0 %v5666
    %6251 = vmatpush1.bf16.msra.mxu0 %v5665
    %6252 = vmatprep.subr.bf16.mxu0 0
    %6253 = vmatpush2.bf16.msra.mxu0 0
    %6254 = vmatprep.subr.bf16.mxu0 0
    %6255 = vmatpush2.bf16.msra.mxu0 0
    %6256 = vmatprep.subr.bf16.mxu0 0
    %6257 = vmatpush2.bf16.msra.mxu0 0
    %6258 = vmatprep.subr.bf16.mxu0 0
    %6259 = vmatpush2.bf16.msra.mxu0 0
    %6260 = vmatprep.subr.bf16.mxu0 0
    %6261 = vmatpush2.bf16.msra.mxu0 0
    %6262 = vmatprep.subr.bf16.mxu0 0
    %6263 = vmatpush2.bf16.msra.mxu0 0
    %6264 = vmatprep.subr.bf16.mxu0 0
    %6265 = vmatpush2.bf16.msra.mxu0 0
    %6266 = vmatprep.subr.bf16.mxu0 0
    %6267 = vmatpush2.bf16.msra.mxu0 0
    %6268 = vmatprep.mubr.bf16.mxu0 0
    %6269 = vmatmul.mubr.bf16.gmra.mxu0 %v3644
    %v6270 = vpop.f32.mrf.mxu0
    %v6271 = vadd.f32 %v6230, %v6270
    %v6272 = vpop.f32.mrf.mxu0
    %v6273 = vadd.f32 %v6232, %v6272
    %v6274 = vpop.f32.mrf.mxu0
    %v6275 = vpop.f32.mrf.mxu0
    %6276 = vdwg.mxu0
    %6277 = vmatprep.subr.bf16.mxu0 %v5381
    %6278 = vmatpush1.bf16.msra.mxu0 %v5380
    %6279 = vmatprep.subr.bf16.mxu0 %v5374
    %6280 = vmatpush1.bf16.msra.mxu0 %v5373
    %6281 = vmatprep.subr.bf16.mxu0 %v5367
    %6282 = vmatpush1.bf16.msra.mxu0 %v5366
    %6283 = vmatprep.subr.bf16.mxu0 %v5360
    %6284 = vmatpush1.bf16.msra.mxu0 %v5359
    %6285 = vmatprep.subr.bf16.mxu0 %v5353
    %6286 = vmatpush1.bf16.msra.mxu0 %v5352
    %6287 = vmatprep.subr.bf16.mxu0 %v5346
    %6288 = vmatpush1.bf16.msra.mxu0 %v5345
    %6289 = vmatprep.subr.bf16.mxu0 %v5339
    %6290 = vmatpush1.bf16.msra.mxu0 %v5338
    %6291 = vmatprep.subr.bf16.mxu0 %v5332
    %6292 = vmatpush1.bf16.msra.mxu0 %v5331
    %6293 = vmatprep.subr.bf16.mxu0 %v5437
    %6294 = vmatpush2.bf16.msra.mxu0 %v5436
    %6295 = vmatprep.subr.bf16.mxu0 %v5430
    %6296 = vmatpush2.bf16.msra.mxu0 %v5429
    %6297 = vmatprep.subr.bf16.mxu0 %v5423
    %6298 = vmatpush2.bf16.msra.mxu0 %v5422
    %6299 = vmatprep.subr.bf16.mxu0 %v5416
    %6300 = vmatpush2.bf16.msra.mxu0 %v5415
    %6301 = vmatprep.subr.bf16.mxu0 %v5409
    %6302 = vmatpush2.bf16.msra.mxu0 %v5408
    %6303 = vmatprep.subr.bf16.mxu0 %v5402
    %6304 = vmatpush2.bf16.msra.mxu0 %v5401
    %6305 = vmatprep.subr.bf16.mxu0 %v5395
    %6306 = vmatpush2.bf16.msra.mxu0 %v5394
    %6307 = vmatprep.subr.bf16.mxu0 %v5388
    %6308 = vmatpush2.bf16.msra.mxu0 %v5387
    %6309 = vmatprep.mubr.bf16.mxu0 %v3639
    %6310 = vmatmul.mubr.bf16.gmra.mxu0 %v3638
    %v6311 = vpop.f32.mrf.mxu0
    %v6312 = vadd.f32 0.0, %v6311
    %v6313 = vpop.f32.mrf.mxu0
    %v6314 = vadd.f32 0.0, %v6313
    %v6315 = vpop.f32.mrf.mxu0
    %v6316 = vpop.f32.mrf.mxu0
    %6317 = vdwg.mxu0
    %6318 = vmatprep.subr.bf16.mxu0 %v5493
    %6319 = vmatpush1.bf16.msra.mxu0 %v5492
    %6320 = vmatprep.subr.bf16.mxu0 %v5486
    %6321 = vmatpush1.bf16.msra.mxu0 %v5485
    %6322 = vmatprep.subr.bf16.mxu0 %v5479
    %6323 = vmatpush1.bf16.msra.mxu0 %v5478
    %6324 = vmatprep.subr.bf16.mxu0 %v5472
    %6325 = vmatpush1.bf16.msra.mxu0 %v5471
    %6326 = vmatprep.subr.bf16.mxu0 %v5465
    %6327 = vmatpush1.bf16.msra.mxu0 %v5464
    %6328 = vmatprep.subr.bf16.mxu0 %v5458
    %6329 = vmatpush1.bf16.msra.mxu0 %v5457
    %6330 = vmatprep.subr.bf16.mxu0 %v5451
    %6331 = vmatpush1.bf16.msra.mxu0 %v5450
    %6332 = vmatprep.subr.bf16.mxu0 %v5444
    %6333 = vmatpush1.bf16.msra.mxu0 %v5443
    %6334 = vmatprep.subr.bf16.mxu0 %v5549
    %6335 = vmatpush2.bf16.msra.mxu0 %v5548
    %6336 = vmatprep.subr.bf16.mxu0 %v5542
    %6337 = vmatpush2.bf16.msra.mxu0 %v5541
    %6338 = vmatprep.subr.bf16.mxu0 %v5535
    %6339 = vmatpush2.bf16.msra.mxu0 %v5534
    %6340 = vmatprep.subr.bf16.mxu0 %v5528
    %6341 = vmatpush2.bf16.msra.mxu0 %v5527
    %6342 = vmatprep.subr.bf16.mxu0 %v5521
    %6343 = vmatpush2.bf16.msra.mxu0 %v5520
    %6344 = vmatprep.subr.bf16.mxu0 %v5514
    %6345 = vmatpush2.bf16.msra.mxu0 %v5513
    %6346 = vmatprep.subr.bf16.mxu0 %v5507
    %6347 = vmatpush2.bf16.msra.mxu0 %v5506
    %6348 = vmatprep.subr.bf16.mxu0 %v5500
    %6349 = vmatpush2.bf16.msra.mxu0 %v5499
    %6350 = vmatprep.mubr.bf16.mxu0 %v3641
    %6351 = vmatmul.mubr.bf16.gmra.mxu0 %v3640
    %v6352 = vpop.f32.mrf.mxu0
    %v6353 = vadd.f32 %v6312, %v6352
    %v6354 = vpop.f32.mrf.mxu0
    %v6355 = vadd.f32 %v6314, %v6354
    %v6356 = vpop.f32.mrf.mxu0
    %v6357 = vpop.f32.mrf.mxu0
    %6358 = vdwg.mxu0
    %6359 = vmatprep.subr.bf16.mxu0 %v5605
    %6360 = vmatpush1.bf16.msra.mxu0 %v5604
    %6361 = vmatprep.subr.bf16.mxu0 %v5598
    %6362 = vmatpush1.bf16.msra.mxu0 %v5597
    %6363 = vmatprep.subr.bf16.mxu0 %v5591
    %6364 = vmatpush1.bf16.msra.mxu0 %v5590
    %6365 = vmatprep.subr.bf16.mxu0 %v5584
    %6366 = vmatpush1.bf16.msra.mxu0 %v5583
    %6367 = vmatprep.subr.bf16.mxu0 %v5577
    %6368 = vmatpush1.bf16.msra.mxu0 %v5576
    %6369 = vmatprep.subr.bf16.mxu0 %v5570
    %6370 = vmatpush1.bf16.msra.mxu0 %v5569
    %6371 = vmatprep.subr.bf16.mxu0 %v5563
    %6372 = vmatpush1.bf16.msra.mxu0 %v5562
    %6373 = vmatprep.subr.bf16.mxu0 %v5556
    %6374 = vmatpush1.bf16.msra.mxu0 %v5555
    %6375 = vmatprep.subr.bf16.mxu0 %v5661
    %6376 = vmatpush2.bf16.msra.mxu0 %v5660
    %6377 = vmatprep.subr.bf16.mxu0 %v5654
    %6378 = vmatpush2.bf16.msra.mxu0 %v5653
    %6379 = vmatprep.subr.bf16.mxu0 %v5647
    %6380 = vmatpush2.bf16.msra.mxu0 %v5646
    %6381 = vmatprep.subr.bf16.mxu0 %v5640
    %6382 = vmatpush2.bf16.msra.mxu0 %v5639
    %6383 = vmatprep.subr.bf16.mxu0 %v5633
    %6384 = vmatpush2.bf16.msra.mxu0 %v5632
    %6385 = vmatprep.subr.bf16.mxu0 %v5626
    %6386 = vmatpush2.bf16.msra.mxu0 %v5625
    %6387 = vmatprep.subr.bf16.mxu0 %v5619
    %6388 = vmatpush2.bf16.msra.mxu0 %v5618
    %6389 = vmatprep.subr.bf16.mxu0 %v5612
    %6390 = vmatpush2.bf16.msra.mxu0 %v5611
    %6391 = vmatprep.mubr.bf16.mxu0 %v3643
    %6392 = vmatmul.mubr.bf16.gmra.mxu0 %v3642
    %v6393 = vpop.f32.mrf.mxu0
    %v6394 = vadd.f32 %v6353, %v6393
    %v6395 = vpop.f32.mrf.mxu0
    %v6396 = vadd.f32 %v6355, %v6395
    %v6397 = vpop.f32.mrf.mxu0
    %v6398 = vpop.f32.mrf.mxu0
    %6399 = vdwg.mxu0
    %6400 = vmatprep.subr.bf16.mxu0 %v5717
    %6401 = vmatpush1.bf16.msra.mxu0 %v5716
    %6402 = vmatprep.subr.bf16.mxu0 %v5710
    %6403 = vmatpush1.bf16.msra.mxu0 %v5709
    %6404 = vmatprep.subr.bf16.mxu0 %v5703
    %6405 = vmatpush1.bf16.msra.mxu0 %v5702
    %6406 = vmatprep.subr.bf16.mxu0 %v5696
    %6407 = vmatpush1.bf16.msra.mxu0 %v5695
    %6408 = vmatprep.subr.bf16.mxu0 %v5689
    %6409 = vmatpush1.bf16.msra.mxu0 %v5688
    %6410 = vmatprep.subr.bf16.mxu0 %v5682
    %6411 = vmatpush1.bf16.msra.mxu0 %v5681
    %6412 = vmatprep.subr.bf16.mxu0 %v5675
    %6413 = vmatpush1.bf16.msra.mxu0 %v5674
    %6414 = vmatprep.subr.bf16.mxu0 %v5668
    %6415 = vmatpush1.bf16.msra.mxu0 %v5667
    %6416 = vmatprep.subr.bf16.mxu0 0
    %6417 = vmatpush2.bf16.msra.mxu0 0
    %6418 = vmatprep.subr.bf16.mxu0 0
    %6419 = vmatpush2.bf16.msra.mxu0 0
    %6420 = vmatprep.subr.bf16.mxu0 0
    %6421 = vmatpush2.bf16.msra.mxu0 0
    %6422 = vmatprep.subr.bf16.mxu0 0
    %6423 = vmatpush2.bf16.msra.mxu0 0
    %6424 = vmatprep.subr.bf16.mxu0 0
    %6425 = vmatpush2.bf16.msra.mxu0 0
    %6426 = vmatprep.subr.bf16.mxu0 0
    %6427 = vmatpush2.bf16.msra.mxu0 0
    %6428 = vmatprep.subr.bf16.mxu0 0
    %6429 = vmatpush2.bf16.msra.mxu0 0
    %6430 = vmatprep.subr.bf16.mxu0 0
    %6431 = vmatpush2.bf16.msra.mxu0 0
    %6432 = vmatprep.mubr.bf16.mxu0 0
    %6433 = vmatmul.mubr.bf16.gmra.mxu0 %v3644
    %v6434 = vpop.f32.mrf.mxu0
    %v6435 = vadd.f32 %v6394, %v6434
    %v6436 = vpop.f32.mrf.mxu0
    %v6437 = vadd.f32 %v6396, %v6436
    %v6438 = vpop.f32.mrf.mxu0
    %v6439 = vpop.f32.mrf.mxu0
    %6440 = vdwg.mxu0
    %6441 = vmatprep.subr.bf16.mxu0 %v5383
    %6442 = vmatpush1.bf16.msra.mxu0 %v5382
    %6443 = vmatprep.subr.bf16.mxu0 %v5376
    %6444 = vmatpush1.bf16.msra.mxu0 %v5375
    %6445 = vmatprep.subr.bf16.mxu0 %v5369
    %6446 = vmatpush1.bf16.msra.mxu0 %v5368
    %6447 = vmatprep.subr.bf16.mxu0 %v5362
    %6448 = vmatpush1.bf16.msra.mxu0 %v5361
    %6449 = vmatprep.subr.bf16.mxu0 %v5355
    %6450 = vmatpush1.bf16.msra.mxu0 %v5354
    %6451 = vmatprep.subr.bf16.mxu0 %v5348
    %6452 = vmatpush1.bf16.msra.mxu0 %v5347
    %6453 = vmatprep.subr.bf16.mxu0 %v5341
    %6454 = vmatpush1.bf16.msra.mxu0 %v5340
    %6455 = vmatprep.subr.bf16.mxu0 %v5334
    %6456 = vmatpush1.bf16.msra.mxu0 %v5333
    %6457 = vmatprep.subr.bf16.mxu0 %v5439
    %6458 = vmatpush2.bf16.msra.mxu0 %v5438
    %6459 = vmatprep.subr.bf16.mxu0 %v5432
    %6460 = vmatpush2.bf16.msra.mxu0 %v5431
    %6461 = vmatprep.subr.bf16.mxu0 %v5425
    %6462 = vmatpush2.bf16.msra.mxu0 %v5424
    %6463 = vmatprep.subr.bf16.mxu0 %v5418
    %6464 = vmatpush2.bf16.msra.mxu0 %v5417
    %6465 = vmatprep.subr.bf16.mxu0 %v5411
    %6466 = vmatpush2.bf16.msra.mxu0 %v5410
    %6467 = vmatprep.subr.bf16.mxu0 %v5404
    %6468 = vmatpush2.bf16.msra.mxu0 %v5403
    %6469 = vmatprep.subr.bf16.mxu0 %v5397
    %6470 = vmatpush2.bf16.msra.mxu0 %v5396
    %6471 = vmatprep.subr.bf16.mxu0 %v5390
    %6472 = vmatpush2.bf16.msra.mxu0 %v5389
    %6473 = vmatprep.mubr.bf16.mxu0 %v3639
    %6474 = vmatmul.mubr.bf16.gmra.mxu0 %v3638
    %v6475 = vpop.f32.mrf.mxu0
    %v6476 = vadd.f32 0.0, %v6475
    %v6477 = vpop.f32.mrf.mxu0
    %v6478 = vadd.f32 0.0, %v6477
    %v6479 = vpop.f32.mrf.mxu0
    %v6480 = vpop.f32.mrf.mxu0
    %6481 = vdwg.mxu0
    %6482 = vmatprep.subr.bf16.mxu0 %v5495
    %6483 = vmatpush1.bf16.msra.mxu0 %v5494
    %6484 = vmatprep.subr.bf16.mxu0 %v5488
    %6485 = vmatpush1.bf16.msra.mxu0 %v5487
    %6486 = vmatprep.subr.bf16.mxu0 %v5481
    %6487 = vmatpush1.bf16.msra.mxu0 %v5480
    %6488 = vmatprep.subr.bf16.mxu0 %v5474
    %6489 = vmatpush1.bf16.msra.mxu0 %v5473
    %6490 = vmatprep.subr.bf16.mxu0 %v5467
    %6491 = vmatpush1.bf16.msra.mxu0 %v5466
    %6492 = vmatprep.subr.bf16.mxu0 %v5460
    %6493 = vmatpush1.bf16.msra.mxu0 %v5459
    %6494 = vmatprep.subr.bf16.mxu0 %v5453
    %6495 = vmatpush1.bf16.msra.mxu0 %v5452
    %6496 = vmatprep.subr.bf16.mxu0 %v5446
    %6497 = vmatpush1.bf16.msra.mxu0 %v5445
    %6498 = vmatprep.subr.bf16.mxu0 %v5551
    %6499 = vmatpush2.bf16.msra.mxu0 %v5550
    %6500 = vmatprep.subr.bf16.mxu0 %v5544
    %6501 = vmatpush2.bf16.msra.mxu0 %v5543
    %6502 = vmatprep.subr.bf16.mxu0 %v5537
    %6503 = vmatpush2.bf16.msra.mxu0 %v5536
    %6504 = vmatprep.subr.bf16.mxu0 %v5530
    %6505 = vmatpush2.bf16.msra.mxu0 %v5529
    %6506 = vmatprep.subr.bf16.mxu0 %v5523
    %6507 = vmatpush2.bf16.msra.mxu0 %v5522
    %6508 = vmatprep.subr.bf16.mxu0 %v5516
    %6509 = vmatpush2.bf16.msra.mxu0 %v5515
    %6510 = vmatprep.subr.bf16.mxu0 %v5509
    %6511 = vmatpush2.bf16.msra.mxu0 %v5508
    %6512 = vmatprep.subr.bf16.mxu0 %v5502
    %6513 = vmatpush2.bf16.msra.mxu0 %v5501
    %6514 = vmatprep.mubr.bf16.mxu0 %v3641
    %6515 = vmatmul.mubr.bf16.gmra.mxu0 %v3640
    %v6516 = vpop.f32.mrf.mxu0
    %v6517 = vadd.f32 %v6476, %v6516
    %v6518 = vpop.f32.mrf.mxu0
    %v6519 = vadd.f32 %v6478, %v6518
    %v6520 = vpop.f32.mrf.mxu0
    %v6521 = vpop.f32.mrf.mxu0
    %6522 = vdwg.mxu0
    %6523 = vmatprep.subr.bf16.mxu0 %v5607
    %6524 = vmatpush1.bf16.msra.mxu0 %v5606
    %6525 = vmatprep.subr.bf16.mxu0 %v5600
    %6526 = vmatpush1.bf16.msra.mxu0 %v5599
    %6527 = vmatprep.subr.bf16.mxu0 %v5593
    %6528 = vmatpush1.bf16.msra.mxu0 %v5592
    %6529 = vmatprep.subr.bf16.mxu0 %v5586
    %6530 = vmatpush1.bf16.msra.mxu0 %v5585
    %6531 = vmatprep.subr.bf16.mxu0 %v5579
    %6532 = vmatpush1.bf16.msra.mxu0 %v5578
    %6533 = vmatprep.subr.bf16.mxu0 %v5572
    %6534 = vmatpush1.bf16.msra.mxu0 %v5571
    %6535 = vmatprep.subr.bf16.mxu0 %v5565
    %6536 = vmatpush1.bf16.msra.mxu0 %v5564
    %6537 = vmatprep.subr.bf16.mxu0 %v5558
    %6538 = vmatpush1.bf16.msra.mxu0 %v5557
    %6539 = vmatprep.subr.bf16.mxu0 %v5663
    %6540 = vmatpush2.bf16.msra.mxu0 %v5662
    %6541 = vmatprep.subr.bf16.mxu0 %v5656
    %6542 = vmatpush2.bf16.msra.mxu0 %v5655
    %6543 = vmatprep.subr.bf16.mxu0 %v5649
    %6544 = vmatpush2.bf16.msra.mxu0 %v5648
    %6545 = vmatprep.subr.bf16.mxu0 %v5642
    %6546 = vmatpush2.bf16.msra.mxu0 %v5641
    %6547 = vmatprep.subr.bf16.mxu0 %v5635
    %6548 = vmatpush2.bf16.msra.mxu0 %v5634
    %6549 = vmatprep.subr.bf16.mxu0 %v5628
    %6550 = vmatpush2.bf16.msra.mxu0 %v5627
    %6551 = vmatprep.subr.bf16.mxu0 %v5621
    %6552 = vmatpush2.bf16.msra.mxu0 %v5620
    %6553 = vmatprep.subr.bf16.mxu0 %v5614
    %6554 = vmatpush2.bf16.msra.mxu0 %v5613
    %6555 = vmatprep.mubr.bf16.mxu0 %v3643
    %6556 = vmatmul.mubr.bf16.gmra.mxu0 %v3642
    %v6557 = vpop.f32.mrf.mxu0
    %v6558 = vadd.f32 %v6517, %v6557
    %v6559 = vpop.f32.mrf.mxu0
    %v6560 = vadd.f32 %v6519, %v6559
    %v6561 = vpop.f32.mrf.mxu0
    %v6562 = vpop.f32.mrf.mxu0
    %6563 = vdwg.mxu0
    %6564 = vmatprep.subr.bf16.mxu0 %v5719
    %6565 = vmatpush1.bf16.msra.mxu0 %v5718
    %6566 = vmatprep.subr.bf16.mxu0 %v5712
    %6567 = vmatpush1.bf16.msra.mxu0 %v5711
    %6568 = vmatprep.subr.bf16.mxu0 %v5705
    %6569 = vmatpush1.bf16.msra.mxu0 %v5704
    %6570 = vmatprep.subr.bf16.mxu0 %v5698
    %6571 = vmatpush1.bf16.msra.mxu0 %v5697
    %6572 = vmatprep.subr.bf16.mxu0 %v5691
    %6573 = vmatpush1.bf16.msra.mxu0 %v5690
    %6574 = vmatprep.subr.bf16.mxu0 %v5684
    %6575 = vmatpush1.bf16.msra.mxu0 %v5683
    %6576 = vmatprep.subr.bf16.mxu0 %v5677
    %6577 = vmatpush1.bf16.msra.mxu0 %v5676
    %6578 = vmatprep.subr.bf16.mxu0 %v5670
    %6579 = vmatpush1.bf16.msra.mxu0 %v5669
    %6580 = vmatprep.subr.bf16.mxu0 0
    %6581 = vmatpush2.bf16.msra.mxu0 0
    %6582 = vmatprep.subr.bf16.mxu0 0
    %6583 = vmatpush2.bf16.msra.mxu0 0
    %6584 = vmatprep.subr.bf16.mxu0 0
    %6585 = vmatpush2.bf16.msra.mxu0 0
    %6586 = vmatprep.subr.bf16.mxu0 0
    %6587 = vmatpush2.bf16.msra.mxu0 0
    %6588 = vmatprep.subr.bf16.mxu0 0
    %6589 = vmatpush2.bf16.msra.mxu0 0
    %6590 = vmatprep.subr.bf16.mxu0 0
    %6591 = vmatpush2.bf16.msra.mxu0 0
    %6592 = vmatprep.subr.bf16.mxu0 0
    %6593 = vmatpush2.bf16.msra.mxu0 0
    %6594 = vmatprep.subr.bf16.mxu0 0
    %6595 = vmatpush2.bf16.msra.mxu0 0
    %6596 = vmatprep.mubr.bf16.mxu0 0
    %6597 = vmatmul.mubr.bf16.gmra.mxu0 %v3644
    %v6598 = vpop.f32.mrf.mxu0
    %v6599 = vadd.f32 %v6558, %v6598
    %v6600 = vpop.f32.mrf.mxu0
    %v6601 = vadd.f32 %v6560, %v6600
    %v6602 = vpop.f32.mrf.mxu0
    %v6603 = vpop.f32.mrf.mxu0
    %6604 = vdwg.mxu0
    %6605 = vmatprep.subr.bf16.mxu0 0
    %6606 = vmatpush1.bf16.msra.mxu0 %v5384
    %6607 = vmatprep.subr.bf16.mxu0 0
    %6608 = vmatpush1.bf16.msra.mxu0 %v5377
    %6609 = vmatprep.subr.bf16.mxu0 0
    %6610 = vmatpush1.bf16.msra.mxu0 %v5370
    %6611 = vmatprep.subr.bf16.mxu0 0
    %6612 = vmatpush1.bf16.msra.mxu0 %v5363
    %6613 = vmatprep.subr.bf16.mxu0 0
    %6614 = vmatpush1.bf16.msra.mxu0 %v5356
    %6615 = vmatprep.subr.bf16.mxu0 0
    %6616 = vmatpush1.bf16.msra.mxu0 %v5349
    %6617 = vmatprep.subr.bf16.mxu0 0
    %6618 = vmatpush1.bf16.msra.mxu0 %v5342
    %6619 = vmatprep.subr.bf16.mxu0 0
    %6620 = vmatpush1.bf16.msra.mxu0 %v5335
    %6621 = vmatprep.subr.bf16.mxu0 0
    %6622 = vmatpush2.bf16.msra.mxu0 %v5440
    %6623 = vmatprep.subr.bf16.mxu0 0
    %6624 = vmatpush2.bf16.msra.mxu0 %v5433
    %6625 = vmatprep.subr.bf16.mxu0 0
    %6626 = vmatpush2.bf16.msra.mxu0 %v5426
    %6627 = vmatprep.subr.bf16.mxu0 0
    %6628 = vmatpush2.bf16.msra.mxu0 %v5419
    %6629 = vmatprep.subr.bf16.mxu0 0
    %6630 = vmatpush2.bf16.msra.mxu0 %v5412
    %6631 = vmatprep.subr.bf16.mxu0 0
    %6632 = vmatpush2.bf16.msra.mxu0 %v5405
    %6633 = vmatprep.subr.bf16.mxu0 0
    %6634 = vmatpush2.bf16.msra.mxu0 %v5398
    %6635 = vmatprep.subr.bf16.mxu0 0
    %6636 = vmatpush2.bf16.msra.mxu0 %v5391
    %6637 = vmatprep.mubr.bf16.mxu0 %v3639
    %6638 = vmatmul.mubr.bf16.gmra.mxu0 %v3638
    %v6639 = vpop.f32.mrf.mxu0
    %v6640 = vadd.f32 0.0, %v6639
    %v6641 = vpop.f32.mrf.mxu0
    %v6642 = vpop.f32.mrf.mxu0
    %v6643 = vpop.f32.mrf.mxu0
    %6644 = vdwg.mxu0
    %6645 = vmatprep.subr.bf16.mxu0 0
    %6646 = vmatpush1.bf16.msra.mxu0 %v5496
    %6647 = vmatprep.subr.bf16.mxu0 0
    %6648 = vmatpush1.bf16.msra.mxu0 %v5489
    %6649 = vmatprep.subr.bf16.mxu0 0
    %6650 = vmatpush1.bf16.msra.mxu0 %v5482
    %6651 = vmatprep.subr.bf16.mxu0 0
    %6652 = vmatpush1.bf16.msra.mxu0 %v5475
    %6653 = vmatprep.subr.bf16.mxu0 0
    %6654 = vmatpush1.bf16.msra.mxu0 %v5468
    %6655 = vmatprep.subr.bf16.mxu0 0
    %6656 = vmatpush1.bf16.msra.mxu0 %v5461
    %6657 = vmatprep.subr.bf16.mxu0 0
    %6658 = vmatpush1.bf16.msra.mxu0 %v5454
    %6659 = vmatprep.subr.bf16.mxu0 0
    %6660 = vmatpush1.bf16.msra.mxu0 %v5447
    %6661 = vmatprep.subr.bf16.mxu0 0
    %6662 = vmatpush2.bf16.msra.mxu0 %v5552
    %6663 = vmatprep.subr.bf16.mxu0 0
    %6664 = vmatpush2.bf16.msra.mxu0 %v5545
    %6665 = vmatprep.subr.bf16.mxu0 0
    %6666 = vmatpush2.bf16.msra.mxu0 %v5538
    %6667 = vmatprep.subr.bf16.mxu0 0
    %6668 = vmatpush2.bf16.msra.mxu0 %v5531
    %6669 = vmatprep.subr.bf16.mxu0 0
    %6670 = vmatpush2.bf16.msra.mxu0 %v5524
    %6671 = vmatprep.subr.bf16.mxu0 0
    %6672 = vmatpush2.bf16.msra.mxu0 %v5517
    %6673 = vmatprep.subr.bf16.mxu0 0
    %6674 = vmatpush2.bf16.msra.mxu0 %v5510
    %6675 = vmatprep.subr.bf16.mxu0 0
    %6676 = vmatpush2.bf16.msra.mxu0 %v5503
    %6677 = vmatprep.mubr.bf16.mxu0 %v3641
    %6678 = vmatmul.mubr.bf16.gmra.mxu0 %v3640
    %v6679 = vpop.f32.mrf.mxu0
    %v6680 = vadd.f32 %v6640, %v6679
    %v6681 = vpop.f32.mrf.mxu0
    %v6682 = vpop.f32.mrf.mxu0
    %v6683 = vpop.f32.mrf.mxu0
    %6684 = vdwg.mxu0
    %6685 = vmatprep.subr.bf16.mxu0 0
    %6686 = vmatpush1.bf16.msra.mxu0 %v5608
    %6687 = vmatprep.subr.bf16.mxu0 0
    %6688 = vmatpush1.bf16.msra.mxu0 %v5601
    %6689 = vmatprep.subr.bf16.mxu0 0
    %6690 = vmatpush1.bf16.msra.mxu0 %v5594
    %6691 = vmatprep.subr.bf16.mxu0 0
    %6692 = vmatpush1.bf16.msra.mxu0 %v5587
    %6693 = vmatprep.subr.bf16.mxu0 0
    %6694 = vmatpush1.bf16.msra.mxu0 %v5580
    %6695 = vmatprep.subr.bf16.mxu0 0
    %6696 = vmatpush1.bf16.msra.mxu0 %v5573
    %6697 = vmatprep.subr.bf16.mxu0 0
    %6698 = vmatpush1.bf16.msra.mxu0 %v5566
    %6699 = vmatprep.subr.bf16.mxu0 0
    %6700 = vmatpush1.bf16.msra.mxu0 %v5559
    %6701 = vmatprep.subr.bf16.mxu0 0
    %6702 = vmatpush2.bf16.msra.mxu0 %v5664
    %6703 = vmatprep.subr.bf16.mxu0 0
    %6704 = vmatpush2.bf16.msra.mxu0 %v5657
    %6705 = vmatprep.subr.bf16.mxu0 0
    %6706 = vmatpush2.bf16.msra.mxu0 %v5650
    %6707 = vmatprep.subr.bf16.mxu0 0
    %6708 = vmatpush2.bf16.msra.mxu0 %v5643
    %6709 = vmatprep.subr.bf16.mxu0 0
    %6710 = vmatpush2.bf16.msra.mxu0 %v5636
    %6711 = vmatprep.subr.bf16.mxu0 0
    %6712 = vmatpush2.bf16.msra.mxu0 %v5629
    %6713 = vmatprep.subr.bf16.mxu0 0
    %6714 = vmatpush2.bf16.msra.mxu0 %v5622
    %6715 = vmatprep.subr.bf16.mxu0 0
    %6716 = vmatpush2.bf16.msra.mxu0 %v5615
    %6717 = vmatprep.mubr.bf16.mxu0 %v3643
    %6718 = vmatmul.mubr.bf16.gmra.mxu0 %v3642
    %v6719 = vpop.f32.mrf.mxu0
    %v6720 = vadd.f32 %v6680, %v6719
    %v6721 = vpop.f32.mrf.mxu0
    %v6722 = vpop.f32.mrf.mxu0
    %v6723 = vpop.f32.mrf.mxu0
    %6724 = vdwg.mxu0
    %6725 = vmatprep.subr.bf16.mxu0 0
    %6726 = vmatpush1.bf16.msra.mxu0 %v5720
    %6727 = vmatprep.subr.bf16.mxu0 0
    %6728 = vmatpush1.bf16.msra.mxu0 %v5713
    %6729 = vmatprep.subr.bf16.mxu0 0
    %6730 = vmatpush1.bf16.msra.mxu0 %v5706
    %6731 = vmatprep.subr.bf16.mxu0 0
    %6732 = vmatpush1.bf16.msra.mxu0 %v5699
    %6733 = vmatprep.subr.bf16.mxu0 0
    %6734 = vmatpush1.bf16.msra.mxu0 %v5692
    %6735 = vmatprep.subr.bf16.mxu0 0
    %6736 = vmatpush1.bf16.msra.mxu0 %v5685
    %6737 = vmatprep.subr.bf16.mxu0 0
    %6738 = vmatpush1.bf16.msra.mxu0 %v5678
    %6739 = vmatprep.subr.bf16.mxu0 0
    %6740 = vmatpush1.bf16.msra.mxu0 %v5671
    %6741 = vmatprep.subr.bf16.mxu0 0
    %6742 = vmatpush2.bf16.msra.mxu0 0
    %6743 = vmatprep.subr.bf16.mxu0 0
    %6744 = vmatpush2.bf16.msra.mxu0 0
    %6745 = vmatprep.subr.bf16.mxu0 0
    %6746 = vmatpush2.bf16.msra.mxu0 0
    %6747 = vmatprep.subr.bf16.mxu0 0
    %6748 = vmatpush2.bf16.msra.mxu0 0
    %6749 = vmatprep.subr.bf16.mxu0 0
    %6750 = vmatpush2.bf16.msra.mxu0 0
    %6751 = vmatprep.subr.bf16.mxu0 0
    %6752 = vmatpush2.bf16.msra.mxu0 0
    %6753 = vmatprep.subr.bf16.mxu0 0
    %6754 = vmatpush2.bf16.msra.mxu0 0
    %6755 = vmatprep.subr.bf16.mxu0 0
    %6756 = vmatpush2.bf16.msra.mxu0 0
    %6757 = vmatprep.mubr.bf16.mxu0 0
    %6758 = vmatmul.mubr.bf16.gmra.mxu0 %v3644
    %v6759 = vpop.f32.mrf.mxu0
    %v6760 = vadd.f32 %v6720, %v6759
    %v6761 = vpop.f32.mrf.mxu0
    %v6762 = vpop.f32.mrf.mxu0
    %v6763 = vpop.f32.mrf.mxu0
    %6764 = vdwg.mxu0
    %v6765 = vld [vmem:[#allocation13] sm:$0xff]
    %v6766 = vld [vmem:[#allocation14] sm:$0xff]
    %v6767 = vrot.slane %v6271, 4
    %v6768 = vadd.f32 %v6271, %v6767
    %v6769 = vrot.slane %v6768, 2
    %v6770 = vadd.f32 %v6768, %v6769
    %v6771 = vrot.slane %v6770, 1
    %v6772 = vadd.f32 %v6770, %v6771
    %v6773 = vrot.slane %v6273, 4
    %v6774 = vadd.f32 %v6273, %v6773
    %v6775 = vrot.slane %v6774, 2
    %v6776 = vadd.f32 %v6774, %v6775
    %v6777 = vrot.slane %v6776, 1
    %v6778 = vadd.f32 %v6776, %v6777
    %v6779 = vrot.slane %v6435, 4
    %v6780 = vadd.f32 %v6435, %v6779
    %v6781 = vrot.slane %v6780, 2
    %v6782 = vadd.f32 %v6780, %v6781
    %v6783 = vrot.slane %v6782, 1
    %v6784 = vadd.f32 %v6782, %v6783
    %v6785 = vrot.slane %v6437, 4
    %v6786 = vadd.f32 %v6437, %v6785
    %v6787 = vrot.slane %v6786, 2
    %v6788 = vadd.f32 %v6786, %v6787
    %v6789 = vrot.slane %v6788, 1
    %v6790 = vadd.f32 %v6788, %v6789
    %v6791 = vrot.slane %v6599, 4
    %v6792 = vadd.f32 %v6599, %v6791
    %v6793 = vrot.slane %v6792, 2
    %v6794 = vadd.f32 %v6792, %v6793
    %v6795 = vrot.slane %v6794, 1
    %v6796 = vadd.f32 %v6794, %v6795
    %v6797 = vrot.slane %v6601, 4
    %v6798 = vadd.f32 %v6601, %v6797
    %v6799 = vrot.slane %v6798, 2
    %v6800 = vadd.f32 %v6798, %v6799
    %v6801 = vrot.slane %v6800, 1
    %v6802 = vadd.f32 %v6800, %v6801
    %v6803 = vrot.slane %v6760, 4
    %v6804 = vadd.f32 %v6760, %v6803
    %v6805 = vrot.slane %v6804, 2
    %v6806 = vadd.f32 %v6804, %v6805
    %v6807 = vrot.slane %v6806, 1
    %v6808 = vadd.f32 %v6806, %v6807
    %v6809 = vmul.f32 %v6772, %v3325
    %v6810 = vmul.f32 %v6778, %v3325
    %v6811 = vmul.f32 %v6784, %v3325
    %v6812 = vmul.f32 %v6790, %v3325
    %v6813 = vmul.f32 %v6796, %v3325
    %v6814 = vmul.f32 %v6802, %v3325
    %v6815 = vmul.f32 %v6808, %v3325
    %v6816 = vmul.f32 %v6271, %v6271
    %v6817 = vmul.f32 %v6273, %v6273
    %v6818 = vmul.f32 %v6435, %v6435
    %v6819 = vmul.f32 %v6437, %v6437
    %v6820 = vmul.f32 %v6599, %v6599
    %v6821 = vmul.f32 %v6601, %v6601
    %v6822 = vmul.f32 %v6760, %v6760
    %v6823 = vrot.slane %v6816, 4
    %v6824 = vadd.f32 %v6816, %v6823
    %v6825 = vrot.slane %v6824, 2
    %v6826 = vadd.f32 %v6824, %v6825
    %v6827 = vrot.slane %v6826, 1
    %v6828 = vadd.f32 %v6826, %v6827
    %v6829 = vrot.slane %v6817, 4
    %v6830 = vadd.f32 %v6817, %v6829
    %v6831 = vrot.slane %v6830, 2
    %v6832 = vadd.f32 %v6830, %v6831
    %v6833 = vrot.slane %v6832, 1
    %v6834 = vadd.f32 %v6832, %v6833
    %v6835 = vrot.slane %v6818, 4
    %v6836 = vadd.f32 %v6818, %v6835
    %v6837 = vrot.slane %v6836, 2
    %v6838 = vadd.f32 %v6836, %v6837
    %v6839 = vrot.slane %v6838, 1
    %v6840 = vadd.f32 %v6838, %v6839
    %v6841 = vrot.slane %v6819, 4
    %v6842 = vadd.f32 %v6819, %v6841
    %v6843 = vrot.slane %v6842, 2
    %v6844 = vadd.f32 %v6842, %v6843
    %v6845 = vrot.slane %v6844, 1
    %v6846 = vadd.f32 %v6844, %v6845
    %v6847 = vrot.slane %v6820, 4
    %v6848 = vadd.f32 %v6820, %v6847
    %v6849 = vrot.slane %v6848, 2
    %v6850 = vadd.f32 %v6848, %v6849
    %v6851 = vrot.slane %v6850, 1
    %v6852 = vadd.f32 %v6850, %v6851
    %v6853 = vrot.slane %v6821, 4
    %v6854 = vadd.f32 %v6821, %v6853
    %v6855 = vrot.slane %v6854, 2
    %v6856 = vadd.f32 %v6854, %v6855
    %v6857 = vrot.slane %v6856, 1
    %v6858 = vadd.f32 %v6856, %v6857
    %v6859 = vrot.slane %v6822, 4
    %v6860 = vadd.f32 %v6822, %v6859
    %v6861 = vrot.slane %v6860, 2
    %v6862 = vadd.f32 %v6860, %v6861
    %v6863 = vrot.slane %v6862, 1
    %v6864 = vadd.f32 %v6862, %v6863
    %v6865 = vmul.f32 %v6828, %v3325
    %v6866 = vmul.f32 %v6834, %v3325
    %v6867 = vmul.f32 %v6840, %v3325
    %v6868 = vmul.f32 %v6846, %v3325
    %v6869 = vmul.f32 %v6852, %v3325
    %v6870 = vmul.f32 %v6858, %v3325
    %v6871 = vmul.f32 %v6864, %v3325
    %v6872 = vmul.f32 %v6809, %v6809
    %v6873 = vmul.f32 %v6810, %v6810
    %v6874 = vmul.f32 %v6811, %v6811
    %v6875 = vmul.f32 %v6812, %v6812
    %v6876 = vmul.f32 %v6813, %v6813
    %v6877 = vmul.f32 %v6814, %v6814
    %v6878 = vmul.f32 %v6815, %v6815
    %v6879 = vsub.f32 %v6865, %v6872
    %v6880 = vsub.f32 %v6866, %v6873
    %v6881 = vsub.f32 %v6867, %v6874
    %v6882 = vsub.f32 %v6868, %v6875
    %v6883 = vsub.f32 %v6869, %v6876
    %v6884 = vsub.f32 %v6870, %v6877
    %v6885 = vsub.f32 %v6871, %v6878
    %v6886 = vmax.f32 %v6879, 0.0
    %v6887 = vmax.f32 %v6880, 0.0
    %v6888 = vmax.f32 %v6881, 0.0
    %v6889 = vmax.f32 %v6882, 0.0
    %v6890 = vmax.f32 %v6883, 0.0
    %v6891 = vmax.f32 %v6884, 0.0
    %v6892 = vmax.f32 %v6885, 0.0
    %v6893 = vadd.f32 %v6886, 1e-05
    %v6894 = vadd.f32 %v6887, 1e-05
    %v6895 = vadd.f32 %v6888, 1e-05
    %v6896 = vadd.f32 %v6889, 1e-05
    %v6897 = vadd.f32 %v6890, 1e-05
    %v6898 = vadd.f32 %v6891, 1e-05
    %v6899 = vadd.f32 %v6892, 1e-05
    %v6900 = vrsqrt.pop %v6893
    %v6901 = vrsqrt.pop %v6894
    %v6902 = vrsqrt.pop %v6895
    %v6903 = vrsqrt.pop %v6896
    %v6904 = vrsqrt.pop %v6897
    %v6905 = vrsqrt.pop %v6898
    %v6906 = vrsqrt.pop %v6899
    %v6914 = vcombine.low %v6900, %v6901
    %v6915 = vcombine.low %v6902, %v6903
    %v6916 = vcombine.low %v6904, %v6905
    %v6918 = vunpack.c.l.s4 1966171168
    %v6919 = vunpack.c.0.s8 %v6918
    %v6920 = vlaneseq
    %v6921 = vshrl.u32 %v6920, 7
    %v6922 = vsub.s32 %v6919, %v6921
    %v6923 = vrot.slane %v6914, %v6922
    %v6925 = vunpack.c.l.s4 1966171168
    %v6926 = vunpack.c.0.s8 %v6925
    %v6927 = vlaneseq
    %v6928 = vshrl.u32 %v6927, 7
    %v6929 = vsub.s32 %v6926, %v6928
    %v6930 = vrot.slane %v6915, %v6929
    %v6932 = vunpack.c.l.s4 1966171168
    %v6933 = vunpack.c.0.s8 %v6932
    %v6934 = vlaneseq
    %v6935 = vshrl.u32 %v6934, 7
    %v6936 = vsub.s32 %v6933, %v6935
    %v6937 = vrot.slane %v6916, %v6936
    %v6939 = vunpack.c.l.s4 1966171168
    %v6940 = vunpack.c.0.s8 %v6939
    %v6941 = vlaneseq
    %v6942 = vshrl.u32 %v6941, 7
    %v6943 = vsub.s32 %v6940, %v6942
    %v6944 = vrot.slane %v6906, %v6943
    %v6945 = vcombine.low %v6923, %v6930
    %v6946 = vcombine.low %v6937, %v6944
    %v6948 = vunpack.c.l.s4 1966171168
    %v6949 = vunpack.c.0.s8 %v6948
    %v6950 = vlaneseq
    %v6951 = vshrl.u32 %v6950, 7
    %v6952 = vsub.s32 %v6949, %v6951
    %v6953 = vrot.slane %v6945, %v6952
    %v6955 = vunpack.c.l.s4 1966171168
    %v6956 = vunpack.c.0.s8 %v6955
    %v6957 = vlaneseq
    %v6958 = vshrl.u32 %v6957, 7
    %v6959 = vsub.s32 %v6956, %v6958
    %v6960 = vrot.slane %v6946, %v6959
    %v6961 = vcombine.low %v6953, %v6960
    %v6963 = vmul.f32 %v6765, %v6961
    %v6965 = vlaneseq
    %v6966 = vshrl.u32 %v6965, 7
    %v6967 = vsub.s32 0, %v6966
    %v6968 = vrot.slane %v6963, %v6967
    %v6969 = vlaneseq
    %v6970 = vshrl.u32 %v6969, 7
    %v6971 = vsub.s32 1, %v6970
    %v6972 = vrot.slane %v6963, %v6971
    %v6973 = vlaneseq
    %v6974 = vshrl.u32 %v6973, 7
    %v6975 = vsub.s32 2, %v6974
    %v6976 = vrot.slane %v6963, %v6975
    %v6977 = vlaneseq
    %v6978 = vshrl.u32 %v6977, 7
    %v6979 = vsub.s32 3, %v6978
    %v6980 = vrot.slane %v6963, %v6979
    %v6981 = vlaneseq
    %v6982 = vshrl.u32 %v6981, 7
    %v6983 = vsub.s32 4, %v6982
    %v6984 = vrot.slane %v6963, %v6983
    %v6985 = vlaneseq
    %v6986 = vshrl.u32 %v6985, 7
    %v6987 = vsub.s32 5, %v6986
    %v6988 = vrot.slane %v6963, %v6987
    %v6989 = vlaneseq
    %v6990 = vshrl.u32 %v6989, 7
    %v6991 = vsub.s32 6, %v6990
    %v6992 = vrot.slane %v6963, %v6991
    %v7000 = vmul.f32 %v6809, %v6968
    %v7001 = vmul.f32 %v6810, %v6972
    %v7002 = vmul.f32 %v6811, %v6976
    %v7003 = vmul.f32 %v6812, %v6980
    %v7004 = vmul.f32 %v6813, %v6984
    %v7005 = vmul.f32 %v6814, %v6988
    %v7006 = vmul.f32 %v6815, %v6992
    %v7014 = vcombine.low %v7000, %v7001
    %v7015 = vcombine.low %v7002, %v7003
    %v7016 = vcombine.low %v7004, %v7005
    %v7018 = vunpack.c.l.s4 1966171168
    %v7019 = vunpack.c.0.s8 %v7018
    %v7020 = vlaneseq
    %v7021 = vshrl.u32 %v7020, 7
    %v7022 = vsub.s32 %v7019, %v7021
    %v7023 = vrot.slane %v7014, %v7022
    %v7025 = vunpack.c.l.s4 1966171168
    %v7026 = vunpack.c.0.s8 %v7025
    %v7027 = vlaneseq
    %v7028 = vshrl.u32 %v7027, 7
    %v7029 = vsub.s32 %v7026, %v7028
    %v7030 = vrot.slane %v7015, %v7029
    %v7032 = vunpack.c.l.s4 1966171168
    %v7033 = vunpack.c.0.s8 %v7032
    %v7034 = vlaneseq
    %v7035 = vshrl.u32 %v7034, 7
    %v7036 = vsub.s32 %v7033, %v7035
    %v7037 = vrot.slane %v7016, %v7036
    %v7039 = vunpack.c.l.s4 1966171168
    %v7040 = vunpack.c.0.s8 %v7039
    %v7041 = vlaneseq
    %v7042 = vshrl.u32 %v7041, 7
    %v7043 = vsub.s32 %v7040, %v7042
    %v7044 = vrot.slane %v7006, %v7043
    %v7045 = vcombine.low %v7023, %v7030
    %v7046 = vcombine.low %v7037, %v7044
    %v7048 = vunpack.c.l.s4 1966171168
    %v7049 = vunpack.c.0.s8 %v7048
    %v7050 = vlaneseq
    %v7051 = vshrl.u32 %v7050, 7
    %v7052 = vsub.s32 %v7049, %v7051
    %v7053 = vrot.slane %v7045, %v7052
    %v7055 = vunpack.c.l.s4 1966171168
    %v7056 = vunpack.c.0.s8 %v7055
    %v7057 = vlaneseq
    %v7058 = vshrl.u32 %v7057, 7
    %v7059 = vsub.s32 %v7056, %v7058
    %v7060 = vrot.slane %v7046, %v7059
    %v7061 = vcombine.low %v7053, %v7060
    %v7063 = vsub.f32 %v6766, %v7061
    %v7064 = vmul.f32 %v6271, %v6968
    %v7065 = vmul.f32 %v6273, %v6972
    %v7066 = vmul.f32 %v6435, %v6976
    %v7067 = vmul.f32 %v6437, %v6980
    %v7068 = vmul.f32 %v6599, %v6984
    %v7069 = vmul.f32 %v6601, %v6988
    %v7070 = vmul.f32 %v6760, %v6992
    %v7072 = vlaneseq
    %v7073 = vshrl.u32 %v7072, 7
    %v7074 = vsub.s32 0, %v7073
    %v7075 = vrot.slane %v7063, %v7074
    %v7076 = vlaneseq
    %v7077 = vshrl.u32 %v7076, 7
    %v7078 = vsub.s32 1, %v7077
    %v7079 = vrot.slane %v7063, %v7078
    %v7080 = vlaneseq
    %v7081 = vshrl.u32 %v7080, 7
    %v7082 = vsub.s32 2, %v7081
    %v7083 = vrot.slane %v7063, %v7082
    %v7084 = vlaneseq
    %v7085 = vshrl.u32 %v7084, 7
    %v7086 = vsub.s32 3, %v7085
    %v7087 = vrot.slane %v7063, %v7086
    %v7088 = vlaneseq
    %v7089 = vshrl.u32 %v7088, 7
    %v7090 = vsub.s32 4, %v7089
    %v7091 = vrot.slane %v7063, %v7090
    %v7092 = vlaneseq
    %v7093 = vshrl.u32 %v7092, 7
    %v7094 = vsub.s32 5, %v7093
    %v7095 = vrot.slane %v7063, %v7094
    %v7096 = vlaneseq
    %v7097 = vshrl.u32 %v7096, 7
    %v7098 = vsub.s32 6, %v7097
    %v7099 = vrot.slane %v7063, %v7098
    %v7107 = vadd.f32 %v7064, %v7075
    %v7108 = vadd.f32 %v7065, %v7079
    %v7109 = vadd.f32 %v7066, %v7083
    %v7110 = vadd.f32 %v7067, %v7087
    %v7111 = vadd.f32 %v7068, %v7091
    %v7112 = vadd.f32 %v7069, %v7095
    %v7113 = vadd.f32 %v7070, %v7099
    %v7114 = vmax.f32 %v7107, 0.0
    %v7115 = vmax.f32 %v7108, 0.0
    %v7116 = vmax.f32 %v7109, 0.0
    %v7117 = vmax.f32 %v7110, 0.0
    %v7118 = vmax.f32 %v7111, 0.0
    %v7119 = vmax.f32 %v7112, 0.0
    %v7120 = vmax.f32 %v7113, 0.0
    %v7121 = vpack.c.bf16 %v7114, %v7114
    %v7122 = vpack.c.bf16 %v7115, %v7115
    %v7123 = vpack.c.bf16 %v7116, %v7116
    %v7124 = vpack.c.bf16 %v7117, %v7117
    %v7125 = vpack.c.bf16 %v7118, %v7118
    %v7126 = vpack.c.bf16 %v7119, %v7119
    %v7127 = vpack.c.bf16 %v7120, %v7120
    %s7128 = smul.u32 %s3645, 1
    %s7129 = sshll.u32 %s7128, 4
    %7130 = dma.done %s124, %s7129
    %v7131 = vld [vmem:[#allocation3] sm:$0xf]
    %v7132 = vld [vmem:[#allocation3 + $0x4] sm:$0xf]
    %v7133 = vld [vmem:[#allocation3 + $0x8] sm:$0xf]
    %v7134 = vld [vmem:[#allocation3 + $0xc] sm:$0xf]
    %v7135 = vld [vmem:[#allocation3 + $0x10] sm:$0xf]
    %v7136 = vld [vmem:[#allocation3 + $0x14] sm:$0xf]
    %v7137 = vld [vmem:[#allocation3 + $0x18] sm:$0xf]
    %v7138 = vld [vmem:[#allocation3 + $0x1c] sm:$0xf]
    %v7139 = vld [vmem:[#allocation3 + $0x20] sm:$0xf]
    %v7140 = vld [vmem:[#allocation3 + $0x24] sm:$0xf]
    %v7141 = vld [vmem:[#allocation3 + $0x28] sm:$0xf]
    %v7142 = vld [vmem:[#allocation3 + $0x2c] sm:$0xf]
    %v7143 = vld [vmem:[#allocation3 + $0x30] sm:$0xf]
    %v7144 = vld [vmem:[#allocation3 + $0x34] sm:$0xf]
    %v7145 = vld [vmem:[#allocation3 + $0x38] sm:$0xf]
    %v7146 = vld [vmem:[#allocation3 + $0x3c] sm:$0xf]
    %v7147 = vld [vmem:[#allocation3 + $0x40] sm:$0xf]
    %v7148 = vld [vmem:[#allocation3 + $0x44] sm:$0xf]
    %v7149 = vld [vmem:[#allocation3 + $0x48] sm:$0xf]
    %v7150 = vld [vmem:[#allocation3 + $0x4c] sm:$0xf]
    %v7151 = vld [vmem:[#allocation3 + $0x50] sm:$0xf]
    %v7152 = vld [vmem:[#allocation3 + $0x54] sm:$0xf]
    %v7153 = vld [vmem:[#allocation3 + $0x58] sm:$0xf]
    %v7154 = vld [vmem:[#allocation3 + $0x5c] sm:$0xf]
    %v7155 = vld [vmem:[#allocation3 + $0x60] sm:$0xf]
    %v7156 = vld [vmem:[#allocation3 + $0x64] sm:$0xf]
    %v7157 = vld [vmem:[#allocation3 + $0x68] sm:$0xf]
    %v7158 = vld [vmem:[#allocation3 + $0x6c] sm:$0xf]
    %v7159 = vld [vmem:[#allocation3 + $0x70] sm:$0xf]
    %v7160 = vld [vmem:[#allocation3 + $0x74] sm:$0xf]
    %v7161 = vld [vmem:[#allocation3 + $0x78] sm:$0xf]
    %v7162 = vld [vmem:[#allocation3 + $0x7c] sm:$0xf]
    %v7163 = vld [vmem:[#allocation3 + $0x80] sm:$0xf]
    %v7164 = vld [vmem:[#allocation3 + $0x84] sm:$0xf]
    %v7165 = vld [vmem:[#allocation3 + $0x88] sm:$0xf]
    %v7166 = vld [vmem:[#allocation3 + $0x8c] sm:$0xf]
    %v7167 = vld [vmem:[#allocation3 + $0x90] sm:$0xf]
    %v7168 = vld [vmem:[#allocation3 + $0x94] sm:$0xf]
    %v7169 = vld [vmem:[#allocation3 + $0x98] sm:$0xf]
    %v7170 = vld [vmem:[#allocation3 + $0x9c] sm:$0xf]
    %v7171 = vld [vmem:[#allocation3 + $0xa0] sm:$0xf]
    %v7172 = vld [vmem:[#allocation3 + $0xa4] sm:$0xf]
    %v7173 = vld [vmem:[#allocation3 + $0xa8] sm:$0xf]
    %v7174 = vld [vmem:[#allocation3 + $0xac] sm:$0xf]
    %v7175 = vld [vmem:[#allocation3 + $0xb0] sm:$0xf]
    %v7176 = vld [vmem:[#allocation3 + $0xb4] sm:$0xf]
    %v7177 = vld [vmem:[#allocation3 + $0xb8] sm:$0xf]
    %v7178 = vld [vmem:[#allocation3 + $0xbc] sm:$0xf]
    %v7179 = vld [vmem:[#allocation3 + $0xc0] sm:$0xf]
    %v7180 = vld [vmem:[#allocation3 + $0xc4] sm:$0xf]
    %v7181 = vld [vmem:[#allocation3 + $0xc8] sm:$0xf]
    %v7182 = vld [vmem:[#allocation3 + $0xcc] sm:$0xf]
    %v7183 = vld [vmem:[#allocation3 + $0xd0] sm:$0xf]
    %v7184 = vld [vmem:[#allocation3 + $0xd4] sm:$0xf]
    %v7185 = vld [vmem:[#allocation3 + $0xd8] sm:$0xf]
    %v7186 = vld [vmem:[#allocation3 + $0xdc] sm:$0xf]
    %v7187 = vld [vmem:[#allocation3 + $0xe0] sm:$0xf]
    %v7188 = vld [vmem:[#allocation3 + $0xe4] sm:$0xf]
    %v7189 = vld [vmem:[#allocation3 + $0xe8] sm:$0xf]
    %v7190 = vld [vmem:[#allocation3 + $0xec] sm:$0xf]
    %v7191 = vld [vmem:[#allocation3 + $0xf0] sm:$0xf]
    %v7192 = vld [vmem:[#allocation3 + $0xf4] sm:$0xf]
    %v7193 = vld [vmem:[#allocation3 + $0xf8] sm:$0xf]
    %v7194 = vld [vmem:[#allocation3 + $0xfc] sm:$0xf]
    %v7195 = vld [vmem:[#allocation3 + $0x100] sm:$0xf]
    %v7196 = vld [vmem:[#allocation3 + $0x104] sm:$0xf]
    %v7197 = vld [vmem:[#allocation3 + $0x108] sm:$0xf]
    %v7198 = vld [vmem:[#allocation3 + $0x10c] sm:$0xf]
    %v7199 = vld [vmem:[#allocation3 + $0x110] sm:$0xf]
    %v7200 = vld [vmem:[#allocation3 + $0x114] sm:$0xf]
    %v7201 = vld [vmem:[#allocation3 + $0x118] sm:$0xf]
    %v7202 = vld [vmem:[#allocation3 + $0x11c] sm:$0xf]
    %v7203 = vld [vmem:[#allocation3 + $0x120] sm:$0xf]
    %v7204 = vld [vmem:[#allocation3 + $0x124] sm:$0xf]
    %v7205 = vld [vmem:[#allocation3 + $0x128] sm:$0xf]
    %v7206 = vld [vmem:[#allocation3 + $0x12c] sm:$0xf]
    %v7207 = vld [vmem:[#allocation3 + $0x130] sm:$0xf]
    %v7208 = vld [vmem:[#allocation3 + $0x134] sm:$0xf]
    %v7209 = vld [vmem:[#allocation3 + $0x138] sm:$0xf]
    %v7210 = vld [vmem:[#allocation3 + $0x13c] sm:$0xf]
    %v7211 = vld [vmem:[#allocation3 + $0x140] sm:$0xf]
    %v7212 = vld [vmem:[#allocation3 + $0x144] sm:$0xf]
    %v7213 = vld [vmem:[#allocation3 + $0x148] sm:$0xf]
    %v7214 = vld [vmem:[#allocation3 + $0x14c] sm:$0xf]
    %v7215 = vld [vmem:[#allocation3 + $0x150] sm:$0xf]
    %v7216 = vld [vmem:[#allocation3 + $0x154] sm:$0xf]
    %v7217 = vld [vmem:[#allocation3 + $0x158] sm:$0xf]
    %v7218 = vld [vmem:[#allocation3 + $0x15c] sm:$0xf]
    %v7219 = vld [vmem:[#allocation3 + $0x160] sm:$0xf]
    %v7220 = vld [vmem:[#allocation3 + $0x164] sm:$0xf]
    %v7221 = vld [vmem:[#allocation3 + $0x168] sm:$0xf]
    %v7222 = vld [vmem:[#allocation3 + $0x16c] sm:$0xf]
    %v7223 = vld [vmem:[#allocation3 + $0x170] sm:$0xf]
    %v7224 = vld [vmem:[#allocation3 + $0x174] sm:$0xf]
    %v7225 = vld [vmem:[#allocation3 + $0x178] sm:$0xf]
    %v7226 = vld [vmem:[#allocation3 + $0x17c] sm:$0xf]
    %v7227 = vld [vmem:[#allocation3 + $0x180] sm:$0xf]
    %v7228 = vld [vmem:[#allocation3 + $0x184] sm:$0xf]
    %v7229 = vld [vmem:[#allocation3 + $0x188] sm:$0xf]
    %v7230 = vld [vmem:[#allocation3 + $0x18c] sm:$0xf]
    %v7231 = vld [vmem:[#allocation3 + $0x190] sm:$0xf]
    %v7232 = vld [vmem:[#allocation3 + $0x194] sm:$0xf]
    %v7233 = vld [vmem:[#allocation3 + $0x198] sm:$0xf]
    %v7234 = vld [vmem:[#allocation3 + $0x19c] sm:$0xf]
    %v7235 = vld [vmem:[#allocation3 + $0x1a0] sm:$0xf]
    %v7236 = vld [vmem:[#allocation3 + $0x1a4] sm:$0xf]
    %v7237 = vld [vmem:[#allocation3 + $0x1a8] sm:$0xf]
    %v7238 = vld [vmem:[#allocation3 + $0x1ac] sm:$0xf]
    %v7239 = vld [vmem:[#allocation3 + $0x1b0] sm:$0xf]
    %v7240 = vld [vmem:[#allocation3 + $0x1b4] sm:$0xf]
    %v7241 = vld [vmem:[#allocation3 + $0x1b8] sm:$0xf]
    %v7242 = vld [vmem:[#allocation3 + $0x1bc] sm:$0xf]
    %v7243 = vld [vmem:[#allocation16] sm:$0x1]
    %v7245 = vlaneseq
    %v7246 = vshrl.u32 %v7245, 7
    %v7247 = vsub.s32 0, %v7246
    %v7248 = vrot.slane %v7243, %v7247
    %v7362 = vunpack.c.l.b16 %v7131
    %v7363 = vunpack.c.l.b16 %v7132
    %v7364 = vunpack.c.l.b16 %v7133
    %v7365 = vunpack.c.l.b16 %v7134
    %v7366 = vunpack.c.l.b16 %v7135
    %v7367 = vunpack.c.l.b16 %v7136
    %v7368 = vunpack.c.l.b16 %v7137
    %v7369 = vunpack.c.l.b16 %v7138
    %v7370 = vunpack.c.l.b16 %v7139
    %v7371 = vunpack.c.l.b16 %v7140
    %v7372 = vunpack.c.l.b16 %v7141
    %v7373 = vunpack.c.l.b16 %v7142
    %v7374 = vunpack.c.l.b16 %v7143
    %v7375 = vunpack.c.l.b16 %v7144
    %v7376 = vunpack.c.l.b16 %v7145
    %v7377 = vunpack.c.l.b16 %v7146
    %v7378 = vunpack.c.l.b16 %v7147
    %v7379 = vunpack.c.l.b16 %v7148
    %v7380 = vunpack.c.l.b16 %v7149
    %v7381 = vunpack.c.l.b16 %v7150
    %v7382 = vunpack.c.l.b16 %v7151
    %v7383 = vunpack.c.l.b16 %v7152
    %v7384 = vunpack.c.l.b16 %v7153
    %v7385 = vunpack.c.l.b16 %v7154
    %v7386 = vunpack.c.l.b16 %v7155
    %v7387 = vunpack.c.l.b16 %v7156
    %v7388 = vunpack.c.l.b16 %v7157
    %v7389 = vunpack.c.l.b16 %v7158
    %v7390 = vunpack.c.l.b16 %v7159
    %v7391 = vunpack.c.l.b16 %v7160
    %v7392 = vunpack.c.l.b16 %v7161
    %v7393 = vunpack.c.l.b16 %v7162
    %v7394 = vunpack.c.l.b16 %v7163
    %v7395 = vunpack.c.l.b16 %v7164
    %v7396 = vunpack.c.l.b16 %v7165
    %v7397 = vunpack.c.l.b16 %v7166
    %v7398 = vunpack.c.l.b16 %v7167
    %v7399 = vunpack.c.l.b16 %v7168
    %v7400 = vunpack.c.l.b16 %v7169
    %v7401 = vunpack.c.l.b16 %v7170
    %v7402 = vunpack.c.l.b16 %v7171
    %v7403 = vunpack.c.l.b16 %v7172
    %v7404 = vunpack.c.l.b16 %v7173
    %v7405 = vunpack.c.l.b16 %v7174
    %v7406 = vunpack.c.l.b16 %v7175
    %v7407 = vunpack.c.l.b16 %v7176
    %v7408 = vunpack.c.l.b16 %v7177
    %v7409 = vunpack.c.l.b16 %v7178
    %v7410 = vunpack.c.l.b16 %v7179
    %v7411 = vunpack.c.l.b16 %v7180
    %v7412 = vunpack.c.l.b16 %v7181
    %v7413 = vunpack.c.l.b16 %v7182
    %v7414 = vunpack.c.l.b16 %v7183
    %v7415 = vunpack.c.l.b16 %v7184
    %v7416 = vunpack.c.l.b16 %v7185
    %v7417 = vunpack.c.l.b16 %v7186
    %v7418 = vunpack.c.l.b16 %v7187
    %v7419 = vunpack.c.l.b16 %v7188
    %v7420 = vunpack.c.l.b16 %v7189
    %v7421 = vunpack.c.l.b16 %v7190
    %v7422 = vunpack.c.l.b16 %v7191
    %v7423 = vunpack.c.l.b16 %v7192
    %v7424 = vunpack.c.l.b16 %v7193
    %v7425 = vunpack.c.l.b16 %v7194
    %v7426 = vunpack.c.l.b16 %v7195
    %v7427 = vunpack.c.l.b16 %v7196
    %v7428 = vunpack.c.l.b16 %v7197
    %v7429 = vunpack.c.l.b16 %v7198
    %v7430 = vunpack.c.l.b16 %v7199
    %v7431 = vunpack.c.l.b16 %v7200
    %v7432 = vunpack.c.l.b16 %v7201
    %v7433 = vunpack.c.l.b16 %v7202
    %v7434 = vunpack.c.l.b16 %v7203
    %v7435 = vunpack.c.l.b16 %v7204
    %v7436 = vunpack.c.l.b16 %v7205
    %v7437 = vunpack.c.l.b16 %v7206
    %v7438 = vunpack.c.l.b16 %v7207
    %v7439 = vunpack.c.l.b16 %v7208
    %v7440 = vunpack.c.l.b16 %v7209
    %v7441 = vunpack.c.l.b16 %v7210
    %v7442 = vunpack.c.l.b16 %v7211
    %v7443 = vunpack.c.l.b16 %v7212
    %v7444 = vunpack.c.l.b16 %v7213
    %v7445 = vunpack.c.l.b16 %v7214
    %v7446 = vunpack.c.l.b16 %v7215
    %v7447 = vunpack.c.l.b16 %v7216
    %v7448 = vunpack.c.l.b16 %v7217
    %v7449 = vunpack.c.l.b16 %v7218
    %v7450 = vunpack.c.l.b16 %v7219
    %v7451 = vunpack.c.l.b16 %v7220
    %v7452 = vunpack.c.l.b16 %v7221
    %v7453 = vunpack.c.l.b16 %v7222
    %v7454 = vunpack.c.l.b16 %v7223
    %v7455 = vunpack.c.l.b16 %v7224
    %v7456 = vunpack.c.l.b16 %v7225
    %v7457 = vunpack.c.l.b16 %v7226
    %v7458 = vunpack.c.l.b16 %v7227
    %v7459 = vunpack.c.l.b16 %v7228
    %v7460 = vunpack.c.l.b16 %v7229
    %v7461 = vunpack.c.l.b16 %v7230
    %v7462 = vunpack.c.l.b16 %v7231
    %v7463 = vunpack.c.l.b16 %v7232
    %v7464 = vunpack.c.l.b16 %v7233
    %v7465 = vunpack.c.l.b16 %v7234
    %v7466 = vunpack.c.l.b16 %v7235
    %v7467 = vunpack.c.l.b16 %v7236
    %v7468 = vunpack.c.l.b16 %v7237
    %v7469 = vunpack.c.l.b16 %v7238
    %v7470 = vunpack.c.l.b16 %v7239
    %v7471 = vunpack.c.l.b16 %v7240
    %v7472 = vunpack.c.l.b16 %v7241
    %v7473 = vunpack.c.l.b16 %v7242
    %v7474 = vpack.c.b16 %v7363, %v7362
    %v7475 = vpack.c.b16 %v7365, %v7364
    %v7476 = vpack.c.b16 %v7367, %v7366
    %v7477 = vpack.c.b16 %v7369, %v7368
    %v7478 = vpack.c.b16 %v7371, %v7370
    %v7479 = vpack.c.b16 %v7373, %v7372
    %v7480 = vpack.c.b16 %v7375, %v7374
    %v7481 = vpack.c.b16 %v7377, %v7376
    %v7482 = vpack.c.b16 %v7379, %v7378
    %v7483 = vpack.c.b16 %v7381, %v7380
    %v7484 = vpack.c.b16 %v7383, %v7382
    %v7485 = vpack.c.b16 %v7385, %v7384
    %v7486 = vpack.c.b16 %v7387, %v7386
    %v7487 = vpack.c.b16 %v7389, %v7388
    %v7488 = vpack.c.b16 %v7391, %v7390
    %v7489 = vpack.c.b16 %v7393, %v7392
    %v7490 = vpack.c.b16 %v7395, %v7394
    %v7491 = vpack.c.b16 %v7397, %v7396
    %v7492 = vpack.c.b16 %v7399, %v7398
    %v7493 = vpack.c.b16 %v7401, %v7400
    %v7494 = vpack.c.b16 %v7403, %v7402
    %v7495 = vpack.c.b16 %v7405, %v7404
    %v7496 = vpack.c.b16 %v7407, %v7406
    %v7497 = vpack.c.b16 %v7409, %v7408
    %v7498 = vpack.c.b16 %v7411, %v7410
    %v7499 = vpack.c.b16 %v7413, %v7412
    %v7500 = vpack.c.b16 %v7415, %v7414
    %v7501 = vpack.c.b16 %v7417, %v7416
    %v7502 = vpack.c.b16 %v7419, %v7418
    %v7503 = vpack.c.b16 %v7421, %v7420
    %v7504 = vpack.c.b16 %v7423, %v7422
    %v7505 = vpack.c.b16 %v7425, %v7424
    %v7506 = vpack.c.b16 %v7427, %v7426
    %v7507 = vpack.c.b16 %v7429, %v7428
    %v7508 = vpack.c.b16 %v7431, %v7430
    %v7509 = vpack.c.b16 %v7433, %v7432
    %v7510 = vpack.c.b16 %v7435, %v7434
    %v7511 = vpack.c.b16 %v7437, %v7436
    %v7512 = vpack.c.b16 %v7439, %v7438
    %v7513 = vpack.c.b16 %v7441, %v7440
    %v7514 = vpack.c.b16 %v7443, %v7442
    %v7515 = vpack.c.b16 %v7445, %v7444
    %v7516 = vpack.c.b16 %v7447, %v7446
    %v7517 = vpack.c.b16 %v7449, %v7448
    %v7518 = vpack.c.b16 %v7451, %v7450
    %v7519 = vpack.c.b16 %v7453, %v7452
    %v7520 = vpack.c.b16 %v7455, %v7454
    %v7521 = vpack.c.b16 %v7457, %v7456
    %v7522 = vpack.c.b16 %v7459, %v7458
    %v7523 = vpack.c.b16 %v7461, %v7460
    %v7524 = vpack.c.b16 %v7463, %v7462
    %v7525 = vpack.c.b16 %v7465, %v7464
    %v7526 = vpack.c.b16 %v7467, %v7466
    %v7527 = vpack.c.b16 %v7469, %v7468
    %v7528 = vpack.c.b16 %v7471, %v7470
    %v7529 = vpack.c.b16 %v7473, %v7472
    %7586 = vmatprep.subr.bf16.mxu0 0
    %7587 = vmatpush1.bf16.msra.mxu0 %v7481
    %7588 = vmatprep.subr.bf16.mxu0 0
    %7589 = vmatpush1.bf16.msra.mxu0 %v7480
    %7590 = vmatprep.subr.bf16.mxu0 0
    %7591 = vmatpush1.bf16.msra.mxu0 %v7479
    %7592 = vmatprep.subr.bf16.mxu0 0
    %7593 = vmatpush1.bf16.msra.mxu0 %v7478
    %7594 = vmatprep.subr.bf16.mxu0 0
    %7595 = vmatpush1.bf16.msra.mxu0 %v7477
    %7596 = vmatprep.subr.bf16.mxu0 0
    %7597 = vmatpush1.bf16.msra.mxu0 %v7476
    %7598 = vmatprep.subr.bf16.mxu0 0
    %7599 = vmatpush1.bf16.msra.mxu0 %v7475
    %7600 = vmatprep.subr.bf16.mxu0 0
    %7601 = vmatpush1.bf16.msra.mxu0 %v7474
    %7602 = vmatprep.subr.bf16.mxu0 0
    %7603 = vmatpush2.bf16.msra.mxu0 %v7489
    %7604 = vmatprep.subr.bf16.mxu0 0
    %7605 = vmatpush2.bf16.msra.mxu0 %v7488
    %7606 = vmatprep.subr.bf16.mxu0 0
    %7607 = vmatpush2.bf16.msra.mxu0 %v7487
    %7608 = vmatprep.subr.bf16.mxu0 0
    %7609 = vmatpush2.bf16.msra.mxu0 %v7486
    %7610 = vmatprep.subr.bf16.mxu0 0
    %7611 = vmatpush2.bf16.msra.mxu0 %v7485
    %7612 = vmatprep.subr.bf16.mxu0 0
    %7613 = vmatpush2.bf16.msra.mxu0 %v7484
    %7614 = vmatprep.subr.bf16.mxu0 0
    %7615 = vmatpush2.bf16.msra.mxu0 %v7483
    %7616 = vmatprep.subr.bf16.mxu0 0
    %7617 = vmatpush2.bf16.msra.mxu0 %v7482
    %7618 = vmatprep.mubr.bf16.mxu0 %v7122
    %7619 = vmatmul.mubr.bf16.gmra.mxu0 %v7121
    %v7620 = vpop.f32.mrf.mxu0
    %v7621 = vadd.f32 %v7248, %v7620
    %v7622 = vpop.f32.mrf.mxu0
    %v7623 = vpop.f32.mrf.mxu0
    %v7624 = vpop.f32.mrf.mxu0
    %7625 = vdwg.mxu0
    %7626 = vmatprep.subr.bf16.mxu0 0
    %7627 = vmatpush1.bf16.msra.mxu0 %v7497
    %7628 = vmatprep.subr.bf16.mxu0 0
    %7629 = vmatpush1.bf16.msra.mxu0 %v7496
    %7630 = vmatprep.subr.bf16.mxu0 0
    %7631 = vmatpush1.bf16.msra.mxu0 %v7495
    %7632 = vmatprep.subr.bf16.mxu0 0
    %7633 = vmatpush1.bf16.msra.mxu0 %v7494
    %7634 = vmatprep.subr.bf16.mxu0 0
    %7635 = vmatpush1.bf16.msra.mxu0 %v7493
    %7636 = vmatprep.subr.bf16.mxu0 0
    %7637 = vmatpush1.bf16.msra.mxu0 %v7492
    %7638 = vmatprep.subr.bf16.mxu0 0
    %7639 = vmatpush1.bf16.msra.mxu0 %v7491
    %7640 = vmatprep.subr.bf16.mxu0 0
    %7641 = vmatpush1.bf16.msra.mxu0 %v7490
    %7642 = vmatprep.subr.bf16.mxu0 0
    %7643 = vmatpush2.bf16.msra.mxu0 %v7505
    %7644 = vmatprep.subr.bf16.mxu0 0
    %7645 = vmatpush2.bf16.msra.mxu0 %v7504
    %7646 = vmatprep.subr.bf16.mxu0 0
    %7647 = vmatpush2.bf16.msra.mxu0 %v7503
    %7648 = vmatprep.subr.bf16.mxu0 0
    %7649 = vmatpush2.bf16.msra.mxu0 %v7502
    %7650 = vmatprep.subr.bf16.mxu0 0
    %7651 = vmatpush2.bf16.msra.mxu0 %v7501
    %7652 = vmatprep.subr.bf16.mxu0 0
    %7653 = vmatpush2.bf16.msra.mxu0 %v7500
    %7654 = vmatprep.subr.bf16.mxu0 0
    %7655 = vmatpush2.bf16.msra.mxu0 %v7499
    %7656 = vmatprep.subr.bf16.mxu0 0
    %7657 = vmatpush2.bf16.msra.mxu0 %v7498
    %7658 = vmatprep.mubr.bf16.mxu0 %v7124
    %7659 = vmatmul.mubr.bf16.gmra.mxu0 %v7123
    %v7660 = vpop.f32.mrf.mxu0
    %v7661 = vadd.f32 %v7621, %v7660
    %v7662 = vpop.f32.mrf.mxu0
    %v7663 = vpop.f32.mrf.mxu0
    %v7664 = vpop.f32.mrf.mxu0
    %7665 = vdwg.mxu0
    %7666 = vmatprep.subr.bf16.mxu0 0
    %7667 = vmatpush1.bf16.msra.mxu0 %v7513
    %7668 = vmatprep.subr.bf16.mxu0 0
    %7669 = vmatpush1.bf16.msra.mxu0 %v7512
    %7670 = vmatprep.subr.bf16.mxu0 0
    %7671 = vmatpush1.bf16.msra.mxu0 %v7511
    %7672 = vmatprep.subr.bf16.mxu0 0
    %7673 = vmatpush1.bf16.msra.mxu0 %v7510
    %7674 = vmatprep.subr.bf16.mxu0 0
    %7675 = vmatpush1.bf16.msra.mxu0 %v7509
    %7676 = vmatprep.subr.bf16.mxu0 0
    %7677 = vmatpush1.bf16.msra.mxu0 %v7508
    %7678 = vmatprep.subr.bf16.mxu0 0
    %7679 = vmatpush1.bf16.msra.mxu0 %v7507
    %7680 = vmatprep.subr.bf16.mxu0 0
    %7681 = vmatpush1.bf16.msra.mxu0 %v7506
    %7682 = vmatprep.subr.bf16.mxu0 0
    %7683 = vmatpush2.bf16.msra.mxu0 %v7521
    %7684 = vmatprep.subr.bf16.mxu0 0
    %7685 = vmatpush2.bf16.msra.mxu0 %v7520
    %7686 = vmatprep.subr.bf16.mxu0 0
    %7687 = vmatpush2.bf16.msra.mxu0 %v7519
    %7688 = vmatprep.subr.bf16.mxu0 0
    %7689 = vmatpush2.bf16.msra.mxu0 %v7518
    %7690 = vmatprep.subr.bf16.mxu0 0
    %7691 = vmatpush2.bf16.msra.mxu0 %v7517
    %7692 = vmatprep.subr.bf16.mxu0 0
    %7693 = vmatpush2.bf16.msra.mxu0 %v7516
    %7694 = vmatprep.subr.bf16.mxu0 0
    %7695 = vmatpush2.bf16.msra.mxu0 %v7515
    %7696 = vmatprep.subr.bf16.mxu0 0
    %7697 = vmatpush2.bf16.msra.mxu0 %v7514
    %7698 = vmatprep.mubr.bf16.mxu0 %v7126
    %7699 = vmatmul.mubr.bf16.gmra.mxu0 %v7125
    %v7700 = vpop.f32.mrf.mxu0
    %v7701 = vadd.f32 %v7661, %v7700
    %v7702 = vpop.f32.mrf.mxu0
    %v7703 = vpop.f32.mrf.mxu0
    %v7704 = vpop.f32.mrf.mxu0
    %7705 = vdwg.mxu0
    %7706 = vmatprep.subr.bf16.mxu0 0
    %7707 = vmatpush1.bf16.msra.mxu0 %v7529
    %7708 = vmatprep.subr.bf16.mxu0 0
    %7709 = vmatpush1.bf16.msra.mxu0 %v7528
    %7710 = vmatprep.subr.bf16.mxu0 0
    %7711 = vmatpush1.bf16.msra.mxu0 %v7527
    %7712 = vmatprep.subr.bf16.mxu0 0
    %7713 = vmatpush1.bf16.msra.mxu0 %v7526
    %7714 = vmatprep.subr.bf16.mxu0 0
    %7715 = vmatpush1.bf16.msra.mxu0 %v7525
    %7716 = vmatprep.subr.bf16.mxu0 0
    %7717 = vmatpush1.bf16.msra.mxu0 %v7524
    %7718 = vmatprep.subr.bf16.mxu0 0
    %7719 = vmatpush1.bf16.msra.mxu0 %v7523
    %7720 = vmatprep.subr.bf16.mxu0 0
    %7721 = vmatpush1.bf16.msra.mxu0 %v7522
    %7722 = vmatprep.subr.bf16.mxu0 0
    %7723 = vmatpush2.bf16.msra.mxu0 0
    %7724 = vmatprep.subr.bf16.mxu0 0
    %7725 = vmatpush2.bf16.msra.mxu0 0
    %7726 = vmatprep.subr.bf16.mxu0 0
    %7727 = vmatpush2.bf16.msra.mxu0 0
    %7728 = vmatprep.subr.bf16.mxu0 0
    %7729 = vmatpush2.bf16.msra.mxu0 0
    %7730 = vmatprep.subr.bf16.mxu0 0
    %7731 = vmatpush2.bf16.msra.mxu0 0
    %7732 = vmatprep.subr.bf16.mxu0 0
    %7733 = vmatpush2.bf16.msra.mxu0 0
    %7734 = vmatprep.subr.bf16.mxu0 0
    %7735 = vmatpush2.bf16.msra.mxu0 0
    %7736 = vmatprep.subr.bf16.mxu0 0
    %7737 = vmatpush2.bf16.msra.mxu0 0
    %7738 = vmatprep.mubr.bf16.mxu0 0
    %7739 = vmatmul.mubr.bf16.gmra.mxu0 %v7127
    %v7740 = vpop.f32.mrf.mxu0
    %v7741 = vadd.f32 %v7701, %v7740
    %v7742 = vpop.f32.mrf.mxu0
    %v7743 = vpop.f32.mrf.mxu0
    %v7744 = vpop.f32.mrf.mxu0
    %7745 = vdwg.mxu0
    %7746 = vst [vmem:[#allocation17] sm:$0xff] %v7741
    // Predicated region
    $region66: #{tpu_custom_call.1} parent=1 // pred_check
      _
    $region67: #{tpu_custom_call.1} parent=1 // pred_check_branch
      %7748 = sbr.rel (0) target = $region69
    $region68: #{tpu_custom_call.1} parent=1 // pred_region
      %s7750 = ssub.s32 128, 128
      %7751 = vsyncadd [#allocation7], %s7750
      %s7753 = sshll.u32 [#allocation17], 4
      %s7754 = int_to_ptr.vmem [resolvable:$true] %s7753
      %7756 = dma.vmem_to_hbm [thread:$0]  %s7754, 128, %s9, [#allocation7]
    $region69: #{tpu_custom_call.1} parent=1 // pred_fallthru
      _
    // Predicated region
    $region70: #{tpu_custom_call.1} parent=1 // pred_check
      _
    $region71: #{tpu_custom_call.1} parent=1 // pred_check_branch
      %7758 = sbr.rel (0) target = $region73
    $region72: #{tpu_custom_call.1} parent=1 // pred_region
      %7759 = dma.done [#allocation7], 128
    $region73: #{tpu_custom_call.1} parent=1 // pred_fallthru
      _
    %7760 = vsyncpa [#allocation6], 1
    %7761 = vsyncpa [#allocation9], 1
    %7762 = vsyncpa [#allocation12], 1
    %7763 = vsyncpa [#allocation15], 1
    %7764 = vsyncpa [#allocation7], 1
  %7765 = vsyncmov [#allocation4]
  %s7766 = vpop.sfrf %7765
  %p7767 = scmp.eq.s32.totalorder %s7766, 0
  %p7768 = pneg %p7767
  %7770 = shalt.err (%p7768)
  %s7771 = scalar_lea.sflag [#allocation4], 1
  %7772 = vsyncmov %s7771
  %s7773 = vpop.sfrf %7772
  %p7774 = scmp.eq.s32.totalorder %s7773, 0
  %p7775 = pneg %p7774
  %7777 = shalt.err (%p7775)

</llo_original>
